<compile_context>
chip_gen: v7x
topology: tpu7x:2x2x1
jax: 0.10.0
libtpu: 0.0.40
codegen_flags: <defaults>
</compile_context>

<pallas_src>
import functools

import jax
import jax.numpy as jnp
from jax import lax
from jax.experimental import pallas as pl
from jax.experimental.pallas import tpu as pltpu


def _conv3x3_flat(src_ref, w_ref, *, Wo, L, mask_l, mask_r):
    """3x3 same-padded conv on a zero-padded, width-flattened image held in VMEM.

    src_ref: (C_in, (Ho + 4) * Wo) -- rows: [extra0, top-pad, Ho image rows, bot-pad, extra0]
    w_ref  : (9, C_out, C_in)      -- tap (ty, tx) stored at index ty * 3 + tx
    Returns (C_out, L) f32 with L = Ho * Wo (flat output, lane-dense).
    mask_l / mask_r: (1, L) 0/1 masks removing the row-wraparound columns of the
    left (tx=0) / right (tx=2) taps.
    """
    co = w_ref.shape[1]
    acc = jnp.zeros((co, L), jnp.float32)
    for tx in range(3):
        part = jnp.zeros((co, L), jnp.float32)
        for ty in range(3):
            off = (ty + 1) * Wo + tx - 1                       # static offset
            slab = src_ref[:, off:off + L]                     # (C_in, L)
            part = part + jnp.dot(w_ref[ty * 3 + tx], slab,
                                  preferred_element_type=jnp.float32)
        if tx == 0:
            part = part * mask_l
        elif tx == 2:
            part = part * mask_r
        acc = acc + part
    return acc


def _deconv2d_fuse_kernel(x_ref, xpre_ref, wd_ref, wc_ref, bn_ref, sup_ref,
                          mask_ref, o_ref, u_ref, z_ref, *, H, W):
    Ho, Wo = 2 * H, 2 * W
    L = Ho * Wo
    Lp = (Ho + 4) * Wo
    co = wd_ref.shape[1]

    mask_l = mask_ref[0:1, :]
    mask_r = mask_ref[1:2, :]

    # ---- stage 1: ConvTranspose2d(s=2,k=3,p=1,op=1) == zero-upsample x by 2 and
    # run a 3x3 same-conv with the spatially-flipped / IO-transposed kernel. ----
    u_ref[...] = jnp.zeros(u_ref.shape, jnp.float32)
    sup = sup_ref[...]                               # (W, Wo) 0/1 column-stretch
    for iy in range(H):                              # static unrolled loop
        row = x_ref[:, iy * W:(iy + 1) * W]          # (C_in, W)
        stretched = jnp.dot(row, sup, preferred_element_type=jnp.float32)
        u_ref[:, (2 * iy + 2) * Wo:(2 * iy + 3) * Wo] = stretched

    y = _conv3x3_flat(u_ref, wd_ref, Wo=Wo, L=L, mask_l=mask_l, mask_r=mask_r)
    y = jnp.maximum(y * bn_ref[:, 0:1] + bn_ref[:, 1:2], 0.0)   # BN1 + ReLU

    # ---- concat([deconv_out, x_pre], channel dim) into the padded scratch -----
    z_ref[:, 0:2 * Wo] = jnp.zeros((2 * co, 2 * Wo), jnp.float32)
    z_ref[:, 2 * Wo + L:Lp] = jnp.zeros((2 * co, 2 * Wo), jnp.float32)
    z_ref[0:co, 2 * Wo:2 * Wo + L] = y
    z_ref[co:2 * co, 2 * Wo:2 * Wo + L] = xpre_ref[...]

    # ---- stage 2: Conv2d(2*C_out -> C_out, k=3, p=1) + BN2 + ReLU -------------
    out = _conv3x3_flat(z_ref, wc_ref, Wo=Wo, L=L, mask_l=mask_l, mask_r=mask_r)
    out = jnp.maximum(out * bn_ref[:, 2:3] + bn_ref[:, 3:4], 0.0)
    o_ref[...] = out.astype(o_ref.dtype)


def deconv2d_fuse(x_pre, x, wd, wc, bn1, bn2, *, eps=1e-5, out_dtype=None):
    """Fused DeConv2dFuse forward (inference-mode BN).

    x     : (N, C_in, H, W)        input to the transposed conv
    x_pre : (N, C_out, 2H, 2W)     skip feature concatenated after the deconv
    wd    : (C_in, C_out, 3, 3)    ConvTranspose2d weight (PyTorch layout)
    wc    : (C_out, 2*C_out, 3, 3) Conv2d weight (PyTorch layout)
    bn1,bn2: (gamma, beta, running_mean, running_var), each (C_out,)
    """
    N, C_in, H, W = x.shape
    Co = wd.shape[1]
    Ho, Wo = 2 * H, 2 * W
    L = Ho * Wo
    Lp = (Ho + 4) * Wo
    out_dtype = out_dtype if out_dtype is not None else x.dtype

    # Free (metadata-only) reshapes into the flat-lane layout.
    xf = x.reshape(N, C_in, H * W).astype(jnp.float32)
    xpf = x_pre.reshape(N, Co, L).astype(jnp.float32)

    # Tiny parameter prep (no activation-sized HBM traffic).
    wd_taps = jnp.transpose(wd[:, :, ::-1, ::-1], (2, 3, 1, 0)) \
        .reshape(9, Co, C_in).astype(jnp.float32)        # flipped + IO-transposed
    wc_taps = jnp.transpose(wc, (2, 3, 0, 1)) \
        .reshape(9, Co, 2 * Co).astype(jnp.float32)

    def fold(bn):
        g, b, m, v = bn
        s = g * lax.rsqrt(v + eps)
        return s, b - m * s

    s1, t1 = fold(bn1)
    s2, t2 = fold(bn2)
    bn_tab = jnp.stack([s1, t1, s2, t2], axis=1).astype(jnp.float32)   # (Co, 4)

    # 0/1 column-stretch matrix: places x row values at even columns of a 2W row.
    s_up = (jnp.arange(Wo)[None, :] == (2 * jnp.arange(W))[:, None]
            ).astype(jnp.float32)                                      # (W, Wo)
    # Left/right border masks for the flat layout (kill row wraparound).
    col = jnp.arange(L) % Wo
    masks = jnp.stack([(col != 0), (col != Wo - 1)], axis=0).astype(jnp.float32)

    kernel = functools.partial(_deconv2d_fuse_kernel, H=H, W=W)
    out_flat = pl.pallas_call(
        kernel,
        out_shape=jax.ShapeDtypeStruct((N, Co, L), out_dtype),
        grid_spec=pltpu.PrefetchScalarGridSpec(
            num_scalar_prefetch=0,
            grid=(N,),
            in_specs=[
                pl.BlockSpec((pl.Squeezed(), C_in, H * W), lambda n: (n, 0, 0)),
                pl.BlockSpec((pl.Squeezed(), Co, L), lambda n: (n, 0, 0)),
                pl.BlockSpec((9, Co, C_in), lambda n: (0, 0, 0)),
                pl.BlockSpec((9, Co, 2 * Co), lambda n: (0, 0, 0)),
                pl.BlockSpec((Co, 4), lambda n: (0, 0)),
                pl.BlockSpec((W, Wo), lambda n: (0, 0)),
                pl.BlockSpec((2, L), lambda n: (0, 0)),
            ],
            out_specs=pl.BlockSpec((pl.Squeezed(), Co, L), lambda n: (n, 0, 0)),
            scratch_shapes=[
                pltpu.VMEM((C_in, Lp), jnp.float32),      # zero-upsampled x (+halo)
                pltpu.VMEM((2 * Co, Lp), jnp.float32),    # concat input (+halo)
            ],
        ),
        compiler_params=pltpu.CompilerParams(dimension_semantics=("parallel",)),
    )(xf, xpf, wd_taps, wc_taps, bn_tab, s_up, masks)

    return out_flat.reshape(N, Co, Ho, Wo)   # metadata-only reshape


def _reference(x_pre, x, wd, wc, bn1, bn2, eps=1e-5):
    """Pure-JAX replica of the PyTorch DeConv2dFuse forward (inference-mode BN)."""
    dn = ('NCHW', 'OIHW', 'NCHW')
    hp = lax.Precision.HIGHEST
    # ConvTranspose2d(s=2, p=1, op=1, k=3) == lhs-dilated conv with flipped,
    # IO-transposed kernel and padding (k-1-p, k-1-p+op) = (1, 2).
    w_eff = jnp.transpose(wd, (1, 0, 2, 3))[:, :, ::-1, ::-1]
    y = lax.conv_general_dilated(x, w_eff, window_strides=(1, 1),
                                 padding=((1, 2), (1, 2)), lhs_dilation=(2, 2),
                                 dimension_numbers=dn, precision=hp)
    g1, b1, m1, v1 = bn1
    y = (y - m1.reshape(1, -1, 1, 1)) * (g1 * lax.rsqrt(v1 + eps)).reshape(1, -1, 1, 1) \
        + b1.reshape(1, -1, 1, 1)
    y = jnp.maximum(y, 0.0)
    z = jnp.concatenate([y, x_pre], axis=1)
    o = lax.conv_general_dilated(z, wc, (1, 1), ((1, 1), (1, 1)),
                                 dimension_numbers=dn, precision=hp)
    g2, b2, m2, v2 = bn2
    o = (o - m2.reshape(1, -1, 1, 1)) * (g2 * lax.rsqrt(v2 + eps)).reshape(1, -1, 1, 1) \
        + b2.reshape(1, -1, 1, 1)
    return jnp.maximum(o, 0.0)


if __name__ == "__main__":
    N, C_in, Co, H, W = 2, 4, 8, 16, 16
    ks = jax.random.split(jax.random.PRNGKey(0), 12)
    x = jax.random.normal(ks[0], (N, C_in, H, W), jnp.float32)
    x_pre = jax.random.normal(ks[1], (N, Co, 2 * H, 2 * W), jnp.float32)
    wd = 0.2 * jax.random.normal(ks[2], (C_in, Co, 3, 3), jnp.float32)
    wc = 0.2 * jax.random.normal(ks[3], (Co, 2 * Co, 3, 3), jnp.float32)
    bn1 = (1.0 + 0.1 * jax.random.normal(ks[4], (Co,)),
           0.1 * jax.random.normal(ks[5], (Co,)),
           0.1 * jax.random.normal(ks[6], (Co,)),
           1.0 + 0.1 * jnp.abs(jax.random.normal(ks[7], (Co,))))
    bn2 = (1.0 + 0.1 * jax.random.normal(ks[8], (Co,)),
           0.1 * jax.random.normal(ks[9], (Co,)),
           0.1 * jax.random.normal(ks[10], (Co,)),
           1.0 + 0.1 * jnp.abs(jax.random.normal(ks[11], (Co,))))

    out = deconv2d_fuse(x_pre, x, wd, wc, bn1, bn2)
    jax.block_until_ready(out)

    ref = _reference(x_pre, x, wd, wc, bn1, bn2)
    assert out.shape == (N, Co, 2 * H, 2 * W)
    max_err = float(jnp.max(jnp.abs(out - ref)))
    assert jnp.allclose(out, ref, atol=1e-3, rtol=1e-3), f"mismatch, max abs err = {max_err}"

    print("KERNEL_OK")
</pallas_src>

<mosaic_0001>
module attributes {stable_mosaic.version = 11 : i64} {
  func.func @_deconv2d_fuse_kernel(%arg0: i32, %arg1: memref<1x4x256xf32, #tpu.memory_space<vmem>>, %arg2: memref<1x8x1024xf32, #tpu.memory_space<vmem>>, %arg3: memref<9x8x4xf32, #tpu.memory_space<vmem>>, %arg4: memref<9x8x16xf32, #tpu.memory_space<vmem>>, %arg5: memref<8x4xf32, #tpu.memory_space<vmem>>, %arg6: memref<16x32xf32, #tpu.memory_space<vmem>>, %arg7: memref<2x1024xf32, #tpu.memory_space<vmem>>, %arg8: memref<1x8x1024xf32, #tpu.memory_space<vmem>>, %arg9: memref<4x1152xf32, #tpu.memory_space<vmem>>, %arg10: memref<16x1152xf32, #tpu.memory_space<vmem>>) attributes {dimension_semantics = [#tpu.dimension_semantics<parallel>], iteration_bounds = array<i64: 2>, scalar_prefetch = 0 : i64, scratch_operands = 2 : i64, tpu.core_type = #tpu.core_type<tc>, window_params = [{transform_indices = @transform_0, window_bounds = array<i64: 1, 4, 256>}, {transform_indices = @transform_1, window_bounds = array<i64: 1, 8, 1024>}, {pipeline_mode = #tpu.pipeline_mode<synchronous>, transform_indices = @transform_2, window_bounds = array<i64: 9, 8, 4>}, {pipeline_mode = #tpu.pipeline_mode<synchronous>, transform_indices = @transform_3, window_bounds = array<i64: 9, 8, 16>}, {pipeline_mode = #tpu.pipeline_mode<synchronous>, transform_indices = @transform_4, window_bounds = array<i64: 8, 4>}, {pipeline_mode = #tpu.pipeline_mode<synchronous>, transform_indices = @transform_5, window_bounds = array<i64: 16, 32>}, {pipeline_mode = #tpu.pipeline_mode<synchronous>, transform_indices = @transform_6, window_bounds = array<i64: 2, 1024>}, {transform_indices = @transform_7, window_bounds = array<i64: 1, 8, 1024>}]} {
    %c0 = arith.constant 0 : index
    %c0_0 = arith.constant 0 : index
    %0 = vector.load %arg7[%c0, %c0_0] : memref<2x1024xf32, #tpu.memory_space<vmem>>, vector<1x1024xf32>
    %c1 = arith.constant 1 : index
    %c0_1 = arith.constant 0 : index
    %1 = vector.load %arg7[%c1, %c0_1] : memref<2x1024xf32, #tpu.memory_space<vmem>>, vector<1x1024xf32>
    %cst = arith.constant 0.000000e+00 : f32
    %2 = vector.broadcast %cst : f32 to vector<4x1152xf32>
    %c0_2 = arith.constant 0 : index
    %c0_3 = arith.constant 0 : index
    %3 = vector.load %arg9[%c0_2, %c0_3] : memref<4x1152xf32, #tpu.memory_space<vmem>>, vector<4x1152xf32>
    tpu.vector_store %arg9[%c0_2, %c0_3], %2 {strides = array<i32>} : memref<4x1152xf32, #tpu.memory_space<vmem>>, vector<4x1152xf32>,
    %c0_4 = arith.constant 0 : index
    %c0_5 = arith.constant 0 : index
    %4 = vector.load %arg6[%c0_4, %c0_5] : memref<16x32xf32, #tpu.memory_space<vmem>>, vector<16x32xf32>
    %c0_6 = arith.constant 0 : index
    %c0_7 = arith.constant 0 : index
    %c0_8 = arith.constant 0 : index
    %5 = vector.load %arg1[%c0_6, %c0_7, %c0_8] : memref<1x4x256xf32, #tpu.memory_space<vmem>>, vector<1x4x16xf32>
    %6 = vector.shape_cast %5 : vector<1x4x16xf32> to vector<4x16xf32>
    %cst_9 = arith.constant dense<0.000000e+00> : vector<4x32xf32>
    %7 = tpu.matmul %6, %4, %cst_9 {dimension_numbers = #tpu.dot_dimension_numbers<[1], [0], [0], [1], [0, 0, 1, 1], [], []>} : vector<4x16xf32>, vector<16x32xf32>, vector<4x32xf32> -> vector<4x32xf32>
    %c0_10 = arith.constant 0 : index
    %c64 = arith.constant 64 : index
    %8 = vector.load %arg9[%c0_10, %c64] : memref<4x1152xf32, #tpu.memory_space<vmem>>, vector<4x32xf32>
    tpu.vector_store %arg9[%c0_10, %c64], %7 {strides = array<i32>} : memref<4x1152xf32, #tpu.memory_space<vmem>>, vector<4x32xf32>,
    %c0_11 = arith.constant 0 : index
    %c0_12 = arith.constant 0 : index
    %c16 = arith.constant 16 : index
    %9 = vector.load %arg1[%c0_11, %c0_12, %c16] : memref<1x4x256xf32, #tpu.memory_space<vmem>>, vector<1x4x16xf32>
    %10 = vector.shape_cast %9 : vector<1x4x16xf32> to vector<4x16xf32>
    %cst_13 = arith.constant dense<0.000000e+00> : vector<4x32xf32>
    %11 = tpu.matmul %10, %4, %cst_13 {dimension_numbers = #tpu.dot_dimension_numbers<[1], [0], [0], [1], [0, 0, 1, 1], [], []>} : vector<4x16xf32>, vector<16x32xf32>, vector<4x32xf32> -> vector<4x32xf32>
    %c0_14 = arith.constant 0 : index
    %c128 = arith.constant 128 : index
    %12 = vector.load %arg9[%c0_14, %c128] : memref<4x1152xf32, #tpu.memory_space<vmem>>, vector<4x32xf32>
    tpu.vector_store %arg9[%c0_14, %c128], %11 {strides = array<i32>} : memref<4x1152xf32, #tpu.memory_space<vmem>>, vector<4x32xf32>,
    %c0_15 = arith.constant 0 : index
    %c0_16 = arith.constant 0 : index
    %c32 = arith.constant 32 : index
    %13 = vector.load %arg1[%c0_15, %c0_16, %c32] : memref<1x4x256xf32, #tpu.memory_space<vmem>>, vector<1x4x16xf32>
    %14 = vector.shape_cast %13 : vector<1x4x16xf32> to vector<4x16xf32>
    %cst_17 = arith.constant dense<0.000000e+00> : vector<4x32xf32>
    %15 = tpu.matmul %14, %4, %cst_17 {dimension_numbers = #tpu.dot_dimension_numbers<[1], [0], [0], [1], [0, 0, 1, 1], [], []>} : vector<4x16xf32>, vector<16x32xf32>, vector<4x32xf32> -> vector<4x32xf32>
    %c0_18 = arith.constant 0 : index
    %c192 = arith.constant 192 : index
    %16 = vector.load %arg9[%c0_18, %c192] : memref<4x1152xf32, #tpu.memory_space<vmem>>, vector<4x32xf32>
    tpu.vector_store %arg9[%c0_18, %c192], %15 {strides = array<i32>} : memref<4x1152xf32, #tpu.memory_space<vmem>>, vector<4x32xf32>,
    %c0_19 = arith.constant 0 : index
    %c0_20 = arith.constant 0 : index
    %c48 = arith.constant 48 : index
    %17 = vector.load %arg1[%c0_19, %c0_20, %c48] : memref<1x4x256xf32, #tpu.memory_space<vmem>>, vector<1x4x16xf32>
    %18 = vector.shape_cast %17 : vector<1x4x16xf32> to vector<4x16xf32>
    %cst_21 = arith.constant dense<0.000000e+00> : vector<4x32xf32>
    %19 = tpu.matmul %18, %4, %cst_21 {dimension_numbers = #tpu.dot_dimension_numbers<[1], [0], [0], [1], [0, 0, 1, 1], [], []>} : vector<4x16xf32>, vector<16x32xf32>, vector<4x32xf32> -> vector<4x32xf32>
    %c0_22 = arith.constant 0 : index
    %c256 = arith.constant 256 : index
    %20 = vector.load %arg9[%c0_22, %c256] : memref<4x1152xf32, #tpu.memory_space<vmem>>, vector<4x32xf32>
    tpu.vector_store %arg9[%c0_22, %c256], %19 {strides = array<i32>} : memref<4x1152xf32, #tpu.memory_space<vmem>>, vector<4x32xf32>,
    %c0_23 = arith.constant 0 : index
    %c0_24 = arith.constant 0 : index
    %c64_25 = arith.constant 64 : index
    %21 = vector.load %arg1[%c0_23, %c0_24, %c64_25] : memref<1x4x256xf32, #tpu.memory_space<vmem>>, vector<1x4x16xf32>
    %22 = vector.shape_cast %21 : vector<1x4x16xf32> to vector<4x16xf32>
    %cst_26 = arith.constant dense<0.000000e+00> : vector<4x32xf32>
    %23 = tpu.matmul %22, %4, %cst_26 {dimension_numbers = #tpu.dot_dimension_numbers<[1], [0], [0], [1], [0, 0, 1, 1], [], []>} : vector<4x16xf32>, vector<16x32xf32>, vector<4x32xf32> -> vector<4x32xf32>
    %c0_27 = arith.constant 0 : index
    %c320 = arith.constant 320 : index
    %24 = vector.load %arg9[%c0_27, %c320] : memref<4x1152xf32, #tpu.memory_space<vmem>>, vector<4x32xf32>
    tpu.vector_store %arg9[%c0_27, %c320], %23 {strides = array<i32>} : memref<4x1152xf32, #tpu.memory_space<vmem>>, vector<4x32xf32>,
    %c0_28 = arith.constant 0 : index
    %c0_29 = arith.constant 0 : index
    %c80 = arith.constant 80 : index
    %25 = vector.load %arg1[%c0_28, %c0_29, %c80] : memref<1x4x256xf32, #tpu.memory_space<vmem>>, vector<1x4x16xf32>
    %26 = vector.shape_cast %25 : vector<1x4x16xf32> to vector<4x16xf32>
    %cst_30 = arith.constant dense<0.000000e+00> : vector<4x32xf32>
    %27 = tpu.matmul %26, %4, %cst_30 {dimension_numbers = #tpu.dot_dimension_numbers<[1], [0], [0], [1], [0, 0, 1, 1], [], []>} : vector<4x16xf32>, vector<16x32xf32>, vector<4x32xf32> -> vector<4x32xf32>
    %c0_31 = arith.constant 0 : index
    %c384 = arith.constant 384 : index
    %28 = vector.load %arg9[%c0_31, %c384] : memref<4x1152xf32, #tpu.memory_space<vmem>>, vector<4x32xf32>
    tpu.vector_store %arg9[%c0_31, %c384], %27 {strides = array<i32>} : memref<4x1152xf32, #tpu.memory_space<vmem>>, vector<4x32xf32>,
    %c0_32 = arith.constant 0 : index
    %c0_33 = arith.constant 0 : index
    %c96 = arith.constant 96 : index
    %29 = vector.load %arg1[%c0_32, %c0_33, %c96] : memref<1x4x256xf32, #tpu.memory_space<vmem>>, vector<1x4x16xf32>
    %30 = vector.shape_cast %29 : vector<1x4x16xf32> to vector<4x16xf32>
    %cst_34 = arith.constant dense<0.000000e+00> : vector<4x32xf32>
    %31 = tpu.matmul %30, %4, %cst_34 {dimension_numbers = #tpu.dot_dimension_numbers<[1], [0], [0], [1], [0, 0, 1, 1], [], []>} : vector<4x16xf32>, vector<16x32xf32>, vector<4x32xf32> -> vector<4x32xf32>
    %c0_35 = arith.constant 0 : index
    %c448 = arith.constant 448 : index
    %32 = vector.load %arg9[%c0_35, %c448] : memref<4x1152xf32, #tpu.memory_space<vmem>>, vector<4x32xf32>
    tpu.vector_store %arg9[%c0_35, %c448], %31 {strides = array<i32>} : memref<4x1152xf32, #tpu.memory_space<vmem>>, vector<4x32xf32>,
    %c0_36 = arith.constant 0 : index
    %c0_37 = arith.constant 0 : index
    %c112 = arith.constant 112 : index
    %33 = vector.load %arg1[%c0_36, %c0_37, %c112] : memref<1x4x256xf32, #tpu.memory_space<vmem>>, vector<1x4x16xf32>
    %34 = vector.shape_cast %33 : vector<1x4x16xf32> to vector<4x16xf32>
    %cst_38 = arith.constant dense<0.000000e+00> : vector<4x32xf32>
    %35 = tpu.matmul %34, %4, %cst_38 {dimension_numbers = #tpu.dot_dimension_numbers<[1], [0], [0], [1], [0, 0, 1, 1], [], []>} : vector<4x16xf32>, vector<16x32xf32>, vector<4x32xf32> -> vector<4x32xf32>
    %c0_39 = arith.constant 0 : index
    %c512 = arith.constant 512 : index
    %36 = vector.load %arg9[%c0_39, %c512] : memref<4x1152xf32, #tpu.memory_space<vmem>>, vector<4x32xf32>
    tpu.vector_store %arg9[%c0_39, %c512], %35 {strides = array<i32>} : memref<4x1152xf32, #tpu.memory_space<vmem>>, vector<4x32xf32>,
    %c0_40 = arith.constant 0 : index
    %c0_41 = arith.constant 0 : index
    %c128_42 = arith.constant 128 : index
    %37 = vector.load %arg1[%c0_40, %c0_41, %c128_42] : memref<1x4x256xf32, #tpu.memory_space<vmem>>, vector<1x4x16xf32>
    %38 = vector.shape_cast %37 : vector<1x4x16xf32> to vector<4x16xf32>
    %cst_43 = arith.constant dense<0.000000e+00> : vector<4x32xf32>
    %39 = tpu.matmul %38, %4, %cst_43 {dimension_numbers = #tpu.dot_dimension_numbers<[1], [0], [0], [1], [0, 0, 1, 1], [], []>} : vector<4x16xf32>, vector<16x32xf32>, vector<4x32xf32> -> vector<4x32xf32>
    %c0_44 = arith.constant 0 : index
    %c576 = arith.constant 576 : index
    %40 = vector.load %arg9[%c0_44, %c576] : memref<4x1152xf32, #tpu.memory_space<vmem>>, vector<4x32xf32>
    tpu.vector_store %arg9[%c0_44, %c576], %39 {strides = array<i32>} : memref<4x1152xf32, #tpu.memory_space<vmem>>, vector<4x32xf32>,
    %c0_45 = arith.constant 0 : index
    %c0_46 = arith.constant 0 : index
    %c144 = arith.constant 144 : index
    %41 = vector.load %arg1[%c0_45, %c0_46, %c144] : memref<1x4x256xf32, #tpu.memory_space<vmem>>, vector<1x4x16xf32>
    %42 = vector.shape_cast %41 : vector<1x4x16xf32> to vector<4x16xf32>
    %cst_47 = arith.constant dense<0.000000e+00> : vector<4x32xf32>
    %43 = tpu.matmul %42, %4, %cst_47 {dimension_numbers = #tpu.dot_dimension_numbers<[1], [0], [0], [1], [0, 0, 1, 1], [], []>} : vector<4x16xf32>, vector<16x32xf32>, vector<4x32xf32> -> vector<4x32xf32>
    %c0_48 = arith.constant 0 : index
    %c640 = arith.constant 640 : index
    %44 = vector.load %arg9[%c0_48, %c640] : memref<4x1152xf32, #tpu.memory_space<vmem>>, vector<4x32xf32>
    tpu.vector_store %arg9[%c0_48, %c640], %43 {strides = array<i32>} : memref<4x1152xf32, #tpu.memory_space<vmem>>, vector<4x32xf32>,
    %c0_49 = arith.constant 0 : index
    %c0_50 = arith.constant 0 : index
    %c160 = arith.constant 160 : index
    %45 = vector.load %arg1[%c0_49, %c0_50, %c160] : memref<1x4x256xf32, #tpu.memory_space<vmem>>, vector<1x4x16xf32>
    %46 = vector.shape_cast %45 : vector<1x4x16xf32> to vector<4x16xf32>
    %cst_51 = arith.constant dense<0.000000e+00> : vector<4x32xf32>
    %47 = tpu.matmul %46, %4, %cst_51 {dimension_numbers = #tpu.dot_dimension_numbers<[1], [0], [0], [1], [0, 0, 1, 1], [], []>} : vector<4x16xf32>, vector<16x32xf32>, vector<4x32xf32> -> vector<4x32xf32>
    %c0_52 = arith.constant 0 : index
    %c704 = arith.constant 704 : index
    %48 = vector.load %arg9[%c0_52, %c704] : memref<4x1152xf32, #tpu.memory_space<vmem>>, vector<4x32xf32>
    tpu.vector_store %arg9[%c0_52, %c704], %47 {strides = array<i32>} : memref<4x1152xf32, #tpu.memory_space<vmem>>, vector<4x32xf32>,
    %c0_53 = arith.constant 0 : index
    %c0_54 = arith.constant 0 : index
    %c176 = arith.constant 176 : index
    %49 = vector.load %arg1[%c0_53, %c0_54, %c176] : memref<1x4x256xf32, #tpu.memory_space<vmem>>, vector<1x4x16xf32>
    %50 = vector.shape_cast %49 : vector<1x4x16xf32> to vector<4x16xf32>
    %cst_55 = arith.constant dense<0.000000e+00> : vector<4x32xf32>
    %51 = tpu.matmul %50, %4, %cst_55 {dimension_numbers = #tpu.dot_dimension_numbers<[1], [0], [0], [1], [0, 0, 1, 1], [], []>} : vector<4x16xf32>, vector<16x32xf32>, vector<4x32xf32> -> vector<4x32xf32>
    %c0_56 = arith.constant 0 : index
    %c768 = arith.constant 768 : index
    %52 = vector.load %arg9[%c0_56, %c768] : memref<4x1152xf32, #tpu.memory_space<vmem>>, vector<4x32xf32>
    tpu.vector_store %arg9[%c0_56, %c768], %51 {strides = array<i32>} : memref<4x1152xf32, #tpu.memory_space<vmem>>, vector<4x32xf32>,
    %c0_57 = arith.constant 0 : index
    %c0_58 = arith.constant 0 : index
    %c192_59 = arith.constant 192 : index
    %53 = vector.load %arg1[%c0_57, %c0_58, %c192_59] : memref<1x4x256xf32, #tpu.memory_space<vmem>>, vector<1x4x16xf32>
    %54 = vector.shape_cast %53 : vector<1x4x16xf32> to vector<4x16xf32>
    %cst_60 = arith.constant dense<0.000000e+00> : vector<4x32xf32>
    %55 = tpu.matmul %54, %4, %cst_60 {dimension_numbers = #tpu.dot_dimension_numbers<[1], [0], [0], [1], [0, 0, 1, 1], [], []>} : vector<4x16xf32>, vector<16x32xf32>, vector<4x32xf32> -> vector<4x32xf32>
    %c0_61 = arith.constant 0 : index
    %c832 = arith.constant 832 : index
    %56 = vector.load %arg9[%c0_61, %c832] : memref<4x1152xf32, #tpu.memory_space<vmem>>, vector<4x32xf32>
    tpu.vector_store %arg9[%c0_61, %c832], %55 {strides = array<i32>} : memref<4x1152xf32, #tpu.memory_space<vmem>>, vector<4x32xf32>,
    %c0_62 = arith.constant 0 : index
    %c0_63 = arith.constant 0 : index
    %c208 = arith.constant 208 : index
    %57 = vector.load %arg1[%c0_62, %c0_63, %c208] : memref<1x4x256xf32, #tpu.memory_space<vmem>>, vector<1x4x16xf32>
    %58 = vector.shape_cast %57 : vector<1x4x16xf32> to vector<4x16xf32>
    %cst_64 = arith.constant dense<0.000000e+00> : vector<4x32xf32>
    %59 = tpu.matmul %58, %4, %cst_64 {dimension_numbers = #tpu.dot_dimension_numbers<[1], [0], [0], [1], [0, 0, 1, 1], [], []>} : vector<4x16xf32>, vector<16x32xf32>, vector<4x32xf32> -> vector<4x32xf32>
    %c0_65 = arith.constant 0 : index
    %c896 = arith.constant 896 : index
    %60 = vector.load %arg9[%c0_65, %c896] : memref<4x1152xf32, #tpu.memory_space<vmem>>, vector<4x32xf32>
    tpu.vector_store %arg9[%c0_65, %c896], %59 {strides = array<i32>} : memref<4x1152xf32, #tpu.memory_space<vmem>>, vector<4x32xf32>,
    %c0_66 = arith.constant 0 : index
    %c0_67 = arith.constant 0 : index
    %c224 = arith.constant 224 : index
    %61 = vector.load %arg1[%c0_66, %c0_67, %c224] : memref<1x4x256xf32, #tpu.memory_space<vmem>>, vector<1x4x16xf32>
    %62 = vector.shape_cast %61 : vector<1x4x16xf32> to vector<4x16xf32>
    %cst_68 = arith.constant dense<0.000000e+00> : vector<4x32xf32>
    %63 = tpu.matmul %62, %4, %cst_68 {dimension_numbers = #tpu.dot_dimension_numbers<[1], [0], [0], [1], [0, 0, 1, 1], [], []>} : vector<4x16xf32>, vector<16x32xf32>, vector<4x32xf32> -> vector<4x32xf32>
    %c0_69 = arith.constant 0 : index
    %c960 = arith.constant 960 : index
    %64 = vector.load %arg9[%c0_69, %c960] : memref<4x1152xf32, #tpu.memory_space<vmem>>, vector<4x32xf32>
    tpu.vector_store %arg9[%c0_69, %c960], %63 {strides = array<i32>} : memref<4x1152xf32, #tpu.memory_space<vmem>>, vector<4x32xf32>,
    %c0_70 = arith.constant 0 : index
    %c0_71 = arith.constant 0 : index
    %c240 = arith.constant 240 : index
    %65 = vector.load %arg1[%c0_70, %c0_71, %c240] : memref<1x4x256xf32, #tpu.memory_space<vmem>>, vector<1x4x16xf32>
    %66 = vector.shape_cast %65 : vector<1x4x16xf32> to vector<4x16xf32>
    %cst_72 = arith.constant dense<0.000000e+00> : vector<4x32xf32>
    %67 = tpu.matmul %66, %4, %cst_72 {dimension_numbers = #tpu.dot_dimension_numbers<[1], [0], [0], [1], [0, 0, 1, 1], [], []>} : vector<4x16xf32>, vector<16x32xf32>, vector<4x32xf32> -> vector<4x32xf32>
    %c0_73 = arith.constant 0 : index
    %c1024 = arith.constant 1024 : index
    %68 = vector.load %arg9[%c0_73, %c1024] : memref<4x1152xf32, #tpu.memory_space<vmem>>, vector<4x32xf32>
    tpu.vector_store %arg9[%c0_73, %c1024], %67 {strides = array<i32>} : memref<4x1152xf32, #tpu.memory_space<vmem>>, vector<4x32xf32>,
    %cst_74 = arith.constant 0.000000e+00 : f32
    %69 = vector.broadcast %cst_74 : f32 to vector<8x1024xf32>
    %cst_75 = arith.constant 0.000000e+00 : f32
    %70 = vector.broadcast %cst_75 : f32 to vector<8x1024xf32>
    %c0_76 = arith.constant 0 : index
    %c31 = arith.constant 31 : index
    %71 = vector.load %arg9[%c0_76, %c31] : memref<4x1152xf32, #tpu.memory_space<vmem>>, vector<4x1024xf32>
    %c0_77 = arith.constant 0 : index
    %c0_78 = arith.constant 0 : index
    %c0_79 = arith.constant 0 : index
    %72 = vector.load %arg3[%c0_77, %c0_78, %c0_79] : memref<9x8x4xf32, #tpu.memory_space<vmem>>, vector<1x8x4xf32>
    %73 = vector.shape_cast %72 : vector<1x8x4xf32> to vector<8x4xf32>
    %cst_80 = arith.constant dense<0.000000e+00> : vector<8x1024xf32>
    %74 = tpu.matmul %73, %71, %cst_80 {dimension_numbers = #tpu.dot_dimension_numbers<[1], [0], [0], [1], [0, 0, 1, 1], [], []>} : vector<8x4xf32>, vector<4x1024xf32>, vector<8x1024xf32> -> vector<8x1024xf32>
    %75 = arith.addf %70, %74 : vector<8x1024xf32>
    %c0_81 = arith.constant 0 : index
    %c63 = arith.constant 63 : index
    %76 = vector.load %arg9[%c0_81, %c63] : memref<4x1152xf32, #tpu.memory_space<vmem>>, vector<4x1024xf32>
    %c3 = arith.constant 3 : index
    %c0_82 = arith.constant 0 : index
    %c0_83 = arith.constant 0 : index
    %77 = vector.load %arg3[%c3, %c0_82, %c0_83] : memref<9x8x4xf32, #tpu.memory_space<vmem>>, vector<1x8x4xf32>
    %78 = vector.shape_cast %77 : vector<1x8x4xf32> to vector<8x4xf32>
    %cst_84 = arith.constant dense<0.000000e+00> : vector<8x1024xf32>
    %79 = tpu.matmul %78, %76, %cst_84 {dimension_numbers = #tpu.dot_dimension_numbers<[1], [0], [0], [1], [0, 0, 1, 1], [], []>} : vector<8x4xf32>, vector<4x1024xf32>, vector<8x1024xf32> -> vector<8x1024xf32>
    %80 = arith.addf %75, %79 : vector<8x1024xf32>
    %c0_85 = arith.constant 0 : index
    %c95 = arith.constant 95 : index
    %81 = vector.load %arg9[%c0_85, %c95] : memref<4x1152xf32, #tpu.memory_space<vmem>>, vector<4x1024xf32>
    %c6 = arith.constant 6 : index
    %c0_86 = arith.constant 0 : index
    %c0_87 = arith.constant 0 : index
    %82 = vector.load %arg3[%c6, %c0_86, %c0_87] : memref<9x8x4xf32, #tpu.memory_space<vmem>>, vector<1x8x4xf32>
    %83 = vector.shape_cast %82 : vector<1x8x4xf32> to vector<8x4xf32>
    %cst_88 = arith.constant dense<0.000000e+00> : vector<8x1024xf32>
    %84 = tpu.matmul %83, %81, %cst_88 {dimension_numbers = #tpu.dot_dimension_numbers<[1], [0], [0], [1], [0, 0, 1, 1], [], []>} : vector<8x4xf32>, vector<4x1024xf32>, vector<8x1024xf32> -> vector<8x1024xf32>
    %85 = arith.addf %80, %84 : vector<8x1024xf32>
    %86 = vector.broadcast %0 : vector<1x1024xf32> to vector<8x1024xf32>
    %87 = arith.mulf %85, %86 : vector<8x1024xf32>
    %88 = arith.addf %69, %87 : vector<8x1024xf32>
    %cst_89 = arith.constant 0.000000e+00 : f32
    %89 = vector.broadcast %cst_89 : f32 to vector<8x1024xf32>
    %c0_90 = arith.constant 0 : index
    %c32_91 = arith.constant 32 : index
    %90 = vector.load %arg9[%c0_90, %c32_91] : memref<4x1152xf32, #tpu.memory_space<vmem>>, vector<4x1024xf32>
    %c1_92 = arith.constant 1 : index
    %c0_93 = arith.constant 0 : index
    %c0_94 = arith.constant 0 : index
    %91 = vector.load %arg3[%c1_92, %c0_93, %c0_94] : memref<9x8x4xf32, #tpu.memory_space<vmem>>, vector<1x8x4xf32>
    %92 = vector.shape_cast %91 : vector<1x8x4xf32> to vector<8x4xf32>
    %cst_95 = arith.constant dense<0.000000e+00> : vector<8x1024xf32>
    %93 = tpu.matmul %92, %90, %cst_95 {dimension_numbers = #tpu.dot_dimension_numbers<[1], [0], [0], [1], [0, 0, 1, 1], [], []>} : vector<8x4xf32>, vector<4x1024xf32>, vector<8x1024xf32> -> vector<8x1024xf32>
    %94 = arith.addf %89, %93 : vector<8x1024xf32>
    %c0_96 = arith.constant 0 : index
    %c64_97 = arith.constant 64 : index
    %95 = vector.load %arg9[%c0_96, %c64_97] : memref<4x1152xf32, #tpu.memory_space<vmem>>, vector<4x1024xf32>
    %c4 = arith.constant 4 : index
    %c0_98 = arith.constant 0 : index
    %c0_99 = arith.constant 0 : index
    %96 = vector.load %arg3[%c4, %c0_98, %c0_99] : memref<9x8x4xf32, #tpu.memory_space<vmem>>, vector<1x8x4xf32>
    %97 = vector.shape_cast %96 : vector<1x8x4xf32> to vector<8x4xf32>
    %cst_100 = arith.constant dense<0.000000e+00> : vector<8x1024xf32>
    %98 = tpu.matmul %97, %95, %cst_100 {dimension_numbers = #tpu.dot_dimension_numbers<[1], [0], [0], [1], [0, 0, 1, 1], [], []>} : vector<8x4xf32>, vector<4x1024xf32>, vector<8x1024xf32> -> vector<8x1024xf32>
    %99 = arith.addf %94, %98 : vector<8x1024xf32>
    %c0_101 = arith.constant 0 : index
    %c96_102 = arith.constant 96 : index
    %100 = vector.load %arg9[%c0_101, %c96_102] : memref<4x1152xf32, #tpu.memory_space<vmem>>, vector<4x1024xf32>
    %c7 = arith.constant 7 : index
    %c0_103 = arith.constant 0 : index
    %c0_104 = arith.constant 0 : index
    %101 = vector.load %arg3[%c7, %c0_103, %c0_104] : memref<9x8x4xf32, #tpu.memory_space<vmem>>, vector<1x8x4xf32>
    %102 = vector.shape_cast %101 : vector<1x8x4xf32> to vector<8x4xf32>
    %cst_105 = arith.constant dense<0.000000e+00> : vector<8x1024xf32>
    %103 = tpu.matmul %102, %100, %cst_105 {dimension_numbers = #tpu.dot_dimension_numbers<[1], [0], [0], [1], [0, 0, 1, 1], [], []>} : vector<8x4xf32>, vector<4x1024xf32>, vector<8x1024xf32> -> vector<8x1024xf32>
    %104 = arith.addf %99, %103 : vector<8x1024xf32>
    %105 = arith.addf %88, %104 : vector<8x1024xf32>
    %cst_106 = arith.constant 0.000000e+00 : f32
    %106 = vector.broadcast %cst_106 : f32 to vector<8x1024xf32>
    %c0_107 = arith.constant 0 : index
    %c33 = arith.constant 33 : index
    %107 = vector.load %arg9[%c0_107, %c33] : memref<4x1152xf32, #tpu.memory_space<vmem>>, vector<4x1024xf32>
    %c2 = arith.constant 2 : index
    %c0_108 = arith.constant 0 : index
    %c0_109 = arith.constant 0 : index
    %108 = vector.load %arg3[%c2, %c0_108, %c0_109] : memref<9x8x4xf32, #tpu.memory_space<vmem>>, vector<1x8x4xf32>
    %109 = vector.shape_cast %108 : vector<1x8x4xf32> to vector<8x4xf32>
    %cst_110 = arith.constant dense<0.000000e+00> : vector<8x1024xf32>
    %110 = tpu.matmul %109, %107, %cst_110 {dimension_numbers = #tpu.dot_dimension_numbers<[1], [0], [0], [1], [0, 0, 1, 1], [], []>} : vector<8x4xf32>, vector<4x1024xf32>, vector<8x1024xf32> -> vector<8x1024xf32>
    %111 = arith.addf %106, %110 : vector<8x1024xf32>
    %c0_111 = arith.constant 0 : index
    %c65 = arith.constant 65 : index
    %112 = vector.load %arg9[%c0_111, %c65] : memref<4x1152xf32, #tpu.memory_space<vmem>>, vector<4x1024xf32>
    %c5 = arith.constant 5 : index
    %c0_112 = arith.constant 0 : index
    %c0_113 = arith.constant 0 : index
    %113 = vector.load %arg3[%c5, %c0_112, %c0_113] : memref<9x8x4xf32, #tpu.memory_space<vmem>>, vector<1x8x4xf32>
    %114 = vector.shape_cast %113 : vector<1x8x4xf32> to vector<8x4xf32>
    %cst_114 = arith.constant dense<0.000000e+00> : vector<8x1024xf32>
    %115 = tpu.matmul %114, %112, %cst_114 {dimension_numbers = #tpu.dot_dimension_numbers<[1], [0], [0], [1], [0, 0, 1, 1], [], []>} : vector<8x4xf32>, vector<4x1024xf32>, vector<8x1024xf32> -> vector<8x1024xf32>
    %116 = arith.addf %111, %115 : vector<8x1024xf32>
    %c0_115 = arith.constant 0 : index
    %c97 = arith.constant 97 : index
    %117 = vector.load %arg9[%c0_115, %c97] : memref<4x1152xf32, #tpu.memory_space<vmem>>, vector<4x1024xf32>
    %c8 = arith.constant 8 : index
    %c0_116 = arith.constant 0 : index
    %c0_117 = arith.constant 0 : index
    %118 = vector.load %arg3[%c8, %c0_116, %c0_117] : memref<9x8x4xf32, #tpu.memory_space<vmem>>, vector<1x8x4xf32>
    %119 = vector.shape_cast %118 : vector<1x8x4xf32> to vector<8x4xf32>
    %cst_118 = arith.constant dense<0.000000e+00> : vector<8x1024xf32>
    %120 = tpu.matmul %119, %117, %cst_118 {dimension_numbers = #tpu.dot_dimension_numbers<[1], [0], [0], [1], [0, 0, 1, 1], [], []>} : vector<8x4xf32>, vector<4x1024xf32>, vector<8x1024xf32> -> vector<8x1024xf32>
    %121 = arith.addf %116, %120 : vector<8x1024xf32>
    %122 = vector.broadcast %1 : vector<1x1024xf32> to vector<8x1024xf32>
    %123 = arith.mulf %121, %122 : vector<8x1024xf32>
    %124 = arith.addf %105, %123 : vector<8x1024xf32>
    %c0_119 = arith.constant 0 : index
    %c0_120 = arith.constant 0 : index
    %125 = vector.load %arg5[%c0_119, %c0_120] : memref<8x4xf32, #tpu.memory_space<vmem>>, vector<8x1xf32>
    %126 = vector.broadcast %125 : vector<8x1xf32> to vector<8x1024xf32>
    %127 = arith.mulf %124, %126 : vector<8x1024xf32>
    %c0_121 = arith.constant 0 : index
    %c1_122 = arith.constant 1 : index
    %128 = vector.load %arg5[%c0_121, %c1_122] : memref<8x4xf32, #tpu.memory_space<vmem>>, vector<8x1xf32>
    %129 = vector.broadcast %128 : vector<8x1xf32> to vector<8x1024xf32>
    %130 = arith.addf %127, %129 : vector<8x1024xf32>
    %cst_123 = arith.constant 0.000000e+00 : f32
    %131 = vector.broadcast %cst_123 : f32 to vector<8x1024xf32>
    %132 = arith.maximumf %130, %131 : vector<8x1024xf32>
    %cst_124 = arith.constant 0.000000e+00 : f32
    %133 = vector.broadcast %cst_124 : f32 to vector<16x64xf32>
    %c0_125 = arith.constant 0 : index
    %c0_126 = arith.constant 0 : index
    %134 = vector.load %arg10[%c0_125, %c0_126] : memref<16x1152xf32, #tpu.memory_space<vmem>>, vector<16x64xf32>
    tpu.vector_store %arg10[%c0_125, %c0_126], %133 {strides = array<i32>} : memref<16x1152xf32, #tpu.memory_space<vmem>>, vector<16x64xf32>,
    %cst_127 = arith.constant 0.000000e+00 : f32
    %135 = vector.broadcast %cst_127 : f32 to vector<16x64xf32>
    %c0_128 = arith.constant 0 : index
    %c1088 = arith.constant 1088 : index
    %136 = vector.load %arg10[%c0_128, %c1088] : memref<16x1152xf32, #tpu.memory_space<vmem>>, vector<16x64xf32>
    tpu.vector_store %arg10[%c0_128, %c1088], %135 {strides = array<i32>} : memref<16x1152xf32, #tpu.memory_space<vmem>>, vector<16x64xf32>,
    %c0_129 = arith.constant 0 : index
    %c64_130 = arith.constant 64 : index
    %137 = vector.load %arg10[%c0_129, %c64_130] : memref<16x1152xf32, #tpu.memory_space<vmem>>, vector<8x1024xf32>
    tpu.vector_store %arg10[%c0_129, %c64_130], %132 {strides = array<i32>} : memref<16x1152xf32, #tpu.memory_space<vmem>>, vector<8x1024xf32>,
    %c0_131 = arith.constant 0 : index
    %c0_132 = arith.constant 0 : index
    %c0_133 = arith.constant 0 : index
    %138 = vector.load %arg2[%c0_131, %c0_132, %c0_133] : memref<1x8x1024xf32, #tpu.memory_space<vmem>>, vector<1x8x1024xf32>
    %139 = vector.shape_cast %138 : vector<1x8x1024xf32> to vector<8x1024xf32>
    %c8_134 = arith.constant 8 : index
    %c64_135 = arith.constant 64 : index
    %140 = vector.load %arg10[%c8_134, %c64_135] : memref<16x1152xf32, #tpu.memory_space<vmem>>, vector<8x1024xf32>
    tpu.vector_store %arg10[%c8_134, %c64_135], %139 {strides = array<i32>} : memref<16x1152xf32, #tpu.memory_space<vmem>>, vector<8x1024xf32>,
    %cst_136 = arith.constant 0.000000e+00 : f32
    %141 = vector.broadcast %cst_136 : f32 to vector<8x1024xf32>
    %cst_137 = arith.constant 0.000000e+00 : f32
    %142 = vector.broadcast %cst_137 : f32 to vector<8x1024xf32>
    %c0_138 = arith.constant 0 : index
    %c31_139 = arith.constant 31 : index
    %143 = vector.load %arg10[%c0_138, %c31_139] : memref<16x1152xf32, #tpu.memory_space<vmem>>, vector<16x1024xf32>
    %c0_140 = arith.constant 0 : index
    %c0_141 = arith.constant 0 : index
    %c0_142 = arith.constant 0 : index
    %144 = vector.load %arg4[%c0_140, %c0_141, %c0_142] : memref<9x8x16xf32, #tpu.memory_space<vmem>>, vector<1x8x16xf32>
    %145 = vector.shape_cast %144 : vector<1x8x16xf32> to vector<8x16xf32>
    %cst_143 = arith.constant dense<0.000000e+00> : vector<8x1024xf32>
    %146 = tpu.matmul %145, %143, %cst_143 {dimension_numbers = #tpu.dot_dimension_numbers<[1], [0], [0], [1], [0, 0, 1, 1], [], []>} : vector<8x16xf32>, vector<16x1024xf32>, vector<8x1024xf32> -> vector<8x1024xf32>
    %147 = arith.addf %142, %146 : vector<8x1024xf32>
    %c0_144 = arith.constant 0 : index
    %c63_145 = arith.constant 63 : index
    %148 = vector.load %arg10[%c0_144, %c63_145] : memref<16x1152xf32, #tpu.memory_space<vmem>>, vector<16x1024xf32>
    %c3_146 = arith.constant 3 : index
    %c0_147 = arith.constant 0 : index
    %c0_148 = arith.constant 0 : index
    %149 = vector.load %arg4[%c3_146, %c0_147, %c0_148] : memref<9x8x16xf32, #tpu.memory_space<vmem>>, vector<1x8x16xf32>
    %150 = vector.shape_cast %149 : vector<1x8x16xf32> to vector<8x16xf32>
    %cst_149 = arith.constant dense<0.000000e+00> : vector<8x1024xf32>
    %151 = tpu.matmul %150, %148, %cst_149 {dimension_numbers = #tpu.dot_dimension_numbers<[1], [0], [0], [1], [0, 0, 1, 1], [], []>} : vector<8x16xf32>, vector<16x1024xf32>, vector<8x1024xf32> -> vector<8x1024xf32>
    %152 = arith.addf %147, %151 : vector<8x1024xf32>
    %c0_150 = arith.constant 0 : index
    %c95_151 = arith.constant 95 : index
    %153 = vector.load %arg10[%c0_150, %c95_151] : memref<16x1152xf32, #tpu.memory_space<vmem>>, vector<16x1024xf32>
    %c6_152 = arith.constant 6 : index
    %c0_153 = arith.constant 0 : index
    %c0_154 = arith.constant 0 : index
    %154 = vector.load %arg4[%c6_152, %c0_153, %c0_154] : memref<9x8x16xf32, #tpu.memory_space<vmem>>, vector<1x8x16xf32>
    %155 = vector.shape_cast %154 : vector<1x8x16xf32> to vector<8x16xf32>
    %cst_155 = arith.constant dense<0.000000e+00> : vector<8x1024xf32>
    %156 = tpu.matmul %155, %153, %cst_155 {dimension_numbers = #tpu.dot_dimension_numbers<[1], [0], [0], [1], [0, 0, 1, 1], [], []>} : vector<8x16xf32>, vector<16x1024xf32>, vector<8x1024xf32> -> vector<8x1024xf32>
    %157 = arith.addf %152, %156 : vector<8x1024xf32>
    %158 = vector.broadcast %0 : vector<1x1024xf32> to vector<8x1024xf32>
    %159 = arith.mulf %157, %158 : vector<8x1024xf32>
    %160 = arith.addf %141, %159 : vector<8x1024xf32>
    %cst_156 = arith.constant 0.000000e+00 : f32
    %161 = vector.broadcast %cst_156 : f32 to vector<8x1024xf32>
    %c0_157 = arith.constant 0 : index
    %c32_158 = arith.constant 32 : index
    %162 = vector.load %arg10[%c0_157, %c32_158] : memref<16x1152xf32, #tpu.memory_space<vmem>>, vector<16x1024xf32>
    %c1_159 = arith.constant 1 : index
    %c0_160 = arith.constant 0 : index
    %c0_161 = arith.constant 0 : index
    %163 = vector.load %arg4[%c1_159, %c0_160, %c0_161] : memref<9x8x16xf32, #tpu.memory_space<vmem>>, vector<1x8x16xf32>
    %164 = vector.shape_cast %163 : vector<1x8x16xf32> to vector<8x16xf32>
    %cst_162 = arith.constant dense<0.000000e+00> : vector<8x1024xf32>
    %165 = tpu.matmul %164, %162, %cst_162 {dimension_numbers = #tpu.dot_dimension_numbers<[1], [0], [0], [1], [0, 0, 1, 1], [], []>} : vector<8x16xf32>, vector<16x1024xf32>, vector<8x1024xf32> -> vector<8x1024xf32>
    %166 = arith.addf %161, %165 : vector<8x1024xf32>
    %c0_163 = arith.constant 0 : index
    %c64_164 = arith.constant 64 : index
    %167 = vector.load %arg10[%c0_163, %c64_164] : memref<16x1152xf32, #tpu.memory_space<vmem>>, vector<16x1024xf32>
    %c4_165 = arith.constant 4 : index
    %c0_166 = arith.constant 0 : index
    %c0_167 = arith.constant 0 : index
    %168 = vector.load %arg4[%c4_165, %c0_166, %c0_167] : memref<9x8x16xf32, #tpu.memory_space<vmem>>, vector<1x8x16xf32>
    %169 = vector.shape_cast %168 : vector<1x8x16xf32> to vector<8x16xf32>
    %cst_168 = arith.constant dense<0.000000e+00> : vector<8x1024xf32>
    %170 = tpu.matmul %169, %167, %cst_168 {dimension_numbers = #tpu.dot_dimension_numbers<[1], [0], [0], [1], [0, 0, 1, 1], [], []>} : vector<8x16xf32>, vector<16x1024xf32>, vector<8x1024xf32> -> vector<8x1024xf32>
    %171 = arith.addf %166, %170 : vector<8x1024xf32>
    %c0_169 = arith.constant 0 : index
    %c96_170 = arith.constant 96 : index
    %172 = vector.load %arg10[%c0_169, %c96_170] : memref<16x1152xf32, #tpu.memory_space<vmem>>, vector<16x1024xf32>
    %c7_171 = arith.constant 7 : index
    %c0_172 = arith.constant 0 : index
    %c0_173 = arith.constant 0 : index
    %173 = vector.load %arg4[%c7_171, %c0_172, %c0_173] : memref<9x8x16xf32, #tpu.memory_space<vmem>>, vector<1x8x16xf32>
    %174 = vector.shape_cast %173 : vector<1x8x16xf32> to vector<8x16xf32>
    %cst_174 = arith.constant dense<0.000000e+00> : vector<8x1024xf32>
    %175 = tpu.matmul %174, %172, %cst_174 {dimension_numbers = #tpu.dot_dimension_numbers<[1], [0], [0], [1], [0, 0, 1, 1], [], []>} : vector<8x16xf32>, vector<16x1024xf32>, vector<8x1024xf32> -> vector<8x1024xf32>
    %176 = arith.addf %171, %175 : vector<8x1024xf32>
    %177 = arith.addf %160, %176 : vector<8x1024xf32>
    %cst_175 = arith.constant 0.000000e+00 : f32
    %178 = vector.broadcast %cst_175 : f32 to vector<8x1024xf32>
    %c0_176 = arith.constant 0 : index
    %c33_177 = arith.constant 33 : index
    %179 = vector.load %arg10[%c0_176, %c33_177] : memref<16x1152xf32, #tpu.memory_space<vmem>>, vector<16x1024xf32>
    %c2_178 = arith.constant 2 : index
    %c0_179 = arith.constant 0 : index
    %c0_180 = arith.constant 0 : index
    %180 = vector.load %arg4[%c2_178, %c0_179, %c0_180] : memref<9x8x16xf32, #tpu.memory_space<vmem>>, vector<1x8x16xf32>
    %181 = vector.shape_cast %180 : vector<1x8x16xf32> to vector<8x16xf32>
    %cst_181 = arith.constant dense<0.000000e+00> : vector<8x1024xf32>
    %182 = tpu.matmul %181, %179, %cst_181 {dimension_numbers = #tpu.dot_dimension_numbers<[1], [0], [0], [1], [0, 0, 1, 1], [], []>} : vector<8x16xf32>, vector<16x1024xf32>, vector<8x1024xf32> -> vector<8x1024xf32>
    %183 = arith.addf %178, %182 : vector<8x1024xf32>
    %c0_182 = arith.constant 0 : index
    %c65_183 = arith.constant 65 : index
    %184 = vector.load %arg10[%c0_182, %c65_183] : memref<16x1152xf32, #tpu.memory_space<vmem>>, vector<16x1024xf32>
    %c5_184 = arith.constant 5 : index
    %c0_185 = arith.constant 0 : index
    %c0_186 = arith.constant 0 : index
    %185 = vector.load %arg4[%c5_184, %c0_185, %c0_186] : memref<9x8x16xf32, #tpu.memory_space<vmem>>, vector<1x8x16xf32>
    %186 = vector.shape_cast %185 : vector<1x8x16xf32> to vector<8x16xf32>
    %cst_187 = arith.constant dense<0.000000e+00> : vector<8x1024xf32>
    %187 = tpu.matmul %186, %184, %cst_187 {dimension_numbers = #tpu.dot_dimension_numbers<[1], [0], [0], [1], [0, 0, 1, 1], [], []>} : vector<8x16xf32>, vector<16x1024xf32>, vector<8x1024xf32> -> vector<8x1024xf32>
    %188 = arith.addf %183, %187 : vector<8x1024xf32>
    %c0_188 = arith.constant 0 : index
    %c97_189 = arith.constant 97 : index
    %189 = vector.load %arg10[%c0_188, %c97_189] : memref<16x1152xf32, #tpu.memory_space<vmem>>, vector<16x1024xf32>
    %c8_190 = arith.constant 8 : index
    %c0_191 = arith.constant 0 : index
    %c0_192 = arith.constant 0 : index
    %190 = vector.load %arg4[%c8_190, %c0_191, %c0_192] : memref<9x8x16xf32, #tpu.memory_space<vmem>>, vector<1x8x16xf32>
    %191 = vector.shape_cast %190 : vector<1x8x16xf32> to vector<8x16xf32>
    %cst_193 = arith.constant dense<0.000000e+00> : vector<8x1024xf32>
    %192 = tpu.matmul %191, %189, %cst_193 {dimension_numbers = #tpu.dot_dimension_numbers<[1], [0], [0], [1], [0, 0, 1, 1], [], []>} : vector<8x16xf32>, vector<16x1024xf32>, vector<8x1024xf32> -> vector<8x1024xf32>
    %193 = arith.addf %188, %192 : vector<8x1024xf32>
    %194 = vector.broadcast %1 : vector<1x1024xf32> to vector<8x1024xf32>
    %195 = arith.mulf %193, %194 : vector<8x1024xf32>
    %196 = arith.addf %177, %195 : vector<8x1024xf32>
    %c0_194 = arith.constant 0 : index
    %c2_195 = arith.constant 2 : index
    %197 = vector.load %arg5[%c0_194, %c2_195] : memref<8x4xf32, #tpu.memory_space<vmem>>, vector<8x1xf32>
    %198 = vector.broadcast %197 : vector<8x1xf32> to vector<8x1024xf32>
    %199 = arith.mulf %196, %198 : vector<8x1024xf32>
    %c0_196 = arith.constant 0 : index
    %c3_197 = arith.constant 3 : index
    %200 = vector.load %arg5[%c0_196, %c3_197] : memref<8x4xf32, #tpu.memory_space<vmem>>, vector<8x1xf32>
    %201 = vector.broadcast %200 : vector<8x1xf32> to vector<8x1024xf32>
    %202 = arith.addf %199, %201 : vector<8x1024xf32>
    %cst_198 = arith.constant 0.000000e+00 : f32
    %203 = vector.broadcast %cst_198 : f32 to vector<8x1024xf32>
    %204 = arith.maximumf %202, %203 : vector<8x1024xf32>
    %c0_199 = arith.constant 0 : index
    %c0_200 = arith.constant 0 : index
    %c0_201 = arith.constant 0 : index
    %205 = vector.load %arg8[%c0_199, %c0_200, %c0_201] : memref<1x8x1024xf32, #tpu.memory_space<vmem>>, vector<1x8x1024xf32>
    %206 = vector.shape_cast %205 : vector<1x8x1024xf32> to vector<8x1024xf32>
    %207 = vector.shape_cast %204 : vector<8x1024xf32> to vector<1x8x1024xf32>
    tpu.vector_store %arg8[%c0_199, %c0_200, %c0_201], %207 {strides = array<i32>} : memref<1x8x1024xf32, #tpu.memory_space<vmem>>, vector<1x8x1024xf32>,
    return
  }
  func.func @transform_0(%arg0: i32) -> (i32, i32, i32) {
    %c0_i32 = arith.constant 0 : i32
    %c0_i32_0 = arith.constant 0 : i32
    %c0_i32_1 = arith.constant 0 : i32
    return %arg0, %c0_i32, %c0_i32_0 : i32, i32, i32
  }
  func.func @transform_1(%arg0: i32) -> (i32, i32, i32) {
    %c0_i32 = arith.constant 0 : i32
    %c0_i32_0 = arith.constant 0 : i32
    %c0_i32_1 = arith.constant 0 : i32
    return %arg0, %c0_i32, %c0_i32_0 : i32, i32, i32
  }
  func.func @transform_2(%arg0: i32) -> (i32, i32, i32) {
    %c0_i32 = arith.constant 0 : i32
    %c0_i32_0 = arith.constant 0 : i32
    %c0_i32_1 = arith.constant 0 : i32
    %c0_i32_2 = arith.constant 0 : i32
    return %c0_i32, %c0_i32_0, %c0_i32_1 : i32, i32, i32
  }
  func.func @transform_3(%arg0: i32) -> (i32, i32, i32) {
    %c0_i32 = arith.constant 0 : i32
    %c0_i32_0 = arith.constant 0 : i32
    %c0_i32_1 = arith.constant 0 : i32
    %c0_i32_2 = arith.constant 0 : i32
    return %c0_i32, %c0_i32_0, %c0_i32_1 : i32, i32, i32
  }
  func.func @transform_4(%arg0: i32) -> (i32, i32) {
    %c0_i32 = arith.constant 0 : i32
    %c0_i32_0 = arith.constant 0 : i32
    %c0_i32_1 = arith.constant 0 : i32
    return %c0_i32, %c0_i32_0 : i32, i32
  }
  func.func @transform_5(%arg0: i32) -> (i32, i32) {
    %c0_i32 = arith.constant 0 : i32
    %c0_i32_0 = arith.constant 0 : i32
    %c0_i32_1 = arith.constant 0 : i32
    return %c0_i32, %c0_i32_0 : i32, i32
  }
  func.func @transform_6(%arg0: i32) -> (i32, i32) {
    %c0_i32 = arith.constant 0 : i32
    %c0_i32_0 = arith.constant 0 : i32
    %c0_i32_1 = arith.constant 0 : i32
    return %c0_i32, %c0_i32_0 : i32, i32
  }
  func.func @transform_7(%arg0: i32) -> (i32, i32, i32) {
    %c0_i32 = arith.constant 0 : i32
    %c0_i32_0 = arith.constant 0 : i32
    %c0_i32_1 = arith.constant 0 : i32
    return %arg0, %c0_i32, %c0_i32_0 : i32, i32, i32
  }
}

</mosaic_0001>

<llo_original>
// kernel: tpu_custom_call.1
$region0: #{tpu_custom_call.1}
  #allocation0 [shape = 'u32[]', space=smem, size = 0x4, offset = 0x4, fixed_abs, tag = 'smem constant byte address 0x4 - core index']
  #allocation1 [shape = 'u32[144,128]{1,0:T(1,128)}', space=vmem, size = 0x12000, scoped, tag = 'internal scratch']
  #allocation2 [shape = 'f32[4,1152]{1,0:T(4,128)}', space=vmem, size = 0x4800, scoped, tag = 'scratch operand']
  #allocation3 [shape = 'f32[16,1152]{1,0:T(8,128)}', space=vmem, size = 0x12000, scoped, tag = 'scratch operand']
  %s0 = inlined_call_operand.vmem [shape: f32[2,4,256], index: 0, kind: input, shape index: {}]
  %s1 = inlined_call_operand.hbm [shape: f32[2,8,1024], index: 1, kind: input, shape index: {}]
  %s2 = inlined_call_operand.vmem [shape: f32[9,8,4], index: 2, kind: input, shape index: {}]
  %s3 = inlined_call_operand.vmem [shape: f32[9,8,16], index: 3, kind: input, shape index: {}]
  %s4 = inlined_call_operand.vmem [shape: f32[8,4], index: 4, kind: input, shape index: {}]
  %s5 = inlined_call_operand.vmem [shape: f32[16,32], index: 5, kind: input, shape index: {}]
  %s6 = inlined_call_operand.vmem [shape: f32[2,1024], index: 6, kind: input, shape index: {}]
  %s7 = inlined_call_operand.hbm [shape: f32[2,8,1024], index: 7, kind: output, shape index: {}]
  %s8 = sld [smem:[#allocation0]]
  $region65: #{tpu_custom_call.1} parent=0
    _
  %s10 = ssub.s32 1, %s8
  %s11 = scalar_select 0, %s10, %s8
  $region1: #{tpu_custom_call.1} parent=0
    #allocation4 [shape = 'u8[65536]{0}', space=vmem, size = 0x10000, scoped, tag = 'input window, operand 1']
    #allocation5 [shape = 's32[2]{0}', space=sflag, size = 0x8, scoped, tag = 'scoped memory for tpu_custom_call.1']
    #allocation6 [shape = 's32[2]{0}', space=sflag, size = 0x8, scoped, tag = 'scoped memory for tpu_custom_call.1']
    #allocation7 [shape = 'u8[65536]{0}', space=vmem, size = 0x10000, scoped, tag = 'output window, operand 0']
    %12 = vsyncpa [#allocation5], 0
    %s13 = scalar_lea.sflag [#allocation5], 1
    %14 = vsyncpa %s13, 0
    %15 = vsyncpa [#allocation6], 0
    %s16 = scalar_lea.sflag [#allocation6], 1
    %17 = vsyncpa %s16, 0
    loop: start=0, step=1, limit=4
    $region2: #{tpu_custom_call.1} parent=1 // loop_pre_header
      _
    $region3: #{tpu_custom_call.1} parent=1 // loop_header
      %s19 = sphi 0, %s23
      %p20 = scmp.ge.s32.totalorder %s19, 4
      %s29 = sphi 0, %s31
      %s32 = sphi 0, %s29
      %s33 = sphi 0, %s32
      %s49 = sphi 0, %s33
      %s55 = sphi 0, %s57
      %s58 = sphi 0, %s55
      %s59 = sphi 0, %s58
      %s75 = sphi 0, %s59
      %s79 = sphi 0, %s79
      %s81 = sphi 0, %s79
      %s82 = sphi 0, %s81
      %s96 = sphi 0, %s82
      %s100 = sphi 0, %s100
      %s102 = sphi 0, %s100
      %s103 = sphi 0, %s102
      %s117 = sphi 0, %s103
      %s121 = sphi 0, %s121
      %s123 = sphi 0, %s121
      %s124 = sphi 0, %s123
      %s138 = sphi 0, %s124
      %s142 = sphi 0, %s142
      %s144 = sphi 0, %s142
      %s145 = sphi 0, %s144
      %s159 = sphi 0, %s145
      %s163 = sphi 0, %s163
      %s165 = sphi 0, %s163
      %s166 = sphi 0, %s165
      %s180 = sphi 0, %s166
      %s186 = sphi 0, %s188
      %s189 = sphi 0, %s186
      %s190 = sphi 0, %s189
      %s206 = sphi 0, %s190
    $region4: #{tpu_custom_call.1} parent=1 // loop_header_branch
      %22 = sbr.rel (%p20) target = $region8
    $region5: #{tpu_custom_call.1} parent=1 // loop_body
      %s24 = ssub.s32 %s19, 1
      %s25 = ssub.s32 %s19, 2
      %s26 = sadd.s32 %s19, 1
      %s27 = ssub.s32 %s19, %s26
      %p28 = scmp.eq.s32.totalorder %s27, 0
      %s30 = sadd.s32 %s29, 1
      %s31 = scalar_select %p28, %s29, %s30
      %p34 = pneg %p28
      %p35 = scmp.eq.s32.totalorder %s19, 1
      %p36 = por %p34, %p35
      %p37 = scmp.ne.s32.totalorder %s29, %s32
      %p38 = scmp.eq.s32.totalorder %s19, 0
      %p39 = por %p37, %p38
      %p40 = scmp.ne.s32.totalorder %s29, %s32
      %p41 = scmp.eq.s32.totalorder %s24, 1
      %p42 = por %p40, %p41
      %p43 = scmp.ne.s32.totalorder %s32, %s33
      %p44 = scmp.eq.s32.totalorder %s24, 0
      %p45 = por %p43, %p44
      %p46 = scmp.ne.s32.totalorder %s32, %s33
      %p47 = scmp.eq.s32.totalorder %s25, 1
      %p48 = por %p46, %p47
      %p50 = scmp.ne.s32.totalorder %s33, %s49
      %p51 = scmp.eq.s32.totalorder %s25, 0
      %p52 = por %p50, %p51
      %s53 = ssub.s32 %s19, %s26
      %p54 = scmp.eq.s32.totalorder %s53, 0
      %s56 = sadd.s32 %s55, 1
      %s57 = scalar_select %p54, %s55, %s56
      %p60 = pneg %p54
      %p61 = scmp.eq.s32.totalorder %s19, 1
      %p62 = por %p60, %p61
      %p63 = scmp.ne.s32.totalorder %s55, %s58
      %p64 = scmp.eq.s32.totalorder %s19, 0
      %p65 = por %p63, %p64
      %p66 = scmp.ne.s32.totalorder %s55, %s58
      %p67 = scmp.eq.s32.totalorder %s24, 1
      %p68 = por %p66, %p67
      %p69 = scmp.ne.s32.totalorder %s58, %s59
      %p70 = scmp.eq.s32.totalorder %s24, 0
      %p71 = por %p69, %p70
      %p72 = scmp.ne.s32.totalorder %s58, %s59
      %p73 = scmp.eq.s32.totalorder %s25, 1
      %p74 = por %p72, %p73
      %p76 = scmp.ne.s32.totalorder %s59, %s75
      %p77 = scmp.eq.s32.totalorder %s25, 0
      %p78 = por %p76, %p77
      %s80 = sadd.s32 %s79, 1
      %p83 = scmp.eq.s32.totalorder %s19, 1
      %p84 = scmp.ne.s32.totalorder %s79, %s81
      %p85 = scmp.eq.s32.totalorder %s19, 0
      %p86 = por %p84, %p85
      %p87 = scmp.ne.s32.totalorder %s79, %s81
      %p88 = scmp.eq.s32.totalorder %s24, 1
      %p89 = por %p87, %p88
      %p90 = scmp.ne.s32.totalorder %s81, %s82
      %p91 = scmp.eq.s32.totalorder %s24, 0
      %p92 = por %p90, %p91
      %p93 = scmp.ne.s32.totalorder %s81, %s82
      %p94 = scmp.eq.s32.totalorder %s25, 1
      %p95 = por %p93, %p94
      %p97 = scmp.ne.s32.totalorder %s82, %s96
      %p98 = scmp.eq.s32.totalorder %s25, 0
      %p99 = por %p97, %p98
      %s101 = sadd.s32 %s100, 1
      %p104 = scmp.eq.s32.totalorder %s19, 1
      %p105 = scmp.ne.s32.totalorder %s100, %s102
      %p106 = scmp.eq.s32.totalorder %s19, 0
      %p107 = por %p105, %p106
      %p108 = scmp.ne.s32.totalorder %s100, %s102
      %p109 = scmp.eq.s32.totalorder %s24, 1
      %p110 = por %p108, %p109
      %p111 = scmp.ne.s32.totalorder %s102, %s103
      %p112 = scmp.eq.s32.totalorder %s24, 0
      %p113 = por %p111, %p112
      %p114 = scmp.ne.s32.totalorder %s102, %s103
      %p115 = scmp.eq.s32.totalorder %s25, 1
      %p116 = por %p114, %p115
      %p118 = scmp.ne.s32.totalorder %s103, %s117
      %p119 = scmp.eq.s32.totalorder %s25, 0
      %p120 = por %p118, %p119
      %s122 = sadd.s32 %s121, 1
      %p125 = scmp.eq.s32.totalorder %s19, 1
      %p126 = scmp.ne.s32.totalorder %s121, %s123
      %p127 = scmp.eq.s32.totalorder %s19, 0
      %p128 = por %p126, %p127
      %p129 = scmp.ne.s32.totalorder %s121, %s123
      %p130 = scmp.eq.s32.totalorder %s24, 1
      %p131 = por %p129, %p130
      %p132 = scmp.ne.s32.totalorder %s123, %s124
      %p133 = scmp.eq.s32.totalorder %s24, 0
      %p134 = por %p132, %p133
      %p135 = scmp.ne.s32.totalorder %s123, %s124
      %p136 = scmp.eq.s32.totalorder %s25, 1
      %p137 = por %p135, %p136
      %p139 = scmp.ne.s32.totalorder %s124, %s138
      %p140 = scmp.eq.s32.totalorder %s25, 0
      %p141 = por %p139, %p140
      %s143 = sadd.s32 %s142, 1
      %p146 = scmp.eq.s32.totalorder %s19, 1
      %p147 = scmp.ne.s32.totalorder %s142, %s144
      %p148 = scmp.eq.s32.totalorder %s19, 0
      %p149 = por %p147, %p148
      %p150 = scmp.ne.s32.totalorder %s142, %s144
      %p151 = scmp.eq.s32.totalorder %s24, 1
      %p152 = por %p150, %p151
      %p153 = scmp.ne.s32.totalorder %s144, %s145
      %p154 = scmp.eq.s32.totalorder %s24, 0
      %p155 = por %p153, %p154
      %p156 = scmp.ne.s32.totalorder %s144, %s145
      %p157 = scmp.eq.s32.totalorder %s25, 1
      %p158 = por %p156, %p157
      %p160 = scmp.ne.s32.totalorder %s145, %s159
      %p161 = scmp.eq.s32.totalorder %s25, 0
      %p162 = por %p160, %p161
      %s164 = sadd.s32 %s163, 1
      %p167 = scmp.eq.s32.totalorder %s19, 1
      %p168 = scmp.ne.s32.totalorder %s163, %s165
      %p169 = scmp.eq.s32.totalorder %s19, 0
      %p170 = por %p168, %p169
      %p171 = scmp.ne.s32.totalorder %s163, %s165
      %p172 = scmp.eq.s32.totalorder %s24, 1
      %p173 = por %p171, %p172
      %p174 = scmp.ne.s32.totalorder %s165, %s166
      %p175 = scmp.eq.s32.totalorder %s24, 0
      %p176 = por %p174, %p175
      %p177 = scmp.ne.s32.totalorder %s165, %s166
      %p178 = scmp.eq.s32.totalorder %s25, 1
      %p179 = por %p177, %p178
      %p181 = scmp.ne.s32.totalorder %s166, %s180
      %p182 = scmp.eq.s32.totalorder %s25, 0
      %p183 = por %p181, %p182
      %s184 = ssub.s32 %s19, %s26
      %p185 = scmp.eq.s32.totalorder %s184, 0
      %s187 = sadd.s32 %s186, 1
      %s188 = scalar_select %p185, %s186, %s187
      %p191 = pneg %p185
      %p192 = scmp.eq.s32.totalorder %s19, 1
      %p193 = por %p191, %p192
      %p194 = scmp.ne.s32.totalorder %s186, %s189
      %p195 = scmp.eq.s32.totalorder %s19, 0
      %p196 = por %p194, %p195
      %p197 = scmp.ne.s32.totalorder %s186, %s189
      %p198 = scmp.eq.s32.totalorder %s24, 1
      %p199 = por %p197, %p198
      %p200 = scmp.ne.s32.totalorder %s189, %s190
      %p201 = scmp.eq.s32.totalorder %s24, 0
      %p202 = por %p200, %p201
      %p203 = scmp.ne.s32.totalorder %s189, %s190
      %p204 = scmp.eq.s32.totalorder %s25, 1
      %p205 = por %p203, %p204
      %p207 = scmp.ne.s32.totalorder %s190, %s206
      %p208 = scmp.eq.s32.totalorder %s25, 0
      %p209 = por %p207, %p208
      %p210 = scmp.le.s32.totalorder 1, %s19
      %p211 = scmp.lt.s32.totalorder %s19, 3
      %p212 = pnand %p210, %p211
      %p213 = pneg %p212
      // Predicated region
      $region9: #{tpu_custom_call.1} parent=5 // pred_check
        _
      $region10: #{tpu_custom_call.1} parent=5 // pred_check_branch
        %215 = sbr.rel (%p212) target = $region12
      $region11: #{tpu_custom_call.1} parent=5 // pred_region
        %s216 = ssub.s32 %s19, 1
        // Predicated region
        $region13: #{tpu_custom_call.1} parent=11 // pred_check
          %p217 = pneg %p92
        $region14: #{tpu_custom_call.1} parent=11 // pred_check_branch
          %219 = sbr.rel (%p217) target = $region16
        $region15: #{tpu_custom_call.1} parent=11 // pred_region
          _
        $region16: #{tpu_custom_call.1} parent=11 // pred_fallthru
          _
        // Predicated region
        $region17: #{tpu_custom_call.1} parent=11 // pred_check
          %p220 = pneg %p113
        $region18: #{tpu_custom_call.1} parent=11 // pred_check_branch
          %222 = sbr.rel (%p220) target = $region20
        $region19: #{tpu_custom_call.1} parent=11 // pred_region
          _
        $region20: #{tpu_custom_call.1} parent=11 // pred_fallthru
          _
        // Predicated region
        $region21: #{tpu_custom_call.1} parent=11 // pred_check
          %p223 = pneg %p134
        $region22: #{tpu_custom_call.1} parent=11 // pred_check_branch
          %225 = sbr.rel (%p223) target = $region24
        $region23: #{tpu_custom_call.1} parent=11 // pred_region
          _
        $region24: #{tpu_custom_call.1} parent=11 // pred_fallthru
          _
        // Predicated region
        $region25: #{tpu_custom_call.1} parent=11 // pred_check
          %p226 = pneg %p155
        $region26: #{tpu_custom_call.1} parent=11 // pred_check_branch
          %228 = sbr.rel (%p226) target = $region28
        $region27: #{tpu_custom_call.1} parent=11 // pred_region
          _
        $region28: #{tpu_custom_call.1} parent=11 // pred_fallthru
          _
        // Predicated region
        $region29: #{tpu_custom_call.1} parent=11 // pred_check
          %p229 = pneg %p176
        $region30: #{tpu_custom_call.1} parent=11 // pred_check_branch
          %231 = sbr.rel (%p229) target = $region32
        $region31: #{tpu_custom_call.1} parent=11 // pred_region
          _
        $region32: #{tpu_custom_call.1} parent=11 // pred_fallthru
          _
      $region12: #{tpu_custom_call.1} parent=5 // pred_fallthru
        _
      %p232 = scmp.lt.s32.totalorder %s19, 2
      // Predicated region
      $region33: #{tpu_custom_call.1} parent=5 // pred_check
        %p233 = pneg %p232
      $region34: #{tpu_custom_call.1} parent=5 // pred_check_branch
        %235 = sbr.rel (%p233) target = $region36
      $region35: #{tpu_custom_call.1} parent=5 // pred_region
        // Predicated region
        $region37: #{tpu_custom_call.1} parent=35 // pred_check
          %p236 = pneg %p39
        $region38: #{tpu_custom_call.1} parent=35 // pred_check_branch
          %238 = sbr.rel (%p236) target = $region40
        $region39: #{tpu_custom_call.1} parent=35 // pred_region
          %p239 = scmp.lt.s32.totalorder %s19, 1
          %s240 = scalar_select %p239, %s19, 1
          %s241 = smul.addr %s240, 2
          %s242 = smul.addr %s241, 4
          %s243 = scalar_lea.vmem %s0, %s242
        $region40: #{tpu_custom_call.1} parent=35 // pred_fallthru
          _
        // Predicated region
        $region41: #{tpu_custom_call.1} parent=35 // pred_check
          %p244 = pneg %p65
        $region42: #{tpu_custom_call.1} parent=35 // pred_check_branch
          %246 = sbr.rel (%p244) target = $region44
        $region43: #{tpu_custom_call.1} parent=35 // pred_region
          %s247 = sand.u32 %s55, 1
          %s248 = scalar_lea.sflag [#allocation5], %s247
          %s249 = sand.u32 %s55, 1
          %s250 = smul.addr %s249, 64
          %s251 = scalar_lea.vmem [#allocation4], %s250
          %s253 = ssub.s32 1024, 1024
          %254 = vsyncadd %s248, %s253
          %s255 = smul.addr %s19, 8
          %s256 = smul.addr %s255, 128
          %s257 = scalar_lea.hbm %s1, %s256
          %s259 = sshll.u32 %s251, 4
          %s260 = int_to_ptr.vmem [resolvable:$true] %s259
          %262 = dma.hbm_to_vmem [thread:$0]  %s257, 1024, %s260, %s248
        $region44: #{tpu_custom_call.1} parent=35 // pred_fallthru
          _
      $region36: #{tpu_custom_call.1} parent=5 // pred_fallthru
        _
      %p263 = scmp.le.s32.totalorder 1, %s19
      %p264 = scmp.lt.s32.totalorder %s19, 3
      %p265 = pnand %p263, %p264
      %p266 = pneg %p265
      // Predicated region
      $region45: #{tpu_custom_call.1} parent=5 // pred_check
        _
      $region46: #{tpu_custom_call.1} parent=5 // pred_check_branch
        %268 = sbr.rel (%p265) target = $region48
      $region47: #{tpu_custom_call.1} parent=5 // pred_region
        %s269 = ssub.s32 %s19, 1
        %s270 = sand.u32 %s58, 1
        %s271 = scalar_lea.sflag [#allocation5], %s270
        %s272 = sand.u32 %s58, 1
        %s273 = smul.addr %s272, 64
        %s274 = scalar_lea.vmem [#allocation4], %s273
        // Predicated region
        $region49: #{tpu_custom_call.1} parent=47 // pred_check
          %p275 = pneg %p71
        $region50: #{tpu_custom_call.1} parent=47 // pred_check_branch
          %277 = sbr.rel (%p275) target = $region52
        $region51: #{tpu_custom_call.1} parent=47 // pred_region
          %278 = dma.done %s271, 1024
        $region52: #{tpu_custom_call.1} parent=47 // pred_fallthru
          _
        %p279 = scmp.lt.s32.totalorder %s24, 1
        %s280 = scalar_select %p279, %s24, 1
        %s281 = smul.addr %s280, 2
        %s282 = smul.addr %s281, 4
        %s283 = scalar_lea.vmem %s0, %s282
        %p284 = pneg %p45
        %p285 = pneg %p42
        %s286 = sand.u32 %s58, 1
        %s287 = scalar_lea.sflag [#allocation5], %s286
        %s288 = sand.u32 %s58, 1
        %s289 = smul.addr %s288, 64
        %s290 = scalar_lea.vmem [#allocation4], %s289
        %p291 = pneg %p71
        %p292 = pneg %p68
        %p293 = pneg %p92
        %p294 = pneg %p89
        %p295 = pneg %p113
        %p296 = pneg %p110
        %p297 = pneg %p134
        %p298 = pneg %p131
        %p299 = pneg %p155
        %p300 = pneg %p152
        %p301 = pneg %p176
        %p302 = pneg %p173
        %p303 = pneg %p202
        %p304 = pneg %p199
        %s305 = sand.u32 %s189, 1
        %s306 = scalar_lea.sflag [#allocation6], %s305
        %s307 = sand.u32 %s189, 1
        %s308 = smul.addr %s307, 64
        %s309 = scalar_lea.vmem [#allocation7], %s308
        %p310 = scmp.lt.s32.totalorder %s24, 1
        %s311 = scalar_select %p310, %s24, 1
        %s312 = smul.addr %s311, 2
        %s313 = smul.addr %s312, 4
        %s314 = scalar_lea.vmem %s0, %s313
        %v315 = vld [vmem:[%s6] ss:$2 sm:$0xff]
        %s316 = scalar_lea.vmem %s6, 1
        %v317 = vld [vmem:[%s316] ss:$2 sm:$0xff]
        %318 = vst [vmem:[#allocation2] sm:$0xff] 0.0
        %319 = vst [vmem:[#allocation2 + $0x8] sm:$0xff] 0.0
        %320 = vst [vmem:[#allocation2 + $0x10] sm:$0xff] 0.0
        %321 = vst [vmem:[#allocation2 + $0x18] sm:$0xff] 0.0
        %322 = vst [vmem:[#allocation2 + $0x20] sm:$0xf] 0.0
        %v323 = vld [vmem:[%s5] sm:$0xff]
        %v324 = vld [vmem:[%s5 + $0x8] sm:$0xff]
        %v325 = vld [vmem:[%s314] sm:$0xf]
        %vm326 = vcmask 130048
        %v328 = vsel %vm326, %v325, 0
        %330 = vmatprep.subr.mxu0 0.0
        %331 = vmatpush1.msra.mxu0 %v323
        %332 = vmatprep.subr.mxu0 0.0
        %333 = vmatpush1.msra.mxu0 %v324
        %334 = vmatprep.subr.mxu0 0.0
        %335 = vmatpush1.msra.mxu0 0.0
        %336 = vmatprep.subr.mxu0 0.0
        %337 = vmatpush1.msra.mxu0 0.0
        %338 = vmatprep.subr.mxu0 0.0
        %339 = vmatpush1.msra.mxu0 0.0
        %340 = vmatprep.subr.mxu0 0.0
        %341 = vmatpush1.msra.mxu0 0.0
        %342 = vmatprep.subr.mxu0 0.0
        %343 = vmatpush1.msra.mxu0 0.0
        %344 = vmatprep.subr.mxu0 0.0
        %345 = vmatpush1.msra.mxu0 0.0
        %346 = vmatprep.subr.mxu0 0.0
        %347 = vmatpush1.msra.mxu0 0.0
        %348 = vmatprep.subr.mxu0 0.0
        %349 = vmatpush1.msra.mxu0 0.0
        %350 = vmatprep.subr.mxu0 0.0
        %351 = vmatpush1.msra.mxu0 0.0
        %352 = vmatprep.subr.mxu0 0.0
        %353 = vmatpush1.msra.mxu0 0.0
        %354 = vmatprep.subr.mxu0 0.0
        %355 = vmatpush1.msra.mxu0 0.0
        %356 = vmatprep.subr.mxu0 0.0
        %357 = vmatpush1.msra.mxu0 0.0
        %358 = vmatprep.subr.mxu0 0.0
        %359 = vmatpush1.msra.mxu0 0.0
        %360 = vmatprep.subr.mxu0 0.0
        %361 = vmatpush1.msra.mxu0 0.0
        %362 = vmatprep.subr.mxu0 0.0
        %363 = vmatpush1.msra.mxu0 0.0
        %364 = vmatprep.subr.mxu0 0.0
        %365 = vmatpush1.msra.mxu0 0.0
        %366 = vmatprep.subr.mxu0 0.0
        %367 = vmatpush1.msra.mxu0 0.0
        %368 = vmatprep.subr.mxu0 0.0
        %369 = vmatpush1.msra.mxu0 0.0
        %370 = vmatprep.subr.mxu0 0.0
        %371 = vmatpush1.msra.mxu0 0.0
        %372 = vmatprep.subr.mxu0 0.0
        %373 = vmatpush1.msra.mxu0 0.0
        %374 = vmatprep.subr.mxu0 0.0
        %375 = vmatpush1.msra.mxu0 0.0
        %376 = vmatprep.subr.mxu0 0.0
        %377 = vmatpush1.msra.mxu0 0.0
        %378 = vmatprep.subr.mxu0 0.0
        %379 = vmatpush1.msra.mxu0 0.0
        %380 = vmatprep.subr.mxu0 0.0
        %381 = vmatpush1.msra.mxu0 0.0
        %382 = vmatprep.subr.mxu0 0.0
        %383 = vmatpush1.msra.mxu0 0.0
        %384 = vmatprep.subr.mxu0 0.0
        %385 = vmatpush1.msra.mxu0 0.0
        %386 = vmatprep.subr.mxu0 0.0
        %387 = vmatpush1.msra.mxu0 0.0
        %388 = vmatprep.subr.mxu0 0.0
        %389 = vmatpush1.msra.mxu0 0.0
        %390 = vmatprep.subr.mxu0 0.0
        %391 = vmatpush1.msra.mxu0 0.0
        %392 = vmatprep.subr.mxu0 0.0
        %393 = vmatpush1.msra.mxu0 0.0
        %394 = vmatprep.mubr.f32.mxu0 0.0
        %395 = vmatmul.mubr.f32.gmra.mrb[0].mxu0 %v328
        %v396 = vpop.f32.mrb[0].mxu0
        %v397 = vadd.f32 0.0, %v396
        %v398 = vpop.f32.mrb[0].mxu0
        %399 = vdwg.mxu0
        %401 = vrot.lane.b32.xlu0 %v397, 64
        %v402 = vpop.permute.xlu0 %401
        %vm404 = vcmask 781824
        %405 = vst.msk [vmem:[#allocation2] sm:$0xf] %vm404, %v402
        %v406 = vld [vmem:[%s314] sm:$0xf]
        %408 = vrot.lane.b32.xlu0 %v406, 112
        %v409 = vpop.permute.xlu0 %408
        %v410 = vsel %vm326, %v409, 0
        %412 = vmatprep.subr.mxu0 0.0
        %413 = vmatpush1.msra.mxu0 %v323
        %414 = vmatprep.subr.mxu0 0.0
        %415 = vmatpush1.msra.mxu0 %v324
        %416 = vmatprep.subr.mxu0 0.0
        %417 = vmatpush1.msra.mxu0 0.0
        %418 = vmatprep.subr.mxu0 0.0
        %419 = vmatpush1.msra.mxu0 0.0
        %420 = vmatprep.subr.mxu0 0.0
        %421 = vmatpush1.msra.mxu0 0.0
        %422 = vmatprep.subr.mxu0 0.0
        %423 = vmatpush1.msra.mxu0 0.0
        %424 = vmatprep.subr.mxu0 0.0
        %425 = vmatpush1.msra.mxu0 0.0
        %426 = vmatprep.subr.mxu0 0.0
        %427 = vmatpush1.msra.mxu0 0.0
        %428 = vmatprep.subr.mxu0 0.0
        %429 = vmatpush1.msra.mxu0 0.0
        %430 = vmatprep.subr.mxu0 0.0
        %431 = vmatpush1.msra.mxu0 0.0
        %432 = vmatprep.subr.mxu0 0.0
        %433 = vmatpush1.msra.mxu0 0.0
        %434 = vmatprep.subr.mxu0 0.0
        %435 = vmatpush1.msra.mxu0 0.0
        %436 = vmatprep.subr.mxu0 0.0
        %437 = vmatpush1.msra.mxu0 0.0
        %438 = vmatprep.subr.mxu0 0.0
        %439 = vmatpush1.msra.mxu0 0.0
        %440 = vmatprep.subr.mxu0 0.0
        %441 = vmatpush1.msra.mxu0 0.0
        %442 = vmatprep.subr.mxu0 0.0
        %443 = vmatpush1.msra.mxu0 0.0
        %444 = vmatprep.subr.mxu0 0.0
        %445 = vmatpush1.msra.mxu0 0.0
        %446 = vmatprep.subr.mxu0 0.0
        %447 = vmatpush1.msra.mxu0 0.0
        %448 = vmatprep.subr.mxu0 0.0
        %449 = vmatpush1.msra.mxu0 0.0
        %450 = vmatprep.subr.mxu0 0.0
        %451 = vmatpush1.msra.mxu0 0.0
        %452 = vmatprep.subr.mxu0 0.0
        %453 = vmatpush1.msra.mxu0 0.0
        %454 = vmatprep.subr.mxu0 0.0
        %455 = vmatpush1.msra.mxu0 0.0
        %456 = vmatprep.subr.mxu0 0.0
        %457 = vmatpush1.msra.mxu0 0.0
        %458 = vmatprep.subr.mxu0 0.0
        %459 = vmatpush1.msra.mxu0 0.0
        %460 = vmatprep.subr.mxu0 0.0
        %461 = vmatpush1.msra.mxu0 0.0
        %462 = vmatprep.subr.mxu0 0.0
        %463 = vmatpush1.msra.mxu0 0.0
        %464 = vmatprep.subr.mxu0 0.0
        %465 = vmatpush1.msra.mxu0 0.0
        %466 = vmatprep.subr.mxu0 0.0
        %467 = vmatpush1.msra.mxu0 0.0
        %468 = vmatprep.subr.mxu0 0.0
        %469 = vmatpush1.msra.mxu0 0.0
        %470 = vmatprep.subr.mxu0 0.0
        %471 = vmatpush1.msra.mxu0 0.0
        %472 = vmatprep.subr.mxu0 0.0
        %473 = vmatpush1.msra.mxu0 0.0
        %474 = vmatprep.subr.mxu0 0.0
        %475 = vmatpush1.msra.mxu0 0.0
        %476 = vmatprep.mubr.f32.mxu0 0.0
        %477 = vmatmul.mubr.f32.gmra.mrb[0].mxu0 %v410
        %v478 = vpop.f32.mrb[0].mxu0
        %v479 = vadd.f32 0.0, %v478
        %v480 = vpop.f32.mrb[0].mxu0
        %481 = vdwg.mxu0
        %vm482 = vcmask 257024
        %483 = vst.msk [vmem:[#allocation2 + $0x4] sm:$0xf] %vm482, %v479
        %v484 = vld [vmem:[%s314] sm:$0xf]
        %486 = vrot.lane.b32.xlu0 %v484, 96
        %v487 = vpop.permute.xlu0 %486
        %v488 = vsel %vm326, %v487, 0
        %490 = vmatprep.subr.mxu0 0.0
        %491 = vmatpush1.msra.mxu0 %v323
        %492 = vmatprep.subr.mxu0 0.0
        %493 = vmatpush1.msra.mxu0 %v324
        %494 = vmatprep.subr.mxu0 0.0
        %495 = vmatpush1.msra.mxu0 0.0
        %496 = vmatprep.subr.mxu0 0.0
        %497 = vmatpush1.msra.mxu0 0.0
        %498 = vmatprep.subr.mxu0 0.0
        %499 = vmatpush1.msra.mxu0 0.0
        %500 = vmatprep.subr.mxu0 0.0
        %501 = vmatpush1.msra.mxu0 0.0
        %502 = vmatprep.subr.mxu0 0.0
        %503 = vmatpush1.msra.mxu0 0.0
        %504 = vmatprep.subr.mxu0 0.0
        %505 = vmatpush1.msra.mxu0 0.0
        %506 = vmatprep.subr.mxu0 0.0
        %507 = vmatpush1.msra.mxu0 0.0
        %508 = vmatprep.subr.mxu0 0.0
        %509 = vmatpush1.msra.mxu0 0.0
        %510 = vmatprep.subr.mxu0 0.0
        %511 = vmatpush1.msra.mxu0 0.0
        %512 = vmatprep.subr.mxu0 0.0
        %513 = vmatpush1.msra.mxu0 0.0
        %514 = vmatprep.subr.mxu0 0.0
        %515 = vmatpush1.msra.mxu0 0.0
        %516 = vmatprep.subr.mxu0 0.0
        %517 = vmatpush1.msra.mxu0 0.0
        %518 = vmatprep.subr.mxu0 0.0
        %519 = vmatpush1.msra.mxu0 0.0
        %520 = vmatprep.subr.mxu0 0.0
        %521 = vmatpush1.msra.mxu0 0.0
        %522 = vmatprep.subr.mxu0 0.0
        %523 = vmatpush1.msra.mxu0 0.0
        %524 = vmatprep.subr.mxu0 0.0
        %525 = vmatpush1.msra.mxu0 0.0
        %526 = vmatprep.subr.mxu0 0.0
        %527 = vmatpush1.msra.mxu0 0.0
        %528 = vmatprep.subr.mxu0 0.0
        %529 = vmatpush1.msra.mxu0 0.0
        %530 = vmatprep.subr.mxu0 0.0
        %531 = vmatpush1.msra.mxu0 0.0
        %532 = vmatprep.subr.mxu0 0.0
        %533 = vmatpush1.msra.mxu0 0.0
        %534 = vmatprep.subr.mxu0 0.0
        %535 = vmatpush1.msra.mxu0 0.0
        %536 = vmatprep.subr.mxu0 0.0
        %537 = vmatpush1.msra.mxu0 0.0
        %538 = vmatprep.subr.mxu0 0.0
        %539 = vmatpush1.msra.mxu0 0.0
        %540 = vmatprep.subr.mxu0 0.0
        %541 = vmatpush1.msra.mxu0 0.0
        %542 = vmatprep.subr.mxu0 0.0
        %543 = vmatpush1.msra.mxu0 0.0
        %544 = vmatprep.subr.mxu0 0.0
        %545 = vmatpush1.msra.mxu0 0.0
        %546 = vmatprep.subr.mxu0 0.0
        %547 = vmatpush1.msra.mxu0 0.0
        %548 = vmatprep.subr.mxu0 0.0
        %549 = vmatpush1.msra.mxu0 0.0
        %550 = vmatprep.subr.mxu0 0.0
        %551 = vmatpush1.msra.mxu0 0.0
        %552 = vmatprep.subr.mxu0 0.0
        %553 = vmatpush1.msra.mxu0 0.0
        %554 = vmatprep.mubr.f32.mxu0 0.0
        %555 = vmatmul.mubr.f32.gmra.mrb[0].mxu0 %v488
        %v556 = vpop.f32.mrb[0].mxu0
        %v557 = vadd.f32 0.0, %v556
        %v558 = vpop.f32.mrb[0].mxu0
        %559 = vdwg.mxu0
        %561 = vrot.lane.b32.xlu0 %v557, 64
        %v562 = vpop.permute.xlu0 %561
        %564 = vst.msk [vmem:[#allocation2 + $0x4] sm:$0xf] %vm404, %v562
        %v565 = vld [vmem:[%s314] sm:$0xf]
        %567 = vrot.lane.b32.xlu0 %v565, 80
        %v568 = vpop.permute.xlu0 %567
        %v569 = vsel %vm326, %v568, 0
        %571 = vmatprep.subr.mxu0 0.0
        %572 = vmatpush1.msra.mxu0 %v323
        %573 = vmatprep.subr.mxu0 0.0
        %574 = vmatpush1.msra.mxu0 %v324
        %575 = vmatprep.subr.mxu0 0.0
        %576 = vmatpush1.msra.mxu0 0.0
        %577 = vmatprep.subr.mxu0 0.0
        %578 = vmatpush1.msra.mxu0 0.0
        %579 = vmatprep.subr.mxu0 0.0
        %580 = vmatpush1.msra.mxu0 0.0
        %581 = vmatprep.subr.mxu0 0.0
        %582 = vmatpush1.msra.mxu0 0.0
        %583 = vmatprep.subr.mxu0 0.0
        %584 = vmatpush1.msra.mxu0 0.0
        %585 = vmatprep.subr.mxu0 0.0
        %586 = vmatpush1.msra.mxu0 0.0
        %587 = vmatprep.subr.mxu0 0.0
        %588 = vmatpush1.msra.mxu0 0.0
        %589 = vmatprep.subr.mxu0 0.0
        %590 = vmatpush1.msra.mxu0 0.0
        %591 = vmatprep.subr.mxu0 0.0
        %592 = vmatpush1.msra.mxu0 0.0
        %593 = vmatprep.subr.mxu0 0.0
        %594 = vmatpush1.msra.mxu0 0.0
        %595 = vmatprep.subr.mxu0 0.0
        %596 = vmatpush1.msra.mxu0 0.0
        %597 = vmatprep.subr.mxu0 0.0
        %598 = vmatpush1.msra.mxu0 0.0
        %599 = vmatprep.subr.mxu0 0.0
        %600 = vmatpush1.msra.mxu0 0.0
        %601 = vmatprep.subr.mxu0 0.0
        %602 = vmatpush1.msra.mxu0 0.0
        %603 = vmatprep.subr.mxu0 0.0
        %604 = vmatpush1.msra.mxu0 0.0
        %605 = vmatprep.subr.mxu0 0.0
        %606 = vmatpush1.msra.mxu0 0.0
        %607 = vmatprep.subr.mxu0 0.0
        %608 = vmatpush1.msra.mxu0 0.0
        %609 = vmatprep.subr.mxu0 0.0
        %610 = vmatpush1.msra.mxu0 0.0
        %611 = vmatprep.subr.mxu0 0.0
        %612 = vmatpush1.msra.mxu0 0.0
        %613 = vmatprep.subr.mxu0 0.0
        %614 = vmatpush1.msra.mxu0 0.0
        %615 = vmatprep.subr.mxu0 0.0
        %616 = vmatpush1.msra.mxu0 0.0
        %617 = vmatprep.subr.mxu0 0.0
        %618 = vmatpush1.msra.mxu0 0.0
        %619 = vmatprep.subr.mxu0 0.0
        %620 = vmatpush1.msra.mxu0 0.0
        %621 = vmatprep.subr.mxu0 0.0
        %622 = vmatpush1.msra.mxu0 0.0
        %623 = vmatprep.subr.mxu0 0.0
        %624 = vmatpush1.msra.mxu0 0.0
        %625 = vmatprep.subr.mxu0 0.0
        %626 = vmatpush1.msra.mxu0 0.0
        %627 = vmatprep.subr.mxu0 0.0
        %628 = vmatpush1.msra.mxu0 0.0
        %629 = vmatprep.subr.mxu0 0.0
        %630 = vmatpush1.msra.mxu0 0.0
        %631 = vmatprep.subr.mxu0 0.0
        %632 = vmatpush1.msra.mxu0 0.0
        %633 = vmatprep.subr.mxu0 0.0
        %634 = vmatpush1.msra.mxu0 0.0
        %635 = vmatprep.mubr.f32.mxu0 0.0
        %636 = vmatmul.mubr.f32.gmra.mrb[0].mxu0 %v569
        %v637 = vpop.f32.mrb[0].mxu0
        %v638 = vadd.f32 0.0, %v637
        %v639 = vpop.f32.mrb[0].mxu0
        %640 = vdwg.mxu0
        %641 = vst.msk [vmem:[#allocation2 + $0x8] sm:$0xf] %vm482, %v638
        %v642 = vld [vmem:[%s314] sm:$0xf]
        %644 = vrot.lane.b32.xlu0 %v642, 64
        %v645 = vpop.permute.xlu0 %644
        %v646 = vsel %vm326, %v645, 0
        %648 = vmatprep.subr.mxu0 0.0
        %649 = vmatpush1.msra.mxu0 %v323
        %650 = vmatprep.subr.mxu0 0.0
        %651 = vmatpush1.msra.mxu0 %v324
        %652 = vmatprep.subr.mxu0 0.0
        %653 = vmatpush1.msra.mxu0 0.0
        %654 = vmatprep.subr.mxu0 0.0
        %655 = vmatpush1.msra.mxu0 0.0
        %656 = vmatprep.subr.mxu0 0.0
        %657 = vmatpush1.msra.mxu0 0.0
        %658 = vmatprep.subr.mxu0 0.0
        %659 = vmatpush1.msra.mxu0 0.0
        %660 = vmatprep.subr.mxu0 0.0
        %661 = vmatpush1.msra.mxu0 0.0
        %662 = vmatprep.subr.mxu0 0.0
        %663 = vmatpush1.msra.mxu0 0.0
        %664 = vmatprep.subr.mxu0 0.0
        %665 = vmatpush1.msra.mxu0 0.0
        %666 = vmatprep.subr.mxu0 0.0
        %667 = vmatpush1.msra.mxu0 0.0
        %668 = vmatprep.subr.mxu0 0.0
        %669 = vmatpush1.msra.mxu0 0.0
        %670 = vmatprep.subr.mxu0 0.0
        %671 = vmatpush1.msra.mxu0 0.0
        %672 = vmatprep.subr.mxu0 0.0
        %673 = vmatpush1.msra.mxu0 0.0
        %674 = vmatprep.subr.mxu0 0.0
        %675 = vmatpush1.msra.mxu0 0.0
        %676 = vmatprep.subr.mxu0 0.0
        %677 = vmatpush1.msra.mxu0 0.0
        %678 = vmatprep.subr.mxu0 0.0
        %679 = vmatpush1.msra.mxu0 0.0
        %680 = vmatprep.subr.mxu0 0.0
        %681 = vmatpush1.msra.mxu0 0.0
        %682 = vmatprep.subr.mxu0 0.0
        %683 = vmatpush1.msra.mxu0 0.0
        %684 = vmatprep.subr.mxu0 0.0
        %685 = vmatpush1.msra.mxu0 0.0
        %686 = vmatprep.subr.mxu0 0.0
        %687 = vmatpush1.msra.mxu0 0.0
        %688 = vmatprep.subr.mxu0 0.0
        %689 = vmatpush1.msra.mxu0 0.0
        %690 = vmatprep.subr.mxu0 0.0
        %691 = vmatpush1.msra.mxu0 0.0
        %692 = vmatprep.subr.mxu0 0.0
        %693 = vmatpush1.msra.mxu0 0.0
        %694 = vmatprep.subr.mxu0 0.0
        %695 = vmatpush1.msra.mxu0 0.0
        %696 = vmatprep.subr.mxu0 0.0
        %697 = vmatpush1.msra.mxu0 0.0
        %698 = vmatprep.subr.mxu0 0.0
        %699 = vmatpush1.msra.mxu0 0.0
        %700 = vmatprep.subr.mxu0 0.0
        %701 = vmatpush1.msra.mxu0 0.0
        %702 = vmatprep.subr.mxu0 0.0
        %703 = vmatpush1.msra.mxu0 0.0
        %704 = vmatprep.subr.mxu0 0.0
        %705 = vmatpush1.msra.mxu0 0.0
        %706 = vmatprep.subr.mxu0 0.0
        %707 = vmatpush1.msra.mxu0 0.0
        %708 = vmatprep.subr.mxu0 0.0
        %709 = vmatpush1.msra.mxu0 0.0
        %710 = vmatprep.subr.mxu0 0.0
        %711 = vmatpush1.msra.mxu0 0.0
        %712 = vmatprep.mubr.f32.mxu0 0.0
        %713 = vmatmul.mubr.f32.gmra.mrb[0].mxu0 %v646
        %v714 = vpop.f32.mrb[0].mxu0
        %v715 = vadd.f32 0.0, %v714
        %v716 = vpop.f32.mrb[0].mxu0
        %717 = vdwg.mxu0
        %719 = vrot.lane.b32.xlu0 %v715, 64
        %v720 = vpop.permute.xlu0 %719
        %722 = vst.msk [vmem:[#allocation2 + $0x8] sm:$0xf] %vm404, %v720
        %v723 = vld [vmem:[%s314] sm:$0xf]
        %725 = vrot.lane.b32.xlu0 %v723, 48
        %v726 = vpop.permute.xlu0 %725
        %v727 = vsel %vm326, %v726, 0
        %729 = vmatprep.subr.mxu0 0.0
        %730 = vmatpush1.msra.mxu0 %v323
        %731 = vmatprep.subr.mxu0 0.0
        %732 = vmatpush1.msra.mxu0 %v324
        %733 = vmatprep.subr.mxu0 0.0
        %734 = vmatpush1.msra.mxu0 0.0
        %735 = vmatprep.subr.mxu0 0.0
        %736 = vmatpush1.msra.mxu0 0.0
        %737 = vmatprep.subr.mxu0 0.0
        %738 = vmatpush1.msra.mxu0 0.0
        %739 = vmatprep.subr.mxu0 0.0
        %740 = vmatpush1.msra.mxu0 0.0
        %741 = vmatprep.subr.mxu0 0.0
        %742 = vmatpush1.msra.mxu0 0.0
        %743 = vmatprep.subr.mxu0 0.0
        %744 = vmatpush1.msra.mxu0 0.0
        %745 = vmatprep.subr.mxu0 0.0
        %746 = vmatpush1.msra.mxu0 0.0
        %747 = vmatprep.subr.mxu0 0.0
        %748 = vmatpush1.msra.mxu0 0.0
        %749 = vmatprep.subr.mxu0 0.0
        %750 = vmatpush1.msra.mxu0 0.0
        %751 = vmatprep.subr.mxu0 0.0
        %752 = vmatpush1.msra.mxu0 0.0
        %753 = vmatprep.subr.mxu0 0.0
        %754 = vmatpush1.msra.mxu0 0.0
        %755 = vmatprep.subr.mxu0 0.0
        %756 = vmatpush1.msra.mxu0 0.0
        %757 = vmatprep.subr.mxu0 0.0
        %758 = vmatpush1.msra.mxu0 0.0
        %759 = vmatprep.subr.mxu0 0.0
        %760 = vmatpush1.msra.mxu0 0.0
        %761 = vmatprep.subr.mxu0 0.0
        %762 = vmatpush1.msra.mxu0 0.0
        %763 = vmatprep.subr.mxu0 0.0
        %764 = vmatpush1.msra.mxu0 0.0
        %765 = vmatprep.subr.mxu0 0.0
        %766 = vmatpush1.msra.mxu0 0.0
        %767 = vmatprep.subr.mxu0 0.0
        %768 = vmatpush1.msra.mxu0 0.0
        %769 = vmatprep.subr.mxu0 0.0
        %770 = vmatpush1.msra.mxu0 0.0
        %771 = vmatprep.subr.mxu0 0.0
        %772 = vmatpush1.msra.mxu0 0.0
        %773 = vmatprep.subr.mxu0 0.0
        %774 = vmatpush1.msra.mxu0 0.0
        %775 = vmatprep.subr.mxu0 0.0
        %776 = vmatpush1.msra.mxu0 0.0
        %777 = vmatprep.subr.mxu0 0.0
        %778 = vmatpush1.msra.mxu0 0.0
        %779 = vmatprep.subr.mxu0 0.0
        %780 = vmatpush1.msra.mxu0 0.0
        %781 = vmatprep.subr.mxu0 0.0
        %782 = vmatpush1.msra.mxu0 0.0
        %783 = vmatprep.subr.mxu0 0.0
        %784 = vmatpush1.msra.mxu0 0.0
        %785 = vmatprep.subr.mxu0 0.0
        %786 = vmatpush1.msra.mxu0 0.0
        %787 = vmatprep.subr.mxu0 0.0
        %788 = vmatpush1.msra.mxu0 0.0
        %789 = vmatprep.subr.mxu0 0.0
        %790 = vmatpush1.msra.mxu0 0.0
        %791 = vmatprep.subr.mxu0 0.0
        %792 = vmatpush1.msra.mxu0 0.0
        %793 = vmatprep.mubr.f32.mxu0 0.0
        %794 = vmatmul.mubr.f32.gmra.mrb[0].mxu0 %v727
        %v795 = vpop.f32.mrb[0].mxu0
        %v796 = vadd.f32 0.0, %v795
        %v797 = vpop.f32.mrb[0].mxu0
        %798 = vdwg.mxu0
        %799 = vst.msk [vmem:[#allocation2 + $0xc] sm:$0xf] %vm482, %v796
        %v800 = vld [vmem:[%s314] sm:$0xf]
        %802 = vrot.lane.b32.xlu0 %v800, 32
        %v803 = vpop.permute.xlu0 %802
        %v804 = vsel %vm326, %v803, 0
        %806 = vmatprep.subr.mxu0 0.0
        %807 = vmatpush1.msra.mxu0 %v323
        %808 = vmatprep.subr.mxu0 0.0
        %809 = vmatpush1.msra.mxu0 %v324
        %810 = vmatprep.subr.mxu0 0.0
        %811 = vmatpush1.msra.mxu0 0.0
        %812 = vmatprep.subr.mxu0 0.0
        %813 = vmatpush1.msra.mxu0 0.0
        %814 = vmatprep.subr.mxu0 0.0
        %815 = vmatpush1.msra.mxu0 0.0
        %816 = vmatprep.subr.mxu0 0.0
        %817 = vmatpush1.msra.mxu0 0.0
        %818 = vmatprep.subr.mxu0 0.0
        %819 = vmatpush1.msra.mxu0 0.0
        %820 = vmatprep.subr.mxu0 0.0
        %821 = vmatpush1.msra.mxu0 0.0
        %822 = vmatprep.subr.mxu0 0.0
        %823 = vmatpush1.msra.mxu0 0.0
        %824 = vmatprep.subr.mxu0 0.0
        %825 = vmatpush1.msra.mxu0 0.0
        %826 = vmatprep.subr.mxu0 0.0
        %827 = vmatpush1.msra.mxu0 0.0
        %828 = vmatprep.subr.mxu0 0.0
        %829 = vmatpush1.msra.mxu0 0.0
        %830 = vmatprep.subr.mxu0 0.0
        %831 = vmatpush1.msra.mxu0 0.0
        %832 = vmatprep.subr.mxu0 0.0
        %833 = vmatpush1.msra.mxu0 0.0
        %834 = vmatprep.subr.mxu0 0.0
        %835 = vmatpush1.msra.mxu0 0.0
        %836 = vmatprep.subr.mxu0 0.0
        %837 = vmatpush1.msra.mxu0 0.0
        %838 = vmatprep.subr.mxu0 0.0
        %839 = vmatpush1.msra.mxu0 0.0
        %840 = vmatprep.subr.mxu0 0.0
        %841 = vmatpush1.msra.mxu0 0.0
        %842 = vmatprep.subr.mxu0 0.0
        %843 = vmatpush1.msra.mxu0 0.0
        %844 = vmatprep.subr.mxu0 0.0
        %845 = vmatpush1.msra.mxu0 0.0
        %846 = vmatprep.subr.mxu0 0.0
        %847 = vmatpush1.msra.mxu0 0.0
        %848 = vmatprep.subr.mxu0 0.0
        %849 = vmatpush1.msra.mxu0 0.0
        %850 = vmatprep.subr.mxu0 0.0
        %851 = vmatpush1.msra.mxu0 0.0
        %852 = vmatprep.subr.mxu0 0.0
        %853 = vmatpush1.msra.mxu0 0.0
        %854 = vmatprep.subr.mxu0 0.0
        %855 = vmatpush1.msra.mxu0 0.0
        %856 = vmatprep.subr.mxu0 0.0
        %857 = vmatpush1.msra.mxu0 0.0
        %858 = vmatprep.subr.mxu0 0.0
        %859 = vmatpush1.msra.mxu0 0.0
        %860 = vmatprep.subr.mxu0 0.0
        %861 = vmatpush1.msra.mxu0 0.0
        %862 = vmatprep.subr.mxu0 0.0
        %863 = vmatpush1.msra.mxu0 0.0
        %864 = vmatprep.subr.mxu0 0.0
        %865 = vmatpush1.msra.mxu0 0.0
        %866 = vmatprep.subr.mxu0 0.0
        %867 = vmatpush1.msra.mxu0 0.0
        %868 = vmatprep.subr.mxu0 0.0
        %869 = vmatpush1.msra.mxu0 0.0
        %870 = vmatprep.mubr.f32.mxu0 0.0
        %871 = vmatmul.mubr.f32.gmra.mrb[0].mxu0 %v804
        %v872 = vpop.f32.mrb[0].mxu0
        %v873 = vadd.f32 0.0, %v872
        %v874 = vpop.f32.mrb[0].mxu0
        %875 = vdwg.mxu0
        %877 = vrot.lane.b32.xlu0 %v873, 64
        %v878 = vpop.permute.xlu0 %877
        %880 = vst.msk [vmem:[#allocation2 + $0xc] sm:$0xf] %vm404, %v878
        %v881 = vld [vmem:[%s314] sm:$0xf]
        %883 = vrot.lane.b32.xlu0 %v881, 16
        %v884 = vpop.permute.xlu0 %883
        %v885 = vsel %vm326, %v884, 0
        %887 = vmatprep.subr.mxu0 0.0
        %888 = vmatpush1.msra.mxu0 %v323
        %889 = vmatprep.subr.mxu0 0.0
        %890 = vmatpush1.msra.mxu0 %v324
        %891 = vmatprep.subr.mxu0 0.0
        %892 = vmatpush1.msra.mxu0 0.0
        %893 = vmatprep.subr.mxu0 0.0
        %894 = vmatpush1.msra.mxu0 0.0
        %895 = vmatprep.subr.mxu0 0.0
        %896 = vmatpush1.msra.mxu0 0.0
        %897 = vmatprep.subr.mxu0 0.0
        %898 = vmatpush1.msra.mxu0 0.0
        %899 = vmatprep.subr.mxu0 0.0
        %900 = vmatpush1.msra.mxu0 0.0
        %901 = vmatprep.subr.mxu0 0.0
        %902 = vmatpush1.msra.mxu0 0.0
        %903 = vmatprep.subr.mxu0 0.0
        %904 = vmatpush1.msra.mxu0 0.0
        %905 = vmatprep.subr.mxu0 0.0
        %906 = vmatpush1.msra.mxu0 0.0
        %907 = vmatprep.subr.mxu0 0.0
        %908 = vmatpush1.msra.mxu0 0.0
        %909 = vmatprep.subr.mxu0 0.0
        %910 = vmatpush1.msra.mxu0 0.0
        %911 = vmatprep.subr.mxu0 0.0
        %912 = vmatpush1.msra.mxu0 0.0
        %913 = vmatprep.subr.mxu0 0.0
        %914 = vmatpush1.msra.mxu0 0.0
        %915 = vmatprep.subr.mxu0 0.0
        %916 = vmatpush1.msra.mxu0 0.0
        %917 = vmatprep.subr.mxu0 0.0
        %918 = vmatpush1.msra.mxu0 0.0
        %919 = vmatprep.subr.mxu0 0.0
        %920 = vmatpush1.msra.mxu0 0.0
        %921 = vmatprep.subr.mxu0 0.0
        %922 = vmatpush1.msra.mxu0 0.0
        %923 = vmatprep.subr.mxu0 0.0
        %924 = vmatpush1.msra.mxu0 0.0
        %925 = vmatprep.subr.mxu0 0.0
        %926 = vmatpush1.msra.mxu0 0.0
        %927 = vmatprep.subr.mxu0 0.0
        %928 = vmatpush1.msra.mxu0 0.0
        %929 = vmatprep.subr.mxu0 0.0
        %930 = vmatpush1.msra.mxu0 0.0
        %931 = vmatprep.subr.mxu0 0.0
        %932 = vmatpush1.msra.mxu0 0.0
        %933 = vmatprep.subr.mxu0 0.0
        %934 = vmatpush1.msra.mxu0 0.0
        %935 = vmatprep.subr.mxu0 0.0
        %936 = vmatpush1.msra.mxu0 0.0
        %937 = vmatprep.subr.mxu0 0.0
        %938 = vmatpush1.msra.mxu0 0.0
        %939 = vmatprep.subr.mxu0 0.0
        %940 = vmatpush1.msra.mxu0 0.0
        %941 = vmatprep.subr.mxu0 0.0
        %942 = vmatpush1.msra.mxu0 0.0
        %943 = vmatprep.subr.mxu0 0.0
        %944 = vmatpush1.msra.mxu0 0.0
        %945 = vmatprep.subr.mxu0 0.0
        %946 = vmatpush1.msra.mxu0 0.0
        %947 = vmatprep.subr.mxu0 0.0
        %948 = vmatpush1.msra.mxu0 0.0
        %949 = vmatprep.subr.mxu0 0.0
        %950 = vmatpush1.msra.mxu0 0.0
        %951 = vmatprep.mubr.f32.mxu0 0.0
        %952 = vmatmul.mubr.f32.gmra.mrb[0].mxu0 %v885
        %v953 = vpop.f32.mrb[0].mxu0
        %v954 = vadd.f32 0.0, %v953
        %v955 = vpop.f32.mrb[0].mxu0
        %956 = vdwg.mxu0
        %957 = vst.msk [vmem:[#allocation2 + $0x10] sm:$0xf] %vm482, %v954
        %v958 = vld [vmem:[%s314 + $0x4] sm:$0xf]
        %v960 = vsel %vm326, %v958, 0
        %962 = vmatprep.subr.mxu0 0.0
        %963 = vmatpush1.msra.mxu0 %v323
        %964 = vmatprep.subr.mxu0 0.0
        %965 = vmatpush1.msra.mxu0 %v324
        %966 = vmatprep.subr.mxu0 0.0
        %967 = vmatpush1.msra.mxu0 0.0
        %968 = vmatprep.subr.mxu0 0.0
        %969 = vmatpush1.msra.mxu0 0.0
        %970 = vmatprep.subr.mxu0 0.0
        %971 = vmatpush1.msra.mxu0 0.0
        %972 = vmatprep.subr.mxu0 0.0
        %973 = vmatpush1.msra.mxu0 0.0
        %974 = vmatprep.subr.mxu0 0.0
        %975 = vmatpush1.msra.mxu0 0.0
        %976 = vmatprep.subr.mxu0 0.0
        %977 = vmatpush1.msra.mxu0 0.0
        %978 = vmatprep.subr.mxu0 0.0
        %979 = vmatpush1.msra.mxu0 0.0
        %980 = vmatprep.subr.mxu0 0.0
        %981 = vmatpush1.msra.mxu0 0.0
        %982 = vmatprep.subr.mxu0 0.0
        %983 = vmatpush1.msra.mxu0 0.0
        %984 = vmatprep.subr.mxu0 0.0
        %985 = vmatpush1.msra.mxu0 0.0
        %986 = vmatprep.subr.mxu0 0.0
        %987 = vmatpush1.msra.mxu0 0.0
        %988 = vmatprep.subr.mxu0 0.0
        %989 = vmatpush1.msra.mxu0 0.0
        %990 = vmatprep.subr.mxu0 0.0
        %991 = vmatpush1.msra.mxu0 0.0
        %992 = vmatprep.subr.mxu0 0.0
        %993 = vmatpush1.msra.mxu0 0.0
        %994 = vmatprep.subr.mxu0 0.0
        %995 = vmatpush1.msra.mxu0 0.0
        %996 = vmatprep.subr.mxu0 0.0
        %997 = vmatpush1.msra.mxu0 0.0
        %998 = vmatprep.subr.mxu0 0.0
        %999 = vmatpush1.msra.mxu0 0.0
        %1000 = vmatprep.subr.mxu0 0.0
        %1001 = vmatpush1.msra.mxu0 0.0
        %1002 = vmatprep.subr.mxu0 0.0
        %1003 = vmatpush1.msra.mxu0 0.0
        %1004 = vmatprep.subr.mxu0 0.0
        %1005 = vmatpush1.msra.mxu0 0.0
        %1006 = vmatprep.subr.mxu0 0.0
        %1007 = vmatpush1.msra.mxu0 0.0
        %1008 = vmatprep.subr.mxu0 0.0
        %1009 = vmatpush1.msra.mxu0 0.0
        %1010 = vmatprep.subr.mxu0 0.0
        %1011 = vmatpush1.msra.mxu0 0.0
        %1012 = vmatprep.subr.mxu0 0.0
        %1013 = vmatpush1.msra.mxu0 0.0
        %1014 = vmatprep.subr.mxu0 0.0
        %1015 = vmatpush1.msra.mxu0 0.0
        %1016 = vmatprep.subr.mxu0 0.0
        %1017 = vmatpush1.msra.mxu0 0.0
        %1018 = vmatprep.subr.mxu0 0.0
        %1019 = vmatpush1.msra.mxu0 0.0
        %1020 = vmatprep.subr.mxu0 0.0
        %1021 = vmatpush1.msra.mxu0 0.0
        %1022 = vmatprep.subr.mxu0 0.0
        %1023 = vmatpush1.msra.mxu0 0.0
        %1024 = vmatprep.subr.mxu0 0.0
        %1025 = vmatpush1.msra.mxu0 0.0
        %1026 = vmatprep.mubr.f32.mxu0 0.0
        %1027 = vmatmul.mubr.f32.gmra.mrb[0].mxu0 %v960
        %v1028 = vpop.f32.mrb[0].mxu0
        %v1029 = vadd.f32 0.0, %v1028
        %v1030 = vpop.f32.mrb[0].mxu0
        %1031 = vdwg.mxu0
        %1033 = vrot.lane.b32.xlu0 %v1029, 64
        %v1034 = vpop.permute.xlu0 %1033
        %1036 = vst.msk [vmem:[#allocation2 + $0x10] sm:$0xf] %vm404, %v1034
        %v1037 = vld [vmem:[%s314 + $0x4] sm:$0xf]
        %1039 = vrot.lane.b32.xlu0 %v1037, 112
        %v1040 = vpop.permute.xlu0 %1039
        %v1041 = vsel %vm326, %v1040, 0
        %1043 = vmatprep.subr.mxu0 0.0
        %1044 = vmatpush1.msra.mxu0 %v323
        %1045 = vmatprep.subr.mxu0 0.0
        %1046 = vmatpush1.msra.mxu0 %v324
        %1047 = vmatprep.subr.mxu0 0.0
        %1048 = vmatpush1.msra.mxu0 0.0
        %1049 = vmatprep.subr.mxu0 0.0
        %1050 = vmatpush1.msra.mxu0 0.0
        %1051 = vmatprep.subr.mxu0 0.0
        %1052 = vmatpush1.msra.mxu0 0.0
        %1053 = vmatprep.subr.mxu0 0.0
        %1054 = vmatpush1.msra.mxu0 0.0
        %1055 = vmatprep.subr.mxu0 0.0
        %1056 = vmatpush1.msra.mxu0 0.0
        %1057 = vmatprep.subr.mxu0 0.0
        %1058 = vmatpush1.msra.mxu0 0.0
        %1059 = vmatprep.subr.mxu0 0.0
        %1060 = vmatpush1.msra.mxu0 0.0
        %1061 = vmatprep.subr.mxu0 0.0
        %1062 = vmatpush1.msra.mxu0 0.0
        %1063 = vmatprep.subr.mxu0 0.0
        %1064 = vmatpush1.msra.mxu0 0.0
        %1065 = vmatprep.subr.mxu0 0.0
        %1066 = vmatpush1.msra.mxu0 0.0
        %1067 = vmatprep.subr.mxu0 0.0
        %1068 = vmatpush1.msra.mxu0 0.0
        %1069 = vmatprep.subr.mxu0 0.0
        %1070 = vmatpush1.msra.mxu0 0.0
        %1071 = vmatprep.subr.mxu0 0.0
        %1072 = vmatpush1.msra.mxu0 0.0
        %1073 = vmatprep.subr.mxu0 0.0
        %1074 = vmatpush1.msra.mxu0 0.0
        %1075 = vmatprep.subr.mxu0 0.0
        %1076 = vmatpush1.msra.mxu0 0.0
        %1077 = vmatprep.subr.mxu0 0.0
        %1078 = vmatpush1.msra.mxu0 0.0
        %1079 = vmatprep.subr.mxu0 0.0
        %1080 = vmatpush1.msra.mxu0 0.0
        %1081 = vmatprep.subr.mxu0 0.0
        %1082 = vmatpush1.msra.mxu0 0.0
        %1083 = vmatprep.subr.mxu0 0.0
        %1084 = vmatpush1.msra.mxu0 0.0
        %1085 = vmatprep.subr.mxu0 0.0
        %1086 = vmatpush1.msra.mxu0 0.0
        %1087 = vmatprep.subr.mxu0 0.0
        %1088 = vmatpush1.msra.mxu0 0.0
        %1089 = vmatprep.subr.mxu0 0.0
        %1090 = vmatpush1.msra.mxu0 0.0
        %1091 = vmatprep.subr.mxu0 0.0
        %1092 = vmatpush1.msra.mxu0 0.0
        %1093 = vmatprep.subr.mxu0 0.0
        %1094 = vmatpush1.msra.mxu0 0.0
        %1095 = vmatprep.subr.mxu0 0.0
        %1096 = vmatpush1.msra.mxu0 0.0
        %1097 = vmatprep.subr.mxu0 0.0
        %1098 = vmatpush1.msra.mxu0 0.0
        %1099 = vmatprep.subr.mxu0 0.0
        %1100 = vmatpush1.msra.mxu0 0.0
        %1101 = vmatprep.subr.mxu0 0.0
        %1102 = vmatpush1.msra.mxu0 0.0
        %1103 = vmatprep.subr.mxu0 0.0
        %1104 = vmatpush1.msra.mxu0 0.0
        %1105 = vmatprep.subr.mxu0 0.0
        %1106 = vmatpush1.msra.mxu0 0.0
        %1107 = vmatprep.mubr.f32.mxu0 0.0
        %1108 = vmatmul.mubr.f32.gmra.mrb[0].mxu0 %v1041
        %v1109 = vpop.f32.mrb[0].mxu0
        %v1110 = vadd.f32 0.0, %v1109
        %v1111 = vpop.f32.mrb[0].mxu0
        %1112 = vdwg.mxu0
        %1113 = vst.msk [vmem:[#allocation2 + $0x14] sm:$0xf] %vm482, %v1110
        %v1114 = vld [vmem:[%s314 + $0x4] sm:$0xf]
        %1116 = vrot.lane.b32.xlu0 %v1114, 96
        %v1117 = vpop.permute.xlu0 %1116
        %v1118 = vsel %vm326, %v1117, 0
        %1120 = vmatprep.subr.mxu0 0.0
        %1121 = vmatpush1.msra.mxu0 %v323
        %1122 = vmatprep.subr.mxu0 0.0
        %1123 = vmatpush1.msra.mxu0 %v324
        %1124 = vmatprep.subr.mxu0 0.0
        %1125 = vmatpush1.msra.mxu0 0.0
        %1126 = vmatprep.subr.mxu0 0.0
        %1127 = vmatpush1.msra.mxu0 0.0
        %1128 = vmatprep.subr.mxu0 0.0
        %1129 = vmatpush1.msra.mxu0 0.0
        %1130 = vmatprep.subr.mxu0 0.0
        %1131 = vmatpush1.msra.mxu0 0.0
        %1132 = vmatprep.subr.mxu0 0.0
        %1133 = vmatpush1.msra.mxu0 0.0
        %1134 = vmatprep.subr.mxu0 0.0
        %1135 = vmatpush1.msra.mxu0 0.0
        %1136 = vmatprep.subr.mxu0 0.0
        %1137 = vmatpush1.msra.mxu0 0.0
        %1138 = vmatprep.subr.mxu0 0.0
        %1139 = vmatpush1.msra.mxu0 0.0
        %1140 = vmatprep.subr.mxu0 0.0
        %1141 = vmatpush1.msra.mxu0 0.0
        %1142 = vmatprep.subr.mxu0 0.0
        %1143 = vmatpush1.msra.mxu0 0.0
        %1144 = vmatprep.subr.mxu0 0.0
        %1145 = vmatpush1.msra.mxu0 0.0
        %1146 = vmatprep.subr.mxu0 0.0
        %1147 = vmatpush1.msra.mxu0 0.0
        %1148 = vmatprep.subr.mxu0 0.0
        %1149 = vmatpush1.msra.mxu0 0.0
        %1150 = vmatprep.subr.mxu0 0.0
        %1151 = vmatpush1.msra.mxu0 0.0
        %1152 = vmatprep.subr.mxu0 0.0
        %1153 = vmatpush1.msra.mxu0 0.0
        %1154 = vmatprep.subr.mxu0 0.0
        %1155 = vmatpush1.msra.mxu0 0.0
        %1156 = vmatprep.subr.mxu0 0.0
        %1157 = vmatpush1.msra.mxu0 0.0
        %1158 = vmatprep.subr.mxu0 0.0
        %1159 = vmatpush1.msra.mxu0 0.0
        %1160 = vmatprep.subr.mxu0 0.0
        %1161 = vmatpush1.msra.mxu0 0.0
        %1162 = vmatprep.subr.mxu0 0.0
        %1163 = vmatpush1.msra.mxu0 0.0
        %1164 = vmatprep.subr.mxu0 0.0
        %1165 = vmatpush1.msra.mxu0 0.0
        %1166 = vmatprep.subr.mxu0 0.0
        %1167 = vmatpush1.msra.mxu0 0.0
        %1168 = vmatprep.subr.mxu0 0.0
        %1169 = vmatpush1.msra.mxu0 0.0
        %1170 = vmatprep.subr.mxu0 0.0
        %1171 = vmatpush1.msra.mxu0 0.0
        %1172 = vmatprep.subr.mxu0 0.0
        %1173 = vmatpush1.msra.mxu0 0.0
        %1174 = vmatprep.subr.mxu0 0.0
        %1175 = vmatpush1.msra.mxu0 0.0
        %1176 = vmatprep.subr.mxu0 0.0
        %1177 = vmatpush1.msra.mxu0 0.0
        %1178 = vmatprep.subr.mxu0 0.0
        %1179 = vmatpush1.msra.mxu0 0.0
        %1180 = vmatprep.subr.mxu0 0.0
        %1181 = vmatpush1.msra.mxu0 0.0
        %1182 = vmatprep.subr.mxu0 0.0
        %1183 = vmatpush1.msra.mxu0 0.0
        %1184 = vmatprep.mubr.f32.mxu0 0.0
        %1185 = vmatmul.mubr.f32.gmra.mrb[0].mxu0 %v1118
        %v1186 = vpop.f32.mrb[0].mxu0
        %v1187 = vadd.f32 0.0, %v1186
        %v1188 = vpop.f32.mrb[0].mxu0
        %1189 = vdwg.mxu0
        %1191 = vrot.lane.b32.xlu0 %v1187, 64
        %v1192 = vpop.permute.xlu0 %1191
        %1194 = vst.msk [vmem:[#allocation2 + $0x14] sm:$0xf] %vm404, %v1192
        %v1195 = vld [vmem:[%s314 + $0x4] sm:$0xf]
        %1197 = vrot.lane.b32.xlu0 %v1195, 80
        %v1198 = vpop.permute.xlu0 %1197
        %v1199 = vsel %vm326, %v1198, 0
        %1201 = vmatprep.subr.mxu0 0.0
        %1202 = vmatpush1.msra.mxu0 %v323
        %1203 = vmatprep.subr.mxu0 0.0
        %1204 = vmatpush1.msra.mxu0 %v324
        %1205 = vmatprep.subr.mxu0 0.0
        %1206 = vmatpush1.msra.mxu0 0.0
        %1207 = vmatprep.subr.mxu0 0.0
        %1208 = vmatpush1.msra.mxu0 0.0
        %1209 = vmatprep.subr.mxu0 0.0
        %1210 = vmatpush1.msra.mxu0 0.0
        %1211 = vmatprep.subr.mxu0 0.0
        %1212 = vmatpush1.msra.mxu0 0.0
        %1213 = vmatprep.subr.mxu0 0.0
        %1214 = vmatpush1.msra.mxu0 0.0
        %1215 = vmatprep.subr.mxu0 0.0
        %1216 = vmatpush1.msra.mxu0 0.0
        %1217 = vmatprep.subr.mxu0 0.0
        %1218 = vmatpush1.msra.mxu0 0.0
        %1219 = vmatprep.subr.mxu0 0.0
        %1220 = vmatpush1.msra.mxu0 0.0
        %1221 = vmatprep.subr.mxu0 0.0
        %1222 = vmatpush1.msra.mxu0 0.0
        %1223 = vmatprep.subr.mxu0 0.0
        %1224 = vmatpush1.msra.mxu0 0.0
        %1225 = vmatprep.subr.mxu0 0.0
        %1226 = vmatpush1.msra.mxu0 0.0
        %1227 = vmatprep.subr.mxu0 0.0
        %1228 = vmatpush1.msra.mxu0 0.0
        %1229 = vmatprep.subr.mxu0 0.0
        %1230 = vmatpush1.msra.mxu0 0.0
        %1231 = vmatprep.subr.mxu0 0.0
        %1232 = vmatpush1.msra.mxu0 0.0
        %1233 = vmatprep.subr.mxu0 0.0
        %1234 = vmatpush1.msra.mxu0 0.0
        %1235 = vmatprep.subr.mxu0 0.0
        %1236 = vmatpush1.msra.mxu0 0.0
        %1237 = vmatprep.subr.mxu0 0.0
        %1238 = vmatpush1.msra.mxu0 0.0
        %1239 = vmatprep.subr.mxu0 0.0
        %1240 = vmatpush1.msra.mxu0 0.0
        %1241 = vmatprep.subr.mxu0 0.0
        %1242 = vmatpush1.msra.mxu0 0.0
        %1243 = vmatprep.subr.mxu0 0.0
        %1244 = vmatpush1.msra.mxu0 0.0
        %1245 = vmatprep.subr.mxu0 0.0
        %1246 = vmatpush1.msra.mxu0 0.0
        %1247 = vmatprep.subr.mxu0 0.0
        %1248 = vmatpush1.msra.mxu0 0.0
        %1249 = vmatprep.subr.mxu0 0.0
        %1250 = vmatpush1.msra.mxu0 0.0
        %1251 = vmatprep.subr.mxu0 0.0
        %1252 = vmatpush1.msra.mxu0 0.0
        %1253 = vmatprep.subr.mxu0 0.0
        %1254 = vmatpush1.msra.mxu0 0.0
        %1255 = vmatprep.subr.mxu0 0.0
        %1256 = vmatpush1.msra.mxu0 0.0
        %1257 = vmatprep.subr.mxu0 0.0
        %1258 = vmatpush1.msra.mxu0 0.0
        %1259 = vmatprep.subr.mxu0 0.0
        %1260 = vmatpush1.msra.mxu0 0.0
        %1261 = vmatprep.subr.mxu0 0.0
        %1262 = vmatpush1.msra.mxu0 0.0
        %1263 = vmatprep.subr.mxu0 0.0
        %1264 = vmatpush1.msra.mxu0 0.0
        %1265 = vmatprep.mubr.f32.mxu0 0.0
        %1266 = vmatmul.mubr.f32.gmra.mrb[0].mxu0 %v1199
        %v1267 = vpop.f32.mrb[0].mxu0
        %v1268 = vadd.f32 0.0, %v1267
        %v1269 = vpop.f32.mrb[0].mxu0
        %1270 = vdwg.mxu0
        %1271 = vst.msk [vmem:[#allocation2 + $0x18] sm:$0xf] %vm482, %v1268
        %v1272 = vld [vmem:[%s314 + $0x4] sm:$0xf]
        %1274 = vrot.lane.b32.xlu0 %v1272, 64
        %v1275 = vpop.permute.xlu0 %1274
        %v1276 = vsel %vm326, %v1275, 0
        %1278 = vmatprep.subr.mxu0 0.0
        %1279 = vmatpush1.msra.mxu0 %v323
        %1280 = vmatprep.subr.mxu0 0.0
        %1281 = vmatpush1.msra.mxu0 %v324
        %1282 = vmatprep.subr.mxu0 0.0
        %1283 = vmatpush1.msra.mxu0 0.0
        %1284 = vmatprep.subr.mxu0 0.0
        %1285 = vmatpush1.msra.mxu0 0.0
        %1286 = vmatprep.subr.mxu0 0.0
        %1287 = vmatpush1.msra.mxu0 0.0
        %1288 = vmatprep.subr.mxu0 0.0
        %1289 = vmatpush1.msra.mxu0 0.0
        %1290 = vmatprep.subr.mxu0 0.0
        %1291 = vmatpush1.msra.mxu0 0.0
        %1292 = vmatprep.subr.mxu0 0.0
        %1293 = vmatpush1.msra.mxu0 0.0
        %1294 = vmatprep.subr.mxu0 0.0
        %1295 = vmatpush1.msra.mxu0 0.0
        %1296 = vmatprep.subr.mxu0 0.0
        %1297 = vmatpush1.msra.mxu0 0.0
        %1298 = vmatprep.subr.mxu0 0.0
        %1299 = vmatpush1.msra.mxu0 0.0
        %1300 = vmatprep.subr.mxu0 0.0
        %1301 = vmatpush1.msra.mxu0 0.0
        %1302 = vmatprep.subr.mxu0 0.0
        %1303 = vmatpush1.msra.mxu0 0.0
        %1304 = vmatprep.subr.mxu0 0.0
        %1305 = vmatpush1.msra.mxu0 0.0
        %1306 = vmatprep.subr.mxu0 0.0
        %1307 = vmatpush1.msra.mxu0 0.0
        %1308 = vmatprep.subr.mxu0 0.0
        %1309 = vmatpush1.msra.mxu0 0.0
        %1310 = vmatprep.subr.mxu0 0.0
        %1311 = vmatpush1.msra.mxu0 0.0
        %1312 = vmatprep.subr.mxu0 0.0
        %1313 = vmatpush1.msra.mxu0 0.0
        %1314 = vmatprep.subr.mxu0 0.0
        %1315 = vmatpush1.msra.mxu0 0.0
        %1316 = vmatprep.subr.mxu0 0.0
        %1317 = vmatpush1.msra.mxu0 0.0
        %1318 = vmatprep.subr.mxu0 0.0
        %1319 = vmatpush1.msra.mxu0 0.0
        %1320 = vmatprep.subr.mxu0 0.0
        %1321 = vmatpush1.msra.mxu0 0.0
        %1322 = vmatprep.subr.mxu0 0.0
        %1323 = vmatpush1.msra.mxu0 0.0
        %1324 = vmatprep.subr.mxu0 0.0
        %1325 = vmatpush1.msra.mxu0 0.0
        %1326 = vmatprep.subr.mxu0 0.0
        %1327 = vmatpush1.msra.mxu0 0.0
        %1328 = vmatprep.subr.mxu0 0.0
        %1329 = vmatpush1.msra.mxu0 0.0
        %1330 = vmatprep.subr.mxu0 0.0
        %1331 = vmatpush1.msra.mxu0 0.0
        %1332 = vmatprep.subr.mxu0 0.0
        %1333 = vmatpush1.msra.mxu0 0.0
        %1334 = vmatprep.subr.mxu0 0.0
        %1335 = vmatpush1.msra.mxu0 0.0
        %1336 = vmatprep.subr.mxu0 0.0
        %1337 = vmatpush1.msra.mxu0 0.0
        %1338 = vmatprep.subr.mxu0 0.0
        %1339 = vmatpush1.msra.mxu0 0.0
        %1340 = vmatprep.subr.mxu0 0.0
        %1341 = vmatpush1.msra.mxu0 0.0
        %1342 = vmatprep.mubr.f32.mxu0 0.0
        %1343 = vmatmul.mubr.f32.gmra.mrb[0].mxu0 %v1276
        %v1344 = vpop.f32.mrb[0].mxu0
        %v1345 = vadd.f32 0.0, %v1344
        %v1346 = vpop.f32.mrb[0].mxu0
        %1347 = vdwg.mxu0
        %1349 = vrot.lane.b32.xlu0 %v1345, 64
        %v1350 = vpop.permute.xlu0 %1349
        %1352 = vst.msk [vmem:[#allocation2 + $0x18] sm:$0xf] %vm404, %v1350
        %v1353 = vld [vmem:[%s314 + $0x4] sm:$0xf]
        %1355 = vrot.lane.b32.xlu0 %v1353, 48
        %v1356 = vpop.permute.xlu0 %1355
        %v1357 = vsel %vm326, %v1356, 0
        %1359 = vmatprep.subr.mxu0 0.0
        %1360 = vmatpush1.msra.mxu0 %v323
        %1361 = vmatprep.subr.mxu0 0.0
        %1362 = vmatpush1.msra.mxu0 %v324
        %1363 = vmatprep.subr.mxu0 0.0
        %1364 = vmatpush1.msra.mxu0 0.0
        %1365 = vmatprep.subr.mxu0 0.0
        %1366 = vmatpush1.msra.mxu0 0.0
        %1367 = vmatprep.subr.mxu0 0.0
        %1368 = vmatpush1.msra.mxu0 0.0
        %1369 = vmatprep.subr.mxu0 0.0
        %1370 = vmatpush1.msra.mxu0 0.0
        %1371 = vmatprep.subr.mxu0 0.0
        %1372 = vmatpush1.msra.mxu0 0.0
        %1373 = vmatprep.subr.mxu0 0.0
        %1374 = vmatpush1.msra.mxu0 0.0
        %1375 = vmatprep.subr.mxu0 0.0
        %1376 = vmatpush1.msra.mxu0 0.0
        %1377 = vmatprep.subr.mxu0 0.0
        %1378 = vmatpush1.msra.mxu0 0.0
        %1379 = vmatprep.subr.mxu0 0.0
        %1380 = vmatpush1.msra.mxu0 0.0
        %1381 = vmatprep.subr.mxu0 0.0
        %1382 = vmatpush1.msra.mxu0 0.0
        %1383 = vmatprep.subr.mxu0 0.0
        %1384 = vmatpush1.msra.mxu0 0.0
        %1385 = vmatprep.subr.mxu0 0.0
        %1386 = vmatpush1.msra.mxu0 0.0
        %1387 = vmatprep.subr.mxu0 0.0
        %1388 = vmatpush1.msra.mxu0 0.0
        %1389 = vmatprep.subr.mxu0 0.0
        %1390 = vmatpush1.msra.mxu0 0.0
        %1391 = vmatprep.subr.mxu0 0.0
        %1392 = vmatpush1.msra.mxu0 0.0
        %1393 = vmatprep.subr.mxu0 0.0
        %1394 = vmatpush1.msra.mxu0 0.0
        %1395 = vmatprep.subr.mxu0 0.0
        %1396 = vmatpush1.msra.mxu0 0.0
        %1397 = vmatprep.subr.mxu0 0.0
        %1398 = vmatpush1.msra.mxu0 0.0
        %1399 = vmatprep.subr.mxu0 0.0
        %1400 = vmatpush1.msra.mxu0 0.0
        %1401 = vmatprep.subr.mxu0 0.0
        %1402 = vmatpush1.msra.mxu0 0.0
        %1403 = vmatprep.subr.mxu0 0.0
        %1404 = vmatpush1.msra.mxu0 0.0
        %1405 = vmatprep.subr.mxu0 0.0
        %1406 = vmatpush1.msra.mxu0 0.0
        %1407 = vmatprep.subr.mxu0 0.0
        %1408 = vmatpush1.msra.mxu0 0.0
        %1409 = vmatprep.subr.mxu0 0.0
        %1410 = vmatpush1.msra.mxu0 0.0
        %1411 = vmatprep.subr.mxu0 0.0
        %1412 = vmatpush1.msra.mxu0 0.0
        %1413 = vmatprep.subr.mxu0 0.0
        %1414 = vmatpush1.msra.mxu0 0.0
        %1415 = vmatprep.subr.mxu0 0.0
        %1416 = vmatpush1.msra.mxu0 0.0
        %1417 = vmatprep.subr.mxu0 0.0
        %1418 = vmatpush1.msra.mxu0 0.0
        %1419 = vmatprep.subr.mxu0 0.0
        %1420 = vmatpush1.msra.mxu0 0.0
        %1421 = vmatprep.subr.mxu0 0.0
        %1422 = vmatpush1.msra.mxu0 0.0
        %1423 = vmatprep.mubr.f32.mxu0 0.0
        %1424 = vmatmul.mubr.f32.gmra.mrb[0].mxu0 %v1357
        %v1425 = vpop.f32.mrb[0].mxu0
        %v1426 = vadd.f32 0.0, %v1425
        %v1427 = vpop.f32.mrb[0].mxu0
        %1428 = vdwg.mxu0
        %1429 = vst.msk [vmem:[#allocation2 + $0x1c] sm:$0xf] %vm482, %v1426
        %v1430 = vld [vmem:[%s314 + $0x4] sm:$0xf]
        %1432 = vrot.lane.b32.xlu0 %v1430, 32
        %v1433 = vpop.permute.xlu0 %1432
        %v1434 = vsel %vm326, %v1433, 0
        %1436 = vmatprep.subr.mxu0 0.0
        %1437 = vmatpush1.msra.mxu0 %v323
        %1438 = vmatprep.subr.mxu0 0.0
        %1439 = vmatpush1.msra.mxu0 %v324
        %1440 = vmatprep.subr.mxu0 0.0
        %1441 = vmatpush1.msra.mxu0 0.0
        %1442 = vmatprep.subr.mxu0 0.0
        %1443 = vmatpush1.msra.mxu0 0.0
        %1444 = vmatprep.subr.mxu0 0.0
        %1445 = vmatpush1.msra.mxu0 0.0
        %1446 = vmatprep.subr.mxu0 0.0
        %1447 = vmatpush1.msra.mxu0 0.0
        %1448 = vmatprep.subr.mxu0 0.0
        %1449 = vmatpush1.msra.mxu0 0.0
        %1450 = vmatprep.subr.mxu0 0.0
        %1451 = vmatpush1.msra.mxu0 0.0
        %1452 = vmatprep.subr.mxu0 0.0
        %1453 = vmatpush1.msra.mxu0 0.0
        %1454 = vmatprep.subr.mxu0 0.0
        %1455 = vmatpush1.msra.mxu0 0.0
        %1456 = vmatprep.subr.mxu0 0.0
        %1457 = vmatpush1.msra.mxu0 0.0
        %1458 = vmatprep.subr.mxu0 0.0
        %1459 = vmatpush1.msra.mxu0 0.0
        %1460 = vmatprep.subr.mxu0 0.0
        %1461 = vmatpush1.msra.mxu0 0.0
        %1462 = vmatprep.subr.mxu0 0.0
        %1463 = vmatpush1.msra.mxu0 0.0
        %1464 = vmatprep.subr.mxu0 0.0
        %1465 = vmatpush1.msra.mxu0 0.0
        %1466 = vmatprep.subr.mxu0 0.0
        %1467 = vmatpush1.msra.mxu0 0.0
        %1468 = vmatprep.subr.mxu0 0.0
        %1469 = vmatpush1.msra.mxu0 0.0
        %1470 = vmatprep.subr.mxu0 0.0
        %1471 = vmatpush1.msra.mxu0 0.0
        %1472 = vmatprep.subr.mxu0 0.0
        %1473 = vmatpush1.msra.mxu0 0.0
        %1474 = vmatprep.subr.mxu0 0.0
        %1475 = vmatpush1.msra.mxu0 0.0
        %1476 = vmatprep.subr.mxu0 0.0
        %1477 = vmatpush1.msra.mxu0 0.0
        %1478 = vmatprep.subr.mxu0 0.0
        %1479 = vmatpush1.msra.mxu0 0.0
        %1480 = vmatprep.subr.mxu0 0.0
        %1481 = vmatpush1.msra.mxu0 0.0
        %1482 = vmatprep.subr.mxu0 0.0
        %1483 = vmatpush1.msra.mxu0 0.0
        %1484 = vmatprep.subr.mxu0 0.0
        %1485 = vmatpush1.msra.mxu0 0.0
        %1486 = vmatprep.subr.mxu0 0.0
        %1487 = vmatpush1.msra.mxu0 0.0
        %1488 = vmatprep.subr.mxu0 0.0
        %1489 = vmatpush1.msra.mxu0 0.0
        %1490 = vmatprep.subr.mxu0 0.0
        %1491 = vmatpush1.msra.mxu0 0.0
        %1492 = vmatprep.subr.mxu0 0.0
        %1493 = vmatpush1.msra.mxu0 0.0
        %1494 = vmatprep.subr.mxu0 0.0
        %1495 = vmatpush1.msra.mxu0 0.0
        %1496 = vmatprep.subr.mxu0 0.0
        %1497 = vmatpush1.msra.mxu0 0.0
        %1498 = vmatprep.subr.mxu0 0.0
        %1499 = vmatpush1.msra.mxu0 0.0
        %1500 = vmatprep.mubr.f32.mxu0 0.0
        %1501 = vmatmul.mubr.f32.gmra.mrb[0].mxu0 %v1434
        %v1502 = vpop.f32.mrb[0].mxu0
        %v1503 = vadd.f32 0.0, %v1502
        %v1504 = vpop.f32.mrb[0].mxu0
        %1505 = vdwg.mxu0
        %1507 = vrot.lane.b32.xlu0 %v1503, 64
        %v1508 = vpop.permute.xlu0 %1507
        %1510 = vst.msk [vmem:[#allocation2 + $0x1c] sm:$0xf] %vm404, %v1508
        %v1511 = vld [vmem:[%s314 + $0x4] sm:$0xf]
        %1513 = vrot.lane.b32.xlu0 %v1511, 16
        %v1514 = vpop.permute.xlu0 %1513
        %v1515 = vsel %vm326, %v1514, 0
        %1517 = vmatprep.subr.mxu0 0.0
        %1518 = vmatpush1.msra.mxu0 %v323
        %1519 = vmatprep.subr.mxu0 0.0
        %1520 = vmatpush1.msra.mxu0 %v324
        %1521 = vmatprep.subr.mxu0 0.0
        %1522 = vmatpush1.msra.mxu0 0.0
        %1523 = vmatprep.subr.mxu0 0.0
        %1524 = vmatpush1.msra.mxu0 0.0
        %1525 = vmatprep.subr.mxu0 0.0
        %1526 = vmatpush1.msra.mxu0 0.0
        %1527 = vmatprep.subr.mxu0 0.0
        %1528 = vmatpush1.msra.mxu0 0.0
        %1529 = vmatprep.subr.mxu0 0.0
        %1530 = vmatpush1.msra.mxu0 0.0
        %1531 = vmatprep.subr.mxu0 0.0
        %1532 = vmatpush1.msra.mxu0 0.0
        %1533 = vmatprep.subr.mxu0 0.0
        %1534 = vmatpush1.msra.mxu0 0.0
        %1535 = vmatprep.subr.mxu0 0.0
        %1536 = vmatpush1.msra.mxu0 0.0
        %1537 = vmatprep.subr.mxu0 0.0
        %1538 = vmatpush1.msra.mxu0 0.0
        %1539 = vmatprep.subr.mxu0 0.0
        %1540 = vmatpush1.msra.mxu0 0.0
        %1541 = vmatprep.subr.mxu0 0.0
        %1542 = vmatpush1.msra.mxu0 0.0
        %1543 = vmatprep.subr.mxu0 0.0
        %1544 = vmatpush1.msra.mxu0 0.0
        %1545 = vmatprep.subr.mxu0 0.0
        %1546 = vmatpush1.msra.mxu0 0.0
        %1547 = vmatprep.subr.mxu0 0.0
        %1548 = vmatpush1.msra.mxu0 0.0
        %1549 = vmatprep.subr.mxu0 0.0
        %1550 = vmatpush1.msra.mxu0 0.0
        %1551 = vmatprep.subr.mxu0 0.0
        %1552 = vmatpush1.msra.mxu0 0.0
        %1553 = vmatprep.subr.mxu0 0.0
        %1554 = vmatpush1.msra.mxu0 0.0
        %1555 = vmatprep.subr.mxu0 0.0
        %1556 = vmatpush1.msra.mxu0 0.0
        %1557 = vmatprep.subr.mxu0 0.0
        %1558 = vmatpush1.msra.mxu0 0.0
        %1559 = vmatprep.subr.mxu0 0.0
        %1560 = vmatpush1.msra.mxu0 0.0
        %1561 = vmatprep.subr.mxu0 0.0
        %1562 = vmatpush1.msra.mxu0 0.0
        %1563 = vmatprep.subr.mxu0 0.0
        %1564 = vmatpush1.msra.mxu0 0.0
        %1565 = vmatprep.subr.mxu0 0.0
        %1566 = vmatpush1.msra.mxu0 0.0
        %1567 = vmatprep.subr.mxu0 0.0
        %1568 = vmatpush1.msra.mxu0 0.0
        %1569 = vmatprep.subr.mxu0 0.0
        %1570 = vmatpush1.msra.mxu0 0.0
        %1571 = vmatprep.subr.mxu0 0.0
        %1572 = vmatpush1.msra.mxu0 0.0
        %1573 = vmatprep.subr.mxu0 0.0
        %1574 = vmatpush1.msra.mxu0 0.0
        %1575 = vmatprep.subr.mxu0 0.0
        %1576 = vmatpush1.msra.mxu0 0.0
        %1577 = vmatprep.subr.mxu0 0.0
        %1578 = vmatpush1.msra.mxu0 0.0
        %1579 = vmatprep.subr.mxu0 0.0
        %1580 = vmatpush1.msra.mxu0 0.0
        %1581 = vmatprep.mubr.f32.mxu0 0.0
        %1582 = vmatmul.mubr.f32.gmra.mrb[0].mxu0 %v1515
        %v1583 = vpop.f32.mrb[0].mxu0
        %v1584 = vadd.f32 0.0, %v1583
        %v1585 = vpop.f32.mrb[0].mxu0
        %1586 = vdwg.mxu0
        %1587 = vst.msk [vmem:[#allocation2 + $0x20] sm:$0xf] %vm482, %v1584
        %v1588 = vld [vmem:[#allocation2] sm:$0xff]
        %v1589 = vld [vmem:[#allocation2 + $0x8] sm:$0xff]
        %v1590 = vld [vmem:[#allocation2 + $0x10] sm:$0xff]
        %v1591 = vld [vmem:[#allocation2 + $0x18] sm:$0xff]
        %v1592 = vld [vmem:[#allocation2 + $0x20] sm:$0xf]
        %v1593 = vld [vmem:[%s2] sm:$0xff]
        %s1594 = scalar_lea.vmem %s2, 24
        %v1595 = vld [vmem:[%s1594] sm:$0xff]
        %v1601 = vcombine.high %v1588, %v1588
        %v1602 = vcombine.high %v1589, %v1589
        %v1603 = vcombine.high %v1590, %v1590
        %v1604 = vcombine.high %v1591, %v1591
        %1605 = vrot.lane.b32.xlu0 %v1588, 65
        %v1606 = vpop.permute.xlu0 %1605
        %1607 = vrot.lane.b32.xlu0 %v1601, 65
        %v1608 = vpop.permute.xlu0 %1607
        %1609 = vrot.lane.b32.xlu0 %v1589, 65
        %v1610 = vpop.permute.xlu0 %1609
        %1611 = vrot.lane.b32.xlu0 %v1602, 65
        %v1612 = vpop.permute.xlu0 %1611
        %1613 = vrot.lane.b32.xlu0 %v1590, 65
        %v1614 = vpop.permute.xlu0 %1613
        %1615 = vrot.lane.b32.xlu0 %v1603, 65
        %v1616 = vpop.permute.xlu0 %1615
        %1617 = vrot.lane.b32.xlu0 %v1591, 65
        %v1618 = vpop.permute.xlu0 %1617
        %1619 = vrot.lane.b32.xlu0 %v1604, 65
        %v1620 = vpop.permute.xlu0 %1619
        %1621 = vrot.lane.b32.xlu0 %v1592, 65
        %v1622 = vpop.permute.xlu0 %1621
        %vm1623 = vcmask 531456
        %v1624 = vsel %vm1623, %v1606, %v1608
        %v1625 = vsel %vm1623, %v1608, %v1610
        %v1626 = vsel %vm1623, %v1610, %v1612
        %v1627 = vsel %vm1623, %v1612, %v1614
        %v1628 = vsel %vm1623, %v1614, %v1616
        %v1629 = vsel %vm1623, %v1616, %v1618
        %v1630 = vsel %vm1623, %v1618, %v1620
        %v1631 = vsel %vm1623, %v1620, %v1622
        %vm1632 = vcmask 31744
        %v1634 = vsel %vm1632, %v1595, 0
        %vm1636 = vcmask 1043456
        %v1637 = vsel %vm1636, %v1624, 0
        %v1639 = vsel %vm1636, %v1625, 0
        %v1641 = vsel %vm1636, %v1626, 0
        %v1643 = vsel %vm1636, %v1627, 0
        %v1645 = vsel %vm1636, %v1628, 0
        %v1647 = vsel %vm1636, %v1629, 0
        %v1649 = vsel %vm1636, %v1630, 0
        %v1651 = vsel %vm1636, %v1631, 0
        %1653 = vmatprep.subr.mxu0 %v1639
        %1654 = vmatpush1.msra.mxu0 %v1637
        %1655 = vmatprep.subr.mxu0 0.0
        %1656 = vmatpush1.msra.mxu0 0.0
        %1657 = vmatprep.subr.mxu0 0.0
        %1658 = vmatpush1.msra.mxu0 0.0
        %1659 = vmatprep.subr.mxu0 0.0
        %1660 = vmatpush1.msra.mxu0 0.0
        %1661 = vmatprep.subr.mxu0 0.0
        %1662 = vmatpush1.msra.mxu0 0.0
        %1663 = vmatprep.subr.mxu0 0.0
        %1664 = vmatpush1.msra.mxu0 0.0
        %1665 = vmatprep.subr.mxu0 0.0
        %1666 = vmatpush1.msra.mxu0 0.0
        %1667 = vmatprep.subr.mxu0 0.0
        %1668 = vmatpush1.msra.mxu0 0.0
        %1669 = vmatprep.subr.mxu0 0.0
        %1670 = vmatpush1.msra.mxu0 0.0
        %1671 = vmatprep.subr.mxu0 0.0
        %1672 = vmatpush1.msra.mxu0 0.0
        %1673 = vmatprep.subr.mxu0 0.0
        %1674 = vmatpush1.msra.mxu0 0.0
        %1675 = vmatprep.subr.mxu0 0.0
        %1676 = vmatpush1.msra.mxu0 0.0
        %1677 = vmatprep.subr.mxu0 0.0
        %1678 = vmatpush1.msra.mxu0 0.0
        %1679 = vmatprep.subr.mxu0 0.0
        %1680 = vmatpush1.msra.mxu0 0.0
        %1681 = vmatprep.subr.mxu0 0.0
        %1682 = vmatpush1.msra.mxu0 0.0
        %1683 = vmatprep.subr.mxu0 0.0
        %1684 = vmatpush1.msra.mxu0 0.0
        %1685 = vmatprep.subr.mxu0 0.0
        %1686 = vmatpush1.msra.mxu0 0.0
        %1687 = vmatprep.subr.mxu0 0.0
        %1688 = vmatpush1.msra.mxu0 0.0
        %1689 = vmatprep.subr.mxu0 0.0
        %1690 = vmatpush1.msra.mxu0 0.0
        %1691 = vmatprep.subr.mxu0 0.0
        %1692 = vmatpush1.msra.mxu0 0.0
        %1693 = vmatprep.subr.mxu0 0.0
        %1694 = vmatpush1.msra.mxu0 0.0
        %1695 = vmatprep.subr.mxu0 0.0
        %1696 = vmatpush1.msra.mxu0 0.0
        %1697 = vmatprep.subr.mxu0 0.0
        %1698 = vmatpush1.msra.mxu0 0.0
        %1699 = vmatprep.subr.mxu0 0.0
        %1700 = vmatpush1.msra.mxu0 0.0
        %1701 = vmatprep.subr.mxu0 0.0
        %1702 = vmatpush1.msra.mxu0 0.0
        %1703 = vmatprep.subr.mxu0 0.0
        %1704 = vmatpush1.msra.mxu0 0.0
        %1705 = vmatprep.subr.mxu0 0.0
        %1706 = vmatpush1.msra.mxu0 0.0
        %1707 = vmatprep.subr.mxu0 0.0
        %1708 = vmatpush1.msra.mxu0 0.0
        %1709 = vmatprep.subr.mxu0 0.0
        %1710 = vmatpush1.msra.mxu0 0.0
        %1711 = vmatprep.subr.mxu0 0.0
        %1712 = vmatpush1.msra.mxu0 0.0
        %1713 = vmatprep.subr.mxu0 0.0
        %1714 = vmatpush1.msra.mxu0 0.0
        %1715 = vmatprep.subr.mxu0 0.0
        %1716 = vmatpush1.msra.mxu0 0.0
        %1717 = vmatprep.mubr.f32.mxu0 0.0
        %1718 = vmatmul.mubr.f32.gmra.mrb[0].mxu0 %v1634
        %v1719 = vpop.f32.mrb[0].mxu0
        %v1720 = vadd.f32 0.0, %v1719
        %v1721 = vpop.f32.mrb[0].mxu0
        %v1722 = vadd.f32 0.0, %v1721
        %1723 = vdwg.mxu0
        %1724 = vmatprep.subr.mxu0 %v1643
        %1725 = vmatpush1.msra.mxu0 %v1641
        %1726 = vmatprep.subr.mxu0 0.0
        %1727 = vmatpush1.msra.mxu0 0.0
        %1728 = vmatprep.subr.mxu0 0.0
        %1729 = vmatpush1.msra.mxu0 0.0
        %1730 = vmatprep.subr.mxu0 0.0
        %1731 = vmatpush1.msra.mxu0 0.0
        %1732 = vmatprep.subr.mxu0 0.0
        %1733 = vmatpush1.msra.mxu0 0.0
        %1734 = vmatprep.subr.mxu0 0.0
        %1735 = vmatpush1.msra.mxu0 0.0
        %1736 = vmatprep.subr.mxu0 0.0
        %1737 = vmatpush1.msra.mxu0 0.0
        %1738 = vmatprep.subr.mxu0 0.0
        %1739 = vmatpush1.msra.mxu0 0.0
        %1740 = vmatprep.subr.mxu0 0.0
        %1741 = vmatpush1.msra.mxu0 0.0
        %1742 = vmatprep.subr.mxu0 0.0
        %1743 = vmatpush1.msra.mxu0 0.0
        %1744 = vmatprep.subr.mxu0 0.0
        %1745 = vmatpush1.msra.mxu0 0.0
        %1746 = vmatprep.subr.mxu0 0.0
        %1747 = vmatpush1.msra.mxu0 0.0
        %1748 = vmatprep.subr.mxu0 0.0
        %1749 = vmatpush1.msra.mxu0 0.0
        %1750 = vmatprep.subr.mxu0 0.0
        %1751 = vmatpush1.msra.mxu0 0.0
        %1752 = vmatprep.subr.mxu0 0.0
        %1753 = vmatpush1.msra.mxu0 0.0
        %1754 = vmatprep.subr.mxu0 0.0
        %1755 = vmatpush1.msra.mxu0 0.0
        %1756 = vmatprep.subr.mxu0 0.0
        %1757 = vmatpush1.msra.mxu0 0.0
        %1758 = vmatprep.subr.mxu0 0.0
        %1759 = vmatpush1.msra.mxu0 0.0
        %1760 = vmatprep.subr.mxu0 0.0
        %1761 = vmatpush1.msra.mxu0 0.0
        %1762 = vmatprep.subr.mxu0 0.0
        %1763 = vmatpush1.msra.mxu0 0.0
        %1764 = vmatprep.subr.mxu0 0.0
        %1765 = vmatpush1.msra.mxu0 0.0
        %1766 = vmatprep.subr.mxu0 0.0
        %1767 = vmatpush1.msra.mxu0 0.0
        %1768 = vmatprep.subr.mxu0 0.0
        %1769 = vmatpush1.msra.mxu0 0.0
        %1770 = vmatprep.subr.mxu0 0.0
        %1771 = vmatpush1.msra.mxu0 0.0
        %1772 = vmatprep.subr.mxu0 0.0
        %1773 = vmatpush1.msra.mxu0 0.0
        %1774 = vmatprep.subr.mxu0 0.0
        %1775 = vmatpush1.msra.mxu0 0.0
        %1776 = vmatprep.subr.mxu0 0.0
        %1777 = vmatpush1.msra.mxu0 0.0
        %1778 = vmatprep.subr.mxu0 0.0
        %1779 = vmatpush1.msra.mxu0 0.0
        %1780 = vmatprep.subr.mxu0 0.0
        %1781 = vmatpush1.msra.mxu0 0.0
        %1782 = vmatprep.subr.mxu0 0.0
        %1783 = vmatpush1.msra.mxu0 0.0
        %1784 = vmatprep.subr.mxu0 0.0
        %1785 = vmatpush1.msra.mxu0 0.0
        %1786 = vmatprep.subr.mxu0 0.0
        %1787 = vmatpush1.msra.mxu0 0.0
        %1788 = vmatprep.mubr.f32.mxu0 0.0
        %1789 = vmatmul.mubr.f32.gmra.mrb[0].mxu0 %v1634
        %v1790 = vpop.f32.mrb[0].mxu0
        %v1791 = vadd.f32 0.0, %v1790
        %v1792 = vpop.f32.mrb[0].mxu0
        %v1793 = vadd.f32 0.0, %v1792
        %1794 = vdwg.mxu0
        %1795 = vmatprep.subr.mxu0 %v1647
        %1796 = vmatpush1.msra.mxu0 %v1645
        %1797 = vmatprep.subr.mxu0 0.0
        %1798 = vmatpush1.msra.mxu0 0.0
        %1799 = vmatprep.subr.mxu0 0.0
        %1800 = vmatpush1.msra.mxu0 0.0
        %1801 = vmatprep.subr.mxu0 0.0
        %1802 = vmatpush1.msra.mxu0 0.0
        %1803 = vmatprep.subr.mxu0 0.0
        %1804 = vmatpush1.msra.mxu0 0.0
        %1805 = vmatprep.subr.mxu0 0.0
        %1806 = vmatpush1.msra.mxu0 0.0
        %1807 = vmatprep.subr.mxu0 0.0
        %1808 = vmatpush1.msra.mxu0 0.0
        %1809 = vmatprep.subr.mxu0 0.0
        %1810 = vmatpush1.msra.mxu0 0.0
        %1811 = vmatprep.subr.mxu0 0.0
        %1812 = vmatpush1.msra.mxu0 0.0
        %1813 = vmatprep.subr.mxu0 0.0
        %1814 = vmatpush1.msra.mxu0 0.0
        %1815 = vmatprep.subr.mxu0 0.0
        %1816 = vmatpush1.msra.mxu0 0.0
        %1817 = vmatprep.subr.mxu0 0.0
        %1818 = vmatpush1.msra.mxu0 0.0
        %1819 = vmatprep.subr.mxu0 0.0
        %1820 = vmatpush1.msra.mxu0 0.0
        %1821 = vmatprep.subr.mxu0 0.0
        %1822 = vmatpush1.msra.mxu0 0.0
        %1823 = vmatprep.subr.mxu0 0.0
        %1824 = vmatpush1.msra.mxu0 0.0
        %1825 = vmatprep.subr.mxu0 0.0
        %1826 = vmatpush1.msra.mxu0 0.0
        %1827 = vmatprep.subr.mxu0 0.0
        %1828 = vmatpush1.msra.mxu0 0.0
        %1829 = vmatprep.subr.mxu0 0.0
        %1830 = vmatpush1.msra.mxu0 0.0
        %1831 = vmatprep.subr.mxu0 0.0
        %1832 = vmatpush1.msra.mxu0 0.0
        %1833 = vmatprep.subr.mxu0 0.0
        %1834 = vmatpush1.msra.mxu0 0.0
        %1835 = vmatprep.subr.mxu0 0.0
        %1836 = vmatpush1.msra.mxu0 0.0
        %1837 = vmatprep.subr.mxu0 0.0
        %1838 = vmatpush1.msra.mxu0 0.0
        %1839 = vmatprep.subr.mxu0 0.0
        %1840 = vmatpush1.msra.mxu0 0.0
        %1841 = vmatprep.subr.mxu0 0.0
        %1842 = vmatpush1.msra.mxu0 0.0
        %1843 = vmatprep.subr.mxu0 0.0
        %1844 = vmatpush1.msra.mxu0 0.0
        %1845 = vmatprep.subr.mxu0 0.0
        %1846 = vmatpush1.msra.mxu0 0.0
        %1847 = vmatprep.subr.mxu0 0.0
        %1848 = vmatpush1.msra.mxu0 0.0
        %1849 = vmatprep.subr.mxu0 0.0
        %1850 = vmatpush1.msra.mxu0 0.0
        %1851 = vmatprep.subr.mxu0 0.0
        %1852 = vmatpush1.msra.mxu0 0.0
        %1853 = vmatprep.subr.mxu0 0.0
        %1854 = vmatpush1.msra.mxu0 0.0
        %1855 = vmatprep.subr.mxu0 0.0
        %1856 = vmatpush1.msra.mxu0 0.0
        %1857 = vmatprep.subr.mxu0 0.0
        %1858 = vmatpush1.msra.mxu0 0.0
        %1859 = vmatprep.mubr.f32.mxu0 0.0
        %1860 = vmatmul.mubr.f32.gmra.mrb[0].mxu0 %v1634
        %v1861 = vpop.f32.mrb[0].mxu0
        %v1862 = vadd.f32 0.0, %v1861
        %v1863 = vpop.f32.mrb[0].mxu0
        %v1864 = vadd.f32 0.0, %v1863
        %1865 = vdwg.mxu0
        %1866 = vmatprep.subr.mxu0 %v1651
        %1867 = vmatpush1.msra.mxu0 %v1649
        %1868 = vmatprep.subr.mxu0 0.0
        %1869 = vmatpush1.msra.mxu0 0.0
        %1870 = vmatprep.subr.mxu0 0.0
        %1871 = vmatpush1.msra.mxu0 0.0
        %1872 = vmatprep.subr.mxu0 0.0
        %1873 = vmatpush1.msra.mxu0 0.0
        %1874 = vmatprep.subr.mxu0 0.0
        %1875 = vmatpush1.msra.mxu0 0.0
        %1876 = vmatprep.subr.mxu0 0.0
        %1877 = vmatpush1.msra.mxu0 0.0
        %1878 = vmatprep.subr.mxu0 0.0
        %1879 = vmatpush1.msra.mxu0 0.0
        %1880 = vmatprep.subr.mxu0 0.0
        %1881 = vmatpush1.msra.mxu0 0.0
        %1882 = vmatprep.subr.mxu0 0.0
        %1883 = vmatpush1.msra.mxu0 0.0
        %1884 = vmatprep.subr.mxu0 0.0
        %1885 = vmatpush1.msra.mxu0 0.0
        %1886 = vmatprep.subr.mxu0 0.0
        %1887 = vmatpush1.msra.mxu0 0.0
        %1888 = vmatprep.subr.mxu0 0.0
        %1889 = vmatpush1.msra.mxu0 0.0
        %1890 = vmatprep.subr.mxu0 0.0
        %1891 = vmatpush1.msra.mxu0 0.0
        %1892 = vmatprep.subr.mxu0 0.0
        %1893 = vmatpush1.msra.mxu0 0.0
        %1894 = vmatprep.subr.mxu0 0.0
        %1895 = vmatpush1.msra.mxu0 0.0
        %1896 = vmatprep.subr.mxu0 0.0
        %1897 = vmatpush1.msra.mxu0 0.0
        %1898 = vmatprep.subr.mxu0 0.0
        %1899 = vmatpush1.msra.mxu0 0.0
        %1900 = vmatprep.subr.mxu0 0.0
        %1901 = vmatpush1.msra.mxu0 0.0
        %1902 = vmatprep.subr.mxu0 0.0
        %1903 = vmatpush1.msra.mxu0 0.0
        %1904 = vmatprep.subr.mxu0 0.0
        %1905 = vmatpush1.msra.mxu0 0.0
        %1906 = vmatprep.subr.mxu0 0.0
        %1907 = vmatpush1.msra.mxu0 0.0
        %1908 = vmatprep.subr.mxu0 0.0
        %1909 = vmatpush1.msra.mxu0 0.0
        %1910 = vmatprep.subr.mxu0 0.0
        %1911 = vmatpush1.msra.mxu0 0.0
        %1912 = vmatprep.subr.mxu0 0.0
        %1913 = vmatpush1.msra.mxu0 0.0
        %1914 = vmatprep.subr.mxu0 0.0
        %1915 = vmatpush1.msra.mxu0 0.0
        %1916 = vmatprep.subr.mxu0 0.0
        %1917 = vmatpush1.msra.mxu0 0.0
        %1918 = vmatprep.subr.mxu0 0.0
        %1919 = vmatpush1.msra.mxu0 0.0
        %1920 = vmatprep.subr.mxu0 0.0
        %1921 = vmatpush1.msra.mxu0 0.0
        %1922 = vmatprep.subr.mxu0 0.0
        %1923 = vmatpush1.msra.mxu0 0.0
        %1924 = vmatprep.subr.mxu0 0.0
        %1925 = vmatpush1.msra.mxu0 0.0
        %1926 = vmatprep.subr.mxu0 0.0
        %1927 = vmatpush1.msra.mxu0 0.0
        %1928 = vmatprep.subr.mxu0 0.0
        %1929 = vmatpush1.msra.mxu0 0.0
        %1930 = vmatprep.mubr.f32.mxu0 0.0
        %1931 = vmatmul.mubr.f32.gmra.mrb[0].mxu0 %v1634
        %v1932 = vpop.f32.mrb[0].mxu0
        %v1933 = vadd.f32 0.0, %v1932
        %v1934 = vpop.f32.mrb[0].mxu0
        %v1935 = vadd.f32 0.0, %v1934
        %1936 = vdwg.mxu0
        %1937 = vrot.lane.b32.xlu0 %v1588, 97
        %v1938 = vpop.permute.xlu0 %1937
        %1939 = vrot.lane.b32.xlu0 %v1601, 97
        %v1940 = vpop.permute.xlu0 %1939
        %1941 = vrot.lane.b32.xlu0 %v1589, 97
        %v1942 = vpop.permute.xlu0 %1941
        %1943 = vrot.lane.b32.xlu0 %v1602, 97
        %v1944 = vpop.permute.xlu0 %1943
        %1945 = vrot.lane.b32.xlu0 %v1590, 97
        %v1946 = vpop.permute.xlu0 %1945
        %1947 = vrot.lane.b32.xlu0 %v1603, 97
        %v1948 = vpop.permute.xlu0 %1947
        %1949 = vrot.lane.b32.xlu0 %v1591, 97
        %v1950 = vpop.permute.xlu0 %1949
        %1951 = vrot.lane.b32.xlu0 %v1604, 97
        %v1952 = vpop.permute.xlu0 %1951
        %1953 = vrot.lane.b32.xlu0 %v1592, 97
        %v1954 = vpop.permute.xlu0 %1953
        %vm1955 = vcmask 793600
        %v1956 = vsel %vm1955, %v1938, %v1940
        %v1957 = vsel %vm1955, %v1940, %v1942
        %v1958 = vsel %vm1955, %v1942, %v1944
        %v1959 = vsel %vm1955, %v1944, %v1946
        %v1960 = vsel %vm1955, %v1946, %v1948
        %v1961 = vsel %vm1955, %v1948, %v1950
        %v1962 = vsel %vm1955, %v1950, %v1952
        %v1963 = vsel %vm1955, %v1952, %v1954
        %v1965 = vsel %vm1632, %v1593, 0
        %v1967 = vsel %vm1636, %v1956, 0
        %v1969 = vsel %vm1636, %v1957, 0
        %v1971 = vsel %vm1636, %v1958, 0
        %v1973 = vsel %vm1636, %v1959, 0
        %v1975 = vsel %vm1636, %v1960, 0
        %v1977 = vsel %vm1636, %v1961, 0
        %v1979 = vsel %vm1636, %v1962, 0
        %v1981 = vsel %vm1636, %v1963, 0
        %1983 = vmatprep.subr.mxu0 %v1969
        %1984 = vmatpush1.msra.mxu0 %v1967
        %1985 = vmatprep.subr.mxu0 0.0
        %1986 = vmatpush1.msra.mxu0 0.0
        %1987 = vmatprep.subr.mxu0 0.0
        %1988 = vmatpush1.msra.mxu0 0.0
        %1989 = vmatprep.subr.mxu0 0.0
        %1990 = vmatpush1.msra.mxu0 0.0
        %1991 = vmatprep.subr.mxu0 0.0
        %1992 = vmatpush1.msra.mxu0 0.0
        %1993 = vmatprep.subr.mxu0 0.0
        %1994 = vmatpush1.msra.mxu0 0.0
        %1995 = vmatprep.subr.mxu0 0.0
        %1996 = vmatpush1.msra.mxu0 0.0
        %1997 = vmatprep.subr.mxu0 0.0
        %1998 = vmatpush1.msra.mxu0 0.0
        %1999 = vmatprep.subr.mxu0 0.0
        %2000 = vmatpush1.msra.mxu0 0.0
        %2001 = vmatprep.subr.mxu0 0.0
        %2002 = vmatpush1.msra.mxu0 0.0
        %2003 = vmatprep.subr.mxu0 0.0
        %2004 = vmatpush1.msra.mxu0 0.0
        %2005 = vmatprep.subr.mxu0 0.0
        %2006 = vmatpush1.msra.mxu0 0.0
        %2007 = vmatprep.subr.mxu0 0.0
        %2008 = vmatpush1.msra.mxu0 0.0
        %2009 = vmatprep.subr.mxu0 0.0
        %2010 = vmatpush1.msra.mxu0 0.0
        %2011 = vmatprep.subr.mxu0 0.0
        %2012 = vmatpush1.msra.mxu0 0.0
        %2013 = vmatprep.subr.mxu0 0.0
        %2014 = vmatpush1.msra.mxu0 0.0
        %2015 = vmatprep.subr.mxu0 0.0
        %2016 = vmatpush1.msra.mxu0 0.0
        %2017 = vmatprep.subr.mxu0 0.0
        %2018 = vmatpush1.msra.mxu0 0.0
        %2019 = vmatprep.subr.mxu0 0.0
        %2020 = vmatpush1.msra.mxu0 0.0
        %2021 = vmatprep.subr.mxu0 0.0
        %2022 = vmatpush1.msra.mxu0 0.0
        %2023 = vmatprep.subr.mxu0 0.0
        %2024 = vmatpush1.msra.mxu0 0.0
        %2025 = vmatprep.subr.mxu0 0.0
        %2026 = vmatpush1.msra.mxu0 0.0
        %2027 = vmatprep.subr.mxu0 0.0
        %2028 = vmatpush1.msra.mxu0 0.0
        %2029 = vmatprep.subr.mxu0 0.0
        %2030 = vmatpush1.msra.mxu0 0.0
        %2031 = vmatprep.subr.mxu0 0.0
        %2032 = vmatpush1.msra.mxu0 0.0
        %2033 = vmatprep.subr.mxu0 0.0
        %2034 = vmatpush1.msra.mxu0 0.0
        %2035 = vmatprep.subr.mxu0 0.0
        %2036 = vmatpush1.msra.mxu0 0.0
        %2037 = vmatprep.subr.mxu0 0.0
        %2038 = vmatpush1.msra.mxu0 0.0
        %2039 = vmatprep.subr.mxu0 0.0
        %2040 = vmatpush1.msra.mxu0 0.0
        %2041 = vmatprep.subr.mxu0 0.0
        %2042 = vmatpush1.msra.mxu0 0.0
        %2043 = vmatprep.subr.mxu0 0.0
        %2044 = vmatpush1.msra.mxu0 0.0
        %2045 = vmatprep.subr.mxu0 0.0
        %2046 = vmatpush1.msra.mxu0 0.0
        %2047 = vmatprep.mubr.f32.mxu0 0.0
        %2048 = vmatmul.mubr.f32.gmra.mrb[0].mxu0 %v1965
        %v2049 = vpop.f32.mrb[0].mxu0
        %v2050 = vadd.f32 %v1720, %v2049
        %v2051 = vpop.f32.mrb[0].mxu0
        %v2052 = vadd.f32 %v1722, %v2051
        %2053 = vdwg.mxu0
        %2054 = vmatprep.subr.mxu0 %v1973
        %2055 = vmatpush1.msra.mxu0 %v1971
        %2056 = vmatprep.subr.mxu0 0.0
        %2057 = vmatpush1.msra.mxu0 0.0
        %2058 = vmatprep.subr.mxu0 0.0
        %2059 = vmatpush1.msra.mxu0 0.0
        %2060 = vmatprep.subr.mxu0 0.0
        %2061 = vmatpush1.msra.mxu0 0.0
        %2062 = vmatprep.subr.mxu0 0.0
        %2063 = vmatpush1.msra.mxu0 0.0
        %2064 = vmatprep.subr.mxu0 0.0
        %2065 = vmatpush1.msra.mxu0 0.0
        %2066 = vmatprep.subr.mxu0 0.0
        %2067 = vmatpush1.msra.mxu0 0.0
        %2068 = vmatprep.subr.mxu0 0.0
        %2069 = vmatpush1.msra.mxu0 0.0
        %2070 = vmatprep.subr.mxu0 0.0
        %2071 = vmatpush1.msra.mxu0 0.0
        %2072 = vmatprep.subr.mxu0 0.0
        %2073 = vmatpush1.msra.mxu0 0.0
        %2074 = vmatprep.subr.mxu0 0.0
        %2075 = vmatpush1.msra.mxu0 0.0
        %2076 = vmatprep.subr.mxu0 0.0
        %2077 = vmatpush1.msra.mxu0 0.0
        %2078 = vmatprep.subr.mxu0 0.0
        %2079 = vmatpush1.msra.mxu0 0.0
        %2080 = vmatprep.subr.mxu0 0.0
        %2081 = vmatpush1.msra.mxu0 0.0
        %2082 = vmatprep.subr.mxu0 0.0
        %2083 = vmatpush1.msra.mxu0 0.0
        %2084 = vmatprep.subr.mxu0 0.0
        %2085 = vmatpush1.msra.mxu0 0.0
        %2086 = vmatprep.subr.mxu0 0.0
        %2087 = vmatpush1.msra.mxu0 0.0
        %2088 = vmatprep.subr.mxu0 0.0
        %2089 = vmatpush1.msra.mxu0 0.0
        %2090 = vmatprep.subr.mxu0 0.0
        %2091 = vmatpush1.msra.mxu0 0.0
        %2092 = vmatprep.subr.mxu0 0.0
        %2093 = vmatpush1.msra.mxu0 0.0
        %2094 = vmatprep.subr.mxu0 0.0
        %2095 = vmatpush1.msra.mxu0 0.0
        %2096 = vmatprep.subr.mxu0 0.0
        %2097 = vmatpush1.msra.mxu0 0.0
        %2098 = vmatprep.subr.mxu0 0.0
        %2099 = vmatpush1.msra.mxu0 0.0
        %2100 = vmatprep.subr.mxu0 0.0
        %2101 = vmatpush1.msra.mxu0 0.0
        %2102 = vmatprep.subr.mxu0 0.0
        %2103 = vmatpush1.msra.mxu0 0.0
        %2104 = vmatprep.subr.mxu0 0.0
        %2105 = vmatpush1.msra.mxu0 0.0
        %2106 = vmatprep.subr.mxu0 0.0
        %2107 = vmatpush1.msra.mxu0 0.0
        %2108 = vmatprep.subr.mxu0 0.0
        %2109 = vmatpush1.msra.mxu0 0.0
        %2110 = vmatprep.subr.mxu0 0.0
        %2111 = vmatpush1.msra.mxu0 0.0
        %2112 = vmatprep.subr.mxu0 0.0
        %2113 = vmatpush1.msra.mxu0 0.0
        %2114 = vmatprep.subr.mxu0 0.0
        %2115 = vmatpush1.msra.mxu0 0.0
        %2116 = vmatprep.subr.mxu0 0.0
        %2117 = vmatpush1.msra.mxu0 0.0
        %2118 = vmatprep.mubr.f32.mxu0 0.0
        %2119 = vmatmul.mubr.f32.gmra.mrb[0].mxu0 %v1965
        %v2120 = vpop.f32.mrb[0].mxu0
        %v2121 = vadd.f32 %v1791, %v2120
        %v2122 = vpop.f32.mrb[0].mxu0
        %v2123 = vadd.f32 %v1793, %v2122
        %2124 = vdwg.mxu0
        %2125 = vmatprep.subr.mxu0 %v1977
        %2126 = vmatpush1.msra.mxu0 %v1975
        %2127 = vmatprep.subr.mxu0 0.0
        %2128 = vmatpush1.msra.mxu0 0.0
        %2129 = vmatprep.subr.mxu0 0.0
        %2130 = vmatpush1.msra.mxu0 0.0
        %2131 = vmatprep.subr.mxu0 0.0
        %2132 = vmatpush1.msra.mxu0 0.0
        %2133 = vmatprep.subr.mxu0 0.0
        %2134 = vmatpush1.msra.mxu0 0.0
        %2135 = vmatprep.subr.mxu0 0.0
        %2136 = vmatpush1.msra.mxu0 0.0
        %2137 = vmatprep.subr.mxu0 0.0
        %2138 = vmatpush1.msra.mxu0 0.0
        %2139 = vmatprep.subr.mxu0 0.0
        %2140 = vmatpush1.msra.mxu0 0.0
        %2141 = vmatprep.subr.mxu0 0.0
        %2142 = vmatpush1.msra.mxu0 0.0
        %2143 = vmatprep.subr.mxu0 0.0
        %2144 = vmatpush1.msra.mxu0 0.0
        %2145 = vmatprep.subr.mxu0 0.0
        %2146 = vmatpush1.msra.mxu0 0.0
        %2147 = vmatprep.subr.mxu0 0.0
        %2148 = vmatpush1.msra.mxu0 0.0
        %2149 = vmatprep.subr.mxu0 0.0
        %2150 = vmatpush1.msra.mxu0 0.0
        %2151 = vmatprep.subr.mxu0 0.0
        %2152 = vmatpush1.msra.mxu0 0.0
        %2153 = vmatprep.subr.mxu0 0.0
        %2154 = vmatpush1.msra.mxu0 0.0
        %2155 = vmatprep.subr.mxu0 0.0
        %2156 = vmatpush1.msra.mxu0 0.0
        %2157 = vmatprep.subr.mxu0 0.0
        %2158 = vmatpush1.msra.mxu0 0.0
        %2159 = vmatprep.subr.mxu0 0.0
        %2160 = vmatpush1.msra.mxu0 0.0
        %2161 = vmatprep.subr.mxu0 0.0
        %2162 = vmatpush1.msra.mxu0 0.0
        %2163 = vmatprep.subr.mxu0 0.0
        %2164 = vmatpush1.msra.mxu0 0.0
        %2165 = vmatprep.subr.mxu0 0.0
        %2166 = vmatpush1.msra.mxu0 0.0
        %2167 = vmatprep.subr.mxu0 0.0
        %2168 = vmatpush1.msra.mxu0 0.0
        %2169 = vmatprep.subr.mxu0 0.0
        %2170 = vmatpush1.msra.mxu0 0.0
        %2171 = vmatprep.subr.mxu0 0.0
        %2172 = vmatpush1.msra.mxu0 0.0
        %2173 = vmatprep.subr.mxu0 0.0
        %2174 = vmatpush1.msra.mxu0 0.0
        %2175 = vmatprep.subr.mxu0 0.0
        %2176 = vmatpush1.msra.mxu0 0.0
        %2177 = vmatprep.subr.mxu0 0.0
        %2178 = vmatpush1.msra.mxu0 0.0
        %2179 = vmatprep.subr.mxu0 0.0
        %2180 = vmatpush1.msra.mxu0 0.0
        %2181 = vmatprep.subr.mxu0 0.0
        %2182 = vmatpush1.msra.mxu0 0.0
        %2183 = vmatprep.subr.mxu0 0.0
        %2184 = vmatpush1.msra.mxu0 0.0
        %2185 = vmatprep.subr.mxu0 0.0
        %2186 = vmatpush1.msra.mxu0 0.0
        %2187 = vmatprep.subr.mxu0 0.0
        %2188 = vmatpush1.msra.mxu0 0.0
        %2189 = vmatprep.mubr.f32.mxu0 0.0
        %2190 = vmatmul.mubr.f32.gmra.mrb[0].mxu0 %v1965
        %v2191 = vpop.f32.mrb[0].mxu0
        %v2192 = vadd.f32 %v1862, %v2191
        %v2193 = vpop.f32.mrb[0].mxu0
        %v2194 = vadd.f32 %v1864, %v2193
        %2195 = vdwg.mxu0
        %2196 = vmatprep.subr.mxu0 %v1981
        %2197 = vmatpush1.msra.mxu0 %v1979
        %2198 = vmatprep.subr.mxu0 0.0
        %2199 = vmatpush1.msra.mxu0 0.0
        %2200 = vmatprep.subr.mxu0 0.0
        %2201 = vmatpush1.msra.mxu0 0.0
        %2202 = vmatprep.subr.mxu0 0.0
        %2203 = vmatpush1.msra.mxu0 0.0
        %2204 = vmatprep.subr.mxu0 0.0
        %2205 = vmatpush1.msra.mxu0 0.0
        %2206 = vmatprep.subr.mxu0 0.0
        %2207 = vmatpush1.msra.mxu0 0.0
        %2208 = vmatprep.subr.mxu0 0.0
        %2209 = vmatpush1.msra.mxu0 0.0
        %2210 = vmatprep.subr.mxu0 0.0
        %2211 = vmatpush1.msra.mxu0 0.0
        %2212 = vmatprep.subr.mxu0 0.0
        %2213 = vmatpush1.msra.mxu0 0.0
        %2214 = vmatprep.subr.mxu0 0.0
        %2215 = vmatpush1.msra.mxu0 0.0
        %2216 = vmatprep.subr.mxu0 0.0
        %2217 = vmatpush1.msra.mxu0 0.0
        %2218 = vmatprep.subr.mxu0 0.0
        %2219 = vmatpush1.msra.mxu0 0.0
        %2220 = vmatprep.subr.mxu0 0.0
        %2221 = vmatpush1.msra.mxu0 0.0
        %2222 = vmatprep.subr.mxu0 0.0
        %2223 = vmatpush1.msra.mxu0 0.0
        %2224 = vmatprep.subr.mxu0 0.0
        %2225 = vmatpush1.msra.mxu0 0.0
        %2226 = vmatprep.subr.mxu0 0.0
        %2227 = vmatpush1.msra.mxu0 0.0
        %2228 = vmatprep.subr.mxu0 0.0
        %2229 = vmatpush1.msra.mxu0 0.0
        %2230 = vmatprep.subr.mxu0 0.0
        %2231 = vmatpush1.msra.mxu0 0.0
        %2232 = vmatprep.subr.mxu0 0.0
        %2233 = vmatpush1.msra.mxu0 0.0
        %2234 = vmatprep.subr.mxu0 0.0
        %2235 = vmatpush1.msra.mxu0 0.0
        %2236 = vmatprep.subr.mxu0 0.0
        %2237 = vmatpush1.msra.mxu0 0.0
        %2238 = vmatprep.subr.mxu0 0.0
        %2239 = vmatpush1.msra.mxu0 0.0
        %2240 = vmatprep.subr.mxu0 0.0
        %2241 = vmatpush1.msra.mxu0 0.0
        %2242 = vmatprep.subr.mxu0 0.0
        %2243 = vmatpush1.msra.mxu0 0.0
        %2244 = vmatprep.subr.mxu0 0.0
        %2245 = vmatpush1.msra.mxu0 0.0
        %2246 = vmatprep.subr.mxu0 0.0
        %2247 = vmatpush1.msra.mxu0 0.0
        %2248 = vmatprep.subr.mxu0 0.0
        %2249 = vmatpush1.msra.mxu0 0.0
        %2250 = vmatprep.subr.mxu0 0.0
        %2251 = vmatpush1.msra.mxu0 0.0
        %2252 = vmatprep.subr.mxu0 0.0
        %2253 = vmatpush1.msra.mxu0 0.0
        %2254 = vmatprep.subr.mxu0 0.0
        %2255 = vmatpush1.msra.mxu0 0.0
        %2256 = vmatprep.subr.mxu0 0.0
        %2257 = vmatpush1.msra.mxu0 0.0
        %2258 = vmatprep.subr.mxu0 0.0
        %2259 = vmatpush1.msra.mxu0 0.0
        %2260 = vmatprep.mubr.f32.mxu0 0.0
        %2261 = vmatmul.mubr.f32.gmra.mrb[0].mxu0 %v1965
        %v2262 = vpop.f32.mrb[0].mxu0
        %v2263 = vadd.f32 %v1933, %v2262
        %v2264 = vpop.f32.mrb[0].mxu0
        %v2265 = vadd.f32 %v1935, %v2264
        %2266 = vdwg.mxu0
        %v2267 = vld [vmem:[#allocation2] sm:$0xff]
        %v2268 = vld [vmem:[#allocation2 + $0x8] sm:$0xff]
        %v2269 = vld [vmem:[#allocation2 + $0x10] sm:$0xff]
        %v2270 = vld [vmem:[#allocation2 + $0x18] sm:$0xff]
        %v2271 = vld [vmem:[#allocation2 + $0x20] sm:$0xf]
        %s2272 = scalar_lea.vmem %s2, 48
        %v2273 = vld [vmem:[%s2272] sm:$0xff]
        %v2279 = vcombine.high %v2267, %v2267
        %v2280 = vcombine.high %v2268, %v2268
        %v2281 = vcombine.high %v2269, %v2269
        %v2282 = vcombine.high %v2270, %v2270
        %2283 = vrot.lane.b32.xlu0 %v2267, 33
        %v2284 = vpop.permute.xlu0 %2283
        %2285 = vrot.lane.b32.xlu0 %v2279, 33
        %v2286 = vpop.permute.xlu0 %2285
        %2287 = vrot.lane.b32.xlu0 %v2268, 33
        %v2288 = vpop.permute.xlu0 %2287
        %2289 = vrot.lane.b32.xlu0 %v2280, 33
        %v2290 = vpop.permute.xlu0 %2289
        %2291 = vrot.lane.b32.xlu0 %v2269, 33
        %v2292 = vpop.permute.xlu0 %2291
        %2293 = vrot.lane.b32.xlu0 %v2281, 33
        %v2294 = vpop.permute.xlu0 %2293
        %2295 = vrot.lane.b32.xlu0 %v2270, 33
        %v2296 = vpop.permute.xlu0 %2295
        %2297 = vrot.lane.b32.xlu0 %v2282, 33
        %v2298 = vpop.permute.xlu0 %2297
        %2299 = vrot.lane.b32.xlu0 %v2271, 33
        %v2300 = vpop.permute.xlu0 %2299
        %vm2301 = vcmask 269312
        %v2302 = vsel %vm2301, %v2284, %v2286
        %v2303 = vsel %vm2301, %v2286, %v2288
        %v2304 = vsel %vm2301, %v2288, %v2290
        %v2305 = vsel %vm2301, %v2290, %v2292
        %v2306 = vsel %vm2301, %v2292, %v2294
        %v2307 = vsel %vm2301, %v2294, %v2296
        %v2308 = vsel %vm2301, %v2296, %v2298
        %v2309 = vsel %vm2301, %v2298, %v2300
        %v2311 = vsel %vm1632, %v2273, 0
        %v2313 = vsel %vm1636, %v2302, 0
        %v2315 = vsel %vm1636, %v2303, 0
        %v2317 = vsel %vm1636, %v2304, 0
        %v2319 = vsel %vm1636, %v2305, 0
        %v2321 = vsel %vm1636, %v2306, 0
        %v2323 = vsel %vm1636, %v2307, 0
        %v2325 = vsel %vm1636, %v2308, 0
        %v2327 = vsel %vm1636, %v2309, 0
        %2329 = vmatprep.subr.mxu0 %v2315
        %2330 = vmatpush1.msra.mxu0 %v2313
        %2331 = vmatprep.subr.mxu0 0.0
        %2332 = vmatpush1.msra.mxu0 0.0
        %2333 = vmatprep.subr.mxu0 0.0
        %2334 = vmatpush1.msra.mxu0 0.0
        %2335 = vmatprep.subr.mxu0 0.0
        %2336 = vmatpush1.msra.mxu0 0.0
        %2337 = vmatprep.subr.mxu0 0.0
        %2338 = vmatpush1.msra.mxu0 0.0
        %2339 = vmatprep.subr.mxu0 0.0
        %2340 = vmatpush1.msra.mxu0 0.0
        %2341 = vmatprep.subr.mxu0 0.0
        %2342 = vmatpush1.msra.mxu0 0.0
        %2343 = vmatprep.subr.mxu0 0.0
        %2344 = vmatpush1.msra.mxu0 0.0
        %2345 = vmatprep.subr.mxu0 0.0
        %2346 = vmatpush1.msra.mxu0 0.0
        %2347 = vmatprep.subr.mxu0 0.0
        %2348 = vmatpush1.msra.mxu0 0.0
        %2349 = vmatprep.subr.mxu0 0.0
        %2350 = vmatpush1.msra.mxu0 0.0
        %2351 = vmatprep.subr.mxu0 0.0
        %2352 = vmatpush1.msra.mxu0 0.0
        %2353 = vmatprep.subr.mxu0 0.0
        %2354 = vmatpush1.msra.mxu0 0.0
        %2355 = vmatprep.subr.mxu0 0.0
        %2356 = vmatpush1.msra.mxu0 0.0
        %2357 = vmatprep.subr.mxu0 0.0
        %2358 = vmatpush1.msra.mxu0 0.0
        %2359 = vmatprep.subr.mxu0 0.0
        %2360 = vmatpush1.msra.mxu0 0.0
        %2361 = vmatprep.subr.mxu0 0.0
        %2362 = vmatpush1.msra.mxu0 0.0
        %2363 = vmatprep.subr.mxu0 0.0
        %2364 = vmatpush1.msra.mxu0 0.0
        %2365 = vmatprep.subr.mxu0 0.0
        %2366 = vmatpush1.msra.mxu0 0.0
        %2367 = vmatprep.subr.mxu0 0.0
        %2368 = vmatpush1.msra.mxu0 0.0
        %2369 = vmatprep.subr.mxu0 0.0
        %2370 = vmatpush1.msra.mxu0 0.0
        %2371 = vmatprep.subr.mxu0 0.0
        %2372 = vmatpush1.msra.mxu0 0.0
        %2373 = vmatprep.subr.mxu0 0.0
        %2374 = vmatpush1.msra.mxu0 0.0
        %2375 = vmatprep.subr.mxu0 0.0
        %2376 = vmatpush1.msra.mxu0 0.0
        %2377 = vmatprep.subr.mxu0 0.0
        %2378 = vmatpush1.msra.mxu0 0.0
        %2379 = vmatprep.subr.mxu0 0.0
        %2380 = vmatpush1.msra.mxu0 0.0
        %2381 = vmatprep.subr.mxu0 0.0
        %2382 = vmatpush1.msra.mxu0 0.0
        %2383 = vmatprep.subr.mxu0 0.0
        %2384 = vmatpush1.msra.mxu0 0.0
        %2385 = vmatprep.subr.mxu0 0.0
        %2386 = vmatpush1.msra.mxu0 0.0
        %2387 = vmatprep.subr.mxu0 0.0
        %2388 = vmatpush1.msra.mxu0 0.0
        %2389 = vmatprep.subr.mxu0 0.0
        %2390 = vmatpush1.msra.mxu0 0.0
        %2391 = vmatprep.subr.mxu0 0.0
        %2392 = vmatpush1.msra.mxu0 0.0
        %2393 = vmatprep.mubr.f32.mxu0 0.0
        %2394 = vmatmul.mubr.f32.gmra.mrb[0].mxu0 %v2311
        %v2395 = vpop.f32.mrb[0].mxu0
        %v2396 = vadd.f32 0.0, %v2395
        %v2397 = vpop.f32.mrb[0].mxu0
        %v2398 = vadd.f32 0.0, %v2397
        %2399 = vdwg.mxu0
        %2400 = vmatprep.subr.mxu0 %v2319
        %2401 = vmatpush1.msra.mxu0 %v2317
        %2402 = vmatprep.subr.mxu0 0.0
        %2403 = vmatpush1.msra.mxu0 0.0
        %2404 = vmatprep.subr.mxu0 0.0
        %2405 = vmatpush1.msra.mxu0 0.0
        %2406 = vmatprep.subr.mxu0 0.0
        %2407 = vmatpush1.msra.mxu0 0.0
        %2408 = vmatprep.subr.mxu0 0.0
        %2409 = vmatpush1.msra.mxu0 0.0
        %2410 = vmatprep.subr.mxu0 0.0
        %2411 = vmatpush1.msra.mxu0 0.0
        %2412 = vmatprep.subr.mxu0 0.0
        %2413 = vmatpush1.msra.mxu0 0.0
        %2414 = vmatprep.subr.mxu0 0.0
        %2415 = vmatpush1.msra.mxu0 0.0
        %2416 = vmatprep.subr.mxu0 0.0
        %2417 = vmatpush1.msra.mxu0 0.0
        %2418 = vmatprep.subr.mxu0 0.0
        %2419 = vmatpush1.msra.mxu0 0.0
        %2420 = vmatprep.subr.mxu0 0.0
        %2421 = vmatpush1.msra.mxu0 0.0
        %2422 = vmatprep.subr.mxu0 0.0
        %2423 = vmatpush1.msra.mxu0 0.0
        %2424 = vmatprep.subr.mxu0 0.0
        %2425 = vmatpush1.msra.mxu0 0.0
        %2426 = vmatprep.subr.mxu0 0.0
        %2427 = vmatpush1.msra.mxu0 0.0
        %2428 = vmatprep.subr.mxu0 0.0
        %2429 = vmatpush1.msra.mxu0 0.0
        %2430 = vmatprep.subr.mxu0 0.0
        %2431 = vmatpush1.msra.mxu0 0.0
        %2432 = vmatprep.subr.mxu0 0.0
        %2433 = vmatpush1.msra.mxu0 0.0
        %2434 = vmatprep.subr.mxu0 0.0
        %2435 = vmatpush1.msra.mxu0 0.0
        %2436 = vmatprep.subr.mxu0 0.0
        %2437 = vmatpush1.msra.mxu0 0.0
        %2438 = vmatprep.subr.mxu0 0.0
        %2439 = vmatpush1.msra.mxu0 0.0
        %2440 = vmatprep.subr.mxu0 0.0
        %2441 = vmatpush1.msra.mxu0 0.0
        %2442 = vmatprep.subr.mxu0 0.0
        %2443 = vmatpush1.msra.mxu0 0.0
        %2444 = vmatprep.subr.mxu0 0.0
        %2445 = vmatpush1.msra.mxu0 0.0
        %2446 = vmatprep.subr.mxu0 0.0
        %2447 = vmatpush1.msra.mxu0 0.0
        %2448 = vmatprep.subr.mxu0 0.0
        %2449 = vmatpush1.msra.mxu0 0.0
        %2450 = vmatprep.subr.mxu0 0.0
        %2451 = vmatpush1.msra.mxu0 0.0
        %2452 = vmatprep.subr.mxu0 0.0
        %2453 = vmatpush1.msra.mxu0 0.0
        %2454 = vmatprep.subr.mxu0 0.0
        %2455 = vmatpush1.msra.mxu0 0.0
        %2456 = vmatprep.subr.mxu0 0.0
        %2457 = vmatpush1.msra.mxu0 0.0
        %2458 = vmatprep.subr.mxu0 0.0
        %2459 = vmatpush1.msra.mxu0 0.0
        %2460 = vmatprep.subr.mxu0 0.0
        %2461 = vmatpush1.msra.mxu0 0.0
        %2462 = vmatprep.subr.mxu0 0.0
        %2463 = vmatpush1.msra.mxu0 0.0
        %2464 = vmatprep.mubr.f32.mxu0 0.0
        %2465 = vmatmul.mubr.f32.gmra.mrb[0].mxu0 %v2311
        %v2466 = vpop.f32.mrb[0].mxu0
        %v2467 = vadd.f32 0.0, %v2466
        %v2468 = vpop.f32.mrb[0].mxu0
        %v2469 = vadd.f32 0.0, %v2468
        %2470 = vdwg.mxu0
        %2471 = vmatprep.subr.mxu0 %v2323
        %2472 = vmatpush1.msra.mxu0 %v2321
        %2473 = vmatprep.subr.mxu0 0.0
        %2474 = vmatpush1.msra.mxu0 0.0
        %2475 = vmatprep.subr.mxu0 0.0
        %2476 = vmatpush1.msra.mxu0 0.0
        %2477 = vmatprep.subr.mxu0 0.0
        %2478 = vmatpush1.msra.mxu0 0.0
        %2479 = vmatprep.subr.mxu0 0.0
        %2480 = vmatpush1.msra.mxu0 0.0
        %2481 = vmatprep.subr.mxu0 0.0
        %2482 = vmatpush1.msra.mxu0 0.0
        %2483 = vmatprep.subr.mxu0 0.0
        %2484 = vmatpush1.msra.mxu0 0.0
        %2485 = vmatprep.subr.mxu0 0.0
        %2486 = vmatpush1.msra.mxu0 0.0
        %2487 = vmatprep.subr.mxu0 0.0
        %2488 = vmatpush1.msra.mxu0 0.0
        %2489 = vmatprep.subr.mxu0 0.0
        %2490 = vmatpush1.msra.mxu0 0.0
        %2491 = vmatprep.subr.mxu0 0.0
        %2492 = vmatpush1.msra.mxu0 0.0
        %2493 = vmatprep.subr.mxu0 0.0
        %2494 = vmatpush1.msra.mxu0 0.0
        %2495 = vmatprep.subr.mxu0 0.0
        %2496 = vmatpush1.msra.mxu0 0.0
        %2497 = vmatprep.subr.mxu0 0.0
        %2498 = vmatpush1.msra.mxu0 0.0
        %2499 = vmatprep.subr.mxu0 0.0
        %2500 = vmatpush1.msra.mxu0 0.0
        %2501 = vmatprep.subr.mxu0 0.0
        %2502 = vmatpush1.msra.mxu0 0.0
        %2503 = vmatprep.subr.mxu0 0.0
        %2504 = vmatpush1.msra.mxu0 0.0
        %2505 = vmatprep.subr.mxu0 0.0
        %2506 = vmatpush1.msra.mxu0 0.0
        %2507 = vmatprep.subr.mxu0 0.0
        %2508 = vmatpush1.msra.mxu0 0.0
        %2509 = vmatprep.subr.mxu0 0.0
        %2510 = vmatpush1.msra.mxu0 0.0
        %2511 = vmatprep.subr.mxu0 0.0
        %2512 = vmatpush1.msra.mxu0 0.0
        %2513 = vmatprep.subr.mxu0 0.0
        %2514 = vmatpush1.msra.mxu0 0.0
        %2515 = vmatprep.subr.mxu0 0.0
        %2516 = vmatpush1.msra.mxu0 0.0
        %2517 = vmatprep.subr.mxu0 0.0
        %2518 = vmatpush1.msra.mxu0 0.0
        %2519 = vmatprep.subr.mxu0 0.0
        %2520 = vmatpush1.msra.mxu0 0.0
        %2521 = vmatprep.subr.mxu0 0.0
        %2522 = vmatpush1.msra.mxu0 0.0
        %2523 = vmatprep.subr.mxu0 0.0
        %2524 = vmatpush1.msra.mxu0 0.0
        %2525 = vmatprep.subr.mxu0 0.0
        %2526 = vmatpush1.msra.mxu0 0.0
        %2527 = vmatprep.subr.mxu0 0.0
        %2528 = vmatpush1.msra.mxu0 0.0
        %2529 = vmatprep.subr.mxu0 0.0
        %2530 = vmatpush1.msra.mxu0 0.0
        %2531 = vmatprep.subr.mxu0 0.0
        %2532 = vmatpush1.msra.mxu0 0.0
        %2533 = vmatprep.subr.mxu0 0.0
        %2534 = vmatpush1.msra.mxu0 0.0
        %2535 = vmatprep.mubr.f32.mxu0 0.0
        %2536 = vmatmul.mubr.f32.gmra.mrb[0].mxu0 %v2311
        %v2537 = vpop.f32.mrb[0].mxu0
        %v2538 = vadd.f32 0.0, %v2537
        %v2539 = vpop.f32.mrb[0].mxu0
        %v2540 = vadd.f32 0.0, %v2539
        %2541 = vdwg.mxu0
        %2542 = vmatprep.subr.mxu0 %v2327
        %2543 = vmatpush1.msra.mxu0 %v2325
        %2544 = vmatprep.subr.mxu0 0.0
        %2545 = vmatpush1.msra.mxu0 0.0
        %2546 = vmatprep.subr.mxu0 0.0
        %2547 = vmatpush1.msra.mxu0 0.0
        %2548 = vmatprep.subr.mxu0 0.0
        %2549 = vmatpush1.msra.mxu0 0.0
        %2550 = vmatprep.subr.mxu0 0.0
        %2551 = vmatpush1.msra.mxu0 0.0
        %2552 = vmatprep.subr.mxu0 0.0
        %2553 = vmatpush1.msra.mxu0 0.0
        %2554 = vmatprep.subr.mxu0 0.0
        %2555 = vmatpush1.msra.mxu0 0.0
        %2556 = vmatprep.subr.mxu0 0.0
        %2557 = vmatpush1.msra.mxu0 0.0
        %2558 = vmatprep.subr.mxu0 0.0
        %2559 = vmatpush1.msra.mxu0 0.0
        %2560 = vmatprep.subr.mxu0 0.0
        %2561 = vmatpush1.msra.mxu0 0.0
        %2562 = vmatprep.subr.mxu0 0.0
        %2563 = vmatpush1.msra.mxu0 0.0
        %2564 = vmatprep.subr.mxu0 0.0
        %2565 = vmatpush1.msra.mxu0 0.0
        %2566 = vmatprep.subr.mxu0 0.0
        %2567 = vmatpush1.msra.mxu0 0.0
        %2568 = vmatprep.subr.mxu0 0.0
        %2569 = vmatpush1.msra.mxu0 0.0
        %2570 = vmatprep.subr.mxu0 0.0
        %2571 = vmatpush1.msra.mxu0 0.0
        %2572 = vmatprep.subr.mxu0 0.0
        %2573 = vmatpush1.msra.mxu0 0.0
        %2574 = vmatprep.subr.mxu0 0.0
        %2575 = vmatpush1.msra.mxu0 0.0
        %2576 = vmatprep.subr.mxu0 0.0
        %2577 = vmatpush1.msra.mxu0 0.0
        %2578 = vmatprep.subr.mxu0 0.0
        %2579 = vmatpush1.msra.mxu0 0.0
        %2580 = vmatprep.subr.mxu0 0.0
        %2581 = vmatpush1.msra.mxu0 0.0
        %2582 = vmatprep.subr.mxu0 0.0
        %2583 = vmatpush1.msra.mxu0 0.0
        %2584 = vmatprep.subr.mxu0 0.0
        %2585 = vmatpush1.msra.mxu0 0.0
        %2586 = vmatprep.subr.mxu0 0.0
        %2587 = vmatpush1.msra.mxu0 0.0
        %2588 = vmatprep.subr.mxu0 0.0
        %2589 = vmatpush1.msra.mxu0 0.0
        %2590 = vmatprep.subr.mxu0 0.0
        %2591 = vmatpush1.msra.mxu0 0.0
        %2592 = vmatprep.subr.mxu0 0.0
        %2593 = vmatpush1.msra.mxu0 0.0
        %2594 = vmatprep.subr.mxu0 0.0
        %2595 = vmatpush1.msra.mxu0 0.0
        %2596 = vmatprep.subr.mxu0 0.0
        %2597 = vmatpush1.msra.mxu0 0.0
        %2598 = vmatprep.subr.mxu0 0.0
        %2599 = vmatpush1.msra.mxu0 0.0
        %2600 = vmatprep.subr.mxu0 0.0
        %2601 = vmatpush1.msra.mxu0 0.0
        %2602 = vmatprep.subr.mxu0 0.0
        %2603 = vmatpush1.msra.mxu0 0.0
        %2604 = vmatprep.subr.mxu0 0.0
        %2605 = vmatpush1.msra.mxu0 0.0
        %2606 = vmatprep.mubr.f32.mxu0 0.0
        %2607 = vmatmul.mubr.f32.gmra.mrb[0].mxu0 %v2311
        %v2608 = vpop.f32.mrb[0].mxu0
        %v2609 = vadd.f32 0.0, %v2608
        %v2610 = vpop.f32.mrb[0].mxu0
        %v2611 = vadd.f32 0.0, %v2610
        %2612 = vdwg.mxu0
        %v2613 = vadd.f32 %v2050, %v2396
        %v2614 = vadd.f32 %v2052, %v2398
        %v2615 = vadd.f32 %v2121, %v2467
        %v2616 = vadd.f32 %v2123, %v2469
        %v2617 = vadd.f32 %v2192, %v2538
        %v2618 = vadd.f32 %v2194, %v2540
        %v2619 = vadd.f32 %v2263, %v2609
        %v2620 = vadd.f32 %v2265, %v2611
        %v2622 = vlaneseq
        %v2623 = vshrl.u32 %v2622, 7
        %v2624 = vsub.s32 0, %v2623
        %v2625 = vrot.slane %v315, %v2624
        %v2626 = vlaneseq
        %v2627 = vshrl.u32 %v2626, 7
        %v2628 = vsub.s32 1, %v2627
        %v2629 = vrot.slane %v315, %v2628
        %v2630 = vlaneseq
        %v2631 = vshrl.u32 %v2630, 7
        %v2632 = vsub.s32 2, %v2631
        %v2633 = vrot.slane %v315, %v2632
        %v2634 = vlaneseq
        %v2635 = vshrl.u32 %v2634, 7
        %v2636 = vsub.s32 3, %v2635
        %v2637 = vrot.slane %v315, %v2636
        %v2638 = vlaneseq
        %v2639 = vshrl.u32 %v2638, 7
        %v2640 = vsub.s32 4, %v2639
        %v2641 = vrot.slane %v315, %v2640
        %v2642 = vlaneseq
        %v2643 = vshrl.u32 %v2642, 7
        %v2644 = vsub.s32 5, %v2643
        %v2645 = vrot.slane %v315, %v2644
        %v2646 = vlaneseq
        %v2647 = vshrl.u32 %v2646, 7
        %v2648 = vsub.s32 6, %v2647
        %v2649 = vrot.slane %v315, %v2648
        %v2650 = vlaneseq
        %v2651 = vshrl.u32 %v2650, 7
        %v2652 = vsub.s32 7, %v2651
        %v2653 = vrot.slane %v315, %v2652
        %v2662 = vmul.f32 %v2613, %v2625
        %v2663 = vmul.f32 %v2614, %v2629
        %v2664 = vmul.f32 %v2615, %v2633
        %v2665 = vmul.f32 %v2616, %v2637
        %v2666 = vmul.f32 %v2617, %v2641
        %v2667 = vmul.f32 %v2618, %v2645
        %v2668 = vmul.f32 %v2619, %v2649
        %v2669 = vmul.f32 %v2620, %v2653
        %v2670 = vadd.f32 %v2662, 0.0
        %v2671 = vadd.f32 %v2663, 0.0
        %v2672 = vadd.f32 %v2664, 0.0
        %v2673 = vadd.f32 %v2665, 0.0
        %v2674 = vadd.f32 %v2666, 0.0
        %v2675 = vadd.f32 %v2667, 0.0
        %v2676 = vadd.f32 %v2668, 0.0
        %v2677 = vadd.f32 %v2669, 0.0
        %v2678 = vld [vmem:[#allocation2] sm:$0xff]
        %v2679 = vld [vmem:[#allocation2 + $0x8] sm:$0xff]
        %v2680 = vld [vmem:[#allocation2 + $0x10] sm:$0xff]
        %v2681 = vld [vmem:[#allocation2 + $0x18] sm:$0xff]
        %v2682 = vld [vmem:[#allocation2 + $0x20] sm:$0xf]
        %s2683 = scalar_lea.vmem %s2, 8
        %v2684 = vld [vmem:[%s2683] sm:$0xff]
        %s2685 = scalar_lea.vmem %s2, 32
        %v2686 = vld [vmem:[%s2685] sm:$0xff]
        %v2692 = vcombine.high %v2678, %v2678
        %v2693 = vcombine.high %v2679, %v2679
        %v2694 = vcombine.high %v2680, %v2680
        %v2695 = vcombine.high %v2681, %v2681
        %2696 = vrot.lane.b32.xlu0 %v2678, 64
        %v2697 = vpop.permute.xlu0 %2696
        %2698 = vrot.lane.b32.xlu0 %v2692, 64
        %v2699 = vpop.permute.xlu0 %2698
        %2700 = vrot.lane.b32.xlu0 %v2679, 64
        %v2701 = vpop.permute.xlu0 %2700
        %2702 = vrot.lane.b32.xlu0 %v2693, 64
        %v2703 = vpop.permute.xlu0 %2702
        %2704 = vrot.lane.b32.xlu0 %v2680, 64
        %v2705 = vpop.permute.xlu0 %2704
        %2706 = vrot.lane.b32.xlu0 %v2694, 64
        %v2707 = vpop.permute.xlu0 %2706
        %2708 = vrot.lane.b32.xlu0 %v2681, 64
        %v2709 = vpop.permute.xlu0 %2708
        %2710 = vrot.lane.b32.xlu0 %v2695, 64
        %v2711 = vpop.permute.xlu0 %2710
        %2712 = vrot.lane.b32.xlu0 %v2682, 64
        %v2713 = vpop.permute.xlu0 %2712
        %vm2714 = vcmask 523264
        %v2715 = vsel %vm2714, %v2697, %v2699
        %v2716 = vsel %vm2714, %v2699, %v2701
        %v2717 = vsel %vm2714, %v2701, %v2703
        %v2718 = vsel %vm2714, %v2703, %v2705
        %v2719 = vsel %vm2714, %v2705, %v2707
        %v2720 = vsel %vm2714, %v2707, %v2709
        %v2721 = vsel %vm2714, %v2709, %v2711
        %v2722 = vsel %vm2714, %v2711, %v2713
        %v2724 = vsel %vm1632, %v2686, 0
        %v2726 = vsel %vm1636, %v2715, 0
        %v2728 = vsel %vm1636, %v2716, 0
        %v2730 = vsel %vm1636, %v2717, 0
        %v2732 = vsel %vm1636, %v2718, 0
        %v2734 = vsel %vm1636, %v2719, 0
        %v2736 = vsel %vm1636, %v2720, 0
        %v2738 = vsel %vm1636, %v2721, 0
        %v2740 = vsel %vm1636, %v2722, 0
        %2742 = vmatprep.subr.mxu0 %v2728
        %2743 = vmatpush1.msra.mxu0 %v2726
        %2744 = vmatprep.subr.mxu0 0.0
        %2745 = vmatpush1.msra.mxu0 0.0
        %2746 = vmatprep.subr.mxu0 0.0
        %2747 = vmatpush1.msra.mxu0 0.0
        %2748 = vmatprep.subr.mxu0 0.0
        %2749 = vmatpush1.msra.mxu0 0.0
        %2750 = vmatprep.subr.mxu0 0.0
        %2751 = vmatpush1.msra.mxu0 0.0
        %2752 = vmatprep.subr.mxu0 0.0
        %2753 = vmatpush1.msra.mxu0 0.0
        %2754 = vmatprep.subr.mxu0 0.0
        %2755 = vmatpush1.msra.mxu0 0.0
        %2756 = vmatprep.subr.mxu0 0.0
        %2757 = vmatpush1.msra.mxu0 0.0
        %2758 = vmatprep.subr.mxu0 0.0
        %2759 = vmatpush1.msra.mxu0 0.0
        %2760 = vmatprep.subr.mxu0 0.0
        %2761 = vmatpush1.msra.mxu0 0.0
        %2762 = vmatprep.subr.mxu0 0.0
        %2763 = vmatpush1.msra.mxu0 0.0
        %2764 = vmatprep.subr.mxu0 0.0
        %2765 = vmatpush1.msra.mxu0 0.0
        %2766 = vmatprep.subr.mxu0 0.0
        %2767 = vmatpush1.msra.mxu0 0.0
        %2768 = vmatprep.subr.mxu0 0.0
        %2769 = vmatpush1.msra.mxu0 0.0
        %2770 = vmatprep.subr.mxu0 0.0
        %2771 = vmatpush1.msra.mxu0 0.0
        %2772 = vmatprep.subr.mxu0 0.0
        %2773 = vmatpush1.msra.mxu0 0.0
        %2774 = vmatprep.subr.mxu0 0.0
        %2775 = vmatpush1.msra.mxu0 0.0
        %2776 = vmatprep.subr.mxu0 0.0
        %2777 = vmatpush1.msra.mxu0 0.0
        %2778 = vmatprep.subr.mxu0 0.0
        %2779 = vmatpush1.msra.mxu0 0.0
        %2780 = vmatprep.subr.mxu0 0.0
        %2781 = vmatpush1.msra.mxu0 0.0
        %2782 = vmatprep.subr.mxu0 0.0
        %2783 = vmatpush1.msra.mxu0 0.0
        %2784 = vmatprep.subr.mxu0 0.0
        %2785 = vmatpush1.msra.mxu0 0.0
        %2786 = vmatprep.subr.mxu0 0.0
        %2787 = vmatpush1.msra.mxu0 0.0
        %2788 = vmatprep.subr.mxu0 0.0
        %2789 = vmatpush1.msra.mxu0 0.0
        %2790 = vmatprep.subr.mxu0 0.0
        %2791 = vmatpush1.msra.mxu0 0.0
        %2792 = vmatprep.subr.mxu0 0.0
        %2793 = vmatpush1.msra.mxu0 0.0
        %2794 = vmatprep.subr.mxu0 0.0
        %2795 = vmatpush1.msra.mxu0 0.0
        %2796 = vmatprep.subr.mxu0 0.0
        %2797 = vmatpush1.msra.mxu0 0.0
        %2798 = vmatprep.subr.mxu0 0.0
        %2799 = vmatpush1.msra.mxu0 0.0
        %2800 = vmatprep.subr.mxu0 0.0
        %2801 = vmatpush1.msra.mxu0 0.0
        %2802 = vmatprep.subr.mxu0 0.0
        %2803 = vmatpush1.msra.mxu0 0.0
        %2804 = vmatprep.subr.mxu0 0.0
        %2805 = vmatpush1.msra.mxu0 0.0
        %2806 = vmatprep.mubr.f32.mxu0 0.0
        %2807 = vmatmul.mubr.f32.gmra.mrb[0].mxu0 %v2724
        %v2808 = vpop.f32.mrb[0].mxu0
        %v2809 = vadd.f32 0.0, %v2808
        %v2810 = vpop.f32.mrb[0].mxu0
        %v2811 = vadd.f32 0.0, %v2810
        %2812 = vdwg.mxu0
        %2813 = vmatprep.subr.mxu0 %v2732
        %2814 = vmatpush1.msra.mxu0 %v2730
        %2815 = vmatprep.subr.mxu0 0.0
        %2816 = vmatpush1.msra.mxu0 0.0
        %2817 = vmatprep.subr.mxu0 0.0
        %2818 = vmatpush1.msra.mxu0 0.0
        %2819 = vmatprep.subr.mxu0 0.0
        %2820 = vmatpush1.msra.mxu0 0.0
        %2821 = vmatprep.subr.mxu0 0.0
        %2822 = vmatpush1.msra.mxu0 0.0
        %2823 = vmatprep.subr.mxu0 0.0
        %2824 = vmatpush1.msra.mxu0 0.0
        %2825 = vmatprep.subr.mxu0 0.0
        %2826 = vmatpush1.msra.mxu0 0.0
        %2827 = vmatprep.subr.mxu0 0.0
        %2828 = vmatpush1.msra.mxu0 0.0
        %2829 = vmatprep.subr.mxu0 0.0
        %2830 = vmatpush1.msra.mxu0 0.0
        %2831 = vmatprep.subr.mxu0 0.0
        %2832 = vmatpush1.msra.mxu0 0.0
        %2833 = vmatprep.subr.mxu0 0.0
        %2834 = vmatpush1.msra.mxu0 0.0
        %2835 = vmatprep.subr.mxu0 0.0
        %2836 = vmatpush1.msra.mxu0 0.0
        %2837 = vmatprep.subr.mxu0 0.0
        %2838 = vmatpush1.msra.mxu0 0.0
        %2839 = vmatprep.subr.mxu0 0.0
        %2840 = vmatpush1.msra.mxu0 0.0
        %2841 = vmatprep.subr.mxu0 0.0
        %2842 = vmatpush1.msra.mxu0 0.0
        %2843 = vmatprep.subr.mxu0 0.0
        %2844 = vmatpush1.msra.mxu0 0.0
        %2845 = vmatprep.subr.mxu0 0.0
        %2846 = vmatpush1.msra.mxu0 0.0
        %2847 = vmatprep.subr.mxu0 0.0
        %2848 = vmatpush1.msra.mxu0 0.0
        %2849 = vmatprep.subr.mxu0 0.0
        %2850 = vmatpush1.msra.mxu0 0.0
        %2851 = vmatprep.subr.mxu0 0.0
        %2852 = vmatpush1.msra.mxu0 0.0
        %2853 = vmatprep.subr.mxu0 0.0
        %2854 = vmatpush1.msra.mxu0 0.0
        %2855 = vmatprep.subr.mxu0 0.0
        %2856 = vmatpush1.msra.mxu0 0.0
        %2857 = vmatprep.subr.mxu0 0.0
        %2858 = vmatpush1.msra.mxu0 0.0
        %2859 = vmatprep.subr.mxu0 0.0
        %2860 = vmatpush1.msra.mxu0 0.0
        %2861 = vmatprep.subr.mxu0 0.0
        %2862 = vmatpush1.msra.mxu0 0.0
        %2863 = vmatprep.subr.mxu0 0.0
        %2864 = vmatpush1.msra.mxu0 0.0
        %2865 = vmatprep.subr.mxu0 0.0
        %2866 = vmatpush1.msra.mxu0 0.0
        %2867 = vmatprep.subr.mxu0 0.0
        %2868 = vmatpush1.msra.mxu0 0.0
        %2869 = vmatprep.subr.mxu0 0.0
        %2870 = vmatpush1.msra.mxu0 0.0
        %2871 = vmatprep.subr.mxu0 0.0
        %2872 = vmatpush1.msra.mxu0 0.0
        %2873 = vmatprep.subr.mxu0 0.0
        %2874 = vmatpush1.msra.mxu0 0.0
        %2875 = vmatprep.subr.mxu0 0.0
        %2876 = vmatpush1.msra.mxu0 0.0
        %2877 = vmatprep.mubr.f32.mxu0 0.0
        %2878 = vmatmul.mubr.f32.gmra.mrb[0].mxu0 %v2724
        %v2879 = vpop.f32.mrb[0].mxu0
        %v2880 = vadd.f32 0.0, %v2879
        %v2881 = vpop.f32.mrb[0].mxu0
        %v2882 = vadd.f32 0.0, %v2881
        %2883 = vdwg.mxu0
        %2884 = vmatprep.subr.mxu0 %v2736
        %2885 = vmatpush1.msra.mxu0 %v2734
        %2886 = vmatprep.subr.mxu0 0.0
        %2887 = vmatpush1.msra.mxu0 0.0
        %2888 = vmatprep.subr.mxu0 0.0
        %2889 = vmatpush1.msra.mxu0 0.0
        %2890 = vmatprep.subr.mxu0 0.0
        %2891 = vmatpush1.msra.mxu0 0.0
        %2892 = vmatprep.subr.mxu0 0.0
        %2893 = vmatpush1.msra.mxu0 0.0
        %2894 = vmatprep.subr.mxu0 0.0
        %2895 = vmatpush1.msra.mxu0 0.0
        %2896 = vmatprep.subr.mxu0 0.0
        %2897 = vmatpush1.msra.mxu0 0.0
        %2898 = vmatprep.subr.mxu0 0.0
        %2899 = vmatpush1.msra.mxu0 0.0
        %2900 = vmatprep.subr.mxu0 0.0
        %2901 = vmatpush1.msra.mxu0 0.0
        %2902 = vmatprep.subr.mxu0 0.0
        %2903 = vmatpush1.msra.mxu0 0.0
        %2904 = vmatprep.subr.mxu0 0.0
        %2905 = vmatpush1.msra.mxu0 0.0
        %2906 = vmatprep.subr.mxu0 0.0
        %2907 = vmatpush1.msra.mxu0 0.0
        %2908 = vmatprep.subr.mxu0 0.0
        %2909 = vmatpush1.msra.mxu0 0.0
        %2910 = vmatprep.subr.mxu0 0.0
        %2911 = vmatpush1.msra.mxu0 0.0
        %2912 = vmatprep.subr.mxu0 0.0
        %2913 = vmatpush1.msra.mxu0 0.0
        %2914 = vmatprep.subr.mxu0 0.0
        %2915 = vmatpush1.msra.mxu0 0.0
        %2916 = vmatprep.subr.mxu0 0.0
        %2917 = vmatpush1.msra.mxu0 0.0
        %2918 = vmatprep.subr.mxu0 0.0
        %2919 = vmatpush1.msra.mxu0 0.0
        %2920 = vmatprep.subr.mxu0 0.0
        %2921 = vmatpush1.msra.mxu0 0.0
        %2922 = vmatprep.subr.mxu0 0.0
        %2923 = vmatpush1.msra.mxu0 0.0
        %2924 = vmatprep.subr.mxu0 0.0
        %2925 = vmatpush1.msra.mxu0 0.0
        %2926 = vmatprep.subr.mxu0 0.0
        %2927 = vmatpush1.msra.mxu0 0.0
        %2928 = vmatprep.subr.mxu0 0.0
        %2929 = vmatpush1.msra.mxu0 0.0
        %2930 = vmatprep.subr.mxu0 0.0
        %2931 = vmatpush1.msra.mxu0 0.0
        %2932 = vmatprep.subr.mxu0 0.0
        %2933 = vmatpush1.msra.mxu0 0.0
        %2934 = vmatprep.subr.mxu0 0.0
        %2935 = vmatpush1.msra.mxu0 0.0
        %2936 = vmatprep.subr.mxu0 0.0
        %2937 = vmatpush1.msra.mxu0 0.0
        %2938 = vmatprep.subr.mxu0 0.0
        %2939 = vmatpush1.msra.mxu0 0.0
        %2940 = vmatprep.subr.mxu0 0.0
        %2941 = vmatpush1.msra.mxu0 0.0
        %2942 = vmatprep.subr.mxu0 0.0
        %2943 = vmatpush1.msra.mxu0 0.0
        %2944 = vmatprep.subr.mxu0 0.0
        %2945 = vmatpush1.msra.mxu0 0.0
        %2946 = vmatprep.subr.mxu0 0.0
        %2947 = vmatpush1.msra.mxu0 0.0
        %2948 = vmatprep.mubr.f32.mxu0 0.0
        %2949 = vmatmul.mubr.f32.gmra.mrb[0].mxu0 %v2724
        %v2950 = vpop.f32.mrb[0].mxu0
        %v2951 = vadd.f32 0.0, %v2950
        %v2952 = vpop.f32.mrb[0].mxu0
        %v2953 = vadd.f32 0.0, %v2952
        %2954 = vdwg.mxu0
        %2955 = vmatprep.subr.mxu0 %v2740
        %2956 = vmatpush1.msra.mxu0 %v2738
        %2957 = vmatprep.subr.mxu0 0.0
        %2958 = vmatpush1.msra.mxu0 0.0
        %2959 = vmatprep.subr.mxu0 0.0
        %2960 = vmatpush1.msra.mxu0 0.0
        %2961 = vmatprep.subr.mxu0 0.0
        %2962 = vmatpush1.msra.mxu0 0.0
        %2963 = vmatprep.subr.mxu0 0.0
        %2964 = vmatpush1.msra.mxu0 0.0
        %2965 = vmatprep.subr.mxu0 0.0
        %2966 = vmatpush1.msra.mxu0 0.0
        %2967 = vmatprep.subr.mxu0 0.0
        %2968 = vmatpush1.msra.mxu0 0.0
        %2969 = vmatprep.subr.mxu0 0.0
        %2970 = vmatpush1.msra.mxu0 0.0
        %2971 = vmatprep.subr.mxu0 0.0
        %2972 = vmatpush1.msra.mxu0 0.0
        %2973 = vmatprep.subr.mxu0 0.0
        %2974 = vmatpush1.msra.mxu0 0.0
        %2975 = vmatprep.subr.mxu0 0.0
        %2976 = vmatpush1.msra.mxu0 0.0
        %2977 = vmatprep.subr.mxu0 0.0
        %2978 = vmatpush1.msra.mxu0 0.0
        %2979 = vmatprep.subr.mxu0 0.0
        %2980 = vmatpush1.msra.mxu0 0.0
        %2981 = vmatprep.subr.mxu0 0.0
        %2982 = vmatpush1.msra.mxu0 0.0
        %2983 = vmatprep.subr.mxu0 0.0
        %2984 = vmatpush1.msra.mxu0 0.0
        %2985 = vmatprep.subr.mxu0 0.0
        %2986 = vmatpush1.msra.mxu0 0.0
        %2987 = vmatprep.subr.mxu0 0.0
        %2988 = vmatpush1.msra.mxu0 0.0
        %2989 = vmatprep.subr.mxu0 0.0
        %2990 = vmatpush1.msra.mxu0 0.0
        %2991 = vmatprep.subr.mxu0 0.0
        %2992 = vmatpush1.msra.mxu0 0.0
        %2993 = vmatprep.subr.mxu0 0.0
        %2994 = vmatpush1.msra.mxu0 0.0
        %2995 = vmatprep.subr.mxu0 0.0
        %2996 = vmatpush1.msra.mxu0 0.0
        %2997 = vmatprep.subr.mxu0 0.0
        %2998 = vmatpush1.msra.mxu0 0.0
        %2999 = vmatprep.subr.mxu0 0.0
        %3000 = vmatpush1.msra.mxu0 0.0
        %3001 = vmatprep.subr.mxu0 0.0
        %3002 = vmatpush1.msra.mxu0 0.0
        %3003 = vmatprep.subr.mxu0 0.0
        %3004 = vmatpush1.msra.mxu0 0.0
        %3005 = vmatprep.subr.mxu0 0.0
        %3006 = vmatpush1.msra.mxu0 0.0
        %3007 = vmatprep.subr.mxu0 0.0
        %3008 = vmatpush1.msra.mxu0 0.0
        %3009 = vmatprep.subr.mxu0 0.0
        %3010 = vmatpush1.msra.mxu0 0.0
        %3011 = vmatprep.subr.mxu0 0.0
        %3012 = vmatpush1.msra.mxu0 0.0
        %3013 = vmatprep.subr.mxu0 0.0
        %3014 = vmatpush1.msra.mxu0 0.0
        %3015 = vmatprep.subr.mxu0 0.0
        %3016 = vmatpush1.msra.mxu0 0.0
        %3017 = vmatprep.subr.mxu0 0.0
        %3018 = vmatpush1.msra.mxu0 0.0
        %3019 = vmatprep.mubr.f32.mxu0 0.0
        %3020 = vmatmul.mubr.f32.gmra.mrb[0].mxu0 %v2724
        %v3021 = vpop.f32.mrb[0].mxu0
        %v3022 = vadd.f32 0.0, %v3021
        %v3023 = vpop.f32.mrb[0].mxu0
        %v3024 = vadd.f32 0.0, %v3023
        %3025 = vdwg.mxu0
        %3026 = vrot.lane.b32.xlu0 %v2678, 96
        %v3027 = vpop.permute.xlu0 %3026
        %3028 = vrot.lane.b32.xlu0 %v2692, 96
        %v3029 = vpop.permute.xlu0 %3028
        %3030 = vrot.lane.b32.xlu0 %v2679, 96
        %v3031 = vpop.permute.xlu0 %3030
        %3032 = vrot.lane.b32.xlu0 %v2693, 96
        %v3033 = vpop.permute.xlu0 %3032
        %3034 = vrot.lane.b32.xlu0 %v2680, 96
        %v3035 = vpop.permute.xlu0 %3034
        %3036 = vrot.lane.b32.xlu0 %v2694, 96
        %v3037 = vpop.permute.xlu0 %3036
        %3038 = vrot.lane.b32.xlu0 %v2681, 96
        %v3039 = vpop.permute.xlu0 %3038
        %3040 = vrot.lane.b32.xlu0 %v2695, 96
        %v3041 = vpop.permute.xlu0 %3040
        %3042 = vrot.lane.b32.xlu0 %v2682, 96
        %v3043 = vpop.permute.xlu0 %3042
        %vm3044 = vcmask 785408
        %v3045 = vsel %vm3044, %v3027, %v3029
        %v3046 = vsel %vm3044, %v3029, %v3031
        %v3047 = vsel %vm3044, %v3031, %v3033
        %v3048 = vsel %vm3044, %v3033, %v3035
        %v3049 = vsel %vm3044, %v3035, %v3037
        %v3050 = vsel %vm3044, %v3037, %v3039
        %v3051 = vsel %vm3044, %v3039, %v3041
        %v3052 = vsel %vm3044, %v3041, %v3043
        %v3054 = vsel %vm1632, %v2684, 0
        %v3056 = vsel %vm1636, %v3045, 0
        %v3058 = vsel %vm1636, %v3046, 0
        %v3060 = vsel %vm1636, %v3047, 0
        %v3062 = vsel %vm1636, %v3048, 0
        %v3064 = vsel %vm1636, %v3049, 0
        %v3066 = vsel %vm1636, %v3050, 0
        %v3068 = vsel %vm1636, %v3051, 0
        %v3070 = vsel %vm1636, %v3052, 0
        %3072 = vmatprep.subr.mxu0 %v3058
        %3073 = vmatpush1.msra.mxu0 %v3056
        %3074 = vmatprep.subr.mxu0 0.0
        %3075 = vmatpush1.msra.mxu0 0.0
        %3076 = vmatprep.subr.mxu0 0.0
        %3077 = vmatpush1.msra.mxu0 0.0
        %3078 = vmatprep.subr.mxu0 0.0
        %3079 = vmatpush1.msra.mxu0 0.0
        %3080 = vmatprep.subr.mxu0 0.0
        %3081 = vmatpush1.msra.mxu0 0.0
        %3082 = vmatprep.subr.mxu0 0.0
        %3083 = vmatpush1.msra.mxu0 0.0
        %3084 = vmatprep.subr.mxu0 0.0
        %3085 = vmatpush1.msra.mxu0 0.0
        %3086 = vmatprep.subr.mxu0 0.0
        %3087 = vmatpush1.msra.mxu0 0.0
        %3088 = vmatprep.subr.mxu0 0.0
        %3089 = vmatpush1.msra.mxu0 0.0
        %3090 = vmatprep.subr.mxu0 0.0
        %3091 = vmatpush1.msra.mxu0 0.0
        %3092 = vmatprep.subr.mxu0 0.0
        %3093 = vmatpush1.msra.mxu0 0.0
        %3094 = vmatprep.subr.mxu0 0.0
        %3095 = vmatpush1.msra.mxu0 0.0
        %3096 = vmatprep.subr.mxu0 0.0
        %3097 = vmatpush1.msra.mxu0 0.0
        %3098 = vmatprep.subr.mxu0 0.0
        %3099 = vmatpush1.msra.mxu0 0.0
        %3100 = vmatprep.subr.mxu0 0.0
        %3101 = vmatpush1.msra.mxu0 0.0
        %3102 = vmatprep.subr.mxu0 0.0
        %3103 = vmatpush1.msra.mxu0 0.0
        %3104 = vmatprep.subr.mxu0 0.0
        %3105 = vmatpush1.msra.mxu0 0.0
        %3106 = vmatprep.subr.mxu0 0.0
        %3107 = vmatpush1.msra.mxu0 0.0
        %3108 = vmatprep.subr.mxu0 0.0
        %3109 = vmatpush1.msra.mxu0 0.0
        %3110 = vmatprep.subr.mxu0 0.0
        %3111 = vmatpush1.msra.mxu0 0.0
        %3112 = vmatprep.subr.mxu0 0.0
        %3113 = vmatpush1.msra.mxu0 0.0
        %3114 = vmatprep.subr.mxu0 0.0
        %3115 = vmatpush1.msra.mxu0 0.0
        %3116 = vmatprep.subr.mxu0 0.0
        %3117 = vmatpush1.msra.mxu0 0.0
        %3118 = vmatprep.subr.mxu0 0.0
        %3119 = vmatpush1.msra.mxu0 0.0
        %3120 = vmatprep.subr.mxu0 0.0
        %3121 = vmatpush1.msra.mxu0 0.0
        %3122 = vmatprep.subr.mxu0 0.0
        %3123 = vmatpush1.msra.mxu0 0.0
        %3124 = vmatprep.subr.mxu0 0.0
        %3125 = vmatpush1.msra.mxu0 0.0
        %3126 = vmatprep.subr.mxu0 0.0
        %3127 = vmatpush1.msra.mxu0 0.0
        %3128 = vmatprep.subr.mxu0 0.0
        %3129 = vmatpush1.msra.mxu0 0.0
        %3130 = vmatprep.subr.mxu0 0.0
        %3131 = vmatpush1.msra.mxu0 0.0
        %3132 = vmatprep.subr.mxu0 0.0
        %3133 = vmatpush1.msra.mxu0 0.0
        %3134 = vmatprep.subr.mxu0 0.0
        %3135 = vmatpush1.msra.mxu0 0.0
        %3136 = vmatprep.mubr.f32.mxu0 0.0
        %3137 = vmatmul.mubr.f32.gmra.mrb[0].mxu0 %v3054
        %v3138 = vpop.f32.mrb[0].mxu0
        %v3139 = vadd.f32 %v2809, %v3138
        %v3140 = vpop.f32.mrb[0].mxu0
        %v3141 = vadd.f32 %v2811, %v3140
        %3142 = vdwg.mxu0
        %3143 = vmatprep.subr.mxu0 %v3062
        %3144 = vmatpush1.msra.mxu0 %v3060
        %3145 = vmatprep.subr.mxu0 0.0
        %3146 = vmatpush1.msra.mxu0 0.0
        %3147 = vmatprep.subr.mxu0 0.0
        %3148 = vmatpush1.msra.mxu0 0.0
        %3149 = vmatprep.subr.mxu0 0.0
        %3150 = vmatpush1.msra.mxu0 0.0
        %3151 = vmatprep.subr.mxu0 0.0
        %3152 = vmatpush1.msra.mxu0 0.0
        %3153 = vmatprep.subr.mxu0 0.0
        %3154 = vmatpush1.msra.mxu0 0.0
        %3155 = vmatprep.subr.mxu0 0.0
        %3156 = vmatpush1.msra.mxu0 0.0
        %3157 = vmatprep.subr.mxu0 0.0
        %3158 = vmatpush1.msra.mxu0 0.0
        %3159 = vmatprep.subr.mxu0 0.0
        %3160 = vmatpush1.msra.mxu0 0.0
        %3161 = vmatprep.subr.mxu0 0.0
        %3162 = vmatpush1.msra.mxu0 0.0
        %3163 = vmatprep.subr.mxu0 0.0
        %3164 = vmatpush1.msra.mxu0 0.0
        %3165 = vmatprep.subr.mxu0 0.0
        %3166 = vmatpush1.msra.mxu0 0.0
        %3167 = vmatprep.subr.mxu0 0.0
        %3168 = vmatpush1.msra.mxu0 0.0
        %3169 = vmatprep.subr.mxu0 0.0
        %3170 = vmatpush1.msra.mxu0 0.0
        %3171 = vmatprep.subr.mxu0 0.0
        %3172 = vmatpush1.msra.mxu0 0.0
        %3173 = vmatprep.subr.mxu0 0.0
        %3174 = vmatpush1.msra.mxu0 0.0
        %3175 = vmatprep.subr.mxu0 0.0
        %3176 = vmatpush1.msra.mxu0 0.0
        %3177 = vmatprep.subr.mxu0 0.0
        %3178 = vmatpush1.msra.mxu0 0.0
        %3179 = vmatprep.subr.mxu0 0.0
        %3180 = vmatpush1.msra.mxu0 0.0
        %3181 = vmatprep.subr.mxu0 0.0
        %3182 = vmatpush1.msra.mxu0 0.0
        %3183 = vmatprep.subr.mxu0 0.0
        %3184 = vmatpush1.msra.mxu0 0.0
        %3185 = vmatprep.subr.mxu0 0.0
        %3186 = vmatpush1.msra.mxu0 0.0
        %3187 = vmatprep.subr.mxu0 0.0
        %3188 = vmatpush1.msra.mxu0 0.0
        %3189 = vmatprep.subr.mxu0 0.0
        %3190 = vmatpush1.msra.mxu0 0.0
        %3191 = vmatprep.subr.mxu0 0.0
        %3192 = vmatpush1.msra.mxu0 0.0
        %3193 = vmatprep.subr.mxu0 0.0
        %3194 = vmatpush1.msra.mxu0 0.0
        %3195 = vmatprep.subr.mxu0 0.0
        %3196 = vmatpush1.msra.mxu0 0.0
        %3197 = vmatprep.subr.mxu0 0.0
        %3198 = vmatpush1.msra.mxu0 0.0
        %3199 = vmatprep.subr.mxu0 0.0
        %3200 = vmatpush1.msra.mxu0 0.0
        %3201 = vmatprep.subr.mxu0 0.0
        %3202 = vmatpush1.msra.mxu0 0.0
        %3203 = vmatprep.subr.mxu0 0.0
        %3204 = vmatpush1.msra.mxu0 0.0
        %3205 = vmatprep.subr.mxu0 0.0
        %3206 = vmatpush1.msra.mxu0 0.0
        %3207 = vmatprep.mubr.f32.mxu0 0.0
        %3208 = vmatmul.mubr.f32.gmra.mrb[0].mxu0 %v3054
        %v3209 = vpop.f32.mrb[0].mxu0
        %v3210 = vadd.f32 %v2880, %v3209
        %v3211 = vpop.f32.mrb[0].mxu0
        %v3212 = vadd.f32 %v2882, %v3211
        %3213 = vdwg.mxu0
        %3214 = vmatprep.subr.mxu0 %v3066
        %3215 = vmatpush1.msra.mxu0 %v3064
        %3216 = vmatprep.subr.mxu0 0.0
        %3217 = vmatpush1.msra.mxu0 0.0
        %3218 = vmatprep.subr.mxu0 0.0
        %3219 = vmatpush1.msra.mxu0 0.0
        %3220 = vmatprep.subr.mxu0 0.0
        %3221 = vmatpush1.msra.mxu0 0.0
        %3222 = vmatprep.subr.mxu0 0.0
        %3223 = vmatpush1.msra.mxu0 0.0
        %3224 = vmatprep.subr.mxu0 0.0
        %3225 = vmatpush1.msra.mxu0 0.0
        %3226 = vmatprep.subr.mxu0 0.0
        %3227 = vmatpush1.msra.mxu0 0.0
        %3228 = vmatprep.subr.mxu0 0.0
        %3229 = vmatpush1.msra.mxu0 0.0
        %3230 = vmatprep.subr.mxu0 0.0
        %3231 = vmatpush1.msra.mxu0 0.0
        %3232 = vmatprep.subr.mxu0 0.0
        %3233 = vmatpush1.msra.mxu0 0.0
        %3234 = vmatprep.subr.mxu0 0.0
        %3235 = vmatpush1.msra.mxu0 0.0
        %3236 = vmatprep.subr.mxu0 0.0
        %3237 = vmatpush1.msra.mxu0 0.0
        %3238 = vmatprep.subr.mxu0 0.0
        %3239 = vmatpush1.msra.mxu0 0.0
        %3240 = vmatprep.subr.mxu0 0.0
        %3241 = vmatpush1.msra.mxu0 0.0
        %3242 = vmatprep.subr.mxu0 0.0
        %3243 = vmatpush1.msra.mxu0 0.0
        %3244 = vmatprep.subr.mxu0 0.0
        %3245 = vmatpush1.msra.mxu0 0.0
        %3246 = vmatprep.subr.mxu0 0.0
        %3247 = vmatpush1.msra.mxu0 0.0
        %3248 = vmatprep.subr.mxu0 0.0
        %3249 = vmatpush1.msra.mxu0 0.0
        %3250 = vmatprep.subr.mxu0 0.0
        %3251 = vmatpush1.msra.mxu0 0.0
        %3252 = vmatprep.subr.mxu0 0.0
        %3253 = vmatpush1.msra.mxu0 0.0
        %3254 = vmatprep.subr.mxu0 0.0
        %3255 = vmatpush1.msra.mxu0 0.0
        %3256 = vmatprep.subr.mxu0 0.0
        %3257 = vmatpush1.msra.mxu0 0.0
        %3258 = vmatprep.subr.mxu0 0.0
        %3259 = vmatpush1.msra.mxu0 0.0
        %3260 = vmatprep.subr.mxu0 0.0
        %3261 = vmatpush1.msra.mxu0 0.0
        %3262 = vmatprep.subr.mxu0 0.0
        %3263 = vmatpush1.msra.mxu0 0.0
        %3264 = vmatprep.subr.mxu0 0.0
        %3265 = vmatpush1.msra.mxu0 0.0
        %3266 = vmatprep.subr.mxu0 0.0
        %3267 = vmatpush1.msra.mxu0 0.0
        %3268 = vmatprep.subr.mxu0 0.0
        %3269 = vmatpush1.msra.mxu0 0.0
        %3270 = vmatprep.subr.mxu0 0.0
        %3271 = vmatpush1.msra.mxu0 0.0
        %3272 = vmatprep.subr.mxu0 0.0
        %3273 = vmatpush1.msra.mxu0 0.0
        %3274 = vmatprep.subr.mxu0 0.0
        %3275 = vmatpush1.msra.mxu0 0.0
        %3276 = vmatprep.subr.mxu0 0.0
        %3277 = vmatpush1.msra.mxu0 0.0
        %3278 = vmatprep.mubr.f32.mxu0 0.0
        %3279 = vmatmul.mubr.f32.gmra.mrb[0].mxu0 %v3054
        %v3280 = vpop.f32.mrb[0].mxu0
        %v3281 = vadd.f32 %v2951, %v3280
        %v3282 = vpop.f32.mrb[0].mxu0
        %v3283 = vadd.f32 %v2953, %v3282
        %3284 = vdwg.mxu0
        %3285 = vmatprep.subr.mxu0 %v3070
        %3286 = vmatpush1.msra.mxu0 %v3068
        %3287 = vmatprep.subr.mxu0 0.0
        %3288 = vmatpush1.msra.mxu0 0.0
        %3289 = vmatprep.subr.mxu0 0.0
        %3290 = vmatpush1.msra.mxu0 0.0
        %3291 = vmatprep.subr.mxu0 0.0
        %3292 = vmatpush1.msra.mxu0 0.0
        %3293 = vmatprep.subr.mxu0 0.0
        %3294 = vmatpush1.msra.mxu0 0.0
        %3295 = vmatprep.subr.mxu0 0.0
        %3296 = vmatpush1.msra.mxu0 0.0
        %3297 = vmatprep.subr.mxu0 0.0
        %3298 = vmatpush1.msra.mxu0 0.0
        %3299 = vmatprep.subr.mxu0 0.0
        %3300 = vmatpush1.msra.mxu0 0.0
        %3301 = vmatprep.subr.mxu0 0.0
        %3302 = vmatpush1.msra.mxu0 0.0
        %3303 = vmatprep.subr.mxu0 0.0
        %3304 = vmatpush1.msra.mxu0 0.0
        %3305 = vmatprep.subr.mxu0 0.0
        %3306 = vmatpush1.msra.mxu0 0.0
        %3307 = vmatprep.subr.mxu0 0.0
        %3308 = vmatpush1.msra.mxu0 0.0
        %3309 = vmatprep.subr.mxu0 0.0
        %3310 = vmatpush1.msra.mxu0 0.0
        %3311 = vmatprep.subr.mxu0 0.0
        %3312 = vmatpush1.msra.mxu0 0.0
        %3313 = vmatprep.subr.mxu0 0.0
        %3314 = vmatpush1.msra.mxu0 0.0
        %3315 = vmatprep.subr.mxu0 0.0
        %3316 = vmatpush1.msra.mxu0 0.0
        %3317 = vmatprep.subr.mxu0 0.0
        %3318 = vmatpush1.msra.mxu0 0.0
        %3319 = vmatprep.subr.mxu0 0.0
        %3320 = vmatpush1.msra.mxu0 0.0
        %3321 = vmatprep.subr.mxu0 0.0
        %3322 = vmatpush1.msra.mxu0 0.0
        %3323 = vmatprep.subr.mxu0 0.0
        %3324 = vmatpush1.msra.mxu0 0.0
        %3325 = vmatprep.subr.mxu0 0.0
        %3326 = vmatpush1.msra.mxu0 0.0
        %3327 = vmatprep.subr.mxu0 0.0
        %3328 = vmatpush1.msra.mxu0 0.0
        %3329 = vmatprep.subr.mxu0 0.0
        %3330 = vmatpush1.msra.mxu0 0.0
        %3331 = vmatprep.subr.mxu0 0.0
        %3332 = vmatpush1.msra.mxu0 0.0
        %3333 = vmatprep.subr.mxu0 0.0
        %3334 = vmatpush1.msra.mxu0 0.0
        %3335 = vmatprep.subr.mxu0 0.0
        %3336 = vmatpush1.msra.mxu0 0.0
        %3337 = vmatprep.subr.mxu0 0.0
        %3338 = vmatpush1.msra.mxu0 0.0
        %3339 = vmatprep.subr.mxu0 0.0
        %3340 = vmatpush1.msra.mxu0 0.0
        %3341 = vmatprep.subr.mxu0 0.0
        %3342 = vmatpush1.msra.mxu0 0.0
        %3343 = vmatprep.subr.mxu0 0.0
        %3344 = vmatpush1.msra.mxu0 0.0
        %3345 = vmatprep.subr.mxu0 0.0
        %3346 = vmatpush1.msra.mxu0 0.0
        %3347 = vmatprep.subr.mxu0 0.0
        %3348 = vmatpush1.msra.mxu0 0.0
        %3349 = vmatprep.mubr.f32.mxu0 0.0
        %3350 = vmatmul.mubr.f32.gmra.mrb[0].mxu0 %v3054
        %v3351 = vpop.f32.mrb[0].mxu0
        %v3352 = vadd.f32 %v3022, %v3351
        %v3353 = vpop.f32.mrb[0].mxu0
        %v3354 = vadd.f32 %v3024, %v3353
        %3355 = vdwg.mxu0
        %v3356 = vld [vmem:[#allocation2] sm:$0xff]
        %v3357 = vld [vmem:[#allocation2 + $0x8] sm:$0xff]
        %v3358 = vld [vmem:[#allocation2 + $0x10] sm:$0xff]
        %v3359 = vld [vmem:[#allocation2 + $0x18] sm:$0xff]
        %v3360 = vld [vmem:[#allocation2 + $0x20] sm:$0xf]
        %s3361 = scalar_lea.vmem %s2, 56
        %v3362 = vld [vmem:[%s3361] sm:$0xff]
        %v3368 = vcombine.high %v3356, %v3356
        %v3369 = vcombine.high %v3357, %v3357
        %v3370 = vcombine.high %v3358, %v3358
        %v3371 = vcombine.high %v3359, %v3359
        %3372 = vrot.lane.b32.xlu0 %v3356, 32
        %v3373 = vpop.permute.xlu0 %3372
        %3374 = vrot.lane.b32.xlu0 %v3368, 32
        %v3375 = vpop.permute.xlu0 %3374
        %3376 = vrot.lane.b32.xlu0 %v3357, 32
        %v3377 = vpop.permute.xlu0 %3376
        %3378 = vrot.lane.b32.xlu0 %v3369, 32
        %v3379 = vpop.permute.xlu0 %3378
        %3380 = vrot.lane.b32.xlu0 %v3358, 32
        %v3381 = vpop.permute.xlu0 %3380
        %3382 = vrot.lane.b32.xlu0 %v3370, 32
        %v3383 = vpop.permute.xlu0 %3382
        %3384 = vrot.lane.b32.xlu0 %v3359, 32
        %v3385 = vpop.permute.xlu0 %3384
        %3386 = vrot.lane.b32.xlu0 %v3371, 32
        %v3387 = vpop.permute.xlu0 %3386
        %3388 = vrot.lane.b32.xlu0 %v3360, 32
        %v3389 = vpop.permute.xlu0 %3388
        %vm3390 = vcmask 261120
        %v3391 = vsel %vm3390, %v3373, %v3375
        %v3392 = vsel %vm3390, %v3375, %v3377
        %v3393 = vsel %vm3390, %v3377, %v3379
        %v3394 = vsel %vm3390, %v3379, %v3381
        %v3395 = vsel %vm3390, %v3381, %v3383
        %v3396 = vsel %vm3390, %v3383, %v3385
        %v3397 = vsel %vm3390, %v3385, %v3387
        %v3398 = vsel %vm3390, %v3387, %v3389
        %v3400 = vsel %vm1632, %v3362, 0
        %v3402 = vsel %vm1636, %v3391, 0
        %v3404 = vsel %vm1636, %v3392, 0
        %v3406 = vsel %vm1636, %v3393, 0
        %v3408 = vsel %vm1636, %v3394, 0
        %v3410 = vsel %vm1636, %v3395, 0
        %v3412 = vsel %vm1636, %v3396, 0
        %v3414 = vsel %vm1636, %v3397, 0
        %v3416 = vsel %vm1636, %v3398, 0
        %3418 = vmatprep.subr.mxu0 %v3404
        %3419 = vmatpush1.msra.mxu0 %v3402
        %3420 = vmatprep.subr.mxu0 0.0
        %3421 = vmatpush1.msra.mxu0 0.0
        %3422 = vmatprep.subr.mxu0 0.0
        %3423 = vmatpush1.msra.mxu0 0.0
        %3424 = vmatprep.subr.mxu0 0.0
        %3425 = vmatpush1.msra.mxu0 0.0
        %3426 = vmatprep.subr.mxu0 0.0
        %3427 = vmatpush1.msra.mxu0 0.0
        %3428 = vmatprep.subr.mxu0 0.0
        %3429 = vmatpush1.msra.mxu0 0.0
        %3430 = vmatprep.subr.mxu0 0.0
        %3431 = vmatpush1.msra.mxu0 0.0
        %3432 = vmatprep.subr.mxu0 0.0
        %3433 = vmatpush1.msra.mxu0 0.0
        %3434 = vmatprep.subr.mxu0 0.0
        %3435 = vmatpush1.msra.mxu0 0.0
        %3436 = vmatprep.subr.mxu0 0.0
        %3437 = vmatpush1.msra.mxu0 0.0
        %3438 = vmatprep.subr.mxu0 0.0
        %3439 = vmatpush1.msra.mxu0 0.0
        %3440 = vmatprep.subr.mxu0 0.0
        %3441 = vmatpush1.msra.mxu0 0.0
        %3442 = vmatprep.subr.mxu0 0.0
        %3443 = vmatpush1.msra.mxu0 0.0
        %3444 = vmatprep.subr.mxu0 0.0
        %3445 = vmatpush1.msra.mxu0 0.0
        %3446 = vmatprep.subr.mxu0 0.0
        %3447 = vmatpush1.msra.mxu0 0.0
        %3448 = vmatprep.subr.mxu0 0.0
        %3449 = vmatpush1.msra.mxu0 0.0
        %3450 = vmatprep.subr.mxu0 0.0
        %3451 = vmatpush1.msra.mxu0 0.0
        %3452 = vmatprep.subr.mxu0 0.0
        %3453 = vmatpush1.msra.mxu0 0.0
        %3454 = vmatprep.subr.mxu0 0.0
        %3455 = vmatpush1.msra.mxu0 0.0
        %3456 = vmatprep.subr.mxu0 0.0
        %3457 = vmatpush1.msra.mxu0 0.0
        %3458 = vmatprep.subr.mxu0 0.0
        %3459 = vmatpush1.msra.mxu0 0.0
        %3460 = vmatprep.subr.mxu0 0.0
        %3461 = vmatpush1.msra.mxu0 0.0
        %3462 = vmatprep.subr.mxu0 0.0
        %3463 = vmatpush1.msra.mxu0 0.0
        %3464 = vmatprep.subr.mxu0 0.0
        %3465 = vmatpush1.msra.mxu0 0.0
        %3466 = vmatprep.subr.mxu0 0.0
        %3467 = vmatpush1.msra.mxu0 0.0
        %3468 = vmatprep.subr.mxu0 0.0
        %3469 = vmatpush1.msra.mxu0 0.0
        %3470 = vmatprep.subr.mxu0 0.0
        %3471 = vmatpush1.msra.mxu0 0.0
        %3472 = vmatprep.subr.mxu0 0.0
        %3473 = vmatpush1.msra.mxu0 0.0
        %3474 = vmatprep.subr.mxu0 0.0
        %3475 = vmatpush1.msra.mxu0 0.0
        %3476 = vmatprep.subr.mxu0 0.0
        %3477 = vmatpush1.msra.mxu0 0.0
        %3478 = vmatprep.subr.mxu0 0.0
        %3479 = vmatpush1.msra.mxu0 0.0
        %3480 = vmatprep.subr.mxu0 0.0
        %3481 = vmatpush1.msra.mxu0 0.0
        %3482 = vmatprep.mubr.f32.mxu0 0.0
        %3483 = vmatmul.mubr.f32.gmra.mrb[0].mxu0 %v3400
        %v3484 = vpop.f32.mrb[0].mxu0
        %v3485 = vadd.f32 0.0, %v3484
        %v3486 = vpop.f32.mrb[0].mxu0
        %v3487 = vadd.f32 0.0, %v3486
        %3488 = vdwg.mxu0
        %3489 = vmatprep.subr.mxu0 %v3408
        %3490 = vmatpush1.msra.mxu0 %v3406
        %3491 = vmatprep.subr.mxu0 0.0
        %3492 = vmatpush1.msra.mxu0 0.0
        %3493 = vmatprep.subr.mxu0 0.0
        %3494 = vmatpush1.msra.mxu0 0.0
        %3495 = vmatprep.subr.mxu0 0.0
        %3496 = vmatpush1.msra.mxu0 0.0
        %3497 = vmatprep.subr.mxu0 0.0
        %3498 = vmatpush1.msra.mxu0 0.0
        %3499 = vmatprep.subr.mxu0 0.0
        %3500 = vmatpush1.msra.mxu0 0.0
        %3501 = vmatprep.subr.mxu0 0.0
        %3502 = vmatpush1.msra.mxu0 0.0
        %3503 = vmatprep.subr.mxu0 0.0
        %3504 = vmatpush1.msra.mxu0 0.0
        %3505 = vmatprep.subr.mxu0 0.0
        %3506 = vmatpush1.msra.mxu0 0.0
        %3507 = vmatprep.subr.mxu0 0.0
        %3508 = vmatpush1.msra.mxu0 0.0
        %3509 = vmatprep.subr.mxu0 0.0
        %3510 = vmatpush1.msra.mxu0 0.0
        %3511 = vmatprep.subr.mxu0 0.0
        %3512 = vmatpush1.msra.mxu0 0.0
        %3513 = vmatprep.subr.mxu0 0.0
        %3514 = vmatpush1.msra.mxu0 0.0
        %3515 = vmatprep.subr.mxu0 0.0
        %3516 = vmatpush1.msra.mxu0 0.0
        %3517 = vmatprep.subr.mxu0 0.0
        %3518 = vmatpush1.msra.mxu0 0.0
        %3519 = vmatprep.subr.mxu0 0.0
        %3520 = vmatpush1.msra.mxu0 0.0
        %3521 = vmatprep.subr.mxu0 0.0
        %3522 = vmatpush1.msra.mxu0 0.0
        %3523 = vmatprep.subr.mxu0 0.0
        %3524 = vmatpush1.msra.mxu0 0.0
        %3525 = vmatprep.subr.mxu0 0.0
        %3526 = vmatpush1.msra.mxu0 0.0
        %3527 = vmatprep.subr.mxu0 0.0
        %3528 = vmatpush1.msra.mxu0 0.0
        %3529 = vmatprep.subr.mxu0 0.0
        %3530 = vmatpush1.msra.mxu0 0.0
        %3531 = vmatprep.subr.mxu0 0.0
        %3532 = vmatpush1.msra.mxu0 0.0
        %3533 = vmatprep.subr.mxu0 0.0
        %3534 = vmatpush1.msra.mxu0 0.0
        %3535 = vmatprep.subr.mxu0 0.0
        %3536 = vmatpush1.msra.mxu0 0.0
        %3537 = vmatprep.subr.mxu0 0.0
        %3538 = vmatpush1.msra.mxu0 0.0
        %3539 = vmatprep.subr.mxu0 0.0
        %3540 = vmatpush1.msra.mxu0 0.0
        %3541 = vmatprep.subr.mxu0 0.0
        %3542 = vmatpush1.msra.mxu0 0.0
        %3543 = vmatprep.subr.mxu0 0.0
        %3544 = vmatpush1.msra.mxu0 0.0
        %3545 = vmatprep.subr.mxu0 0.0
        %3546 = vmatpush1.msra.mxu0 0.0
        %3547 = vmatprep.subr.mxu0 0.0
        %3548 = vmatpush1.msra.mxu0 0.0
        %3549 = vmatprep.subr.mxu0 0.0
        %3550 = vmatpush1.msra.mxu0 0.0
        %3551 = vmatprep.subr.mxu0 0.0
        %3552 = vmatpush1.msra.mxu0 0.0
        %3553 = vmatprep.mubr.f32.mxu0 0.0
        %3554 = vmatmul.mubr.f32.gmra.mrb[0].mxu0 %v3400
        %v3555 = vpop.f32.mrb[0].mxu0
        %v3556 = vadd.f32 0.0, %v3555
        %v3557 = vpop.f32.mrb[0].mxu0
        %v3558 = vadd.f32 0.0, %v3557
        %3559 = vdwg.mxu0
        %3560 = vmatprep.subr.mxu0 %v3412
        %3561 = vmatpush1.msra.mxu0 %v3410
        %3562 = vmatprep.subr.mxu0 0.0
        %3563 = vmatpush1.msra.mxu0 0.0
        %3564 = vmatprep.subr.mxu0 0.0
        %3565 = vmatpush1.msra.mxu0 0.0
        %3566 = vmatprep.subr.mxu0 0.0
        %3567 = vmatpush1.msra.mxu0 0.0
        %3568 = vmatprep.subr.mxu0 0.0
        %3569 = vmatpush1.msra.mxu0 0.0
        %3570 = vmatprep.subr.mxu0 0.0
        %3571 = vmatpush1.msra.mxu0 0.0
        %3572 = vmatprep.subr.mxu0 0.0
        %3573 = vmatpush1.msra.mxu0 0.0
        %3574 = vmatprep.subr.mxu0 0.0
        %3575 = vmatpush1.msra.mxu0 0.0
        %3576 = vmatprep.subr.mxu0 0.0
        %3577 = vmatpush1.msra.mxu0 0.0
        %3578 = vmatprep.subr.mxu0 0.0
        %3579 = vmatpush1.msra.mxu0 0.0
        %3580 = vmatprep.subr.mxu0 0.0
        %3581 = vmatpush1.msra.mxu0 0.0
        %3582 = vmatprep.subr.mxu0 0.0
        %3583 = vmatpush1.msra.mxu0 0.0
        %3584 = vmatprep.subr.mxu0 0.0
        %3585 = vmatpush1.msra.mxu0 0.0
        %3586 = vmatprep.subr.mxu0 0.0
        %3587 = vmatpush1.msra.mxu0 0.0
        %3588 = vmatprep.subr.mxu0 0.0
        %3589 = vmatpush1.msra.mxu0 0.0
        %3590 = vmatprep.subr.mxu0 0.0
        %3591 = vmatpush1.msra.mxu0 0.0
        %3592 = vmatprep.subr.mxu0 0.0
        %3593 = vmatpush1.msra.mxu0 0.0
        %3594 = vmatprep.subr.mxu0 0.0
        %3595 = vmatpush1.msra.mxu0 0.0
        %3596 = vmatprep.subr.mxu0 0.0
        %3597 = vmatpush1.msra.mxu0 0.0
        %3598 = vmatprep.subr.mxu0 0.0
        %3599 = vmatpush1.msra.mxu0 0.0
        %3600 = vmatprep.subr.mxu0 0.0
        %3601 = vmatpush1.msra.mxu0 0.0
        %3602 = vmatprep.subr.mxu0 0.0
        %3603 = vmatpush1.msra.mxu0 0.0
        %3604 = vmatprep.subr.mxu0 0.0
        %3605 = vmatpush1.msra.mxu0 0.0
        %3606 = vmatprep.subr.mxu0 0.0
        %3607 = vmatpush1.msra.mxu0 0.0
        %3608 = vmatprep.subr.mxu0 0.0
        %3609 = vmatpush1.msra.mxu0 0.0
        %3610 = vmatprep.subr.mxu0 0.0
        %3611 = vmatpush1.msra.mxu0 0.0
        %3612 = vmatprep.subr.mxu0 0.0
        %3613 = vmatpush1.msra.mxu0 0.0
        %3614 = vmatprep.subr.mxu0 0.0
        %3615 = vmatpush1.msra.mxu0 0.0
        %3616 = vmatprep.subr.mxu0 0.0
        %3617 = vmatpush1.msra.mxu0 0.0
        %3618 = vmatprep.subr.mxu0 0.0
        %3619 = vmatpush1.msra.mxu0 0.0
        %3620 = vmatprep.subr.mxu0 0.0
        %3621 = vmatpush1.msra.mxu0 0.0
        %3622 = vmatprep.subr.mxu0 0.0
        %3623 = vmatpush1.msra.mxu0 0.0
        %3624 = vmatprep.mubr.f32.mxu0 0.0
        %3625 = vmatmul.mubr.f32.gmra.mrb[0].mxu0 %v3400
        %v3626 = vpop.f32.mrb[0].mxu0
        %v3627 = vadd.f32 0.0, %v3626
        %v3628 = vpop.f32.mrb[0].mxu0
        %v3629 = vadd.f32 0.0, %v3628
        %3630 = vdwg.mxu0
        %3631 = vmatprep.subr.mxu0 %v3416
        %3632 = vmatpush1.msra.mxu0 %v3414
        %3633 = vmatprep.subr.mxu0 0.0
        %3634 = vmatpush1.msra.mxu0 0.0
        %3635 = vmatprep.subr.mxu0 0.0
        %3636 = vmatpush1.msra.mxu0 0.0
        %3637 = vmatprep.subr.mxu0 0.0
        %3638 = vmatpush1.msra.mxu0 0.0
        %3639 = vmatprep.subr.mxu0 0.0
        %3640 = vmatpush1.msra.mxu0 0.0
        %3641 = vmatprep.subr.mxu0 0.0
        %3642 = vmatpush1.msra.mxu0 0.0
        %3643 = vmatprep.subr.mxu0 0.0
        %3644 = vmatpush1.msra.mxu0 0.0
        %3645 = vmatprep.subr.mxu0 0.0
        %3646 = vmatpush1.msra.mxu0 0.0
        %3647 = vmatprep.subr.mxu0 0.0
        %3648 = vmatpush1.msra.mxu0 0.0
        %3649 = vmatprep.subr.mxu0 0.0
        %3650 = vmatpush1.msra.mxu0 0.0
        %3651 = vmatprep.subr.mxu0 0.0
        %3652 = vmatpush1.msra.mxu0 0.0
        %3653 = vmatprep.subr.mxu0 0.0
        %3654 = vmatpush1.msra.mxu0 0.0
        %3655 = vmatprep.subr.mxu0 0.0
        %3656 = vmatpush1.msra.mxu0 0.0
        %3657 = vmatprep.subr.mxu0 0.0
        %3658 = vmatpush1.msra.mxu0 0.0
        %3659 = vmatprep.subr.mxu0 0.0
        %3660 = vmatpush1.msra.mxu0 0.0
        %3661 = vmatprep.subr.mxu0 0.0
        %3662 = vmatpush1.msra.mxu0 0.0
        %3663 = vmatprep.subr.mxu0 0.0
        %3664 = vmatpush1.msra.mxu0 0.0
        %3665 = vmatprep.subr.mxu0 0.0
        %3666 = vmatpush1.msra.mxu0 0.0
        %3667 = vmatprep.subr.mxu0 0.0
        %3668 = vmatpush1.msra.mxu0 0.0
        %3669 = vmatprep.subr.mxu0 0.0
        %3670 = vmatpush1.msra.mxu0 0.0
        %3671 = vmatprep.subr.mxu0 0.0
        %3672 = vmatpush1.msra.mxu0 0.0
        %3673 = vmatprep.subr.mxu0 0.0
        %3674 = vmatpush1.msra.mxu0 0.0
        %3675 = vmatprep.subr.mxu0 0.0
        %3676 = vmatpush1.msra.mxu0 0.0
        %3677 = vmatprep.subr.mxu0 0.0
        %3678 = vmatpush1.msra.mxu0 0.0
        %3679 = vmatprep.subr.mxu0 0.0
        %3680 = vmatpush1.msra.mxu0 0.0
        %3681 = vmatprep.subr.mxu0 0.0
        %3682 = vmatpush1.msra.mxu0 0.0
        %3683 = vmatprep.subr.mxu0 0.0
        %3684 = vmatpush1.msra.mxu0 0.0
        %3685 = vmatprep.subr.mxu0 0.0
        %3686 = vmatpush1.msra.mxu0 0.0
        %3687 = vmatprep.subr.mxu0 0.0
        %3688 = vmatpush1.msra.mxu0 0.0
        %3689 = vmatprep.subr.mxu0 0.0
        %3690 = vmatpush1.msra.mxu0 0.0
        %3691 = vmatprep.subr.mxu0 0.0
        %3692 = vmatpush1.msra.mxu0 0.0
        %3693 = vmatprep.subr.mxu0 0.0
        %3694 = vmatpush1.msra.mxu0 0.0
        %3695 = vmatprep.mubr.f32.mxu0 0.0
        %3696 = vmatmul.mubr.f32.gmra.mrb[0].mxu0 %v3400
        %v3697 = vpop.f32.mrb[0].mxu0
        %v3698 = vadd.f32 0.0, %v3697
        %v3699 = vpop.f32.mrb[0].mxu0
        %v3700 = vadd.f32 0.0, %v3699
        %3701 = vdwg.mxu0
        %v3702 = vadd.f32 %v3139, %v3485
        %v3703 = vadd.f32 %v3141, %v3487
        %v3704 = vadd.f32 %v3210, %v3556
        %v3705 = vadd.f32 %v3212, %v3558
        %v3706 = vadd.f32 %v3281, %v3627
        %v3707 = vadd.f32 %v3283, %v3629
        %v3708 = vadd.f32 %v3352, %v3698
        %v3709 = vadd.f32 %v3354, %v3700
        %v3710 = vadd.f32 %v2670, %v3702
        %v3711 = vadd.f32 %v2671, %v3703
        %v3712 = vadd.f32 %v2672, %v3704
        %v3713 = vadd.f32 %v2673, %v3705
        %v3714 = vadd.f32 %v2674, %v3706
        %v3715 = vadd.f32 %v2675, %v3707
        %v3716 = vadd.f32 %v2676, %v3708
        %v3717 = vadd.f32 %v2677, %v3709
        %v3718 = vld [vmem:[#allocation2] sm:$0xff]
        %v3719 = vld [vmem:[#allocation2 + $0x8] sm:$0xff]
        %v3720 = vld [vmem:[#allocation2 + $0x10] sm:$0xff]
        %v3721 = vld [vmem:[#allocation2 + $0x18] sm:$0xff]
        %v3722 = vld [vmem:[#allocation2 + $0x20] sm:$0xf]
        %s3723 = scalar_lea.vmem %s2, 16
        %v3724 = vld [vmem:[%s3723] sm:$0xff]
        %s3725 = scalar_lea.vmem %s2, 40
        %v3726 = vld [vmem:[%s3725] sm:$0xff]
        %v3732 = vcombine.high %v3718, %v3718
        %v3733 = vcombine.high %v3719, %v3719
        %v3734 = vcombine.high %v3720, %v3720
        %v3735 = vcombine.high %v3721, %v3721
        %3736 = vrot.lane.b32.xlu0 %v3718, 63
        %v3737 = vpop.permute.xlu0 %3736
        %3738 = vrot.lane.b32.xlu0 %v3732, 63
        %v3739 = vpop.permute.xlu0 %3738
        %3740 = vrot.lane.b32.xlu0 %v3719, 63
        %v3741 = vpop.permute.xlu0 %3740
        %3742 = vrot.lane.b32.xlu0 %v3733, 63
        %v3743 = vpop.permute.xlu0 %3742
        %3744 = vrot.lane.b32.xlu0 %v3720, 63
        %v3745 = vpop.permute.xlu0 %3744
        %3746 = vrot.lane.b32.xlu0 %v3734, 63
        %v3747 = vpop.permute.xlu0 %3746
        %3748 = vrot.lane.b32.xlu0 %v3721, 63
        %v3749 = vpop.permute.xlu0 %3748
        %3750 = vrot.lane.b32.xlu0 %v3735, 63
        %v3751 = vpop.permute.xlu0 %3750
        %3752 = vrot.lane.b32.xlu0 %v3722, 63
        %v3753 = vpop.permute.xlu0 %3752
        %vm3754 = vcmask 515072
        %v3755 = vsel %vm3754, %v3737, %v3739
        %v3756 = vsel %vm3754, %v3739, %v3741
        %v3757 = vsel %vm3754, %v3741, %v3743
        %v3758 = vsel %vm3754, %v3743, %v3745
        %v3759 = vsel %vm3754, %v3745, %v3747
        %v3760 = vsel %vm3754, %v3747, %v3749
        %v3761 = vsel %vm3754, %v3749, %v3751
        %v3762 = vsel %vm3754, %v3751, %v3753
        %v3764 = vsel %vm1632, %v3726, 0
        %v3766 = vsel %vm1636, %v3755, 0
        %v3768 = vsel %vm1636, %v3756, 0
        %v3770 = vsel %vm1636, %v3757, 0
        %v3772 = vsel %vm1636, %v3758, 0
        %v3774 = vsel %vm1636, %v3759, 0
        %v3776 = vsel %vm1636, %v3760, 0
        %v3778 = vsel %vm1636, %v3761, 0
        %v3780 = vsel %vm1636, %v3762, 0
        %3782 = vmatprep.subr.mxu0 %v3768
        %3783 = vmatpush1.msra.mxu0 %v3766
        %3784 = vmatprep.subr.mxu0 0.0
        %3785 = vmatpush1.msra.mxu0 0.0
        %3786 = vmatprep.subr.mxu0 0.0
        %3787 = vmatpush1.msra.mxu0 0.0
        %3788 = vmatprep.subr.mxu0 0.0
        %3789 = vmatpush1.msra.mxu0 0.0
        %3790 = vmatprep.subr.mxu0 0.0
        %3791 = vmatpush1.msra.mxu0 0.0
        %3792 = vmatprep.subr.mxu0 0.0
        %3793 = vmatpush1.msra.mxu0 0.0
        %3794 = vmatprep.subr.mxu0 0.0
        %3795 = vmatpush1.msra.mxu0 0.0
        %3796 = vmatprep.subr.mxu0 0.0
        %3797 = vmatpush1.msra.mxu0 0.0
        %3798 = vmatprep.subr.mxu0 0.0
        %3799 = vmatpush1.msra.mxu0 0.0
        %3800 = vmatprep.subr.mxu0 0.0
        %3801 = vmatpush1.msra.mxu0 0.0
        %3802 = vmatprep.subr.mxu0 0.0
        %3803 = vmatpush1.msra.mxu0 0.0
        %3804 = vmatprep.subr.mxu0 0.0
        %3805 = vmatpush1.msra.mxu0 0.0
        %3806 = vmatprep.subr.mxu0 0.0
        %3807 = vmatpush1.msra.mxu0 0.0
        %3808 = vmatprep.subr.mxu0 0.0
        %3809 = vmatpush1.msra.mxu0 0.0
        %3810 = vmatprep.subr.mxu0 0.0
        %3811 = vmatpush1.msra.mxu0 0.0
        %3812 = vmatprep.subr.mxu0 0.0
        %3813 = vmatpush1.msra.mxu0 0.0
        %3814 = vmatprep.subr.mxu0 0.0
        %3815 = vmatpush1.msra.mxu0 0.0
        %3816 = vmatprep.subr.mxu0 0.0
        %3817 = vmatpush1.msra.mxu0 0.0
        %3818 = vmatprep.subr.mxu0 0.0
        %3819 = vmatpush1.msra.mxu0 0.0
        %3820 = vmatprep.subr.mxu0 0.0
        %3821 = vmatpush1.msra.mxu0 0.0
        %3822 = vmatprep.subr.mxu0 0.0
        %3823 = vmatpush1.msra.mxu0 0.0
        %3824 = vmatprep.subr.mxu0 0.0
        %3825 = vmatpush1.msra.mxu0 0.0
        %3826 = vmatprep.subr.mxu0 0.0
        %3827 = vmatpush1.msra.mxu0 0.0
        %3828 = vmatprep.subr.mxu0 0.0
        %3829 = vmatpush1.msra.mxu0 0.0
        %3830 = vmatprep.subr.mxu0 0.0
        %3831 = vmatpush1.msra.mxu0 0.0
        %3832 = vmatprep.subr.mxu0 0.0
        %3833 = vmatpush1.msra.mxu0 0.0
        %3834 = vmatprep.subr.mxu0 0.0
        %3835 = vmatpush1.msra.mxu0 0.0
        %3836 = vmatprep.subr.mxu0 0.0
        %3837 = vmatpush1.msra.mxu0 0.0
        %3838 = vmatprep.subr.mxu0 0.0
        %3839 = vmatpush1.msra.mxu0 0.0
        %3840 = vmatprep.subr.mxu0 0.0
        %3841 = vmatpush1.msra.mxu0 0.0
        %3842 = vmatprep.subr.mxu0 0.0
        %3843 = vmatpush1.msra.mxu0 0.0
        %3844 = vmatprep.subr.mxu0 0.0
        %3845 = vmatpush1.msra.mxu0 0.0
        %3846 = vmatprep.mubr.f32.mxu0 0.0
        %3847 = vmatmul.mubr.f32.gmra.mrb[0].mxu0 %v3764
        %v3848 = vpop.f32.mrb[0].mxu0
        %v3849 = vadd.f32 0.0, %v3848
        %v3850 = vpop.f32.mrb[0].mxu0
        %v3851 = vadd.f32 0.0, %v3850
        %3852 = vdwg.mxu0
        %3853 = vmatprep.subr.mxu0 %v3772
        %3854 = vmatpush1.msra.mxu0 %v3770
        %3855 = vmatprep.subr.mxu0 0.0
        %3856 = vmatpush1.msra.mxu0 0.0
        %3857 = vmatprep.subr.mxu0 0.0
        %3858 = vmatpush1.msra.mxu0 0.0
        %3859 = vmatprep.subr.mxu0 0.0
        %3860 = vmatpush1.msra.mxu0 0.0
        %3861 = vmatprep.subr.mxu0 0.0
        %3862 = vmatpush1.msra.mxu0 0.0
        %3863 = vmatprep.subr.mxu0 0.0
        %3864 = vmatpush1.msra.mxu0 0.0
        %3865 = vmatprep.subr.mxu0 0.0
        %3866 = vmatpush1.msra.mxu0 0.0
        %3867 = vmatprep.subr.mxu0 0.0
        %3868 = vmatpush1.msra.mxu0 0.0
        %3869 = vmatprep.subr.mxu0 0.0
        %3870 = vmatpush1.msra.mxu0 0.0
        %3871 = vmatprep.subr.mxu0 0.0
        %3872 = vmatpush1.msra.mxu0 0.0
        %3873 = vmatprep.subr.mxu0 0.0
        %3874 = vmatpush1.msra.mxu0 0.0
        %3875 = vmatprep.subr.mxu0 0.0
        %3876 = vmatpush1.msra.mxu0 0.0
        %3877 = vmatprep.subr.mxu0 0.0
        %3878 = vmatpush1.msra.mxu0 0.0
        %3879 = vmatprep.subr.mxu0 0.0
        %3880 = vmatpush1.msra.mxu0 0.0
        %3881 = vmatprep.subr.mxu0 0.0
        %3882 = vmatpush1.msra.mxu0 0.0
        %3883 = vmatprep.subr.mxu0 0.0
        %3884 = vmatpush1.msra.mxu0 0.0
        %3885 = vmatprep.subr.mxu0 0.0
        %3886 = vmatpush1.msra.mxu0 0.0
        %3887 = vmatprep.subr.mxu0 0.0
        %3888 = vmatpush1.msra.mxu0 0.0
        %3889 = vmatprep.subr.mxu0 0.0
        %3890 = vmatpush1.msra.mxu0 0.0
        %3891 = vmatprep.subr.mxu0 0.0
        %3892 = vmatpush1.msra.mxu0 0.0
        %3893 = vmatprep.subr.mxu0 0.0
        %3894 = vmatpush1.msra.mxu0 0.0
        %3895 = vmatprep.subr.mxu0 0.0
        %3896 = vmatpush1.msra.mxu0 0.0
        %3897 = vmatprep.subr.mxu0 0.0
        %3898 = vmatpush1.msra.mxu0 0.0
        %3899 = vmatprep.subr.mxu0 0.0
        %3900 = vmatpush1.msra.mxu0 0.0
        %3901 = vmatprep.subr.mxu0 0.0
        %3902 = vmatpush1.msra.mxu0 0.0
        %3903 = vmatprep.subr.mxu0 0.0
        %3904 = vmatpush1.msra.mxu0 0.0
        %3905 = vmatprep.subr.mxu0 0.0
        %3906 = vmatpush1.msra.mxu0 0.0
        %3907 = vmatprep.subr.mxu0 0.0
        %3908 = vmatpush1.msra.mxu0 0.0
        %3909 = vmatprep.subr.mxu0 0.0
        %3910 = vmatpush1.msra.mxu0 0.0
        %3911 = vmatprep.subr.mxu0 0.0
        %3912 = vmatpush1.msra.mxu0 0.0
        %3913 = vmatprep.subr.mxu0 0.0
        %3914 = vmatpush1.msra.mxu0 0.0
        %3915 = vmatprep.subr.mxu0 0.0
        %3916 = vmatpush1.msra.mxu0 0.0
        %3917 = vmatprep.mubr.f32.mxu0 0.0
        %3918 = vmatmul.mubr.f32.gmra.mrb[0].mxu0 %v3764
        %v3919 = vpop.f32.mrb[0].mxu0
        %v3920 = vadd.f32 0.0, %v3919
        %v3921 = vpop.f32.mrb[0].mxu0
        %v3922 = vadd.f32 0.0, %v3921
        %3923 = vdwg.mxu0
        %3924 = vmatprep.subr.mxu0 %v3776
        %3925 = vmatpush1.msra.mxu0 %v3774
        %3926 = vmatprep.subr.mxu0 0.0
        %3927 = vmatpush1.msra.mxu0 0.0
        %3928 = vmatprep.subr.mxu0 0.0
        %3929 = vmatpush1.msra.mxu0 0.0
        %3930 = vmatprep.subr.mxu0 0.0
        %3931 = vmatpush1.msra.mxu0 0.0
        %3932 = vmatprep.subr.mxu0 0.0
        %3933 = vmatpush1.msra.mxu0 0.0
        %3934 = vmatprep.subr.mxu0 0.0
        %3935 = vmatpush1.msra.mxu0 0.0
        %3936 = vmatprep.subr.mxu0 0.0
        %3937 = vmatpush1.msra.mxu0 0.0
        %3938 = vmatprep.subr.mxu0 0.0
        %3939 = vmatpush1.msra.mxu0 0.0
        %3940 = vmatprep.subr.mxu0 0.0
        %3941 = vmatpush1.msra.mxu0 0.0
        %3942 = vmatprep.subr.mxu0 0.0
        %3943 = vmatpush1.msra.mxu0 0.0
        %3944 = vmatprep.subr.mxu0 0.0
        %3945 = vmatpush1.msra.mxu0 0.0
        %3946 = vmatprep.subr.mxu0 0.0
        %3947 = vmatpush1.msra.mxu0 0.0
        %3948 = vmatprep.subr.mxu0 0.0
        %3949 = vmatpush1.msra.mxu0 0.0
        %3950 = vmatprep.subr.mxu0 0.0
        %3951 = vmatpush1.msra.mxu0 0.0
        %3952 = vmatprep.subr.mxu0 0.0
        %3953 = vmatpush1.msra.mxu0 0.0
        %3954 = vmatprep.subr.mxu0 0.0
        %3955 = vmatpush1.msra.mxu0 0.0
        %3956 = vmatprep.subr.mxu0 0.0
        %3957 = vmatpush1.msra.mxu0 0.0
        %3958 = vmatprep.subr.mxu0 0.0
        %3959 = vmatpush1.msra.mxu0 0.0
        %3960 = vmatprep.subr.mxu0 0.0
        %3961 = vmatpush1.msra.mxu0 0.0
        %3962 = vmatprep.subr.mxu0 0.0
        %3963 = vmatpush1.msra.mxu0 0.0
        %3964 = vmatprep.subr.mxu0 0.0
        %3965 = vmatpush1.msra.mxu0 0.0
        %3966 = vmatprep.subr.mxu0 0.0
        %3967 = vmatpush1.msra.mxu0 0.0
        %3968 = vmatprep.subr.mxu0 0.0
        %3969 = vmatpush1.msra.mxu0 0.0
        %3970 = vmatprep.subr.mxu0 0.0
        %3971 = vmatpush1.msra.mxu0 0.0
        %3972 = vmatprep.subr.mxu0 0.0
        %3973 = vmatpush1.msra.mxu0 0.0
        %3974 = vmatprep.subr.mxu0 0.0
        %3975 = vmatpush1.msra.mxu0 0.0
        %3976 = vmatprep.subr.mxu0 0.0
        %3977 = vmatpush1.msra.mxu0 0.0
        %3978 = vmatprep.subr.mxu0 0.0
        %3979 = vmatpush1.msra.mxu0 0.0
        %3980 = vmatprep.subr.mxu0 0.0
        %3981 = vmatpush1.msra.mxu0 0.0
        %3982 = vmatprep.subr.mxu0 0.0
        %3983 = vmatpush1.msra.mxu0 0.0
        %3984 = vmatprep.subr.mxu0 0.0
        %3985 = vmatpush1.msra.mxu0 0.0
        %3986 = vmatprep.subr.mxu0 0.0
        %3987 = vmatpush1.msra.mxu0 0.0
        %3988 = vmatprep.mubr.f32.mxu0 0.0
        %3989 = vmatmul.mubr.f32.gmra.mrb[0].mxu0 %v3764
        %v3990 = vpop.f32.mrb[0].mxu0
        %v3991 = vadd.f32 0.0, %v3990
        %v3992 = vpop.f32.mrb[0].mxu0
        %v3993 = vadd.f32 0.0, %v3992
        %3994 = vdwg.mxu0
        %3995 = vmatprep.subr.mxu0 %v3780
        %3996 = vmatpush1.msra.mxu0 %v3778
        %3997 = vmatprep.subr.mxu0 0.0
        %3998 = vmatpush1.msra.mxu0 0.0
        %3999 = vmatprep.subr.mxu0 0.0
        %4000 = vmatpush1.msra.mxu0 0.0
        %4001 = vmatprep.subr.mxu0 0.0
        %4002 = vmatpush1.msra.mxu0 0.0
        %4003 = vmatprep.subr.mxu0 0.0
        %4004 = vmatpush1.msra.mxu0 0.0
        %4005 = vmatprep.subr.mxu0 0.0
        %4006 = vmatpush1.msra.mxu0 0.0
        %4007 = vmatprep.subr.mxu0 0.0
        %4008 = vmatpush1.msra.mxu0 0.0
        %4009 = vmatprep.subr.mxu0 0.0
        %4010 = vmatpush1.msra.mxu0 0.0
        %4011 = vmatprep.subr.mxu0 0.0
        %4012 = vmatpush1.msra.mxu0 0.0
        %4013 = vmatprep.subr.mxu0 0.0
        %4014 = vmatpush1.msra.mxu0 0.0
        %4015 = vmatprep.subr.mxu0 0.0
        %4016 = vmatpush1.msra.mxu0 0.0
        %4017 = vmatprep.subr.mxu0 0.0
        %4018 = vmatpush1.msra.mxu0 0.0
        %4019 = vmatprep.subr.mxu0 0.0
        %4020 = vmatpush1.msra.mxu0 0.0
        %4021 = vmatprep.subr.mxu0 0.0
        %4022 = vmatpush1.msra.mxu0 0.0
        %4023 = vmatprep.subr.mxu0 0.0
        %4024 = vmatpush1.msra.mxu0 0.0
        %4025 = vmatprep.subr.mxu0 0.0
        %4026 = vmatpush1.msra.mxu0 0.0
        %4027 = vmatprep.subr.mxu0 0.0
        %4028 = vmatpush1.msra.mxu0 0.0
        %4029 = vmatprep.subr.mxu0 0.0
        %4030 = vmatpush1.msra.mxu0 0.0
        %4031 = vmatprep.subr.mxu0 0.0
        %4032 = vmatpush1.msra.mxu0 0.0
        %4033 = vmatprep.subr.mxu0 0.0
        %4034 = vmatpush1.msra.mxu0 0.0
        %4035 = vmatprep.subr.mxu0 0.0
        %4036 = vmatpush1.msra.mxu0 0.0
        %4037 = vmatprep.subr.mxu0 0.0
        %4038 = vmatpush1.msra.mxu0 0.0
        %4039 = vmatprep.subr.mxu0 0.0
        %4040 = vmatpush1.msra.mxu0 0.0
        %4041 = vmatprep.subr.mxu0 0.0
        %4042 = vmatpush1.msra.mxu0 0.0
        %4043 = vmatprep.subr.mxu0 0.0
        %4044 = vmatpush1.msra.mxu0 0.0
        %4045 = vmatprep.subr.mxu0 0.0
        %4046 = vmatpush1.msra.mxu0 0.0
        %4047 = vmatprep.subr.mxu0 0.0
        %4048 = vmatpush1.msra.mxu0 0.0
        %4049 = vmatprep.subr.mxu0 0.0
        %4050 = vmatpush1.msra.mxu0 0.0
        %4051 = vmatprep.subr.mxu0 0.0
        %4052 = vmatpush1.msra.mxu0 0.0
        %4053 = vmatprep.subr.mxu0 0.0
        %4054 = vmatpush1.msra.mxu0 0.0
        %4055 = vmatprep.subr.mxu0 0.0
        %4056 = vmatpush1.msra.mxu0 0.0
        %4057 = vmatprep.subr.mxu0 0.0
        %4058 = vmatpush1.msra.mxu0 0.0
        %4059 = vmatprep.mubr.f32.mxu0 0.0
        %4060 = vmatmul.mubr.f32.gmra.mrb[0].mxu0 %v3764
        %v4061 = vpop.f32.mrb[0].mxu0
        %v4062 = vadd.f32 0.0, %v4061
        %v4063 = vpop.f32.mrb[0].mxu0
        %v4064 = vadd.f32 0.0, %v4063
        %4065 = vdwg.mxu0
        %4066 = vrot.lane.b32.xlu0 %v3718, 95
        %v4067 = vpop.permute.xlu0 %4066
        %4068 = vrot.lane.b32.xlu0 %v3732, 95
        %v4069 = vpop.permute.xlu0 %4068
        %4070 = vrot.lane.b32.xlu0 %v3719, 95
        %v4071 = vpop.permute.xlu0 %4070
        %4072 = vrot.lane.b32.xlu0 %v3733, 95
        %v4073 = vpop.permute.xlu0 %4072
        %4074 = vrot.lane.b32.xlu0 %v3720, 95
        %v4075 = vpop.permute.xlu0 %4074
        %4076 = vrot.lane.b32.xlu0 %v3734, 95
        %v4077 = vpop.permute.xlu0 %4076
        %4078 = vrot.lane.b32.xlu0 %v3721, 95
        %v4079 = vpop.permute.xlu0 %4078
        %4080 = vrot.lane.b32.xlu0 %v3735, 95
        %v4081 = vpop.permute.xlu0 %4080
        %4082 = vrot.lane.b32.xlu0 %v3722, 95
        %v4083 = vpop.permute.xlu0 %4082
        %vm4084 = vcmask 777216
        %v4085 = vsel %vm4084, %v4067, %v4069
        %v4086 = vsel %vm4084, %v4069, %v4071
        %v4087 = vsel %vm4084, %v4071, %v4073
        %v4088 = vsel %vm4084, %v4073, %v4075
        %v4089 = vsel %vm4084, %v4075, %v4077
        %v4090 = vsel %vm4084, %v4077, %v4079
        %v4091 = vsel %vm4084, %v4079, %v4081
        %v4092 = vsel %vm4084, %v4081, %v4083
        %v4094 = vsel %vm1632, %v3724, 0
        %v4096 = vsel %vm1636, %v4085, 0
        %v4098 = vsel %vm1636, %v4086, 0
        %v4100 = vsel %vm1636, %v4087, 0
        %v4102 = vsel %vm1636, %v4088, 0
        %v4104 = vsel %vm1636, %v4089, 0
        %v4106 = vsel %vm1636, %v4090, 0
        %v4108 = vsel %vm1636, %v4091, 0
        %v4110 = vsel %vm1636, %v4092, 0
        %4112 = vmatprep.subr.mxu0 %v4098
        %4113 = vmatpush1.msra.mxu0 %v4096
        %4114 = vmatprep.subr.mxu0 0.0
        %4115 = vmatpush1.msra.mxu0 0.0
        %4116 = vmatprep.subr.mxu0 0.0
        %4117 = vmatpush1.msra.mxu0 0.0
        %4118 = vmatprep.subr.mxu0 0.0
        %4119 = vmatpush1.msra.mxu0 0.0
        %4120 = vmatprep.subr.mxu0 0.0
        %4121 = vmatpush1.msra.mxu0 0.0
        %4122 = vmatprep.subr.mxu0 0.0
        %4123 = vmatpush1.msra.mxu0 0.0
        %4124 = vmatprep.subr.mxu0 0.0
        %4125 = vmatpush1.msra.mxu0 0.0
        %4126 = vmatprep.subr.mxu0 0.0
        %4127 = vmatpush1.msra.mxu0 0.0
        %4128 = vmatprep.subr.mxu0 0.0
        %4129 = vmatpush1.msra.mxu0 0.0
        %4130 = vmatprep.subr.mxu0 0.0
        %4131 = vmatpush1.msra.mxu0 0.0
        %4132 = vmatprep.subr.mxu0 0.0
        %4133 = vmatpush1.msra.mxu0 0.0
        %4134 = vmatprep.subr.mxu0 0.0
        %4135 = vmatpush1.msra.mxu0 0.0
        %4136 = vmatprep.subr.mxu0 0.0
        %4137 = vmatpush1.msra.mxu0 0.0
        %4138 = vmatprep.subr.mxu0 0.0
        %4139 = vmatpush1.msra.mxu0 0.0
        %4140 = vmatprep.subr.mxu0 0.0
        %4141 = vmatpush1.msra.mxu0 0.0
        %4142 = vmatprep.subr.mxu0 0.0
        %4143 = vmatpush1.msra.mxu0 0.0
        %4144 = vmatprep.subr.mxu0 0.0
        %4145 = vmatpush1.msra.mxu0 0.0
        %4146 = vmatprep.subr.mxu0 0.0
        %4147 = vmatpush1.msra.mxu0 0.0
        %4148 = vmatprep.subr.mxu0 0.0
        %4149 = vmatpush1.msra.mxu0 0.0
        %4150 = vmatprep.subr.mxu0 0.0
        %4151 = vmatpush1.msra.mxu0 0.0
        %4152 = vmatprep.subr.mxu0 0.0
        %4153 = vmatpush1.msra.mxu0 0.0
        %4154 = vmatprep.subr.mxu0 0.0
        %4155 = vmatpush1.msra.mxu0 0.0
        %4156 = vmatprep.subr.mxu0 0.0
        %4157 = vmatpush1.msra.mxu0 0.0
        %4158 = vmatprep.subr.mxu0 0.0
        %4159 = vmatpush1.msra.mxu0 0.0
        %4160 = vmatprep.subr.mxu0 0.0
        %4161 = vmatpush1.msra.mxu0 0.0
        %4162 = vmatprep.subr.mxu0 0.0
        %4163 = vmatpush1.msra.mxu0 0.0
        %4164 = vmatprep.subr.mxu0 0.0
        %4165 = vmatpush1.msra.mxu0 0.0
        %4166 = vmatprep.subr.mxu0 0.0
        %4167 = vmatpush1.msra.mxu0 0.0
        %4168 = vmatprep.subr.mxu0 0.0
        %4169 = vmatpush1.msra.mxu0 0.0
        %4170 = vmatprep.subr.mxu0 0.0
        %4171 = vmatpush1.msra.mxu0 0.0
        %4172 = vmatprep.subr.mxu0 0.0
        %4173 = vmatpush1.msra.mxu0 0.0
        %4174 = vmatprep.subr.mxu0 0.0
        %4175 = vmatpush1.msra.mxu0 0.0
        %4176 = vmatprep.mubr.f32.mxu0 0.0
        %4177 = vmatmul.mubr.f32.gmra.mrb[0].mxu0 %v4094
        %v4178 = vpop.f32.mrb[0].mxu0
        %v4179 = vadd.f32 %v3849, %v4178
        %v4180 = vpop.f32.mrb[0].mxu0
        %v4181 = vadd.f32 %v3851, %v4180
        %4182 = vdwg.mxu0
        %4183 = vmatprep.subr.mxu0 %v4102
        %4184 = vmatpush1.msra.mxu0 %v4100
        %4185 = vmatprep.subr.mxu0 0.0
        %4186 = vmatpush1.msra.mxu0 0.0
        %4187 = vmatprep.subr.mxu0 0.0
        %4188 = vmatpush1.msra.mxu0 0.0
        %4189 = vmatprep.subr.mxu0 0.0
        %4190 = vmatpush1.msra.mxu0 0.0
        %4191 = vmatprep.subr.mxu0 0.0
        %4192 = vmatpush1.msra.mxu0 0.0
        %4193 = vmatprep.subr.mxu0 0.0
        %4194 = vmatpush1.msra.mxu0 0.0
        %4195 = vmatprep.subr.mxu0 0.0
        %4196 = vmatpush1.msra.mxu0 0.0
        %4197 = vmatprep.subr.mxu0 0.0
        %4198 = vmatpush1.msra.mxu0 0.0
        %4199 = vmatprep.subr.mxu0 0.0
        %4200 = vmatpush1.msra.mxu0 0.0
        %4201 = vmatprep.subr.mxu0 0.0
        %4202 = vmatpush1.msra.mxu0 0.0
        %4203 = vmatprep.subr.mxu0 0.0
        %4204 = vmatpush1.msra.mxu0 0.0
        %4205 = vmatprep.subr.mxu0 0.0
        %4206 = vmatpush1.msra.mxu0 0.0
        %4207 = vmatprep.subr.mxu0 0.0
        %4208 = vmatpush1.msra.mxu0 0.0
        %4209 = vmatprep.subr.mxu0 0.0
        %4210 = vmatpush1.msra.mxu0 0.0
        %4211 = vmatprep.subr.mxu0 0.0
        %4212 = vmatpush1.msra.mxu0 0.0
        %4213 = vmatprep.subr.mxu0 0.0
        %4214 = vmatpush1.msra.mxu0 0.0
        %4215 = vmatprep.subr.mxu0 0.0
        %4216 = vmatpush1.msra.mxu0 0.0
        %4217 = vmatprep.subr.mxu0 0.0
        %4218 = vmatpush1.msra.mxu0 0.0
        %4219 = vmatprep.subr.mxu0 0.0
        %4220 = vmatpush1.msra.mxu0 0.0
        %4221 = vmatprep.subr.mxu0 0.0
        %4222 = vmatpush1.msra.mxu0 0.0
        %4223 = vmatprep.subr.mxu0 0.0
        %4224 = vmatpush1.msra.mxu0 0.0
        %4225 = vmatprep.subr.mxu0 0.0
        %4226 = vmatpush1.msra.mxu0 0.0
        %4227 = vmatprep.subr.mxu0 0.0
        %4228 = vmatpush1.msra.mxu0 0.0
        %4229 = vmatprep.subr.mxu0 0.0
        %4230 = vmatpush1.msra.mxu0 0.0
        %4231 = vmatprep.subr.mxu0 0.0
        %4232 = vmatpush1.msra.mxu0 0.0
        %4233 = vmatprep.subr.mxu0 0.0
        %4234 = vmatpush1.msra.mxu0 0.0
        %4235 = vmatprep.subr.mxu0 0.0
        %4236 = vmatpush1.msra.mxu0 0.0
        %4237 = vmatprep.subr.mxu0 0.0
        %4238 = vmatpush1.msra.mxu0 0.0
        %4239 = vmatprep.subr.mxu0 0.0
        %4240 = vmatpush1.msra.mxu0 0.0
        %4241 = vmatprep.subr.mxu0 0.0
        %4242 = vmatpush1.msra.mxu0 0.0
        %4243 = vmatprep.subr.mxu0 0.0
        %4244 = vmatpush1.msra.mxu0 0.0
        %4245 = vmatprep.subr.mxu0 0.0
        %4246 = vmatpush1.msra.mxu0 0.0
        %4247 = vmatprep.mubr.f32.mxu0 0.0
        %4248 = vmatmul.mubr.f32.gmra.mrb[0].mxu0 %v4094
        %v4249 = vpop.f32.mrb[0].mxu0
        %v4250 = vadd.f32 %v3920, %v4249
        %v4251 = vpop.f32.mrb[0].mxu0
        %v4252 = vadd.f32 %v3922, %v4251
        %4253 = vdwg.mxu0
        %4254 = vmatprep.subr.mxu0 %v4106
        %4255 = vmatpush1.msra.mxu0 %v4104
        %4256 = vmatprep.subr.mxu0 0.0
        %4257 = vmatpush1.msra.mxu0 0.0
        %4258 = vmatprep.subr.mxu0 0.0
        %4259 = vmatpush1.msra.mxu0 0.0
        %4260 = vmatprep.subr.mxu0 0.0
        %4261 = vmatpush1.msra.mxu0 0.0
        %4262 = vmatprep.subr.mxu0 0.0
        %4263 = vmatpush1.msra.mxu0 0.0
        %4264 = vmatprep.subr.mxu0 0.0
        %4265 = vmatpush1.msra.mxu0 0.0
        %4266 = vmatprep.subr.mxu0 0.0
        %4267 = vmatpush1.msra.mxu0 0.0
        %4268 = vmatprep.subr.mxu0 0.0
        %4269 = vmatpush1.msra.mxu0 0.0
        %4270 = vmatprep.subr.mxu0 0.0
        %4271 = vmatpush1.msra.mxu0 0.0
        %4272 = vmatprep.subr.mxu0 0.0
        %4273 = vmatpush1.msra.mxu0 0.0
        %4274 = vmatprep.subr.mxu0 0.0
        %4275 = vmatpush1.msra.mxu0 0.0
        %4276 = vmatprep.subr.mxu0 0.0
        %4277 = vmatpush1.msra.mxu0 0.0
        %4278 = vmatprep.subr.mxu0 0.0
        %4279 = vmatpush1.msra.mxu0 0.0
        %4280 = vmatprep.subr.mxu0 0.0
        %4281 = vmatpush1.msra.mxu0 0.0
        %4282 = vmatprep.subr.mxu0 0.0
        %4283 = vmatpush1.msra.mxu0 0.0
        %4284 = vmatprep.subr.mxu0 0.0
        %4285 = vmatpush1.msra.mxu0 0.0
        %4286 = vmatprep.subr.mxu0 0.0
        %4287 = vmatpush1.msra.mxu0 0.0
        %4288 = vmatprep.subr.mxu0 0.0
        %4289 = vmatpush1.msra.mxu0 0.0
        %4290 = vmatprep.subr.mxu0 0.0
        %4291 = vmatpush1.msra.mxu0 0.0
        %4292 = vmatprep.subr.mxu0 0.0
        %4293 = vmatpush1.msra.mxu0 0.0
        %4294 = vmatprep.subr.mxu0 0.0
        %4295 = vmatpush1.msra.mxu0 0.0
        %4296 = vmatprep.subr.mxu0 0.0
        %4297 = vmatpush1.msra.mxu0 0.0
        %4298 = vmatprep.subr.mxu0 0.0
        %4299 = vmatpush1.msra.mxu0 0.0
        %4300 = vmatprep.subr.mxu0 0.0
        %4301 = vmatpush1.msra.mxu0 0.0
        %4302 = vmatprep.subr.mxu0 0.0
        %4303 = vmatpush1.msra.mxu0 0.0
        %4304 = vmatprep.subr.mxu0 0.0
        %4305 = vmatpush1.msra.mxu0 0.0
        %4306 = vmatprep.subr.mxu0 0.0
        %4307 = vmatpush1.msra.mxu0 0.0
        %4308 = vmatprep.subr.mxu0 0.0
        %4309 = vmatpush1.msra.mxu0 0.0
        %4310 = vmatprep.subr.mxu0 0.0
        %4311 = vmatpush1.msra.mxu0 0.0
        %4312 = vmatprep.subr.mxu0 0.0
        %4313 = vmatpush1.msra.mxu0 0.0
        %4314 = vmatprep.subr.mxu0 0.0
        %4315 = vmatpush1.msra.mxu0 0.0
        %4316 = vmatprep.subr.mxu0 0.0
        %4317 = vmatpush1.msra.mxu0 0.0
        %4318 = vmatprep.mubr.f32.mxu0 0.0
        %4319 = vmatmul.mubr.f32.gmra.mrb[0].mxu0 %v4094
        %v4320 = vpop.f32.mrb[0].mxu0
        %v4321 = vadd.f32 %v3991, %v4320
        %v4322 = vpop.f32.mrb[0].mxu0
        %v4323 = vadd.f32 %v3993, %v4322
        %4324 = vdwg.mxu0
        %4325 = vmatprep.subr.mxu0 %v4110
        %4326 = vmatpush1.msra.mxu0 %v4108
        %4327 = vmatprep.subr.mxu0 0.0
        %4328 = vmatpush1.msra.mxu0 0.0
        %4329 = vmatprep.subr.mxu0 0.0
        %4330 = vmatpush1.msra.mxu0 0.0
        %4331 = vmatprep.subr.mxu0 0.0
        %4332 = vmatpush1.msra.mxu0 0.0
        %4333 = vmatprep.subr.mxu0 0.0
        %4334 = vmatpush1.msra.mxu0 0.0
        %4335 = vmatprep.subr.mxu0 0.0
        %4336 = vmatpush1.msra.mxu0 0.0
        %4337 = vmatprep.subr.mxu0 0.0
        %4338 = vmatpush1.msra.mxu0 0.0
        %4339 = vmatprep.subr.mxu0 0.0
        %4340 = vmatpush1.msra.mxu0 0.0
        %4341 = vmatprep.subr.mxu0 0.0
        %4342 = vmatpush1.msra.mxu0 0.0
        %4343 = vmatprep.subr.mxu0 0.0
        %4344 = vmatpush1.msra.mxu0 0.0
        %4345 = vmatprep.subr.mxu0 0.0
        %4346 = vmatpush1.msra.mxu0 0.0
        %4347 = vmatprep.subr.mxu0 0.0
        %4348 = vmatpush1.msra.mxu0 0.0
        %4349 = vmatprep.subr.mxu0 0.0
        %4350 = vmatpush1.msra.mxu0 0.0
        %4351 = vmatprep.subr.mxu0 0.0
        %4352 = vmatpush1.msra.mxu0 0.0
        %4353 = vmatprep.subr.mxu0 0.0
        %4354 = vmatpush1.msra.mxu0 0.0
        %4355 = vmatprep.subr.mxu0 0.0
        %4356 = vmatpush1.msra.mxu0 0.0
        %4357 = vmatprep.subr.mxu0 0.0
        %4358 = vmatpush1.msra.mxu0 0.0
        %4359 = vmatprep.subr.mxu0 0.0
        %4360 = vmatpush1.msra.mxu0 0.0
        %4361 = vmatprep.subr.mxu0 0.0
        %4362 = vmatpush1.msra.mxu0 0.0
        %4363 = vmatprep.subr.mxu0 0.0
        %4364 = vmatpush1.msra.mxu0 0.0
        %4365 = vmatprep.subr.mxu0 0.0
        %4366 = vmatpush1.msra.mxu0 0.0
        %4367 = vmatprep.subr.mxu0 0.0
        %4368 = vmatpush1.msra.mxu0 0.0
        %4369 = vmatprep.subr.mxu0 0.0
        %4370 = vmatpush1.msra.mxu0 0.0
        %4371 = vmatprep.subr.mxu0 0.0
        %4372 = vmatpush1.msra.mxu0 0.0
        %4373 = vmatprep.subr.mxu0 0.0
        %4374 = vmatpush1.msra.mxu0 0.0
        %4375 = vmatprep.subr.mxu0 0.0
        %4376 = vmatpush1.msra.mxu0 0.0
        %4377 = vmatprep.subr.mxu0 0.0
        %4378 = vmatpush1.msra.mxu0 0.0
        %4379 = vmatprep.subr.mxu0 0.0
        %4380 = vmatpush1.msra.mxu0 0.0
        %4381 = vmatprep.subr.mxu0 0.0
        %4382 = vmatpush1.msra.mxu0 0.0
        %4383 = vmatprep.subr.mxu0 0.0
        %4384 = vmatpush1.msra.mxu0 0.0
        %4385 = vmatprep.subr.mxu0 0.0
        %4386 = vmatpush1.msra.mxu0 0.0
        %4387 = vmatprep.subr.mxu0 0.0
        %4388 = vmatpush1.msra.mxu0 0.0
        %4389 = vmatprep.mubr.f32.mxu0 0.0
        %4390 = vmatmul.mubr.f32.gmra.mrb[0].mxu0 %v4094
        %v4391 = vpop.f32.mrb[0].mxu0
        %v4392 = vadd.f32 %v4062, %v4391
        %v4393 = vpop.f32.mrb[0].mxu0
        %v4394 = vadd.f32 %v4064, %v4393
        %4395 = vdwg.mxu0
        %v4396 = vld [vmem:[#allocation2] sm:$0xff]
        %v4397 = vld [vmem:[#allocation2 + $0x8] sm:$0xff]
        %v4398 = vld [vmem:[#allocation2 + $0x10] sm:$0xff]
        %v4399 = vld [vmem:[#allocation2 + $0x18] sm:$0xff]
        %v4400 = vld [vmem:[#allocation2 + $0x20] sm:$0xf]
        %s4401 = scalar_lea.vmem %s2, 64
        %v4402 = vld [vmem:[%s4401] sm:$0xff]
        %v4408 = vcombine.high %v4396, %v4396
        %v4409 = vcombine.high %v4397, %v4397
        %v4410 = vcombine.high %v4398, %v4398
        %v4411 = vcombine.high %v4399, %v4399
        %4412 = vrot.lane.b32.xlu0 %v4396, 31
        %v4413 = vpop.permute.xlu0 %4412
        %4414 = vrot.lane.b32.xlu0 %v4408, 31
        %v4415 = vpop.permute.xlu0 %4414
        %4416 = vrot.lane.b32.xlu0 %v4397, 31
        %v4417 = vpop.permute.xlu0 %4416
        %4418 = vrot.lane.b32.xlu0 %v4409, 31
        %v4419 = vpop.permute.xlu0 %4418
        %4420 = vrot.lane.b32.xlu0 %v4398, 31
        %v4421 = vpop.permute.xlu0 %4420
        %4422 = vrot.lane.b32.xlu0 %v4410, 31
        %v4423 = vpop.permute.xlu0 %4422
        %4424 = vrot.lane.b32.xlu0 %v4399, 31
        %v4425 = vpop.permute.xlu0 %4424
        %4426 = vrot.lane.b32.xlu0 %v4411, 31
        %v4427 = vpop.permute.xlu0 %4426
        %4428 = vrot.lane.b32.xlu0 %v4400, 31
        %v4429 = vpop.permute.xlu0 %4428
        %vm4430 = vcmask 252928
        %v4431 = vsel %vm4430, %v4413, %v4415
        %v4432 = vsel %vm4430, %v4415, %v4417
        %v4433 = vsel %vm4430, %v4417, %v4419
        %v4434 = vsel %vm4430, %v4419, %v4421
        %v4435 = vsel %vm4430, %v4421, %v4423
        %v4436 = vsel %vm4430, %v4423, %v4425
        %v4437 = vsel %vm4430, %v4425, %v4427
        %v4438 = vsel %vm4430, %v4427, %v4429
        %v4440 = vsel %vm1632, %v4402, 0
        %v4442 = vsel %vm1636, %v4431, 0
        %v4444 = vsel %vm1636, %v4432, 0
        %v4446 = vsel %vm1636, %v4433, 0
        %v4448 = vsel %vm1636, %v4434, 0
        %v4450 = vsel %vm1636, %v4435, 0
        %v4452 = vsel %vm1636, %v4436, 0
        %v4454 = vsel %vm1636, %v4437, 0
        %v4456 = vsel %vm1636, %v4438, 0
        %4458 = vmatprep.subr.mxu0 %v4444
        %4459 = vmatpush1.msra.mxu0 %v4442
        %4460 = vmatprep.subr.mxu0 0.0
        %4461 = vmatpush1.msra.mxu0 0.0
        %4462 = vmatprep.subr.mxu0 0.0
        %4463 = vmatpush1.msra.mxu0 0.0
        %4464 = vmatprep.subr.mxu0 0.0
        %4465 = vmatpush1.msra.mxu0 0.0
        %4466 = vmatprep.subr.mxu0 0.0
        %4467 = vmatpush1.msra.mxu0 0.0
        %4468 = vmatprep.subr.mxu0 0.0
        %4469 = vmatpush1.msra.mxu0 0.0
        %4470 = vmatprep.subr.mxu0 0.0
        %4471 = vmatpush1.msra.mxu0 0.0
        %4472 = vmatprep.subr.mxu0 0.0
        %4473 = vmatpush1.msra.mxu0 0.0
        %4474 = vmatprep.subr.mxu0 0.0
        %4475 = vmatpush1.msra.mxu0 0.0
        %4476 = vmatprep.subr.mxu0 0.0
        %4477 = vmatpush1.msra.mxu0 0.0
        %4478 = vmatprep.subr.mxu0 0.0
        %4479 = vmatpush1.msra.mxu0 0.0
        %4480 = vmatprep.subr.mxu0 0.0
        %4481 = vmatpush1.msra.mxu0 0.0
        %4482 = vmatprep.subr.mxu0 0.0
        %4483 = vmatpush1.msra.mxu0 0.0
        %4484 = vmatprep.subr.mxu0 0.0
        %4485 = vmatpush1.msra.mxu0 0.0
        %4486 = vmatprep.subr.mxu0 0.0
        %4487 = vmatpush1.msra.mxu0 0.0
        %4488 = vmatprep.subr.mxu0 0.0
        %4489 = vmatpush1.msra.mxu0 0.0
        %4490 = vmatprep.subr.mxu0 0.0
        %4491 = vmatpush1.msra.mxu0 0.0
        %4492 = vmatprep.subr.mxu0 0.0
        %4493 = vmatpush1.msra.mxu0 0.0
        %4494 = vmatprep.subr.mxu0 0.0
        %4495 = vmatpush1.msra.mxu0 0.0
        %4496 = vmatprep.subr.mxu0 0.0
        %4497 = vmatpush1.msra.mxu0 0.0
        %4498 = vmatprep.subr.mxu0 0.0
        %4499 = vmatpush1.msra.mxu0 0.0
        %4500 = vmatprep.subr.mxu0 0.0
        %4501 = vmatpush1.msra.mxu0 0.0
        %4502 = vmatprep.subr.mxu0 0.0
        %4503 = vmatpush1.msra.mxu0 0.0
        %4504 = vmatprep.subr.mxu0 0.0
        %4505 = vmatpush1.msra.mxu0 0.0
        %4506 = vmatprep.subr.mxu0 0.0
        %4507 = vmatpush1.msra.mxu0 0.0
        %4508 = vmatprep.subr.mxu0 0.0
        %4509 = vmatpush1.msra.mxu0 0.0
        %4510 = vmatprep.subr.mxu0 0.0
        %4511 = vmatpush1.msra.mxu0 0.0
        %4512 = vmatprep.subr.mxu0 0.0
        %4513 = vmatpush1.msra.mxu0 0.0
        %4514 = vmatprep.subr.mxu0 0.0
        %4515 = vmatpush1.msra.mxu0 0.0
        %4516 = vmatprep.subr.mxu0 0.0
        %4517 = vmatpush1.msra.mxu0 0.0
        %4518 = vmatprep.subr.mxu0 0.0
        %4519 = vmatpush1.msra.mxu0 0.0
        %4520 = vmatprep.subr.mxu0 0.0
        %4521 = vmatpush1.msra.mxu0 0.0
        %4522 = vmatprep.mubr.f32.mxu0 0.0
        %4523 = vmatmul.mubr.f32.gmra.mrb[0].mxu0 %v4440
        %v4524 = vpop.f32.mrb[0].mxu0
        %v4525 = vadd.f32 0.0, %v4524
        %v4526 = vpop.f32.mrb[0].mxu0
        %v4527 = vadd.f32 0.0, %v4526
        %4528 = vdwg.mxu0
        %4529 = vmatprep.subr.mxu0 %v4448
        %4530 = vmatpush1.msra.mxu0 %v4446
        %4531 = vmatprep.subr.mxu0 0.0
        %4532 = vmatpush1.msra.mxu0 0.0
        %4533 = vmatprep.subr.mxu0 0.0
        %4534 = vmatpush1.msra.mxu0 0.0
        %4535 = vmatprep.subr.mxu0 0.0
        %4536 = vmatpush1.msra.mxu0 0.0
        %4537 = vmatprep.subr.mxu0 0.0
        %4538 = vmatpush1.msra.mxu0 0.0
        %4539 = vmatprep.subr.mxu0 0.0
        %4540 = vmatpush1.msra.mxu0 0.0
        %4541 = vmatprep.subr.mxu0 0.0
        %4542 = vmatpush1.msra.mxu0 0.0
        %4543 = vmatprep.subr.mxu0 0.0
        %4544 = vmatpush1.msra.mxu0 0.0
        %4545 = vmatprep.subr.mxu0 0.0
        %4546 = vmatpush1.msra.mxu0 0.0
        %4547 = vmatprep.subr.mxu0 0.0
        %4548 = vmatpush1.msra.mxu0 0.0
        %4549 = vmatprep.subr.mxu0 0.0
        %4550 = vmatpush1.msra.mxu0 0.0
        %4551 = vmatprep.subr.mxu0 0.0
        %4552 = vmatpush1.msra.mxu0 0.0
        %4553 = vmatprep.subr.mxu0 0.0
        %4554 = vmatpush1.msra.mxu0 0.0
        %4555 = vmatprep.subr.mxu0 0.0
        %4556 = vmatpush1.msra.mxu0 0.0
        %4557 = vmatprep.subr.mxu0 0.0
        %4558 = vmatpush1.msra.mxu0 0.0
        %4559 = vmatprep.subr.mxu0 0.0
        %4560 = vmatpush1.msra.mxu0 0.0
        %4561 = vmatprep.subr.mxu0 0.0
        %4562 = vmatpush1.msra.mxu0 0.0
        %4563 = vmatprep.subr.mxu0 0.0
        %4564 = vmatpush1.msra.mxu0 0.0
        %4565 = vmatprep.subr.mxu0 0.0
        %4566 = vmatpush1.msra.mxu0 0.0
        %4567 = vmatprep.subr.mxu0 0.0
        %4568 = vmatpush1.msra.mxu0 0.0
        %4569 = vmatprep.subr.mxu0 0.0
        %4570 = vmatpush1.msra.mxu0 0.0
        %4571 = vmatprep.subr.mxu0 0.0
        %4572 = vmatpush1.msra.mxu0 0.0
        %4573 = vmatprep.subr.mxu0 0.0
        %4574 = vmatpush1.msra.mxu0 0.0
        %4575 = vmatprep.subr.mxu0 0.0
        %4576 = vmatpush1.msra.mxu0 0.0
        %4577 = vmatprep.subr.mxu0 0.0
        %4578 = vmatpush1.msra.mxu0 0.0
        %4579 = vmatprep.subr.mxu0 0.0
        %4580 = vmatpush1.msra.mxu0 0.0
        %4581 = vmatprep.subr.mxu0 0.0
        %4582 = vmatpush1.msra.mxu0 0.0
        %4583 = vmatprep.subr.mxu0 0.0
        %4584 = vmatpush1.msra.mxu0 0.0
        %4585 = vmatprep.subr.mxu0 0.0
        %4586 = vmatpush1.msra.mxu0 0.0
        %4587 = vmatprep.subr.mxu0 0.0
        %4588 = vmatpush1.msra.mxu0 0.0
        %4589 = vmatprep.subr.mxu0 0.0
        %4590 = vmatpush1.msra.mxu0 0.0
        %4591 = vmatprep.subr.mxu0 0.0
        %4592 = vmatpush1.msra.mxu0 0.0
        %4593 = vmatprep.mubr.f32.mxu0 0.0
        %4594 = vmatmul.mubr.f32.gmra.mrb[0].mxu0 %v4440
        %v4595 = vpop.f32.mrb[0].mxu0
        %v4596 = vadd.f32 0.0, %v4595
        %v4597 = vpop.f32.mrb[0].mxu0
        %v4598 = vadd.f32 0.0, %v4597
        %4599 = vdwg.mxu0
        %4600 = vmatprep.subr.mxu0 %v4452
        %4601 = vmatpush1.msra.mxu0 %v4450
        %4602 = vmatprep.subr.mxu0 0.0
        %4603 = vmatpush1.msra.mxu0 0.0
        %4604 = vmatprep.subr.mxu0 0.0
        %4605 = vmatpush1.msra.mxu0 0.0
        %4606 = vmatprep.subr.mxu0 0.0
        %4607 = vmatpush1.msra.mxu0 0.0
        %4608 = vmatprep.subr.mxu0 0.0
        %4609 = vmatpush1.msra.mxu0 0.0
        %4610 = vmatprep.subr.mxu0 0.0
        %4611 = vmatpush1.msra.mxu0 0.0
        %4612 = vmatprep.subr.mxu0 0.0
        %4613 = vmatpush1.msra.mxu0 0.0
        %4614 = vmatprep.subr.mxu0 0.0
        %4615 = vmatpush1.msra.mxu0 0.0
        %4616 = vmatprep.subr.mxu0 0.0
        %4617 = vmatpush1.msra.mxu0 0.0
        %4618 = vmatprep.subr.mxu0 0.0
        %4619 = vmatpush1.msra.mxu0 0.0
        %4620 = vmatprep.subr.mxu0 0.0
        %4621 = vmatpush1.msra.mxu0 0.0
        %4622 = vmatprep.subr.mxu0 0.0
        %4623 = vmatpush1.msra.mxu0 0.0
        %4624 = vmatprep.subr.mxu0 0.0
        %4625 = vmatpush1.msra.mxu0 0.0
        %4626 = vmatprep.subr.mxu0 0.0
        %4627 = vmatpush1.msra.mxu0 0.0
        %4628 = vmatprep.subr.mxu0 0.0
        %4629 = vmatpush1.msra.mxu0 0.0
        %4630 = vmatprep.subr.mxu0 0.0
        %4631 = vmatpush1.msra.mxu0 0.0
        %4632 = vmatprep.subr.mxu0 0.0
        %4633 = vmatpush1.msra.mxu0 0.0
        %4634 = vmatprep.subr.mxu0 0.0
        %4635 = vmatpush1.msra.mxu0 0.0
        %4636 = vmatprep.subr.mxu0 0.0
        %4637 = vmatpush1.msra.mxu0 0.0
        %4638 = vmatprep.subr.mxu0 0.0
        %4639 = vmatpush1.msra.mxu0 0.0
        %4640 = vmatprep.subr.mxu0 0.0
        %4641 = vmatpush1.msra.mxu0 0.0
        %4642 = vmatprep.subr.mxu0 0.0
        %4643 = vmatpush1.msra.mxu0 0.0
        %4644 = vmatprep.subr.mxu0 0.0
        %4645 = vmatpush1.msra.mxu0 0.0
        %4646 = vmatprep.subr.mxu0 0.0
        %4647 = vmatpush1.msra.mxu0 0.0
        %4648 = vmatprep.subr.mxu0 0.0
        %4649 = vmatpush1.msra.mxu0 0.0
        %4650 = vmatprep.subr.mxu0 0.0
        %4651 = vmatpush1.msra.mxu0 0.0
        %4652 = vmatprep.subr.mxu0 0.0
        %4653 = vmatpush1.msra.mxu0 0.0
        %4654 = vmatprep.subr.mxu0 0.0
        %4655 = vmatpush1.msra.mxu0 0.0
        %4656 = vmatprep.subr.mxu0 0.0
        %4657 = vmatpush1.msra.mxu0 0.0
        %4658 = vmatprep.subr.mxu0 0.0
        %4659 = vmatpush1.msra.mxu0 0.0
        %4660 = vmatprep.subr.mxu0 0.0
        %4661 = vmatpush1.msra.mxu0 0.0
        %4662 = vmatprep.subr.mxu0 0.0
        %4663 = vmatpush1.msra.mxu0 0.0
        %4664 = vmatprep.mubr.f32.mxu0 0.0
        %4665 = vmatmul.mubr.f32.gmra.mrb[0].mxu0 %v4440
        %v4666 = vpop.f32.mrb[0].mxu0
        %v4667 = vadd.f32 0.0, %v4666
        %v4668 = vpop.f32.mrb[0].mxu0
        %v4669 = vadd.f32 0.0, %v4668
        %4670 = vdwg.mxu0
        %4671 = vmatprep.subr.mxu0 %v4456
        %4672 = vmatpush1.msra.mxu0 %v4454
        %4673 = vmatprep.subr.mxu0 0.0
        %4674 = vmatpush1.msra.mxu0 0.0
        %4675 = vmatprep.subr.mxu0 0.0
        %4676 = vmatpush1.msra.mxu0 0.0
        %4677 = vmatprep.subr.mxu0 0.0
        %4678 = vmatpush1.msra.mxu0 0.0
        %4679 = vmatprep.subr.mxu0 0.0
        %4680 = vmatpush1.msra.mxu0 0.0
        %4681 = vmatprep.subr.mxu0 0.0
        %4682 = vmatpush1.msra.mxu0 0.0
        %4683 = vmatprep.subr.mxu0 0.0
        %4684 = vmatpush1.msra.mxu0 0.0
        %4685 = vmatprep.subr.mxu0 0.0
        %4686 = vmatpush1.msra.mxu0 0.0
        %4687 = vmatprep.subr.mxu0 0.0
        %4688 = vmatpush1.msra.mxu0 0.0
        %4689 = vmatprep.subr.mxu0 0.0
        %4690 = vmatpush1.msra.mxu0 0.0
        %4691 = vmatprep.subr.mxu0 0.0
        %4692 = vmatpush1.msra.mxu0 0.0
        %4693 = vmatprep.subr.mxu0 0.0
        %4694 = vmatpush1.msra.mxu0 0.0
        %4695 = vmatprep.subr.mxu0 0.0
        %4696 = vmatpush1.msra.mxu0 0.0
        %4697 = vmatprep.subr.mxu0 0.0
        %4698 = vmatpush1.msra.mxu0 0.0
        %4699 = vmatprep.subr.mxu0 0.0
        %4700 = vmatpush1.msra.mxu0 0.0
        %4701 = vmatprep.subr.mxu0 0.0
        %4702 = vmatpush1.msra.mxu0 0.0
        %4703 = vmatprep.subr.mxu0 0.0
        %4704 = vmatpush1.msra.mxu0 0.0
        %4705 = vmatprep.subr.mxu0 0.0
        %4706 = vmatpush1.msra.mxu0 0.0
        %4707 = vmatprep.subr.mxu0 0.0
        %4708 = vmatpush1.msra.mxu0 0.0
        %4709 = vmatprep.subr.mxu0 0.0
        %4710 = vmatpush1.msra.mxu0 0.0
        %4711 = vmatprep.subr.mxu0 0.0
        %4712 = vmatpush1.msra.mxu0 0.0
        %4713 = vmatprep.subr.mxu0 0.0
        %4714 = vmatpush1.msra.mxu0 0.0
        %4715 = vmatprep.subr.mxu0 0.0
        %4716 = vmatpush1.msra.mxu0 0.0
        %4717 = vmatprep.subr.mxu0 0.0
        %4718 = vmatpush1.msra.mxu0 0.0
        %4719 = vmatprep.subr.mxu0 0.0
        %4720 = vmatpush1.msra.mxu0 0.0
        %4721 = vmatprep.subr.mxu0 0.0
        %4722 = vmatpush1.msra.mxu0 0.0
        %4723 = vmatprep.subr.mxu0 0.0
        %4724 = vmatpush1.msra.mxu0 0.0
        %4725 = vmatprep.subr.mxu0 0.0
        %4726 = vmatpush1.msra.mxu0 0.0
        %4727 = vmatprep.subr.mxu0 0.0
        %4728 = vmatpush1.msra.mxu0 0.0
        %4729 = vmatprep.subr.mxu0 0.0
        %4730 = vmatpush1.msra.mxu0 0.0
        %4731 = vmatprep.subr.mxu0 0.0
        %4732 = vmatpush1.msra.mxu0 0.0
        %4733 = vmatprep.subr.mxu0 0.0
        %4734 = vmatpush1.msra.mxu0 0.0
        %4735 = vmatprep.mubr.f32.mxu0 0.0
        %4736 = vmatmul.mubr.f32.gmra.mrb[0].mxu0 %v4440
        %v4737 = vpop.f32.mrb[0].mxu0
        %v4738 = vadd.f32 0.0, %v4737
        %v4739 = vpop.f32.mrb[0].mxu0
        %v4740 = vadd.f32 0.0, %v4739
        %4741 = vdwg.mxu0
        %v4742 = vadd.f32 %v4179, %v4525
        %v4743 = vadd.f32 %v4181, %v4527
        %v4744 = vadd.f32 %v4250, %v4596
        %v4745 = vadd.f32 %v4252, %v4598
        %v4746 = vadd.f32 %v4321, %v4667
        %v4747 = vadd.f32 %v4323, %v4669
        %v4748 = vadd.f32 %v4392, %v4738
        %v4749 = vadd.f32 %v4394, %v4740
        %v4751 = vlaneseq
        %v4752 = vshrl.u32 %v4751, 7
        %v4753 = vsub.s32 0, %v4752
        %v4754 = vrot.slane %v317, %v4753
        %v4755 = vlaneseq
        %v4756 = vshrl.u32 %v4755, 7
        %v4757 = vsub.s32 1, %v4756
        %v4758 = vrot.slane %v317, %v4757
        %v4759 = vlaneseq
        %v4760 = vshrl.u32 %v4759, 7
        %v4761 = vsub.s32 2, %v4760
        %v4762 = vrot.slane %v317, %v4761
        %v4763 = vlaneseq
        %v4764 = vshrl.u32 %v4763, 7
        %v4765 = vsub.s32 3, %v4764
        %v4766 = vrot.slane %v317, %v4765
        %v4767 = vlaneseq
        %v4768 = vshrl.u32 %v4767, 7
        %v4769 = vsub.s32 4, %v4768
        %v4770 = vrot.slane %v317, %v4769
        %v4771 = vlaneseq
        %v4772 = vshrl.u32 %v4771, 7
        %v4773 = vsub.s32 5, %v4772
        %v4774 = vrot.slane %v317, %v4773
        %v4775 = vlaneseq
        %v4776 = vshrl.u32 %v4775, 7
        %v4777 = vsub.s32 6, %v4776
        %v4778 = vrot.slane %v317, %v4777
        %v4779 = vlaneseq
        %v4780 = vshrl.u32 %v4779, 7
        %v4781 = vsub.s32 7, %v4780
        %v4782 = vrot.slane %v317, %v4781
        %v4791 = vmul.f32 %v4742, %v4754
        %v4792 = vmul.f32 %v4743, %v4758
        %v4793 = vmul.f32 %v4744, %v4762
        %v4794 = vmul.f32 %v4745, %v4766
        %v4795 = vmul.f32 %v4746, %v4770
        %v4796 = vmul.f32 %v4747, %v4774
        %v4797 = vmul.f32 %v4748, %v4778
        %v4798 = vmul.f32 %v4749, %v4782
        %v4799 = vadd.f32 %v3710, %v4791
        %v4800 = vadd.f32 %v3711, %v4792
        %v4801 = vadd.f32 %v3712, %v4793
        %v4802 = vadd.f32 %v3713, %v4794
        %v4803 = vadd.f32 %v3714, %v4795
        %v4804 = vadd.f32 %v3715, %v4796
        %v4805 = vadd.f32 %v3716, %v4797
        %v4806 = vadd.f32 %v3717, %v4798
        %v4807 = vld [vmem:[%s4] sm:$0xff]
        %4809 = vset.pattern.permute.xlu0 0
        %4810 = vperm.xlu0 %4809, %v4807
        %v4811 = vpop.permute.xlu0 %4810
        %v4813 = vmul.f32 %v4799, %v4811
        %v4814 = vmul.f32 %v4800, %v4811
        %v4815 = vmul.f32 %v4801, %v4811
        %v4816 = vmul.f32 %v4802, %v4811
        %v4817 = vmul.f32 %v4803, %v4811
        %v4818 = vmul.f32 %v4804, %v4811
        %v4819 = vmul.f32 %v4805, %v4811
        %v4820 = vmul.f32 %v4806, %v4811
        %4821 = vset.pattern.permute.xlu0 1
        %4822 = vperm.xlu0 %4821, %v4807
        %v4823 = vpop.permute.xlu0 %4822
        %v4825 = vadd.f32 %v4813, %v4823
        %v4826 = vadd.f32 %v4814, %v4823
        %v4827 = vadd.f32 %v4815, %v4823
        %v4828 = vadd.f32 %v4816, %v4823
        %v4829 = vadd.f32 %v4817, %v4823
        %v4830 = vadd.f32 %v4818, %v4823
        %v4831 = vadd.f32 %v4819, %v4823
        %v4832 = vadd.f32 %v4820, %v4823
        %v4833 = vmax.f32 %v4825, 0.0
        %v4834 = vmax.f32 %v4826, 0.0
        %v4835 = vmax.f32 %v4827, 0.0
        %v4836 = vmax.f32 %v4828, 0.0
        %v4837 = vmax.f32 %v4829, 0.0
        %v4838 = vmax.f32 %v4830, 0.0
        %v4839 = vmax.f32 %v4831, 0.0
        %v4840 = vmax.f32 %v4832, 0.0
        %4841 = vst.msk [vmem:[#allocation3] sm:$0xff] %vm2714, 0.0
        %4842 = vst.msk [vmem:[#allocation3 + $0x48] sm:$0xff] %vm2714, 0.0
        %vm4843 = vcmask 1048064
        %4844 = vst.msk [vmem:[#allocation3 + $0x40] sm:$0xff] %vm4843, 0.0
        %4845 = vst.msk [vmem:[#allocation3 + $0x88] sm:$0xff] %vm4843, 0.0
        %4854 = vrot.lane.b32.xlu0 %v4833, 64
        %v4855 = vpop.permute.xlu0 %4854
        %4856 = vrot.lane.b32.xlu0 %v4834, 64
        %v4857 = vpop.permute.xlu0 %4856
        %4858 = vrot.lane.b32.xlu0 %v4835, 64
        %v4859 = vpop.permute.xlu0 %4858
        %4860 = vrot.lane.b32.xlu0 %v4836, 64
        %v4861 = vpop.permute.xlu0 %4860
        %4862 = vrot.lane.b32.xlu0 %v4837, 64
        %v4863 = vpop.permute.xlu0 %4862
        %4864 = vrot.lane.b32.xlu0 %v4838, 64
        %v4865 = vpop.permute.xlu0 %4864
        %4866 = vrot.lane.b32.xlu0 %v4839, 64
        %v4867 = vpop.permute.xlu0 %4866
        %4868 = vrot.lane.b32.xlu0 %v4840, 64
        %v4869 = vpop.permute.xlu0 %4868
        %v4870 = vsel %vm2714, %v4855, %v4857
        %v4871 = vsel %vm2714, %v4857, %v4859
        %v4872 = vsel %vm2714, %v4859, %v4861
        %v4873 = vsel %vm2714, %v4861, %v4863
        %v4874 = vsel %vm2714, %v4863, %v4865
        %v4875 = vsel %vm2714, %v4865, %v4867
        %v4876 = vsel %vm2714, %v4867, %v4869
        %4886 = vst.msk [vmem:[#allocation3] sm:$0xff] %vm4843, %v4855
        %4887 = vst [vmem:[#allocation3 + $0x8] sm:$0xff] %v4870
        %4888 = vst [vmem:[#allocation3 + $0x10] sm:$0xff] %v4871
        %4889 = vst [vmem:[#allocation3 + $0x18] sm:$0xff] %v4872
        %4890 = vst [vmem:[#allocation3 + $0x20] sm:$0xff] %v4873
        %4891 = vst [vmem:[#allocation3 + $0x28] sm:$0xff] %v4874
        %4892 = vst [vmem:[#allocation3 + $0x30] sm:$0xff] %v4875
        %4893 = vst [vmem:[#allocation3 + $0x38] sm:$0xff] %v4876
        %4894 = vst.msk [vmem:[#allocation3 + $0x40] sm:$0xff] %vm2714, %v4869
        %v4895 = vld [vmem:[%s274] sm:$0xff]
        %v4896 = vld [vmem:[%s274 + $0x8] sm:$0xff]
        %v4897 = vld [vmem:[%s274 + $0x10] sm:$0xff]
        %v4898 = vld [vmem:[%s274 + $0x18] sm:$0xff]
        %v4899 = vld [vmem:[%s274 + $0x20] sm:$0xff]
        %v4900 = vld [vmem:[%s274 + $0x28] sm:$0xff]
        %v4901 = vld [vmem:[%s274 + $0x30] sm:$0xff]
        %v4902 = vld [vmem:[%s274 + $0x38] sm:$0xff]
        %4911 = vrot.lane.b32.xlu0 %v4895, 64
        %v4912 = vpop.permute.xlu0 %4911
        %4913 = vrot.lane.b32.xlu0 %v4896, 64
        %v4914 = vpop.permute.xlu0 %4913
        %4915 = vrot.lane.b32.xlu0 %v4897, 64
        %v4916 = vpop.permute.xlu0 %4915
        %4917 = vrot.lane.b32.xlu0 %v4898, 64
        %v4918 = vpop.permute.xlu0 %4917
        %4919 = vrot.lane.b32.xlu0 %v4899, 64
        %v4920 = vpop.permute.xlu0 %4919
        %4921 = vrot.lane.b32.xlu0 %v4900, 64
        %v4922 = vpop.permute.xlu0 %4921
        %4923 = vrot.lane.b32.xlu0 %v4901, 64
        %v4924 = vpop.permute.xlu0 %4923
        %4925 = vrot.lane.b32.xlu0 %v4902, 64
        %v4926 = vpop.permute.xlu0 %4925
        %v4927 = vsel %vm2714, %v4912, %v4914
        %v4928 = vsel %vm2714, %v4914, %v4916
        %v4929 = vsel %vm2714, %v4916, %v4918
        %v4930 = vsel %vm2714, %v4918, %v4920
        %v4931 = vsel %vm2714, %v4920, %v4922
        %v4932 = vsel %vm2714, %v4922, %v4924
        %v4933 = vsel %vm2714, %v4924, %v4926
        %4943 = vst.msk [vmem:[#allocation3 + $0x48] sm:$0xff] %vm4843, %v4912
        %4944 = vst [vmem:[#allocation3 + $0x50] sm:$0xff] %v4927
        %4945 = vst [vmem:[#allocation3 + $0x58] sm:$0xff] %v4928
        %4946 = vst [vmem:[#allocation3 + $0x60] sm:$0xff] %v4929
        %4947 = vst [vmem:[#allocation3 + $0x68] sm:$0xff] %v4930
        %4948 = vst [vmem:[#allocation3 + $0x70] sm:$0xff] %v4931
        %4949 = vst [vmem:[#allocation3 + $0x78] sm:$0xff] %v4932
        %4950 = vst [vmem:[#allocation3 + $0x80] sm:$0xff] %v4933
        %4951 = vst.msk [vmem:[#allocation3 + $0x88] sm:$0xff] %vm2714, %v4926
        %v4952 = vld [vmem:[#allocation3] sm:$0xff]
        %v4953 = vld [vmem:[#allocation3 + $0x8] sm:$0xff]
        %v4954 = vld [vmem:[#allocation3 + $0x10] sm:$0xff]
        %v4955 = vld [vmem:[#allocation3 + $0x18] sm:$0xff]
        %v4956 = vld [vmem:[#allocation3 + $0x20] sm:$0xff]
        %v4957 = vld [vmem:[#allocation3 + $0x28] sm:$0xff]
        %v4958 = vld [vmem:[#allocation3 + $0x30] sm:$0xff]
        %v4959 = vld [vmem:[#allocation3 + $0x38] sm:$0xff]
        %v4960 = vld [vmem:[#allocation3 + $0x40] sm:$0xff]
        %v4961 = vld [vmem:[#allocation3 + $0x48] sm:$0xff]
        %v4962 = vld [vmem:[#allocation3 + $0x50] sm:$0xff]
        %v4963 = vld [vmem:[#allocation3 + $0x58] sm:$0xff]
        %v4964 = vld [vmem:[#allocation3 + $0x60] sm:$0xff]
        %v4965 = vld [vmem:[#allocation3 + $0x68] sm:$0xff]
        %v4966 = vld [vmem:[#allocation3 + $0x70] sm:$0xff]
        %v4967 = vld [vmem:[#allocation3 + $0x78] sm:$0xff]
        %v4968 = vld [vmem:[#allocation3 + $0x80] sm:$0xff]
        %v4969 = vld [vmem:[#allocation3 + $0x88] sm:$0xff]
        %v4970 = vld [vmem:[%s3] sm:$0xff]
        %s4971 = scalar_lea.vmem %s3, 24
        %v4972 = vld [vmem:[%s4971] sm:$0xff]
        %4991 = vrot.lane.b32.xlu0 %v4952, 65
        %v4992 = vpop.permute.xlu0 %4991
        %4993 = vrot.lane.b32.xlu0 %v4953, 65
        %v4994 = vpop.permute.xlu0 %4993
        %4995 = vrot.lane.b32.xlu0 %v4954, 65
        %v4996 = vpop.permute.xlu0 %4995
        %4997 = vrot.lane.b32.xlu0 %v4955, 65
        %v4998 = vpop.permute.xlu0 %4997
        %4999 = vrot.lane.b32.xlu0 %v4956, 65
        %v5000 = vpop.permute.xlu0 %4999
        %5001 = vrot.lane.b32.xlu0 %v4957, 65
        %v5002 = vpop.permute.xlu0 %5001
        %5003 = vrot.lane.b32.xlu0 %v4958, 65
        %v5004 = vpop.permute.xlu0 %5003
        %5005 = vrot.lane.b32.xlu0 %v4959, 65
        %v5006 = vpop.permute.xlu0 %5005
        %5007 = vrot.lane.b32.xlu0 %v4960, 65
        %v5008 = vpop.permute.xlu0 %5007
        %5009 = vrot.lane.b32.xlu0 %v4961, 65
        %v5010 = vpop.permute.xlu0 %5009
        %5011 = vrot.lane.b32.xlu0 %v4962, 65
        %v5012 = vpop.permute.xlu0 %5011
        %5013 = vrot.lane.b32.xlu0 %v4963, 65
        %v5014 = vpop.permute.xlu0 %5013
        %5015 = vrot.lane.b32.xlu0 %v4964, 65
        %v5016 = vpop.permute.xlu0 %5015
        %5017 = vrot.lane.b32.xlu0 %v4965, 65
        %v5018 = vpop.permute.xlu0 %5017
        %5019 = vrot.lane.b32.xlu0 %v4966, 65
        %v5020 = vpop.permute.xlu0 %5019
        %5021 = vrot.lane.b32.xlu0 %v4967, 65
        %v5022 = vpop.permute.xlu0 %5021
        %5023 = vrot.lane.b32.xlu0 %v4968, 65
        %v5024 = vpop.permute.xlu0 %5023
        %5025 = vrot.lane.b32.xlu0 %v4969, 65
        %v5026 = vpop.permute.xlu0 %5025
        %v5027 = vsel %vm1623, %v4992, %v4994
        %v5028 = vsel %vm1623, %v4994, %v4996
        %v5029 = vsel %vm1623, %v4996, %v4998
        %v5030 = vsel %vm1623, %v4998, %v5000
        %v5031 = vsel %vm1623, %v5000, %v5002
        %v5032 = vsel %vm1623, %v5002, %v5004
        %v5033 = vsel %vm1623, %v5004, %v5006
        %v5034 = vsel %vm1623, %v5006, %v5008
        %v5035 = vsel %vm1623, %v5010, %v5012
        %v5036 = vsel %vm1623, %v5012, %v5014
        %v5037 = vsel %vm1623, %v5014, %v5016
        %v5038 = vsel %vm1623, %v5016, %v5018
        %v5039 = vsel %vm1623, %v5018, %v5020
        %v5040 = vsel %vm1623, %v5020, %v5022
        %v5041 = vsel %vm1623, %v5022, %v5024
        %v5042 = vsel %vm1623, %v5024, %v5026
        %v5060 = vsel %vm326, %v4972, 0
        %5062 = vmatprep.subr.mxu0 %v5028
        %5063 = vmatpush1.msra.mxu0 %v5027
        %5064 = vmatprep.subr.mxu0 %v5036
        %5065 = vmatpush1.msra.mxu0 %v5035
        %5066 = vmatprep.subr.mxu0 0.0
        %5067 = vmatpush1.msra.mxu0 0.0
        %5068 = vmatprep.subr.mxu0 0.0
        %5069 = vmatpush1.msra.mxu0 0.0
        %5070 = vmatprep.subr.mxu0 0.0
        %5071 = vmatpush1.msra.mxu0 0.0
        %5072 = vmatprep.subr.mxu0 0.0
        %5073 = vmatpush1.msra.mxu0 0.0
        %5074 = vmatprep.subr.mxu0 0.0
        %5075 = vmatpush1.msra.mxu0 0.0
        %5076 = vmatprep.subr.mxu0 0.0
        %5077 = vmatpush1.msra.mxu0 0.0
        %5078 = vmatprep.subr.mxu0 0.0
        %5079 = vmatpush1.msra.mxu0 0.0
        %5080 = vmatprep.subr.mxu0 0.0
        %5081 = vmatpush1.msra.mxu0 0.0
        %5082 = vmatprep.subr.mxu0 0.0
        %5083 = vmatpush1.msra.mxu0 0.0
        %5084 = vmatprep.subr.mxu0 0.0
        %5085 = vmatpush1.msra.mxu0 0.0
        %5086 = vmatprep.subr.mxu0 0.0
        %5087 = vmatpush1.msra.mxu0 0.0
        %5088 = vmatprep.subr.mxu0 0.0
        %5089 = vmatpush1.msra.mxu0 0.0
        %5090 = vmatprep.subr.mxu0 0.0
        %5091 = vmatpush1.msra.mxu0 0.0
        %5092 = vmatprep.subr.mxu0 0.0
        %5093 = vmatpush1.msra.mxu0 0.0
        %5094 = vmatprep.subr.mxu0 0.0
        %5095 = vmatpush1.msra.mxu0 0.0
        %5096 = vmatprep.subr.mxu0 0.0
        %5097 = vmatpush1.msra.mxu0 0.0
        %5098 = vmatprep.subr.mxu0 0.0
        %5099 = vmatpush1.msra.mxu0 0.0
        %5100 = vmatprep.subr.mxu0 0.0
        %5101 = vmatpush1.msra.mxu0 0.0
        %5102 = vmatprep.subr.mxu0 0.0
        %5103 = vmatpush1.msra.mxu0 0.0
        %5104 = vmatprep.subr.mxu0 0.0
        %5105 = vmatpush1.msra.mxu0 0.0
        %5106 = vmatprep.subr.mxu0 0.0
        %5107 = vmatpush1.msra.mxu0 0.0
        %5108 = vmatprep.subr.mxu0 0.0
        %5109 = vmatpush1.msra.mxu0 0.0
        %5110 = vmatprep.subr.mxu0 0.0
        %5111 = vmatpush1.msra.mxu0 0.0
        %5112 = vmatprep.subr.mxu0 0.0
        %5113 = vmatpush1.msra.mxu0 0.0
        %5114 = vmatprep.subr.mxu0 0.0
        %5115 = vmatpush1.msra.mxu0 0.0
        %5116 = vmatprep.subr.mxu0 0.0
        %5117 = vmatpush1.msra.mxu0 0.0
        %5118 = vmatprep.subr.mxu0 0.0
        %5119 = vmatpush1.msra.mxu0 0.0
        %5120 = vmatprep.subr.mxu0 0.0
        %5121 = vmatpush1.msra.mxu0 0.0
        %5122 = vmatprep.subr.mxu0 0.0
        %5123 = vmatpush1.msra.mxu0 0.0
        %5124 = vmatprep.subr.mxu0 0.0
        %5125 = vmatpush1.msra.mxu0 0.0
        %5126 = vmatprep.mubr.f32.mxu0 0.0
        %5127 = vmatmul.mubr.f32.gmra.mrb[0].mxu0 %v5060
        %v5128 = vpop.f32.mrb[0].mxu0
        %v5129 = vadd.f32 0.0, %v5128
        %v5130 = vpop.f32.mrb[0].mxu0
        %v5131 = vadd.f32 0.0, %v5130
        %5132 = vdwg.mxu0
        %5133 = vmatprep.subr.mxu0 %v5030
        %5134 = vmatpush1.msra.mxu0 %v5029
        %5135 = vmatprep.subr.mxu0 %v5038
        %5136 = vmatpush1.msra.mxu0 %v5037
        %5137 = vmatprep.subr.mxu0 0.0
        %5138 = vmatpush1.msra.mxu0 0.0
        %5139 = vmatprep.subr.mxu0 0.0
        %5140 = vmatpush1.msra.mxu0 0.0
        %5141 = vmatprep.subr.mxu0 0.0
        %5142 = vmatpush1.msra.mxu0 0.0
        %5143 = vmatprep.subr.mxu0 0.0
        %5144 = vmatpush1.msra.mxu0 0.0
        %5145 = vmatprep.subr.mxu0 0.0
        %5146 = vmatpush1.msra.mxu0 0.0
        %5147 = vmatprep.subr.mxu0 0.0
        %5148 = vmatpush1.msra.mxu0 0.0
        %5149 = vmatprep.subr.mxu0 0.0
        %5150 = vmatpush1.msra.mxu0 0.0
        %5151 = vmatprep.subr.mxu0 0.0
        %5152 = vmatpush1.msra.mxu0 0.0
        %5153 = vmatprep.subr.mxu0 0.0
        %5154 = vmatpush1.msra.mxu0 0.0
        %5155 = vmatprep.subr.mxu0 0.0
        %5156 = vmatpush1.msra.mxu0 0.0
        %5157 = vmatprep.subr.mxu0 0.0
        %5158 = vmatpush1.msra.mxu0 0.0
        %5159 = vmatprep.subr.mxu0 0.0
        %5160 = vmatpush1.msra.mxu0 0.0
        %5161 = vmatprep.subr.mxu0 0.0
        %5162 = vmatpush1.msra.mxu0 0.0
        %5163 = vmatprep.subr.mxu0 0.0
        %5164 = vmatpush1.msra.mxu0 0.0
        %5165 = vmatprep.subr.mxu0 0.0
        %5166 = vmatpush1.msra.mxu0 0.0
        %5167 = vmatprep.subr.mxu0 0.0
        %5168 = vmatpush1.msra.mxu0 0.0
        %5169 = vmatprep.subr.mxu0 0.0
        %5170 = vmatpush1.msra.mxu0 0.0
        %5171 = vmatprep.subr.mxu0 0.0
        %5172 = vmatpush1.msra.mxu0 0.0
        %5173 = vmatprep.subr.mxu0 0.0
        %5174 = vmatpush1.msra.mxu0 0.0
        %5175 = vmatprep.subr.mxu0 0.0
        %5176 = vmatpush1.msra.mxu0 0.0
        %5177 = vmatprep.subr.mxu0 0.0
        %5178 = vmatpush1.msra.mxu0 0.0
        %5179 = vmatprep.subr.mxu0 0.0
        %5180 = vmatpush1.msra.mxu0 0.0
        %5181 = vmatprep.subr.mxu0 0.0
        %5182 = vmatpush1.msra.mxu0 0.0
        %5183 = vmatprep.subr.mxu0 0.0
        %5184 = vmatpush1.msra.mxu0 0.0
        %5185 = vmatprep.subr.mxu0 0.0
        %5186 = vmatpush1.msra.mxu0 0.0
        %5187 = vmatprep.subr.mxu0 0.0
        %5188 = vmatpush1.msra.mxu0 0.0
        %5189 = vmatprep.subr.mxu0 0.0
        %5190 = vmatpush1.msra.mxu0 0.0
        %5191 = vmatprep.subr.mxu0 0.0
        %5192 = vmatpush1.msra.mxu0 0.0
        %5193 = vmatprep.subr.mxu0 0.0
        %5194 = vmatpush1.msra.mxu0 0.0
        %5195 = vmatprep.subr.mxu0 0.0
        %5196 = vmatpush1.msra.mxu0 0.0
        %5197 = vmatprep.mubr.f32.mxu0 0.0
        %5198 = vmatmul.mubr.f32.gmra.mrb[0].mxu0 %v5060
        %v5199 = vpop.f32.mrb[0].mxu0
        %v5200 = vadd.f32 0.0, %v5199
        %v5201 = vpop.f32.mrb[0].mxu0
        %v5202 = vadd.f32 0.0, %v5201
        %5203 = vdwg.mxu0
        %5204 = vmatprep.subr.mxu0 %v5032
        %5205 = vmatpush1.msra.mxu0 %v5031
        %5206 = vmatprep.subr.mxu0 %v5040
        %5207 = vmatpush1.msra.mxu0 %v5039
        %5208 = vmatprep.subr.mxu0 0.0
        %5209 = vmatpush1.msra.mxu0 0.0
        %5210 = vmatprep.subr.mxu0 0.0
        %5211 = vmatpush1.msra.mxu0 0.0
        %5212 = vmatprep.subr.mxu0 0.0
        %5213 = vmatpush1.msra.mxu0 0.0
        %5214 = vmatprep.subr.mxu0 0.0
        %5215 = vmatpush1.msra.mxu0 0.0
        %5216 = vmatprep.subr.mxu0 0.0
        %5217 = vmatpush1.msra.mxu0 0.0
        %5218 = vmatprep.subr.mxu0 0.0
        %5219 = vmatpush1.msra.mxu0 0.0
        %5220 = vmatprep.subr.mxu0 0.0
        %5221 = vmatpush1.msra.mxu0 0.0
        %5222 = vmatprep.subr.mxu0 0.0
        %5223 = vmatpush1.msra.mxu0 0.0
        %5224 = vmatprep.subr.mxu0 0.0
        %5225 = vmatpush1.msra.mxu0 0.0
        %5226 = vmatprep.subr.mxu0 0.0
        %5227 = vmatpush1.msra.mxu0 0.0
        %5228 = vmatprep.subr.mxu0 0.0
        %5229 = vmatpush1.msra.mxu0 0.0
        %5230 = vmatprep.subr.mxu0 0.0
        %5231 = vmatpush1.msra.mxu0 0.0
        %5232 = vmatprep.subr.mxu0 0.0
        %5233 = vmatpush1.msra.mxu0 0.0
        %5234 = vmatprep.subr.mxu0 0.0
        %5235 = vmatpush1.msra.mxu0 0.0
        %5236 = vmatprep.subr.mxu0 0.0
        %5237 = vmatpush1.msra.mxu0 0.0
        %5238 = vmatprep.subr.mxu0 0.0
        %5239 = vmatpush1.msra.mxu0 0.0
        %5240 = vmatprep.subr.mxu0 0.0
        %5241 = vmatpush1.msra.mxu0 0.0
        %5242 = vmatprep.subr.mxu0 0.0
        %5243 = vmatpush1.msra.mxu0 0.0
        %5244 = vmatprep.subr.mxu0 0.0
        %5245 = vmatpush1.msra.mxu0 0.0
        %5246 = vmatprep.subr.mxu0 0.0
        %5247 = vmatpush1.msra.mxu0 0.0
        %5248 = vmatprep.subr.mxu0 0.0
        %5249 = vmatpush1.msra.mxu0 0.0
        %5250 = vmatprep.subr.mxu0 0.0
        %5251 = vmatpush1.msra.mxu0 0.0
        %5252 = vmatprep.subr.mxu0 0.0
        %5253 = vmatpush1.msra.mxu0 0.0
        %5254 = vmatprep.subr.mxu0 0.0
        %5255 = vmatpush1.msra.mxu0 0.0
        %5256 = vmatprep.subr.mxu0 0.0
        %5257 = vmatpush1.msra.mxu0 0.0
        %5258 = vmatprep.subr.mxu0 0.0
        %5259 = vmatpush1.msra.mxu0 0.0
        %5260 = vmatprep.subr.mxu0 0.0
        %5261 = vmatpush1.msra.mxu0 0.0
        %5262 = vmatprep.subr.mxu0 0.0
        %5263 = vmatpush1.msra.mxu0 0.0
        %5264 = vmatprep.subr.mxu0 0.0
        %5265 = vmatpush1.msra.mxu0 0.0
        %5266 = vmatprep.subr.mxu0 0.0
        %5267 = vmatpush1.msra.mxu0 0.0
        %5268 = vmatprep.mubr.f32.mxu0 0.0
        %5269 = vmatmul.mubr.f32.gmra.mrb[0].mxu0 %v5060
        %v5270 = vpop.f32.mrb[0].mxu0
        %v5271 = vadd.f32 0.0, %v5270
        %v5272 = vpop.f32.mrb[0].mxu0
        %v5273 = vadd.f32 0.0, %v5272
        %5274 = vdwg.mxu0
        %5275 = vmatprep.subr.mxu0 %v5034
        %5276 = vmatpush1.msra.mxu0 %v5033
        %5277 = vmatprep.subr.mxu0 %v5042
        %5278 = vmatpush1.msra.mxu0 %v5041
        %5279 = vmatprep.subr.mxu0 0.0
        %5280 = vmatpush1.msra.mxu0 0.0
        %5281 = vmatprep.subr.mxu0 0.0
        %5282 = vmatpush1.msra.mxu0 0.0
        %5283 = vmatprep.subr.mxu0 0.0
        %5284 = vmatpush1.msra.mxu0 0.0
        %5285 = vmatprep.subr.mxu0 0.0
        %5286 = vmatpush1.msra.mxu0 0.0
        %5287 = vmatprep.subr.mxu0 0.0
        %5288 = vmatpush1.msra.mxu0 0.0
        %5289 = vmatprep.subr.mxu0 0.0
        %5290 = vmatpush1.msra.mxu0 0.0
        %5291 = vmatprep.subr.mxu0 0.0
        %5292 = vmatpush1.msra.mxu0 0.0
        %5293 = vmatprep.subr.mxu0 0.0
        %5294 = vmatpush1.msra.mxu0 0.0
        %5295 = vmatprep.subr.mxu0 0.0
        %5296 = vmatpush1.msra.mxu0 0.0
        %5297 = vmatprep.subr.mxu0 0.0
        %5298 = vmatpush1.msra.mxu0 0.0
        %5299 = vmatprep.subr.mxu0 0.0
        %5300 = vmatpush1.msra.mxu0 0.0
        %5301 = vmatprep.subr.mxu0 0.0
        %5302 = vmatpush1.msra.mxu0 0.0
        %5303 = vmatprep.subr.mxu0 0.0
        %5304 = vmatpush1.msra.mxu0 0.0
        %5305 = vmatprep.subr.mxu0 0.0
        %5306 = vmatpush1.msra.mxu0 0.0
        %5307 = vmatprep.subr.mxu0 0.0
        %5308 = vmatpush1.msra.mxu0 0.0
        %5309 = vmatprep.subr.mxu0 0.0
        %5310 = vmatpush1.msra.mxu0 0.0
        %5311 = vmatprep.subr.mxu0 0.0
        %5312 = vmatpush1.msra.mxu0 0.0
        %5313 = vmatprep.subr.mxu0 0.0
        %5314 = vmatpush1.msra.mxu0 0.0
        %5315 = vmatprep.subr.mxu0 0.0
        %5316 = vmatpush1.msra.mxu0 0.0
        %5317 = vmatprep.subr.mxu0 0.0
        %5318 = vmatpush1.msra.mxu0 0.0
        %5319 = vmatprep.subr.mxu0 0.0
        %5320 = vmatpush1.msra.mxu0 0.0
        %5321 = vmatprep.subr.mxu0 0.0
        %5322 = vmatpush1.msra.mxu0 0.0
        %5323 = vmatprep.subr.mxu0 0.0
        %5324 = vmatpush1.msra.mxu0 0.0
        %5325 = vmatprep.subr.mxu0 0.0
        %5326 = vmatpush1.msra.mxu0 0.0
        %5327 = vmatprep.subr.mxu0 0.0
        %5328 = vmatpush1.msra.mxu0 0.0
        %5329 = vmatprep.subr.mxu0 0.0
        %5330 = vmatpush1.msra.mxu0 0.0
        %5331 = vmatprep.subr.mxu0 0.0
        %5332 = vmatpush1.msra.mxu0 0.0
        %5333 = vmatprep.subr.mxu0 0.0
        %5334 = vmatpush1.msra.mxu0 0.0
        %5335 = vmatprep.subr.mxu0 0.0
        %5336 = vmatpush1.msra.mxu0 0.0
        %5337 = vmatprep.subr.mxu0 0.0
        %5338 = vmatpush1.msra.mxu0 0.0
        %5339 = vmatprep.mubr.f32.mxu0 0.0
        %5340 = vmatmul.mubr.f32.gmra.mrb[0].mxu0 %v5060
        %v5341 = vpop.f32.mrb[0].mxu0
        %v5342 = vadd.f32 0.0, %v5341
        %v5343 = vpop.f32.mrb[0].mxu0
        %v5344 = vadd.f32 0.0, %v5343
        %5345 = vdwg.mxu0
        %5346 = vrot.lane.b32.xlu0 %v4952, 97
        %v5347 = vpop.permute.xlu0 %5346
        %5348 = vrot.lane.b32.xlu0 %v4953, 97
        %v5349 = vpop.permute.xlu0 %5348
        %5350 = vrot.lane.b32.xlu0 %v4954, 97
        %v5351 = vpop.permute.xlu0 %5350
        %5352 = vrot.lane.b32.xlu0 %v4955, 97
        %v5353 = vpop.permute.xlu0 %5352
        %5354 = vrot.lane.b32.xlu0 %v4956, 97
        %v5355 = vpop.permute.xlu0 %5354
        %5356 = vrot.lane.b32.xlu0 %v4957, 97
        %v5357 = vpop.permute.xlu0 %5356
        %5358 = vrot.lane.b32.xlu0 %v4958, 97
        %v5359 = vpop.permute.xlu0 %5358
        %5360 = vrot.lane.b32.xlu0 %v4959, 97
        %v5361 = vpop.permute.xlu0 %5360
        %5362 = vrot.lane.b32.xlu0 %v4960, 97
        %v5363 = vpop.permute.xlu0 %5362
        %5364 = vrot.lane.b32.xlu0 %v4961, 97
        %v5365 = vpop.permute.xlu0 %5364
        %5366 = vrot.lane.b32.xlu0 %v4962, 97
        %v5367 = vpop.permute.xlu0 %5366
        %5368 = vrot.lane.b32.xlu0 %v4963, 97
        %v5369 = vpop.permute.xlu0 %5368
        %5370 = vrot.lane.b32.xlu0 %v4964, 97
        %v5371 = vpop.permute.xlu0 %5370
        %5372 = vrot.lane.b32.xlu0 %v4965, 97
        %v5373 = vpop.permute.xlu0 %5372
        %5374 = vrot.lane.b32.xlu0 %v4966, 97
        %v5375 = vpop.permute.xlu0 %5374
        %5376 = vrot.lane.b32.xlu0 %v4967, 97
        %v5377 = vpop.permute.xlu0 %5376
        %5378 = vrot.lane.b32.xlu0 %v4968, 97
        %v5379 = vpop.permute.xlu0 %5378
        %5380 = vrot.lane.b32.xlu0 %v4969, 97
        %v5381 = vpop.permute.xlu0 %5380
        %v5382 = vsel %vm1955, %v5347, %v5349
        %v5383 = vsel %vm1955, %v5349, %v5351
        %v5384 = vsel %vm1955, %v5351, %v5353
        %v5385 = vsel %vm1955, %v5353, %v5355
        %v5386 = vsel %vm1955, %v5355, %v5357
        %v5387 = vsel %vm1955, %v5357, %v5359
        %v5388 = vsel %vm1955, %v5359, %v5361
        %v5389 = vsel %vm1955, %v5361, %v5363
        %v5390 = vsel %vm1955, %v5365, %v5367
        %v5391 = vsel %vm1955, %v5367, %v5369
        %v5392 = vsel %vm1955, %v5369, %v5371
        %v5393 = vsel %vm1955, %v5371, %v5373
        %v5394 = vsel %vm1955, %v5373, %v5375
        %v5395 = vsel %vm1955, %v5375, %v5377
        %v5396 = vsel %vm1955, %v5377, %v5379
        %v5397 = vsel %vm1955, %v5379, %v5381
        %v5415 = vsel %vm326, %v4970, 0
        %5417 = vmatprep.subr.mxu0 %v5383
        %5418 = vmatpush1.msra.mxu0 %v5382
        %5419 = vmatprep.subr.mxu0 %v5391
        %5420 = vmatpush1.msra.mxu0 %v5390
        %5421 = vmatprep.subr.mxu0 0.0
        %5422 = vmatpush1.msra.mxu0 0.0
        %5423 = vmatprep.subr.mxu0 0.0
        %5424 = vmatpush1.msra.mxu0 0.0
        %5425 = vmatprep.subr.mxu0 0.0
        %5426 = vmatpush1.msra.mxu0 0.0
        %5427 = vmatprep.subr.mxu0 0.0
        %5428 = vmatpush1.msra.mxu0 0.0
        %5429 = vmatprep.subr.mxu0 0.0
        %5430 = vmatpush1.msra.mxu0 0.0
        %5431 = vmatprep.subr.mxu0 0.0
        %5432 = vmatpush1.msra.mxu0 0.0
        %5433 = vmatprep.subr.mxu0 0.0
        %5434 = vmatpush1.msra.mxu0 0.0
        %5435 = vmatprep.subr.mxu0 0.0
        %5436 = vmatpush1.msra.mxu0 0.0
        %5437 = vmatprep.subr.mxu0 0.0
        %5438 = vmatpush1.msra.mxu0 0.0
        %5439 = vmatprep.subr.mxu0 0.0
        %5440 = vmatpush1.msra.mxu0 0.0
        %5441 = vmatprep.subr.mxu0 0.0
        %5442 = vmatpush1.msra.mxu0 0.0
        %5443 = vmatprep.subr.mxu0 0.0
        %5444 = vmatpush1.msra.mxu0 0.0
        %5445 = vmatprep.subr.mxu0 0.0
        %5446 = vmatpush1.msra.mxu0 0.0
        %5447 = vmatprep.subr.mxu0 0.0
        %5448 = vmatpush1.msra.mxu0 0.0
        %5449 = vmatprep.subr.mxu0 0.0
        %5450 = vmatpush1.msra.mxu0 0.0
        %5451 = vmatprep.subr.mxu0 0.0
        %5452 = vmatpush1.msra.mxu0 0.0
        %5453 = vmatprep.subr.mxu0 0.0
        %5454 = vmatpush1.msra.mxu0 0.0
        %5455 = vmatprep.subr.mxu0 0.0
        %5456 = vmatpush1.msra.mxu0 0.0
        %5457 = vmatprep.subr.mxu0 0.0
        %5458 = vmatpush1.msra.mxu0 0.0
        %5459 = vmatprep.subr.mxu0 0.0
        %5460 = vmatpush1.msra.mxu0 0.0
        %5461 = vmatprep.subr.mxu0 0.0
        %5462 = vmatpush1.msra.mxu0 0.0
        %5463 = vmatprep.subr.mxu0 0.0
        %5464 = vmatpush1.msra.mxu0 0.0
        %5465 = vmatprep.subr.mxu0 0.0
        %5466 = vmatpush1.msra.mxu0 0.0
        %5467 = vmatprep.subr.mxu0 0.0
        %5468 = vmatpush1.msra.mxu0 0.0
        %5469 = vmatprep.subr.mxu0 0.0
        %5470 = vmatpush1.msra.mxu0 0.0
        %5471 = vmatprep.subr.mxu0 0.0
        %5472 = vmatpush1.msra.mxu0 0.0
        %5473 = vmatprep.subr.mxu0 0.0
        %5474 = vmatpush1.msra.mxu0 0.0
        %5475 = vmatprep.subr.mxu0 0.0
        %5476 = vmatpush1.msra.mxu0 0.0
        %5477 = vmatprep.subr.mxu0 0.0
        %5478 = vmatpush1.msra.mxu0 0.0
        %5479 = vmatprep.subr.mxu0 0.0
        %5480 = vmatpush1.msra.mxu0 0.0
        %5481 = vmatprep.mubr.f32.mxu0 0.0
        %5482 = vmatmul.mubr.f32.gmra.mrb[0].mxu0 %v5415
        %v5483 = vpop.f32.mrb[0].mxu0
        %v5484 = vadd.f32 %v5129, %v5483
        %v5485 = vpop.f32.mrb[0].mxu0
        %v5486 = vadd.f32 %v5131, %v5485
        %5487 = vdwg.mxu0
        %5488 = vmatprep.subr.mxu0 %v5385
        %5489 = vmatpush1.msra.mxu0 %v5384
        %5490 = vmatprep.subr.mxu0 %v5393
        %5491 = vmatpush1.msra.mxu0 %v5392
        %5492 = vmatprep.subr.mxu0 0.0
        %5493 = vmatpush1.msra.mxu0 0.0
        %5494 = vmatprep.subr.mxu0 0.0
        %5495 = vmatpush1.msra.mxu0 0.0
        %5496 = vmatprep.subr.mxu0 0.0
        %5497 = vmatpush1.msra.mxu0 0.0
        %5498 = vmatprep.subr.mxu0 0.0
        %5499 = vmatpush1.msra.mxu0 0.0
        %5500 = vmatprep.subr.mxu0 0.0
        %5501 = vmatpush1.msra.mxu0 0.0
        %5502 = vmatprep.subr.mxu0 0.0
        %5503 = vmatpush1.msra.mxu0 0.0
        %5504 = vmatprep.subr.mxu0 0.0
        %5505 = vmatpush1.msra.mxu0 0.0
        %5506 = vmatprep.subr.mxu0 0.0
        %5507 = vmatpush1.msra.mxu0 0.0
        %5508 = vmatprep.subr.mxu0 0.0
        %5509 = vmatpush1.msra.mxu0 0.0
        %5510 = vmatprep.subr.mxu0 0.0
        %5511 = vmatpush1.msra.mxu0 0.0
        %5512 = vmatprep.subr.mxu0 0.0
        %5513 = vmatpush1.msra.mxu0 0.0
        %5514 = vmatprep.subr.mxu0 0.0
        %5515 = vmatpush1.msra.mxu0 0.0
        %5516 = vmatprep.subr.mxu0 0.0
        %5517 = vmatpush1.msra.mxu0 0.0
        %5518 = vmatprep.subr.mxu0 0.0
        %5519 = vmatpush1.msra.mxu0 0.0
        %5520 = vmatprep.subr.mxu0 0.0
        %5521 = vmatpush1.msra.mxu0 0.0
        %5522 = vmatprep.subr.mxu0 0.0
        %5523 = vmatpush1.msra.mxu0 0.0
        %5524 = vmatprep.subr.mxu0 0.0
        %5525 = vmatpush1.msra.mxu0 0.0
        %5526 = vmatprep.subr.mxu0 0.0
        %5527 = vmatpush1.msra.mxu0 0.0
        %5528 = vmatprep.subr.mxu0 0.0
        %5529 = vmatpush1.msra.mxu0 0.0
        %5530 = vmatprep.subr.mxu0 0.0
        %5531 = vmatpush1.msra.mxu0 0.0
        %5532 = vmatprep.subr.mxu0 0.0
        %5533 = vmatpush1.msra.mxu0 0.0
        %5534 = vmatprep.subr.mxu0 0.0
        %5535 = vmatpush1.msra.mxu0 0.0
        %5536 = vmatprep.subr.mxu0 0.0
        %5537 = vmatpush1.msra.mxu0 0.0
        %5538 = vmatprep.subr.mxu0 0.0
        %5539 = vmatpush1.msra.mxu0 0.0
        %5540 = vmatprep.subr.mxu0 0.0
        %5541 = vmatpush1.msra.mxu0 0.0
        %5542 = vmatprep.subr.mxu0 0.0
        %5543 = vmatpush1.msra.mxu0 0.0
        %5544 = vmatprep.subr.mxu0 0.0
        %5545 = vmatpush1.msra.mxu0 0.0
        %5546 = vmatprep.subr.mxu0 0.0
        %5547 = vmatpush1.msra.mxu0 0.0
        %5548 = vmatprep.subr.mxu0 0.0
        %5549 = vmatpush1.msra.mxu0 0.0
        %5550 = vmatprep.subr.mxu0 0.0
        %5551 = vmatpush1.msra.mxu0 0.0
        %5552 = vmatprep.mubr.f32.mxu0 0.0
        %5553 = vmatmul.mubr.f32.gmra.mrb[0].mxu0 %v5415
        %v5554 = vpop.f32.mrb[0].mxu0
        %v5555 = vadd.f32 %v5200, %v5554
        %v5556 = vpop.f32.mrb[0].mxu0
        %v5557 = vadd.f32 %v5202, %v5556
        %5558 = vdwg.mxu0
        %5559 = vmatprep.subr.mxu0 %v5387
        %5560 = vmatpush1.msra.mxu0 %v5386
        %5561 = vmatprep.subr.mxu0 %v5395
        %5562 = vmatpush1.msra.mxu0 %v5394
        %5563 = vmatprep.subr.mxu0 0.0
        %5564 = vmatpush1.msra.mxu0 0.0
        %5565 = vmatprep.subr.mxu0 0.0
        %5566 = vmatpush1.msra.mxu0 0.0
        %5567 = vmatprep.subr.mxu0 0.0
        %5568 = vmatpush1.msra.mxu0 0.0
        %5569 = vmatprep.subr.mxu0 0.0
        %5570 = vmatpush1.msra.mxu0 0.0
        %5571 = vmatprep.subr.mxu0 0.0
        %5572 = vmatpush1.msra.mxu0 0.0
        %5573 = vmatprep.subr.mxu0 0.0
        %5574 = vmatpush1.msra.mxu0 0.0
        %5575 = vmatprep.subr.mxu0 0.0
        %5576 = vmatpush1.msra.mxu0 0.0
        %5577 = vmatprep.subr.mxu0 0.0
        %5578 = vmatpush1.msra.mxu0 0.0
        %5579 = vmatprep.subr.mxu0 0.0
        %5580 = vmatpush1.msra.mxu0 0.0
        %5581 = vmatprep.subr.mxu0 0.0
        %5582 = vmatpush1.msra.mxu0 0.0
        %5583 = vmatprep.subr.mxu0 0.0
        %5584 = vmatpush1.msra.mxu0 0.0
        %5585 = vmatprep.subr.mxu0 0.0
        %5586 = vmatpush1.msra.mxu0 0.0
        %5587 = vmatprep.subr.mxu0 0.0
        %5588 = vmatpush1.msra.mxu0 0.0
        %5589 = vmatprep.subr.mxu0 0.0
        %5590 = vmatpush1.msra.mxu0 0.0
        %5591 = vmatprep.subr.mxu0 0.0
        %5592 = vmatpush1.msra.mxu0 0.0
        %5593 = vmatprep.subr.mxu0 0.0
        %5594 = vmatpush1.msra.mxu0 0.0
        %5595 = vmatprep.subr.mxu0 0.0
        %5596 = vmatpush1.msra.mxu0 0.0
        %5597 = vmatprep.subr.mxu0 0.0
        %5598 = vmatpush1.msra.mxu0 0.0
        %5599 = vmatprep.subr.mxu0 0.0
        %5600 = vmatpush1.msra.mxu0 0.0
        %5601 = vmatprep.subr.mxu0 0.0
        %5602 = vmatpush1.msra.mxu0 0.0
        %5603 = vmatprep.subr.mxu0 0.0
        %5604 = vmatpush1.msra.mxu0 0.0
        %5605 = vmatprep.subr.mxu0 0.0
        %5606 = vmatpush1.msra.mxu0 0.0
        %5607 = vmatprep.subr.mxu0 0.0
        %5608 = vmatpush1.msra.mxu0 0.0
        %5609 = vmatprep.subr.mxu0 0.0
        %5610 = vmatpush1.msra.mxu0 0.0
        %5611 = vmatprep.subr.mxu0 0.0
        %5612 = vmatpush1.msra.mxu0 0.0
        %5613 = vmatprep.subr.mxu0 0.0
        %5614 = vmatpush1.msra.mxu0 0.0
        %5615 = vmatprep.subr.mxu0 0.0
        %5616 = vmatpush1.msra.mxu0 0.0
        %5617 = vmatprep.subr.mxu0 0.0
        %5618 = vmatpush1.msra.mxu0 0.0
        %5619 = vmatprep.subr.mxu0 0.0
        %5620 = vmatpush1.msra.mxu0 0.0
        %5621 = vmatprep.subr.mxu0 0.0
        %5622 = vmatpush1.msra.mxu0 0.0
        %5623 = vmatprep.mubr.f32.mxu0 0.0
        %5624 = vmatmul.mubr.f32.gmra.mrb[0].mxu0 %v5415
        %v5625 = vpop.f32.mrb[0].mxu0
        %v5626 = vadd.f32 %v5271, %v5625
        %v5627 = vpop.f32.mrb[0].mxu0
        %v5628 = vadd.f32 %v5273, %v5627
        %5629 = vdwg.mxu0
        %5630 = vmatprep.subr.mxu0 %v5389
        %5631 = vmatpush1.msra.mxu0 %v5388
        %5632 = vmatprep.subr.mxu0 %v5397
        %5633 = vmatpush1.msra.mxu0 %v5396
        %5634 = vmatprep.subr.mxu0 0.0
        %5635 = vmatpush1.msra.mxu0 0.0
        %5636 = vmatprep.subr.mxu0 0.0
        %5637 = vmatpush1.msra.mxu0 0.0
        %5638 = vmatprep.subr.mxu0 0.0
        %5639 = vmatpush1.msra.mxu0 0.0
        %5640 = vmatprep.subr.mxu0 0.0
        %5641 = vmatpush1.msra.mxu0 0.0
        %5642 = vmatprep.subr.mxu0 0.0
        %5643 = vmatpush1.msra.mxu0 0.0
        %5644 = vmatprep.subr.mxu0 0.0
        %5645 = vmatpush1.msra.mxu0 0.0
        %5646 = vmatprep.subr.mxu0 0.0
        %5647 = vmatpush1.msra.mxu0 0.0
        %5648 = vmatprep.subr.mxu0 0.0
        %5649 = vmatpush1.msra.mxu0 0.0
        %5650 = vmatprep.subr.mxu0 0.0
        %5651 = vmatpush1.msra.mxu0 0.0
        %5652 = vmatprep.subr.mxu0 0.0
        %5653 = vmatpush1.msra.mxu0 0.0
        %5654 = vmatprep.subr.mxu0 0.0
        %5655 = vmatpush1.msra.mxu0 0.0
        %5656 = vmatprep.subr.mxu0 0.0
        %5657 = vmatpush1.msra.mxu0 0.0
        %5658 = vmatprep.subr.mxu0 0.0
        %5659 = vmatpush1.msra.mxu0 0.0
        %5660 = vmatprep.subr.mxu0 0.0
        %5661 = vmatpush1.msra.mxu0 0.0
        %5662 = vmatprep.subr.mxu0 0.0
        %5663 = vmatpush1.msra.mxu0 0.0
        %5664 = vmatprep.subr.mxu0 0.0
        %5665 = vmatpush1.msra.mxu0 0.0
        %5666 = vmatprep.subr.mxu0 0.0
        %5667 = vmatpush1.msra.mxu0 0.0
        %5668 = vmatprep.subr.mxu0 0.0
        %5669 = vmatpush1.msra.mxu0 0.0
        %5670 = vmatprep.subr.mxu0 0.0
        %5671 = vmatpush1.msra.mxu0 0.0
        %5672 = vmatprep.subr.mxu0 0.0
        %5673 = vmatpush1.msra.mxu0 0.0
        %5674 = vmatprep.subr.mxu0 0.0
        %5675 = vmatpush1.msra.mxu0 0.0
        %5676 = vmatprep.subr.mxu0 0.0
        %5677 = vmatpush1.msra.mxu0 0.0
        %5678 = vmatprep.subr.mxu0 0.0
        %5679 = vmatpush1.msra.mxu0 0.0
        %5680 = vmatprep.subr.mxu0 0.0
        %5681 = vmatpush1.msra.mxu0 0.0
        %5682 = vmatprep.subr.mxu0 0.0
        %5683 = vmatpush1.msra.mxu0 0.0
        %5684 = vmatprep.subr.mxu0 0.0
        %5685 = vmatpush1.msra.mxu0 0.0
        %5686 = vmatprep.subr.mxu0 0.0
        %5687 = vmatpush1.msra.mxu0 0.0
        %5688 = vmatprep.subr.mxu0 0.0
        %5689 = vmatpush1.msra.mxu0 0.0
        %5690 = vmatprep.subr.mxu0 0.0
        %5691 = vmatpush1.msra.mxu0 0.0
        %5692 = vmatprep.subr.mxu0 0.0
        %5693 = vmatpush1.msra.mxu0 0.0
        %5694 = vmatprep.mubr.f32.mxu0 0.0
        %5695 = vmatmul.mubr.f32.gmra.mrb[0].mxu0 %v5415
        %v5696 = vpop.f32.mrb[0].mxu0
        %v5697 = vadd.f32 %v5342, %v5696
        %v5698 = vpop.f32.mrb[0].mxu0
        %v5699 = vadd.f32 %v5344, %v5698
        %5700 = vdwg.mxu0
        %s5701 = scalar_lea.vmem %s3, 48
        %v5702 = vld [vmem:[%s5701] sm:$0xff]
        %5703 = vrot.lane.b32.xlu0 %v4952, 33
        %v5704 = vpop.permute.xlu0 %5703
        %5705 = vrot.lane.b32.xlu0 %v4953, 33
        %v5706 = vpop.permute.xlu0 %5705
        %5707 = vrot.lane.b32.xlu0 %v4954, 33
        %v5708 = vpop.permute.xlu0 %5707
        %5709 = vrot.lane.b32.xlu0 %v4955, 33
        %v5710 = vpop.permute.xlu0 %5709
        %5711 = vrot.lane.b32.xlu0 %v4956, 33
        %v5712 = vpop.permute.xlu0 %5711
        %5713 = vrot.lane.b32.xlu0 %v4957, 33
        %v5714 = vpop.permute.xlu0 %5713
        %5715 = vrot.lane.b32.xlu0 %v4958, 33
        %v5716 = vpop.permute.xlu0 %5715
        %5717 = vrot.lane.b32.xlu0 %v4959, 33
        %v5718 = vpop.permute.xlu0 %5717
        %5719 = vrot.lane.b32.xlu0 %v4960, 33
        %v5720 = vpop.permute.xlu0 %5719
        %5721 = vrot.lane.b32.xlu0 %v4961, 33
        %v5722 = vpop.permute.xlu0 %5721
        %5723 = vrot.lane.b32.xlu0 %v4962, 33
        %v5724 = vpop.permute.xlu0 %5723
        %5725 = vrot.lane.b32.xlu0 %v4963, 33
        %v5726 = vpop.permute.xlu0 %5725
        %5727 = vrot.lane.b32.xlu0 %v4964, 33
        %v5728 = vpop.permute.xlu0 %5727
        %5729 = vrot.lane.b32.xlu0 %v4965, 33
        %v5730 = vpop.permute.xlu0 %5729
        %5731 = vrot.lane.b32.xlu0 %v4966, 33
        %v5732 = vpop.permute.xlu0 %5731
        %5733 = vrot.lane.b32.xlu0 %v4967, 33
        %v5734 = vpop.permute.xlu0 %5733
        %5735 = vrot.lane.b32.xlu0 %v4968, 33
        %v5736 = vpop.permute.xlu0 %5735
        %5737 = vrot.lane.b32.xlu0 %v4969, 33
        %v5738 = vpop.permute.xlu0 %5737
        %v5739 = vsel %vm2301, %v5704, %v5706
        %v5740 = vsel %vm2301, %v5706, %v5708
        %v5741 = vsel %vm2301, %v5708, %v5710
        %v5742 = vsel %vm2301, %v5710, %v5712
        %v5743 = vsel %vm2301, %v5712, %v5714
        %v5744 = vsel %vm2301, %v5714, %v5716
        %v5745 = vsel %vm2301, %v5716, %v5718
        %v5746 = vsel %vm2301, %v5718, %v5720
        %v5747 = vsel %vm2301, %v5722, %v5724
        %v5748 = vsel %vm2301, %v5724, %v5726
        %v5749 = vsel %vm2301, %v5726, %v5728
        %v5750 = vsel %vm2301, %v5728, %v5730
        %v5751 = vsel %vm2301, %v5730, %v5732
        %v5752 = vsel %vm2301, %v5732, %v5734
        %v5753 = vsel %vm2301, %v5734, %v5736
        %v5754 = vsel %vm2301, %v5736, %v5738
        %v5772 = vsel %vm326, %v5702, 0
        %5774 = vmatprep.subr.mxu0 %v5740
        %5775 = vmatpush1.msra.mxu0 %v5739
        %5776 = vmatprep.subr.mxu0 %v5748
        %5777 = vmatpush1.msra.mxu0 %v5747
        %5778 = vmatprep.subr.mxu0 0.0
        %5779 = vmatpush1.msra.mxu0 0.0
        %5780 = vmatprep.subr.mxu0 0.0
        %5781 = vmatpush1.msra.mxu0 0.0
        %5782 = vmatprep.subr.mxu0 0.0
        %5783 = vmatpush1.msra.mxu0 0.0
        %5784 = vmatprep.subr.mxu0 0.0
        %5785 = vmatpush1.msra.mxu0 0.0
        %5786 = vmatprep.subr.mxu0 0.0
        %5787 = vmatpush1.msra.mxu0 0.0
        %5788 = vmatprep.subr.mxu0 0.0
        %5789 = vmatpush1.msra.mxu0 0.0
        %5790 = vmatprep.subr.mxu0 0.0
        %5791 = vmatpush1.msra.mxu0 0.0
        %5792 = vmatprep.subr.mxu0 0.0
        %5793 = vmatpush1.msra.mxu0 0.0
        %5794 = vmatprep.subr.mxu0 0.0
        %5795 = vmatpush1.msra.mxu0 0.0
        %5796 = vmatprep.subr.mxu0 0.0
        %5797 = vmatpush1.msra.mxu0 0.0
        %5798 = vmatprep.subr.mxu0 0.0
        %5799 = vmatpush1.msra.mxu0 0.0
        %5800 = vmatprep.subr.mxu0 0.0
        %5801 = vmatpush1.msra.mxu0 0.0
        %5802 = vmatprep.subr.mxu0 0.0
        %5803 = vmatpush1.msra.mxu0 0.0
        %5804 = vmatprep.subr.mxu0 0.0
        %5805 = vmatpush1.msra.mxu0 0.0
        %5806 = vmatprep.subr.mxu0 0.0
        %5807 = vmatpush1.msra.mxu0 0.0
        %5808 = vmatprep.subr.mxu0 0.0
        %5809 = vmatpush1.msra.mxu0 0.0
        %5810 = vmatprep.subr.mxu0 0.0
        %5811 = vmatpush1.msra.mxu0 0.0
        %5812 = vmatprep.subr.mxu0 0.0
        %5813 = vmatpush1.msra.mxu0 0.0
        %5814 = vmatprep.subr.mxu0 0.0
        %5815 = vmatpush1.msra.mxu0 0.0
        %5816 = vmatprep.subr.mxu0 0.0
        %5817 = vmatpush1.msra.mxu0 0.0
        %5818 = vmatprep.subr.mxu0 0.0
        %5819 = vmatpush1.msra.mxu0 0.0
        %5820 = vmatprep.subr.mxu0 0.0
        %5821 = vmatpush1.msra.mxu0 0.0
        %5822 = vmatprep.subr.mxu0 0.0
        %5823 = vmatpush1.msra.mxu0 0.0
        %5824 = vmatprep.subr.mxu0 0.0
        %5825 = vmatpush1.msra.mxu0 0.0
        %5826 = vmatprep.subr.mxu0 0.0
        %5827 = vmatpush1.msra.mxu0 0.0
        %5828 = vmatprep.subr.mxu0 0.0
        %5829 = vmatpush1.msra.mxu0 0.0
        %5830 = vmatprep.subr.mxu0 0.0
        %5831 = vmatpush1.msra.mxu0 0.0
        %5832 = vmatprep.subr.mxu0 0.0
        %5833 = vmatpush1.msra.mxu0 0.0
        %5834 = vmatprep.subr.mxu0 0.0
        %5835 = vmatpush1.msra.mxu0 0.0
        %5836 = vmatprep.subr.mxu0 0.0
        %5837 = vmatpush1.msra.mxu0 0.0
        %5838 = vmatprep.mubr.f32.mxu0 0.0
        %5839 = vmatmul.mubr.f32.gmra.mrb[0].mxu0 %v5772
        %v5840 = vpop.f32.mrb[0].mxu0
        %v5841 = vadd.f32 0.0, %v5840
        %v5842 = vpop.f32.mrb[0].mxu0
        %v5843 = vadd.f32 0.0, %v5842
        %5844 = vdwg.mxu0
        %5845 = vmatprep.subr.mxu0 %v5742
        %5846 = vmatpush1.msra.mxu0 %v5741
        %5847 = vmatprep.subr.mxu0 %v5750
        %5848 = vmatpush1.msra.mxu0 %v5749
        %5849 = vmatprep.subr.mxu0 0.0
        %5850 = vmatpush1.msra.mxu0 0.0
        %5851 = vmatprep.subr.mxu0 0.0
        %5852 = vmatpush1.msra.mxu0 0.0
        %5853 = vmatprep.subr.mxu0 0.0
        %5854 = vmatpush1.msra.mxu0 0.0
        %5855 = vmatprep.subr.mxu0 0.0
        %5856 = vmatpush1.msra.mxu0 0.0
        %5857 = vmatprep.subr.mxu0 0.0
        %5858 = vmatpush1.msra.mxu0 0.0
        %5859 = vmatprep.subr.mxu0 0.0
        %5860 = vmatpush1.msra.mxu0 0.0
        %5861 = vmatprep.subr.mxu0 0.0
        %5862 = vmatpush1.msra.mxu0 0.0
        %5863 = vmatprep.subr.mxu0 0.0
        %5864 = vmatpush1.msra.mxu0 0.0
        %5865 = vmatprep.subr.mxu0 0.0
        %5866 = vmatpush1.msra.mxu0 0.0
        %5867 = vmatprep.subr.mxu0 0.0
        %5868 = vmatpush1.msra.mxu0 0.0
        %5869 = vmatprep.subr.mxu0 0.0
        %5870 = vmatpush1.msra.mxu0 0.0
        %5871 = vmatprep.subr.mxu0 0.0
        %5872 = vmatpush1.msra.mxu0 0.0
        %5873 = vmatprep.subr.mxu0 0.0
        %5874 = vmatpush1.msra.mxu0 0.0
        %5875 = vmatprep.subr.mxu0 0.0
        %5876 = vmatpush1.msra.mxu0 0.0
        %5877 = vmatprep.subr.mxu0 0.0
        %5878 = vmatpush1.msra.mxu0 0.0
        %5879 = vmatprep.subr.mxu0 0.0
        %5880 = vmatpush1.msra.mxu0 0.0
        %5881 = vmatprep.subr.mxu0 0.0
        %5882 = vmatpush1.msra.mxu0 0.0
        %5883 = vmatprep.subr.mxu0 0.0
        %5884 = vmatpush1.msra.mxu0 0.0
        %5885 = vmatprep.subr.mxu0 0.0
        %5886 = vmatpush1.msra.mxu0 0.0
        %5887 = vmatprep.subr.mxu0 0.0
        %5888 = vmatpush1.msra.mxu0 0.0
        %5889 = vmatprep.subr.mxu0 0.0
        %5890 = vmatpush1.msra.mxu0 0.0
        %5891 = vmatprep.subr.mxu0 0.0
        %5892 = vmatpush1.msra.mxu0 0.0
        %5893 = vmatprep.subr.mxu0 0.0
        %5894 = vmatpush1.msra.mxu0 0.0
        %5895 = vmatprep.subr.mxu0 0.0
        %5896 = vmatpush1.msra.mxu0 0.0
        %5897 = vmatprep.subr.mxu0 0.0
        %5898 = vmatpush1.msra.mxu0 0.0
        %5899 = vmatprep.subr.mxu0 0.0
        %5900 = vmatpush1.msra.mxu0 0.0
        %5901 = vmatprep.subr.mxu0 0.0
        %5902 = vmatpush1.msra.mxu0 0.0
        %5903 = vmatprep.subr.mxu0 0.0
        %5904 = vmatpush1.msra.mxu0 0.0
        %5905 = vmatprep.subr.mxu0 0.0
        %5906 = vmatpush1.msra.mxu0 0.0
        %5907 = vmatprep.subr.mxu0 0.0
        %5908 = vmatpush1.msra.mxu0 0.0
        %5909 = vmatprep.mubr.f32.mxu0 0.0
        %5910 = vmatmul.mubr.f32.gmra.mrb[0].mxu0 %v5772
        %v5911 = vpop.f32.mrb[0].mxu0
        %v5912 = vadd.f32 0.0, %v5911
        %v5913 = vpop.f32.mrb[0].mxu0
        %v5914 = vadd.f32 0.0, %v5913
        %5915 = vdwg.mxu0
        %5916 = vmatprep.subr.mxu0 %v5744
        %5917 = vmatpush1.msra.mxu0 %v5743
        %5918 = vmatprep.subr.mxu0 %v5752
        %5919 = vmatpush1.msra.mxu0 %v5751
        %5920 = vmatprep.subr.mxu0 0.0
        %5921 = vmatpush1.msra.mxu0 0.0
        %5922 = vmatprep.subr.mxu0 0.0
        %5923 = vmatpush1.msra.mxu0 0.0
        %5924 = vmatprep.subr.mxu0 0.0
        %5925 = vmatpush1.msra.mxu0 0.0
        %5926 = vmatprep.subr.mxu0 0.0
        %5927 = vmatpush1.msra.mxu0 0.0
        %5928 = vmatprep.subr.mxu0 0.0
        %5929 = vmatpush1.msra.mxu0 0.0
        %5930 = vmatprep.subr.mxu0 0.0
        %5931 = vmatpush1.msra.mxu0 0.0
        %5932 = vmatprep.subr.mxu0 0.0
        %5933 = vmatpush1.msra.mxu0 0.0
        %5934 = vmatprep.subr.mxu0 0.0
        %5935 = vmatpush1.msra.mxu0 0.0
        %5936 = vmatprep.subr.mxu0 0.0
        %5937 = vmatpush1.msra.mxu0 0.0
        %5938 = vmatprep.subr.mxu0 0.0
        %5939 = vmatpush1.msra.mxu0 0.0
        %5940 = vmatprep.subr.mxu0 0.0
        %5941 = vmatpush1.msra.mxu0 0.0
        %5942 = vmatprep.subr.mxu0 0.0
        %5943 = vmatpush1.msra.mxu0 0.0
        %5944 = vmatprep.subr.mxu0 0.0
        %5945 = vmatpush1.msra.mxu0 0.0
        %5946 = vmatprep.subr.mxu0 0.0
        %5947 = vmatpush1.msra.mxu0 0.0
        %5948 = vmatprep.subr.mxu0 0.0
        %5949 = vmatpush1.msra.mxu0 0.0
        %5950 = vmatprep.subr.mxu0 0.0
        %5951 = vmatpush1.msra.mxu0 0.0
        %5952 = vmatprep.subr.mxu0 0.0
        %5953 = vmatpush1.msra.mxu0 0.0
        %5954 = vmatprep.subr.mxu0 0.0
        %5955 = vmatpush1.msra.mxu0 0.0
        %5956 = vmatprep.subr.mxu0 0.0
        %5957 = vmatpush1.msra.mxu0 0.0
        %5958 = vmatprep.subr.mxu0 0.0
        %5959 = vmatpush1.msra.mxu0 0.0
        %5960 = vmatprep.subr.mxu0 0.0
        %5961 = vmatpush1.msra.mxu0 0.0
        %5962 = vmatprep.subr.mxu0 0.0
        %5963 = vmatpush1.msra.mxu0 0.0
        %5964 = vmatprep.subr.mxu0 0.0
        %5965 = vmatpush1.msra.mxu0 0.0
        %5966 = vmatprep.subr.mxu0 0.0
        %5967 = vmatpush1.msra.mxu0 0.0
        %5968 = vmatprep.subr.mxu0 0.0
        %5969 = vmatpush1.msra.mxu0 0.0
        %5970 = vmatprep.subr.mxu0 0.0
        %5971 = vmatpush1.msra.mxu0 0.0
        %5972 = vmatprep.subr.mxu0 0.0
        %5973 = vmatpush1.msra.mxu0 0.0
        %5974 = vmatprep.subr.mxu0 0.0
        %5975 = vmatpush1.msra.mxu0 0.0
        %5976 = vmatprep.subr.mxu0 0.0
        %5977 = vmatpush1.msra.mxu0 0.0
        %5978 = vmatprep.subr.mxu0 0.0
        %5979 = vmatpush1.msra.mxu0 0.0
        %5980 = vmatprep.mubr.f32.mxu0 0.0
        %5981 = vmatmul.mubr.f32.gmra.mrb[0].mxu0 %v5772
        %v5982 = vpop.f32.mrb[0].mxu0
        %v5983 = vadd.f32 0.0, %v5982
        %v5984 = vpop.f32.mrb[0].mxu0
        %v5985 = vadd.f32 0.0, %v5984
        %5986 = vdwg.mxu0
        %5987 = vmatprep.subr.mxu0 %v5746
        %5988 = vmatpush1.msra.mxu0 %v5745
        %5989 = vmatprep.subr.mxu0 %v5754
        %5990 = vmatpush1.msra.mxu0 %v5753
        %5991 = vmatprep.subr.mxu0 0.0
        %5992 = vmatpush1.msra.mxu0 0.0
        %5993 = vmatprep.subr.mxu0 0.0
        %5994 = vmatpush1.msra.mxu0 0.0
        %5995 = vmatprep.subr.mxu0 0.0
        %5996 = vmatpush1.msra.mxu0 0.0
        %5997 = vmatprep.subr.mxu0 0.0
        %5998 = vmatpush1.msra.mxu0 0.0
        %5999 = vmatprep.subr.mxu0 0.0
        %6000 = vmatpush1.msra.mxu0 0.0
        %6001 = vmatprep.subr.mxu0 0.0
        %6002 = vmatpush1.msra.mxu0 0.0
        %6003 = vmatprep.subr.mxu0 0.0
        %6004 = vmatpush1.msra.mxu0 0.0
        %6005 = vmatprep.subr.mxu0 0.0
        %6006 = vmatpush1.msra.mxu0 0.0
        %6007 = vmatprep.subr.mxu0 0.0
        %6008 = vmatpush1.msra.mxu0 0.0
        %6009 = vmatprep.subr.mxu0 0.0
        %6010 = vmatpush1.msra.mxu0 0.0
        %6011 = vmatprep.subr.mxu0 0.0
        %6012 = vmatpush1.msra.mxu0 0.0
        %6013 = vmatprep.subr.mxu0 0.0
        %6014 = vmatpush1.msra.mxu0 0.0
        %6015 = vmatprep.subr.mxu0 0.0
        %6016 = vmatpush1.msra.mxu0 0.0
        %6017 = vmatprep.subr.mxu0 0.0
        %6018 = vmatpush1.msra.mxu0 0.0
        %6019 = vmatprep.subr.mxu0 0.0
        %6020 = vmatpush1.msra.mxu0 0.0
        %6021 = vmatprep.subr.mxu0 0.0
        %6022 = vmatpush1.msra.mxu0 0.0
        %6023 = vmatprep.subr.mxu0 0.0
        %6024 = vmatpush1.msra.mxu0 0.0
        %6025 = vmatprep.subr.mxu0 0.0
        %6026 = vmatpush1.msra.mxu0 0.0
        %6027 = vmatprep.subr.mxu0 0.0
        %6028 = vmatpush1.msra.mxu0 0.0
        %6029 = vmatprep.subr.mxu0 0.0
        %6030 = vmatpush1.msra.mxu0 0.0
        %6031 = vmatprep.subr.mxu0 0.0
        %6032 = vmatpush1.msra.mxu0 0.0
        %6033 = vmatprep.subr.mxu0 0.0
        %6034 = vmatpush1.msra.mxu0 0.0
        %6035 = vmatprep.subr.mxu0 0.0
        %6036 = vmatpush1.msra.mxu0 0.0
        %6037 = vmatprep.subr.mxu0 0.0
        %6038 = vmatpush1.msra.mxu0 0.0
        %6039 = vmatprep.subr.mxu0 0.0
        %6040 = vmatpush1.msra.mxu0 0.0
        %6041 = vmatprep.subr.mxu0 0.0
        %6042 = vmatpush1.msra.mxu0 0.0
        %6043 = vmatprep.subr.mxu0 0.0
        %6044 = vmatpush1.msra.mxu0 0.0
        %6045 = vmatprep.subr.mxu0 0.0
        %6046 = vmatpush1.msra.mxu0 0.0
        %6047 = vmatprep.subr.mxu0 0.0
        %6048 = vmatpush1.msra.mxu0 0.0
        %6049 = vmatprep.subr.mxu0 0.0
        %6050 = vmatpush1.msra.mxu0 0.0
        %6051 = vmatprep.mubr.f32.mxu0 0.0
        %6052 = vmatmul.mubr.f32.gmra.mrb[0].mxu0 %v5772
        %v6053 = vpop.f32.mrb[0].mxu0
        %v6054 = vadd.f32 0.0, %v6053
        %v6055 = vpop.f32.mrb[0].mxu0
        %v6056 = vadd.f32 0.0, %v6055
        %6057 = vdwg.mxu0
        %v6058 = vadd.f32 %v5484, %v5841
        %v6059 = vadd.f32 %v5486, %v5843
        %v6060 = vadd.f32 %v5555, %v5912
        %v6061 = vadd.f32 %v5557, %v5914
        %v6062 = vadd.f32 %v5626, %v5983
        %v6063 = vadd.f32 %v5628, %v5985
        %v6064 = vadd.f32 %v5697, %v6054
        %v6065 = vadd.f32 %v5699, %v6056
        %v6066 = vmul.f32 %v6058, %v2625
        %v6067 = vmul.f32 %v6059, %v2629
        %v6068 = vmul.f32 %v6060, %v2633
        %v6069 = vmul.f32 %v6061, %v2637
        %v6070 = vmul.f32 %v6062, %v2641
        %v6071 = vmul.f32 %v6063, %v2645
        %v6072 = vmul.f32 %v6064, %v2649
        %v6073 = vmul.f32 %v6065, %v2653
        %v6074 = vadd.f32 %v6066, 0.0
        %v6075 = vadd.f32 %v6067, 0.0
        %v6076 = vadd.f32 %v6068, 0.0
        %v6077 = vadd.f32 %v6069, 0.0
        %v6078 = vadd.f32 %v6070, 0.0
        %v6079 = vadd.f32 %v6071, 0.0
        %v6080 = vadd.f32 %v6072, 0.0
        %v6081 = vadd.f32 %v6073, 0.0
        %s6082 = scalar_lea.vmem %s3, 8
        %v6083 = vld [vmem:[%s6082] sm:$0xff]
        %s6084 = scalar_lea.vmem %s3, 32
        %v6085 = vld [vmem:[%s6084] sm:$0xff]
        %6086 = vrot.lane.b32.xlu0 %v4952, 64
        %v6087 = vpop.permute.xlu0 %6086
        %6088 = vrot.lane.b32.xlu0 %v4953, 64
        %v6089 = vpop.permute.xlu0 %6088
        %6090 = vrot.lane.b32.xlu0 %v4954, 64
        %v6091 = vpop.permute.xlu0 %6090
        %6092 = vrot.lane.b32.xlu0 %v4955, 64
        %v6093 = vpop.permute.xlu0 %6092
        %6094 = vrot.lane.b32.xlu0 %v4956, 64
        %v6095 = vpop.permute.xlu0 %6094
        %6096 = vrot.lane.b32.xlu0 %v4957, 64
        %v6097 = vpop.permute.xlu0 %6096
        %6098 = vrot.lane.b32.xlu0 %v4958, 64
        %v6099 = vpop.permute.xlu0 %6098
        %6100 = vrot.lane.b32.xlu0 %v4959, 64
        %v6101 = vpop.permute.xlu0 %6100
        %6102 = vrot.lane.b32.xlu0 %v4960, 64
        %v6103 = vpop.permute.xlu0 %6102
        %6104 = vrot.lane.b32.xlu0 %v4961, 64
        %v6105 = vpop.permute.xlu0 %6104
        %6106 = vrot.lane.b32.xlu0 %v4962, 64
        %v6107 = vpop.permute.xlu0 %6106
        %6108 = vrot.lane.b32.xlu0 %v4963, 64
        %v6109 = vpop.permute.xlu0 %6108
        %6110 = vrot.lane.b32.xlu0 %v4964, 64
        %v6111 = vpop.permute.xlu0 %6110
        %6112 = vrot.lane.b32.xlu0 %v4965, 64
        %v6113 = vpop.permute.xlu0 %6112
        %6114 = vrot.lane.b32.xlu0 %v4966, 64
        %v6115 = vpop.permute.xlu0 %6114
        %6116 = vrot.lane.b32.xlu0 %v4967, 64
        %v6117 = vpop.permute.xlu0 %6116
        %6118 = vrot.lane.b32.xlu0 %v4968, 64
        %v6119 = vpop.permute.xlu0 %6118
        %6120 = vrot.lane.b32.xlu0 %v4969, 64
        %v6121 = vpop.permute.xlu0 %6120
        %v6122 = vsel %vm2714, %v6087, %v6089
        %v6123 = vsel %vm2714, %v6089, %v6091
        %v6124 = vsel %vm2714, %v6091, %v6093
        %v6125 = vsel %vm2714, %v6093, %v6095
        %v6126 = vsel %vm2714, %v6095, %v6097
        %v6127 = vsel %vm2714, %v6097, %v6099
        %v6128 = vsel %vm2714, %v6099, %v6101
        %v6129 = vsel %vm2714, %v6101, %v6103
        %v6130 = vsel %vm2714, %v6105, %v6107
        %v6131 = vsel %vm2714, %v6107, %v6109
        %v6132 = vsel %vm2714, %v6109, %v6111
        %v6133 = vsel %vm2714, %v6111, %v6113
        %v6134 = vsel %vm2714, %v6113, %v6115
        %v6135 = vsel %vm2714, %v6115, %v6117
        %v6136 = vsel %vm2714, %v6117, %v6119
        %v6137 = vsel %vm2714, %v6119, %v6121
        %v6155 = vsel %vm326, %v6085, 0
        %6157 = vmatprep.subr.mxu0 %v6123
        %6158 = vmatpush1.msra.mxu0 %v6122
        %6159 = vmatprep.subr.mxu0 %v6131
        %6160 = vmatpush1.msra.mxu0 %v6130
        %6161 = vmatprep.subr.mxu0 0.0
        %6162 = vmatpush1.msra.mxu0 0.0
        %6163 = vmatprep.subr.mxu0 0.0
        %6164 = vmatpush1.msra.mxu0 0.0
        %6165 = vmatprep.subr.mxu0 0.0
        %6166 = vmatpush1.msra.mxu0 0.0
        %6167 = vmatprep.subr.mxu0 0.0
        %6168 = vmatpush1.msra.mxu0 0.0
        %6169 = vmatprep.subr.mxu0 0.0
        %6170 = vmatpush1.msra.mxu0 0.0
        %6171 = vmatprep.subr.mxu0 0.0
        %6172 = vmatpush1.msra.mxu0 0.0
        %6173 = vmatprep.subr.mxu0 0.0
        %6174 = vmatpush1.msra.mxu0 0.0
        %6175 = vmatprep.subr.mxu0 0.0
        %6176 = vmatpush1.msra.mxu0 0.0
        %6177 = vmatprep.subr.mxu0 0.0
        %6178 = vmatpush1.msra.mxu0 0.0
        %6179 = vmatprep.subr.mxu0 0.0
        %6180 = vmatpush1.msra.mxu0 0.0
        %6181 = vmatprep.subr.mxu0 0.0
        %6182 = vmatpush1.msra.mxu0 0.0
        %6183 = vmatprep.subr.mxu0 0.0
        %6184 = vmatpush1.msra.mxu0 0.0
        %6185 = vmatprep.subr.mxu0 0.0
        %6186 = vmatpush1.msra.mxu0 0.0
        %6187 = vmatprep.subr.mxu0 0.0
        %6188 = vmatpush1.msra.mxu0 0.0
        %6189 = vmatprep.subr.mxu0 0.0
        %6190 = vmatpush1.msra.mxu0 0.0
        %6191 = vmatprep.subr.mxu0 0.0
        %6192 = vmatpush1.msra.mxu0 0.0
        %6193 = vmatprep.subr.mxu0 0.0
        %6194 = vmatpush1.msra.mxu0 0.0
        %6195 = vmatprep.subr.mxu0 0.0
        %6196 = vmatpush1.msra.mxu0 0.0
        %6197 = vmatprep.subr.mxu0 0.0
        %6198 = vmatpush1.msra.mxu0 0.0
        %6199 = vmatprep.subr.mxu0 0.0
        %6200 = vmatpush1.msra.mxu0 0.0
        %6201 = vmatprep.subr.mxu0 0.0
        %6202 = vmatpush1.msra.mxu0 0.0
        %6203 = vmatprep.subr.mxu0 0.0
        %6204 = vmatpush1.msra.mxu0 0.0
        %6205 = vmatprep.subr.mxu0 0.0
        %6206 = vmatpush1.msra.mxu0 0.0
        %6207 = vmatprep.subr.mxu0 0.0
        %6208 = vmatpush1.msra.mxu0 0.0
        %6209 = vmatprep.subr.mxu0 0.0
        %6210 = vmatpush1.msra.mxu0 0.0
        %6211 = vmatprep.subr.mxu0 0.0
        %6212 = vmatpush1.msra.mxu0 0.0
        %6213 = vmatprep.subr.mxu0 0.0
        %6214 = vmatpush1.msra.mxu0 0.0
        %6215 = vmatprep.subr.mxu0 0.0
        %6216 = vmatpush1.msra.mxu0 0.0
        %6217 = vmatprep.subr.mxu0 0.0
        %6218 = vmatpush1.msra.mxu0 0.0
        %6219 = vmatprep.subr.mxu0 0.0
        %6220 = vmatpush1.msra.mxu0 0.0
        %6221 = vmatprep.mubr.f32.mxu0 0.0
        %6222 = vmatmul.mubr.f32.gmra.mrb[0].mxu0 %v6155
        %v6223 = vpop.f32.mrb[0].mxu0
        %v6224 = vadd.f32 0.0, %v6223
        %v6225 = vpop.f32.mrb[0].mxu0
        %v6226 = vadd.f32 0.0, %v6225
        %6227 = vdwg.mxu0
        %6228 = vmatprep.subr.mxu0 %v6125
        %6229 = vmatpush1.msra.mxu0 %v6124
        %6230 = vmatprep.subr.mxu0 %v6133
        %6231 = vmatpush1.msra.mxu0 %v6132
        %6232 = vmatprep.subr.mxu0 0.0
        %6233 = vmatpush1.msra.mxu0 0.0
        %6234 = vmatprep.subr.mxu0 0.0
        %6235 = vmatpush1.msra.mxu0 0.0
        %6236 = vmatprep.subr.mxu0 0.0
        %6237 = vmatpush1.msra.mxu0 0.0
        %6238 = vmatprep.subr.mxu0 0.0
        %6239 = vmatpush1.msra.mxu0 0.0
        %6240 = vmatprep.subr.mxu0 0.0
        %6241 = vmatpush1.msra.mxu0 0.0
        %6242 = vmatprep.subr.mxu0 0.0
        %6243 = vmatpush1.msra.mxu0 0.0
        %6244 = vmatprep.subr.mxu0 0.0
        %6245 = vmatpush1.msra.mxu0 0.0
        %6246 = vmatprep.subr.mxu0 0.0
        %6247 = vmatpush1.msra.mxu0 0.0
        %6248 = vmatprep.subr.mxu0 0.0
        %6249 = vmatpush1.msra.mxu0 0.0
        %6250 = vmatprep.subr.mxu0 0.0
        %6251 = vmatpush1.msra.mxu0 0.0
        %6252 = vmatprep.subr.mxu0 0.0
        %6253 = vmatpush1.msra.mxu0 0.0
        %6254 = vmatprep.subr.mxu0 0.0
        %6255 = vmatpush1.msra.mxu0 0.0
        %6256 = vmatprep.subr.mxu0 0.0
        %6257 = vmatpush1.msra.mxu0 0.0
        %6258 = vmatprep.subr.mxu0 0.0
        %6259 = vmatpush1.msra.mxu0 0.0
        %6260 = vmatprep.subr.mxu0 0.0
        %6261 = vmatpush1.msra.mxu0 0.0
        %6262 = vmatprep.subr.mxu0 0.0
        %6263 = vmatpush1.msra.mxu0 0.0
        %6264 = vmatprep.subr.mxu0 0.0
        %6265 = vmatpush1.msra.mxu0 0.0
        %6266 = vmatprep.subr.mxu0 0.0
        %6267 = vmatpush1.msra.mxu0 0.0
        %6268 = vmatprep.subr.mxu0 0.0
        %6269 = vmatpush1.msra.mxu0 0.0
        %6270 = vmatprep.subr.mxu0 0.0
        %6271 = vmatpush1.msra.mxu0 0.0
        %6272 = vmatprep.subr.mxu0 0.0
        %6273 = vmatpush1.msra.mxu0 0.0
        %6274 = vmatprep.subr.mxu0 0.0
        %6275 = vmatpush1.msra.mxu0 0.0
        %6276 = vmatprep.subr.mxu0 0.0
        %6277 = vmatpush1.msra.mxu0 0.0
        %6278 = vmatprep.subr.mxu0 0.0
        %6279 = vmatpush1.msra.mxu0 0.0
        %6280 = vmatprep.subr.mxu0 0.0
        %6281 = vmatpush1.msra.mxu0 0.0
        %6282 = vmatprep.subr.mxu0 0.0
        %6283 = vmatpush1.msra.mxu0 0.0
        %6284 = vmatprep.subr.mxu0 0.0
        %6285 = vmatpush1.msra.mxu0 0.0
        %6286 = vmatprep.subr.mxu0 0.0
        %6287 = vmatpush1.msra.mxu0 0.0
        %6288 = vmatprep.subr.mxu0 0.0
        %6289 = vmatpush1.msra.mxu0 0.0
        %6290 = vmatprep.subr.mxu0 0.0
        %6291 = vmatpush1.msra.mxu0 0.0
        %6292 = vmatprep.mubr.f32.mxu0 0.0
        %6293 = vmatmul.mubr.f32.gmra.mrb[0].mxu0 %v6155
        %v6294 = vpop.f32.mrb[0].mxu0
        %v6295 = vadd.f32 0.0, %v6294
        %v6296 = vpop.f32.mrb[0].mxu0
        %v6297 = vadd.f32 0.0, %v6296
        %6298 = vdwg.mxu0
        %6299 = vmatprep.subr.mxu0 %v6127
        %6300 = vmatpush1.msra.mxu0 %v6126
        %6301 = vmatprep.subr.mxu0 %v6135
        %6302 = vmatpush1.msra.mxu0 %v6134
        %6303 = vmatprep.subr.mxu0 0.0
        %6304 = vmatpush1.msra.mxu0 0.0
        %6305 = vmatprep.subr.mxu0 0.0
        %6306 = vmatpush1.msra.mxu0 0.0
        %6307 = vmatprep.subr.mxu0 0.0
        %6308 = vmatpush1.msra.mxu0 0.0
        %6309 = vmatprep.subr.mxu0 0.0
        %6310 = vmatpush1.msra.mxu0 0.0
        %6311 = vmatprep.subr.mxu0 0.0
        %6312 = vmatpush1.msra.mxu0 0.0
        %6313 = vmatprep.subr.mxu0 0.0
        %6314 = vmatpush1.msra.mxu0 0.0
        %6315 = vmatprep.subr.mxu0 0.0
        %6316 = vmatpush1.msra.mxu0 0.0
        %6317 = vmatprep.subr.mxu0 0.0
        %6318 = vmatpush1.msra.mxu0 0.0
        %6319 = vmatprep.subr.mxu0 0.0
        %6320 = vmatpush1.msra.mxu0 0.0
        %6321 = vmatprep.subr.mxu0 0.0
        %6322 = vmatpush1.msra.mxu0 0.0
        %6323 = vmatprep.subr.mxu0 0.0
        %6324 = vmatpush1.msra.mxu0 0.0
        %6325 = vmatprep.subr.mxu0 0.0
        %6326 = vmatpush1.msra.mxu0 0.0
        %6327 = vmatprep.subr.mxu0 0.0
        %6328 = vmatpush1.msra.mxu0 0.0
        %6329 = vmatprep.subr.mxu0 0.0
        %6330 = vmatpush1.msra.mxu0 0.0
        %6331 = vmatprep.subr.mxu0 0.0
        %6332 = vmatpush1.msra.mxu0 0.0
        %6333 = vmatprep.subr.mxu0 0.0
        %6334 = vmatpush1.msra.mxu0 0.0
        %6335 = vmatprep.subr.mxu0 0.0
        %6336 = vmatpush1.msra.mxu0 0.0
        %6337 = vmatprep.subr.mxu0 0.0
        %6338 = vmatpush1.msra.mxu0 0.0
        %6339 = vmatprep.subr.mxu0 0.0
        %6340 = vmatpush1.msra.mxu0 0.0
        %6341 = vmatprep.subr.mxu0 0.0
        %6342 = vmatpush1.msra.mxu0 0.0
        %6343 = vmatprep.subr.mxu0 0.0
        %6344 = vmatpush1.msra.mxu0 0.0
        %6345 = vmatprep.subr.mxu0 0.0
        %6346 = vmatpush1.msra.mxu0 0.0
        %6347 = vmatprep.subr.mxu0 0.0
        %6348 = vmatpush1.msra.mxu0 0.0
        %6349 = vmatprep.subr.mxu0 0.0
        %6350 = vmatpush1.msra.mxu0 0.0
        %6351 = vmatprep.subr.mxu0 0.0
        %6352 = vmatpush1.msra.mxu0 0.0
        %6353 = vmatprep.subr.mxu0 0.0
        %6354 = vmatpush1.msra.mxu0 0.0
        %6355 = vmatprep.subr.mxu0 0.0
        %6356 = vmatpush1.msra.mxu0 0.0
        %6357 = vmatprep.subr.mxu0 0.0
        %6358 = vmatpush1.msra.mxu0 0.0
        %6359 = vmatprep.subr.mxu0 0.0
        %6360 = vmatpush1.msra.mxu0 0.0
        %6361 = vmatprep.subr.mxu0 0.0
        %6362 = vmatpush1.msra.mxu0 0.0
        %6363 = vmatprep.mubr.f32.mxu0 0.0
        %6364 = vmatmul.mubr.f32.gmra.mrb[0].mxu0 %v6155
        %v6365 = vpop.f32.mrb[0].mxu0
        %v6366 = vadd.f32 0.0, %v6365
        %v6367 = vpop.f32.mrb[0].mxu0
        %v6368 = vadd.f32 0.0, %v6367
        %6369 = vdwg.mxu0
        %6370 = vmatprep.subr.mxu0 %v6129
        %6371 = vmatpush1.msra.mxu0 %v6128
        %6372 = vmatprep.subr.mxu0 %v6137
        %6373 = vmatpush1.msra.mxu0 %v6136
        %6374 = vmatprep.subr.mxu0 0.0
        %6375 = vmatpush1.msra.mxu0 0.0
        %6376 = vmatprep.subr.mxu0 0.0
        %6377 = vmatpush1.msra.mxu0 0.0
        %6378 = vmatprep.subr.mxu0 0.0
        %6379 = vmatpush1.msra.mxu0 0.0
        %6380 = vmatprep.subr.mxu0 0.0
        %6381 = vmatpush1.msra.mxu0 0.0
        %6382 = vmatprep.subr.mxu0 0.0
        %6383 = vmatpush1.msra.mxu0 0.0
        %6384 = vmatprep.subr.mxu0 0.0
        %6385 = vmatpush1.msra.mxu0 0.0
        %6386 = vmatprep.subr.mxu0 0.0
        %6387 = vmatpush1.msra.mxu0 0.0
        %6388 = vmatprep.subr.mxu0 0.0
        %6389 = vmatpush1.msra.mxu0 0.0
        %6390 = vmatprep.subr.mxu0 0.0
        %6391 = vmatpush1.msra.mxu0 0.0
        %6392 = vmatprep.subr.mxu0 0.0
        %6393 = vmatpush1.msra.mxu0 0.0
        %6394 = vmatprep.subr.mxu0 0.0
        %6395 = vmatpush1.msra.mxu0 0.0
        %6396 = vmatprep.subr.mxu0 0.0
        %6397 = vmatpush1.msra.mxu0 0.0
        %6398 = vmatprep.subr.mxu0 0.0
        %6399 = vmatpush1.msra.mxu0 0.0
        %6400 = vmatprep.subr.mxu0 0.0
        %6401 = vmatpush1.msra.mxu0 0.0
        %6402 = vmatprep.subr.mxu0 0.0
        %6403 = vmatpush1.msra.mxu0 0.0
        %6404 = vmatprep.subr.mxu0 0.0
        %6405 = vmatpush1.msra.mxu0 0.0
        %6406 = vmatprep.subr.mxu0 0.0
        %6407 = vmatpush1.msra.mxu0 0.0
        %6408 = vmatprep.subr.mxu0 0.0
        %6409 = vmatpush1.msra.mxu0 0.0
        %6410 = vmatprep.subr.mxu0 0.0
        %6411 = vmatpush1.msra.mxu0 0.0
        %6412 = vmatprep.subr.mxu0 0.0
        %6413 = vmatpush1.msra.mxu0 0.0
        %6414 = vmatprep.subr.mxu0 0.0
        %6415 = vmatpush1.msra.mxu0 0.0
        %6416 = vmatprep.subr.mxu0 0.0
        %6417 = vmatpush1.msra.mxu0 0.0
        %6418 = vmatprep.subr.mxu0 0.0
        %6419 = vmatpush1.msra.mxu0 0.0
        %6420 = vmatprep.subr.mxu0 0.0
        %6421 = vmatpush1.msra.mxu0 0.0
        %6422 = vmatprep.subr.mxu0 0.0
        %6423 = vmatpush1.msra.mxu0 0.0
        %6424 = vmatprep.subr.mxu0 0.0
        %6425 = vmatpush1.msra.mxu0 0.0
        %6426 = vmatprep.subr.mxu0 0.0
        %6427 = vmatpush1.msra.mxu0 0.0
        %6428 = vmatprep.subr.mxu0 0.0
        %6429 = vmatpush1.msra.mxu0 0.0
        %6430 = vmatprep.subr.mxu0 0.0
        %6431 = vmatpush1.msra.mxu0 0.0
        %6432 = vmatprep.subr.mxu0 0.0
        %6433 = vmatpush1.msra.mxu0 0.0
        %6434 = vmatprep.mubr.f32.mxu0 0.0
        %6435 = vmatmul.mubr.f32.gmra.mrb[0].mxu0 %v6155
        %v6436 = vpop.f32.mrb[0].mxu0
        %v6437 = vadd.f32 0.0, %v6436
        %v6438 = vpop.f32.mrb[0].mxu0
        %v6439 = vadd.f32 0.0, %v6438
        %6440 = vdwg.mxu0
        %6441 = vrot.lane.b32.xlu0 %v4952, 96
        %v6442 = vpop.permute.xlu0 %6441
        %6443 = vrot.lane.b32.xlu0 %v4953, 96
        %v6444 = vpop.permute.xlu0 %6443
        %6445 = vrot.lane.b32.xlu0 %v4954, 96
        %v6446 = vpop.permute.xlu0 %6445
        %6447 = vrot.lane.b32.xlu0 %v4955, 96
        %v6448 = vpop.permute.xlu0 %6447
        %6449 = vrot.lane.b32.xlu0 %v4956, 96
        %v6450 = vpop.permute.xlu0 %6449
        %6451 = vrot.lane.b32.xlu0 %v4957, 96
        %v6452 = vpop.permute.xlu0 %6451
        %6453 = vrot.lane.b32.xlu0 %v4958, 96
        %v6454 = vpop.permute.xlu0 %6453
        %6455 = vrot.lane.b32.xlu0 %v4959, 96
        %v6456 = vpop.permute.xlu0 %6455
        %6457 = vrot.lane.b32.xlu0 %v4960, 96
        %v6458 = vpop.permute.xlu0 %6457
        %6459 = vrot.lane.b32.xlu0 %v4961, 96
        %v6460 = vpop.permute.xlu0 %6459
        %6461 = vrot.lane.b32.xlu0 %v4962, 96
        %v6462 = vpop.permute.xlu0 %6461
        %6463 = vrot.lane.b32.xlu0 %v4963, 96
        %v6464 = vpop.permute.xlu0 %6463
        %6465 = vrot.lane.b32.xlu0 %v4964, 96
        %v6466 = vpop.permute.xlu0 %6465
        %6467 = vrot.lane.b32.xlu0 %v4965, 96
        %v6468 = vpop.permute.xlu0 %6467
        %6469 = vrot.lane.b32.xlu0 %v4966, 96
        %v6470 = vpop.permute.xlu0 %6469
        %6471 = vrot.lane.b32.xlu0 %v4967, 96
        %v6472 = vpop.permute.xlu0 %6471
        %6473 = vrot.lane.b32.xlu0 %v4968, 96
        %v6474 = vpop.permute.xlu0 %6473
        %6475 = vrot.lane.b32.xlu0 %v4969, 96
        %v6476 = vpop.permute.xlu0 %6475
        %v6477 = vsel %vm3044, %v6442, %v6444
        %v6478 = vsel %vm3044, %v6444, %v6446
        %v6479 = vsel %vm3044, %v6446, %v6448
        %v6480 = vsel %vm3044, %v6448, %v6450
        %v6481 = vsel %vm3044, %v6450, %v6452
        %v6482 = vsel %vm3044, %v6452, %v6454
        %v6483 = vsel %vm3044, %v6454, %v6456
        %v6484 = vsel %vm3044, %v6456, %v6458
        %v6485 = vsel %vm3044, %v6460, %v6462
        %v6486 = vsel %vm3044, %v6462, %v6464
        %v6487 = vsel %vm3044, %v6464, %v6466
        %v6488 = vsel %vm3044, %v6466, %v6468
        %v6489 = vsel %vm3044, %v6468, %v6470
        %v6490 = vsel %vm3044, %v6470, %v6472
        %v6491 = vsel %vm3044, %v6472, %v6474
        %v6492 = vsel %vm3044, %v6474, %v6476
        %v6510 = vsel %vm326, %v6083, 0
        %6512 = vmatprep.subr.mxu0 %v6478
        %6513 = vmatpush1.msra.mxu0 %v6477
        %6514 = vmatprep.subr.mxu0 %v6486
        %6515 = vmatpush1.msra.mxu0 %v6485
        %6516 = vmatprep.subr.mxu0 0.0
        %6517 = vmatpush1.msra.mxu0 0.0
        %6518 = vmatprep.subr.mxu0 0.0
        %6519 = vmatpush1.msra.mxu0 0.0
        %6520 = vmatprep.subr.mxu0 0.0
        %6521 = vmatpush1.msra.mxu0 0.0
        %6522 = vmatprep.subr.mxu0 0.0
        %6523 = vmatpush1.msra.mxu0 0.0
        %6524 = vmatprep.subr.mxu0 0.0
        %6525 = vmatpush1.msra.mxu0 0.0
        %6526 = vmatprep.subr.mxu0 0.0
        %6527 = vmatpush1.msra.mxu0 0.0
        %6528 = vmatprep.subr.mxu0 0.0
        %6529 = vmatpush1.msra.mxu0 0.0
        %6530 = vmatprep.subr.mxu0 0.0
        %6531 = vmatpush1.msra.mxu0 0.0
        %6532 = vmatprep.subr.mxu0 0.0
        %6533 = vmatpush1.msra.mxu0 0.0
        %6534 = vmatprep.subr.mxu0 0.0
        %6535 = vmatpush1.msra.mxu0 0.0
        %6536 = vmatprep.subr.mxu0 0.0
        %6537 = vmatpush1.msra.mxu0 0.0
        %6538 = vmatprep.subr.mxu0 0.0
        %6539 = vmatpush1.msra.mxu0 0.0
        %6540 = vmatprep.subr.mxu0 0.0
        %6541 = vmatpush1.msra.mxu0 0.0
        %6542 = vmatprep.subr.mxu0 0.0
        %6543 = vmatpush1.msra.mxu0 0.0
        %6544 = vmatprep.subr.mxu0 0.0
        %6545 = vmatpush1.msra.mxu0 0.0
        %6546 = vmatprep.subr.mxu0 0.0
        %6547 = vmatpush1.msra.mxu0 0.0
        %6548 = vmatprep.subr.mxu0 0.0
        %6549 = vmatpush1.msra.mxu0 0.0
        %6550 = vmatprep.subr.mxu0 0.0
        %6551 = vmatpush1.msra.mxu0 0.0
        %6552 = vmatprep.subr.mxu0 0.0
        %6553 = vmatpush1.msra.mxu0 0.0
        %6554 = vmatprep.subr.mxu0 0.0
        %6555 = vmatpush1.msra.mxu0 0.0
        %6556 = vmatprep.subr.mxu0 0.0
        %6557 = vmatpush1.msra.mxu0 0.0
        %6558 = vmatprep.subr.mxu0 0.0
        %6559 = vmatpush1.msra.mxu0 0.0
        %6560 = vmatprep.subr.mxu0 0.0
        %6561 = vmatpush1.msra.mxu0 0.0
        %6562 = vmatprep.subr.mxu0 0.0
        %6563 = vmatpush1.msra.mxu0 0.0
        %6564 = vmatprep.subr.mxu0 0.0
        %6565 = vmatpush1.msra.mxu0 0.0
        %6566 = vmatprep.subr.mxu0 0.0
        %6567 = vmatpush1.msra.mxu0 0.0
        %6568 = vmatprep.subr.mxu0 0.0
        %6569 = vmatpush1.msra.mxu0 0.0
        %6570 = vmatprep.subr.mxu0 0.0
        %6571 = vmatpush1.msra.mxu0 0.0
        %6572 = vmatprep.subr.mxu0 0.0
        %6573 = vmatpush1.msra.mxu0 0.0
        %6574 = vmatprep.subr.mxu0 0.0
        %6575 = vmatpush1.msra.mxu0 0.0
        %6576 = vmatprep.mubr.f32.mxu0 0.0
        %6577 = vmatmul.mubr.f32.gmra.mrb[0].mxu0 %v6510
        %v6578 = vpop.f32.mrb[0].mxu0
        %v6579 = vadd.f32 %v6224, %v6578
        %v6580 = vpop.f32.mrb[0].mxu0
        %v6581 = vadd.f32 %v6226, %v6580
        %6582 = vdwg.mxu0
        %6583 = vmatprep.subr.mxu0 %v6480
        %6584 = vmatpush1.msra.mxu0 %v6479
        %6585 = vmatprep.subr.mxu0 %v6488
        %6586 = vmatpush1.msra.mxu0 %v6487
        %6587 = vmatprep.subr.mxu0 0.0
        %6588 = vmatpush1.msra.mxu0 0.0
        %6589 = vmatprep.subr.mxu0 0.0
        %6590 = vmatpush1.msra.mxu0 0.0
        %6591 = vmatprep.subr.mxu0 0.0
        %6592 = vmatpush1.msra.mxu0 0.0
        %6593 = vmatprep.subr.mxu0 0.0
        %6594 = vmatpush1.msra.mxu0 0.0
        %6595 = vmatprep.subr.mxu0 0.0
        %6596 = vmatpush1.msra.mxu0 0.0
        %6597 = vmatprep.subr.mxu0 0.0
        %6598 = vmatpush1.msra.mxu0 0.0
        %6599 = vmatprep.subr.mxu0 0.0
        %6600 = vmatpush1.msra.mxu0 0.0
        %6601 = vmatprep.subr.mxu0 0.0
        %6602 = vmatpush1.msra.mxu0 0.0
        %6603 = vmatprep.subr.mxu0 0.0
        %6604 = vmatpush1.msra.mxu0 0.0
        %6605 = vmatprep.subr.mxu0 0.0
        %6606 = vmatpush1.msra.mxu0 0.0
        %6607 = vmatprep.subr.mxu0 0.0
        %6608 = vmatpush1.msra.mxu0 0.0
        %6609 = vmatprep.subr.mxu0 0.0
        %6610 = vmatpush1.msra.mxu0 0.0
        %6611 = vmatprep.subr.mxu0 0.0
        %6612 = vmatpush1.msra.mxu0 0.0
        %6613 = vmatprep.subr.mxu0 0.0
        %6614 = vmatpush1.msra.mxu0 0.0
        %6615 = vmatprep.subr.mxu0 0.0
        %6616 = vmatpush1.msra.mxu0 0.0
        %6617 = vmatprep.subr.mxu0 0.0
        %6618 = vmatpush1.msra.mxu0 0.0
        %6619 = vmatprep.subr.mxu0 0.0
        %6620 = vmatpush1.msra.mxu0 0.0
        %6621 = vmatprep.subr.mxu0 0.0
        %6622 = vmatpush1.msra.mxu0 0.0
        %6623 = vmatprep.subr.mxu0 0.0
        %6624 = vmatpush1.msra.mxu0 0.0
        %6625 = vmatprep.subr.mxu0 0.0
        %6626 = vmatpush1.msra.mxu0 0.0
        %6627 = vmatprep.subr.mxu0 0.0
        %6628 = vmatpush1.msra.mxu0 0.0
        %6629 = vmatprep.subr.mxu0 0.0
        %6630 = vmatpush1.msra.mxu0 0.0
        %6631 = vmatprep.subr.mxu0 0.0
        %6632 = vmatpush1.msra.mxu0 0.0
        %6633 = vmatprep.subr.mxu0 0.0
        %6634 = vmatpush1.msra.mxu0 0.0
        %6635 = vmatprep.subr.mxu0 0.0
        %6636 = vmatpush1.msra.mxu0 0.0
        %6637 = vmatprep.subr.mxu0 0.0
        %6638 = vmatpush1.msra.mxu0 0.0
        %6639 = vmatprep.subr.mxu0 0.0
        %6640 = vmatpush1.msra.mxu0 0.0
        %6641 = vmatprep.subr.mxu0 0.0
        %6642 = vmatpush1.msra.mxu0 0.0
        %6643 = vmatprep.subr.mxu0 0.0
        %6644 = vmatpush1.msra.mxu0 0.0
        %6645 = vmatprep.subr.mxu0 0.0
        %6646 = vmatpush1.msra.mxu0 0.0
        %6647 = vmatprep.mubr.f32.mxu0 0.0
        %6648 = vmatmul.mubr.f32.gmra.mrb[0].mxu0 %v6510
        %v6649 = vpop.f32.mrb[0].mxu0
        %v6650 = vadd.f32 %v6295, %v6649
        %v6651 = vpop.f32.mrb[0].mxu0
        %v6652 = vadd.f32 %v6297, %v6651
        %6653 = vdwg.mxu0
        %6654 = vmatprep.subr.mxu0 %v6482
        %6655 = vmatpush1.msra.mxu0 %v6481
        %6656 = vmatprep.subr.mxu0 %v6490
        %6657 = vmatpush1.msra.mxu0 %v6489
        %6658 = vmatprep.subr.mxu0 0.0
        %6659 = vmatpush1.msra.mxu0 0.0
        %6660 = vmatprep.subr.mxu0 0.0
        %6661 = vmatpush1.msra.mxu0 0.0
        %6662 = vmatprep.subr.mxu0 0.0
        %6663 = vmatpush1.msra.mxu0 0.0
        %6664 = vmatprep.subr.mxu0 0.0
        %6665 = vmatpush1.msra.mxu0 0.0
        %6666 = vmatprep.subr.mxu0 0.0
        %6667 = vmatpush1.msra.mxu0 0.0
        %6668 = vmatprep.subr.mxu0 0.0
        %6669 = vmatpush1.msra.mxu0 0.0
        %6670 = vmatprep.subr.mxu0 0.0
        %6671 = vmatpush1.msra.mxu0 0.0
        %6672 = vmatprep.subr.mxu0 0.0
        %6673 = vmatpush1.msra.mxu0 0.0
        %6674 = vmatprep.subr.mxu0 0.0
        %6675 = vmatpush1.msra.mxu0 0.0
        %6676 = vmatprep.subr.mxu0 0.0
        %6677 = vmatpush1.msra.mxu0 0.0
        %6678 = vmatprep.subr.mxu0 0.0
        %6679 = vmatpush1.msra.mxu0 0.0
        %6680 = vmatprep.subr.mxu0 0.0
        %6681 = vmatpush1.msra.mxu0 0.0
        %6682 = vmatprep.subr.mxu0 0.0
        %6683 = vmatpush1.msra.mxu0 0.0
        %6684 = vmatprep.subr.mxu0 0.0
        %6685 = vmatpush1.msra.mxu0 0.0
        %6686 = vmatprep.subr.mxu0 0.0
        %6687 = vmatpush1.msra.mxu0 0.0
        %6688 = vmatprep.subr.mxu0 0.0
        %6689 = vmatpush1.msra.mxu0 0.0
        %6690 = vmatprep.subr.mxu0 0.0
        %6691 = vmatpush1.msra.mxu0 0.0
        %6692 = vmatprep.subr.mxu0 0.0
        %6693 = vmatpush1.msra.mxu0 0.0
        %6694 = vmatprep.subr.mxu0 0.0
        %6695 = vmatpush1.msra.mxu0 0.0
        %6696 = vmatprep.subr.mxu0 0.0
        %6697 = vmatpush1.msra.mxu0 0.0
        %6698 = vmatprep.subr.mxu0 0.0
        %6699 = vmatpush1.msra.mxu0 0.0
        %6700 = vmatprep.subr.mxu0 0.0
        %6701 = vmatpush1.msra.mxu0 0.0
        %6702 = vmatprep.subr.mxu0 0.0
        %6703 = vmatpush1.msra.mxu0 0.0
        %6704 = vmatprep.subr.mxu0 0.0
        %6705 = vmatpush1.msra.mxu0 0.0
        %6706 = vmatprep.subr.mxu0 0.0
        %6707 = vmatpush1.msra.mxu0 0.0
        %6708 = vmatprep.subr.mxu0 0.0
        %6709 = vmatpush1.msra.mxu0 0.0
        %6710 = vmatprep.subr.mxu0 0.0
        %6711 = vmatpush1.msra.mxu0 0.0
        %6712 = vmatprep.subr.mxu0 0.0
        %6713 = vmatpush1.msra.mxu0 0.0
        %6714 = vmatprep.subr.mxu0 0.0
        %6715 = vmatpush1.msra.mxu0 0.0
        %6716 = vmatprep.subr.mxu0 0.0
        %6717 = vmatpush1.msra.mxu0 0.0
        %6718 = vmatprep.mubr.f32.mxu0 0.0
        %6719 = vmatmul.mubr.f32.gmra.mrb[0].mxu0 %v6510
        %v6720 = vpop.f32.mrb[0].mxu0
        %v6721 = vadd.f32 %v6366, %v6720
        %v6722 = vpop.f32.mrb[0].mxu0
        %v6723 = vadd.f32 %v6368, %v6722
        %6724 = vdwg.mxu0
        %6725 = vmatprep.subr.mxu0 %v6484
        %6726 = vmatpush1.msra.mxu0 %v6483
        %6727 = vmatprep.subr.mxu0 %v6492
        %6728 = vmatpush1.msra.mxu0 %v6491
        %6729 = vmatprep.subr.mxu0 0.0
        %6730 = vmatpush1.msra.mxu0 0.0
        %6731 = vmatprep.subr.mxu0 0.0
        %6732 = vmatpush1.msra.mxu0 0.0
        %6733 = vmatprep.subr.mxu0 0.0
        %6734 = vmatpush1.msra.mxu0 0.0
        %6735 = vmatprep.subr.mxu0 0.0
        %6736 = vmatpush1.msra.mxu0 0.0
        %6737 = vmatprep.subr.mxu0 0.0
        %6738 = vmatpush1.msra.mxu0 0.0
        %6739 = vmatprep.subr.mxu0 0.0
        %6740 = vmatpush1.msra.mxu0 0.0
        %6741 = vmatprep.subr.mxu0 0.0
        %6742 = vmatpush1.msra.mxu0 0.0
        %6743 = vmatprep.subr.mxu0 0.0
        %6744 = vmatpush1.msra.mxu0 0.0
        %6745 = vmatprep.subr.mxu0 0.0
        %6746 = vmatpush1.msra.mxu0 0.0
        %6747 = vmatprep.subr.mxu0 0.0
        %6748 = vmatpush1.msra.mxu0 0.0
        %6749 = vmatprep.subr.mxu0 0.0
        %6750 = vmatpush1.msra.mxu0 0.0
        %6751 = vmatprep.subr.mxu0 0.0
        %6752 = vmatpush1.msra.mxu0 0.0
        %6753 = vmatprep.subr.mxu0 0.0
        %6754 = vmatpush1.msra.mxu0 0.0
        %6755 = vmatprep.subr.mxu0 0.0
        %6756 = vmatpush1.msra.mxu0 0.0
        %6757 = vmatprep.subr.mxu0 0.0
        %6758 = vmatpush1.msra.mxu0 0.0
        %6759 = vmatprep.subr.mxu0 0.0
        %6760 = vmatpush1.msra.mxu0 0.0
        %6761 = vmatprep.subr.mxu0 0.0
        %6762 = vmatpush1.msra.mxu0 0.0
        %6763 = vmatprep.subr.mxu0 0.0
        %6764 = vmatpush1.msra.mxu0 0.0
        %6765 = vmatprep.subr.mxu0 0.0
        %6766 = vmatpush1.msra.mxu0 0.0
        %6767 = vmatprep.subr.mxu0 0.0
        %6768 = vmatpush1.msra.mxu0 0.0
        %6769 = vmatprep.subr.mxu0 0.0
        %6770 = vmatpush1.msra.mxu0 0.0
        %6771 = vmatprep.subr.mxu0 0.0
        %6772 = vmatpush1.msra.mxu0 0.0
        %6773 = vmatprep.subr.mxu0 0.0
        %6774 = vmatpush1.msra.mxu0 0.0
        %6775 = vmatprep.subr.mxu0 0.0
        %6776 = vmatpush1.msra.mxu0 0.0
        %6777 = vmatprep.subr.mxu0 0.0
        %6778 = vmatpush1.msra.mxu0 0.0
        %6779 = vmatprep.subr.mxu0 0.0
        %6780 = vmatpush1.msra.mxu0 0.0
        %6781 = vmatprep.subr.mxu0 0.0
        %6782 = vmatpush1.msra.mxu0 0.0
        %6783 = vmatprep.subr.mxu0 0.0
        %6784 = vmatpush1.msra.mxu0 0.0
        %6785 = vmatprep.subr.mxu0 0.0
        %6786 = vmatpush1.msra.mxu0 0.0
        %6787 = vmatprep.subr.mxu0 0.0
        %6788 = vmatpush1.msra.mxu0 0.0
        %6789 = vmatprep.mubr.f32.mxu0 0.0
        %6790 = vmatmul.mubr.f32.gmra.mrb[0].mxu0 %v6510
        %v6791 = vpop.f32.mrb[0].mxu0
        %v6792 = vadd.f32 %v6437, %v6791
        %v6793 = vpop.f32.mrb[0].mxu0
        %v6794 = vadd.f32 %v6439, %v6793
        %6795 = vdwg.mxu0
        %s6796 = scalar_lea.vmem %s3, 56
        %v6797 = vld [vmem:[%s6796] sm:$0xff]
        %6798 = vrot.lane.b32.xlu0 %v4952, 32
        %v6799 = vpop.permute.xlu0 %6798
        %6800 = vrot.lane.b32.xlu0 %v4953, 32
        %v6801 = vpop.permute.xlu0 %6800
        %6802 = vrot.lane.b32.xlu0 %v4954, 32
        %v6803 = vpop.permute.xlu0 %6802
        %6804 = vrot.lane.b32.xlu0 %v4955, 32
        %v6805 = vpop.permute.xlu0 %6804
        %6806 = vrot.lane.b32.xlu0 %v4956, 32
        %v6807 = vpop.permute.xlu0 %6806
        %6808 = vrot.lane.b32.xlu0 %v4957, 32
        %v6809 = vpop.permute.xlu0 %6808
        %6810 = vrot.lane.b32.xlu0 %v4958, 32
        %v6811 = vpop.permute.xlu0 %6810
        %6812 = vrot.lane.b32.xlu0 %v4959, 32
        %v6813 = vpop.permute.xlu0 %6812
        %6814 = vrot.lane.b32.xlu0 %v4960, 32
        %v6815 = vpop.permute.xlu0 %6814
        %6816 = vrot.lane.b32.xlu0 %v4961, 32
        %v6817 = vpop.permute.xlu0 %6816
        %6818 = vrot.lane.b32.xlu0 %v4962, 32
        %v6819 = vpop.permute.xlu0 %6818
        %6820 = vrot.lane.b32.xlu0 %v4963, 32
        %v6821 = vpop.permute.xlu0 %6820
        %6822 = vrot.lane.b32.xlu0 %v4964, 32
        %v6823 = vpop.permute.xlu0 %6822
        %6824 = vrot.lane.b32.xlu0 %v4965, 32
        %v6825 = vpop.permute.xlu0 %6824
        %6826 = vrot.lane.b32.xlu0 %v4966, 32
        %v6827 = vpop.permute.xlu0 %6826
        %6828 = vrot.lane.b32.xlu0 %v4967, 32
        %v6829 = vpop.permute.xlu0 %6828
        %6830 = vrot.lane.b32.xlu0 %v4968, 32
        %v6831 = vpop.permute.xlu0 %6830
        %6832 = vrot.lane.b32.xlu0 %v4969, 32
        %v6833 = vpop.permute.xlu0 %6832
        %v6834 = vsel %vm3390, %v6799, %v6801
        %v6835 = vsel %vm3390, %v6801, %v6803
        %v6836 = vsel %vm3390, %v6803, %v6805
        %v6837 = vsel %vm3390, %v6805, %v6807
        %v6838 = vsel %vm3390, %v6807, %v6809
        %v6839 = vsel %vm3390, %v6809, %v6811
        %v6840 = vsel %vm3390, %v6811, %v6813
        %v6841 = vsel %vm3390, %v6813, %v6815
        %v6842 = vsel %vm3390, %v6817, %v6819
        %v6843 = vsel %vm3390, %v6819, %v6821
        %v6844 = vsel %vm3390, %v6821, %v6823
        %v6845 = vsel %vm3390, %v6823, %v6825
        %v6846 = vsel %vm3390, %v6825, %v6827
        %v6847 = vsel %vm3390, %v6827, %v6829
        %v6848 = vsel %vm3390, %v6829, %v6831
        %v6849 = vsel %vm3390, %v6831, %v6833
        %v6867 = vsel %vm326, %v6797, 0
        %6869 = vmatprep.subr.mxu0 %v6835
        %6870 = vmatpush1.msra.mxu0 %v6834
        %6871 = vmatprep.subr.mxu0 %v6843
        %6872 = vmatpush1.msra.mxu0 %v6842
        %6873 = vmatprep.subr.mxu0 0.0
        %6874 = vmatpush1.msra.mxu0 0.0
        %6875 = vmatprep.subr.mxu0 0.0
        %6876 = vmatpush1.msra.mxu0 0.0
        %6877 = vmatprep.subr.mxu0 0.0
        %6878 = vmatpush1.msra.mxu0 0.0
        %6879 = vmatprep.subr.mxu0 0.0
        %6880 = vmatpush1.msra.mxu0 0.0
        %6881 = vmatprep.subr.mxu0 0.0
        %6882 = vmatpush1.msra.mxu0 0.0
        %6883 = vmatprep.subr.mxu0 0.0
        %6884 = vmatpush1.msra.mxu0 0.0
        %6885 = vmatprep.subr.mxu0 0.0
        %6886 = vmatpush1.msra.mxu0 0.0
        %6887 = vmatprep.subr.mxu0 0.0
        %6888 = vmatpush1.msra.mxu0 0.0
        %6889 = vmatprep.subr.mxu0 0.0
        %6890 = vmatpush1.msra.mxu0 0.0
        %6891 = vmatprep.subr.mxu0 0.0
        %6892 = vmatpush1.msra.mxu0 0.0
        %6893 = vmatprep.subr.mxu0 0.0
        %6894 = vmatpush1.msra.mxu0 0.0
        %6895 = vmatprep.subr.mxu0 0.0
        %6896 = vmatpush1.msra.mxu0 0.0
        %6897 = vmatprep.subr.mxu0 0.0
        %6898 = vmatpush1.msra.mxu0 0.0
        %6899 = vmatprep.subr.mxu0 0.0
        %6900 = vmatpush1.msra.mxu0 0.0
        %6901 = vmatprep.subr.mxu0 0.0
        %6902 = vmatpush1.msra.mxu0 0.0
        %6903 = vmatprep.subr.mxu0 0.0
        %6904 = vmatpush1.msra.mxu0 0.0
        %6905 = vmatprep.subr.mxu0 0.0
        %6906 = vmatpush1.msra.mxu0 0.0
        %6907 = vmatprep.subr.mxu0 0.0
        %6908 = vmatpush1.msra.mxu0 0.0
        %6909 = vmatprep.subr.mxu0 0.0
        %6910 = vmatpush1.msra.mxu0 0.0
        %6911 = vmatprep.subr.mxu0 0.0
        %6912 = vmatpush1.msra.mxu0 0.0
        %6913 = vmatprep.subr.mxu0 0.0
        %6914 = vmatpush1.msra.mxu0 0.0
        %6915 = vmatprep.subr.mxu0 0.0
        %6916 = vmatpush1.msra.mxu0 0.0
        %6917 = vmatprep.subr.mxu0 0.0
        %6918 = vmatpush1.msra.mxu0 0.0
        %6919 = vmatprep.subr.mxu0 0.0
        %6920 = vmatpush1.msra.mxu0 0.0
        %6921 = vmatprep.subr.mxu0 0.0
        %6922 = vmatpush1.msra.mxu0 0.0
        %6923 = vmatprep.subr.mxu0 0.0
        %6924 = vmatpush1.msra.mxu0 0.0
        %6925 = vmatprep.subr.mxu0 0.0
        %6926 = vmatpush1.msra.mxu0 0.0
        %6927 = vmatprep.subr.mxu0 0.0
        %6928 = vmatpush1.msra.mxu0 0.0
        %6929 = vmatprep.subr.mxu0 0.0
        %6930 = vmatpush1.msra.mxu0 0.0
        %6931 = vmatprep.subr.mxu0 0.0
        %6932 = vmatpush1.msra.mxu0 0.0
        %6933 = vmatprep.mubr.f32.mxu0 0.0
        %6934 = vmatmul.mubr.f32.gmra.mrb[0].mxu0 %v6867
        %v6935 = vpop.f32.mrb[0].mxu0
        %v6936 = vadd.f32 0.0, %v6935
        %v6937 = vpop.f32.mrb[0].mxu0
        %v6938 = vadd.f32 0.0, %v6937
        %6939 = vdwg.mxu0
        %6940 = vmatprep.subr.mxu0 %v6837
        %6941 = vmatpush1.msra.mxu0 %v6836
        %6942 = vmatprep.subr.mxu0 %v6845
        %6943 = vmatpush1.msra.mxu0 %v6844
        %6944 = vmatprep.subr.mxu0 0.0
        %6945 = vmatpush1.msra.mxu0 0.0
        %6946 = vmatprep.subr.mxu0 0.0
        %6947 = vmatpush1.msra.mxu0 0.0
        %6948 = vmatprep.subr.mxu0 0.0
        %6949 = vmatpush1.msra.mxu0 0.0
        %6950 = vmatprep.subr.mxu0 0.0
        %6951 = vmatpush1.msra.mxu0 0.0
        %6952 = vmatprep.subr.mxu0 0.0
        %6953 = vmatpush1.msra.mxu0 0.0
        %6954 = vmatprep.subr.mxu0 0.0
        %6955 = vmatpush1.msra.mxu0 0.0
        %6956 = vmatprep.subr.mxu0 0.0
        %6957 = vmatpush1.msra.mxu0 0.0
        %6958 = vmatprep.subr.mxu0 0.0
        %6959 = vmatpush1.msra.mxu0 0.0
        %6960 = vmatprep.subr.mxu0 0.0
        %6961 = vmatpush1.msra.mxu0 0.0
        %6962 = vmatprep.subr.mxu0 0.0
        %6963 = vmatpush1.msra.mxu0 0.0
        %6964 = vmatprep.subr.mxu0 0.0
        %6965 = vmatpush1.msra.mxu0 0.0
        %6966 = vmatprep.subr.mxu0 0.0
        %6967 = vmatpush1.msra.mxu0 0.0
        %6968 = vmatprep.subr.mxu0 0.0
        %6969 = vmatpush1.msra.mxu0 0.0
        %6970 = vmatprep.subr.mxu0 0.0
        %6971 = vmatpush1.msra.mxu0 0.0
        %6972 = vmatprep.subr.mxu0 0.0
        %6973 = vmatpush1.msra.mxu0 0.0
        %6974 = vmatprep.subr.mxu0 0.0
        %6975 = vmatpush1.msra.mxu0 0.0
        %6976 = vmatprep.subr.mxu0 0.0
        %6977 = vmatpush1.msra.mxu0 0.0
        %6978 = vmatprep.subr.mxu0 0.0
        %6979 = vmatpush1.msra.mxu0 0.0
        %6980 = vmatprep.subr.mxu0 0.0
        %6981 = vmatpush1.msra.mxu0 0.0
        %6982 = vmatprep.subr.mxu0 0.0
        %6983 = vmatpush1.msra.mxu0 0.0
        %6984 = vmatprep.subr.mxu0 0.0
        %6985 = vmatpush1.msra.mxu0 0.0
        %6986 = vmatprep.subr.mxu0 0.0
        %6987 = vmatpush1.msra.mxu0 0.0
        %6988 = vmatprep.subr.mxu0 0.0
        %6989 = vmatpush1.msra.mxu0 0.0
        %6990 = vmatprep.subr.mxu0 0.0
        %6991 = vmatpush1.msra.mxu0 0.0
        %6992 = vmatprep.subr.mxu0 0.0
        %6993 = vmatpush1.msra.mxu0 0.0
        %6994 = vmatprep.subr.mxu0 0.0
        %6995 = vmatpush1.msra.mxu0 0.0
        %6996 = vmatprep.subr.mxu0 0.0
        %6997 = vmatpush1.msra.mxu0 0.0
        %6998 = vmatprep.subr.mxu0 0.0
        %6999 = vmatpush1.msra.mxu0 0.0
        %7000 = vmatprep.subr.mxu0 0.0
        %7001 = vmatpush1.msra.mxu0 0.0
        %7002 = vmatprep.subr.mxu0 0.0
        %7003 = vmatpush1.msra.mxu0 0.0
        %7004 = vmatprep.mubr.f32.mxu0 0.0
        %7005 = vmatmul.mubr.f32.gmra.mrb[0].mxu0 %v6867
        %v7006 = vpop.f32.mrb[0].mxu0
        %v7007 = vadd.f32 0.0, %v7006
        %v7008 = vpop.f32.mrb[0].mxu0
        %v7009 = vadd.f32 0.0, %v7008
        %7010 = vdwg.mxu0
        %7011 = vmatprep.subr.mxu0 %v6839
        %7012 = vmatpush1.msra.mxu0 %v6838
        %7013 = vmatprep.subr.mxu0 %v6847
        %7014 = vmatpush1.msra.mxu0 %v6846
        %7015 = vmatprep.subr.mxu0 0.0
        %7016 = vmatpush1.msra.mxu0 0.0
        %7017 = vmatprep.subr.mxu0 0.0
        %7018 = vmatpush1.msra.mxu0 0.0
        %7019 = vmatprep.subr.mxu0 0.0
        %7020 = vmatpush1.msra.mxu0 0.0
        %7021 = vmatprep.subr.mxu0 0.0
        %7022 = vmatpush1.msra.mxu0 0.0
        %7023 = vmatprep.subr.mxu0 0.0
        %7024 = vmatpush1.msra.mxu0 0.0
        %7025 = vmatprep.subr.mxu0 0.0
        %7026 = vmatpush1.msra.mxu0 0.0
        %7027 = vmatprep.subr.mxu0 0.0
        %7028 = vmatpush1.msra.mxu0 0.0
        %7029 = vmatprep.subr.mxu0 0.0
        %7030 = vmatpush1.msra.mxu0 0.0
        %7031 = vmatprep.subr.mxu0 0.0
        %7032 = vmatpush1.msra.mxu0 0.0
        %7033 = vmatprep.subr.mxu0 0.0
        %7034 = vmatpush1.msra.mxu0 0.0
        %7035 = vmatprep.subr.mxu0 0.0
        %7036 = vmatpush1.msra.mxu0 0.0
        %7037 = vmatprep.subr.mxu0 0.0
        %7038 = vmatpush1.msra.mxu0 0.0
        %7039 = vmatprep.subr.mxu0 0.0
        %7040 = vmatpush1.msra.mxu0 0.0
        %7041 = vmatprep.subr.mxu0 0.0
        %7042 = vmatpush1.msra.mxu0 0.0
        %7043 = vmatprep.subr.mxu0 0.0
        %7044 = vmatpush1.msra.mxu0 0.0
        %7045 = vmatprep.subr.mxu0 0.0
        %7046 = vmatpush1.msra.mxu0 0.0
        %7047 = vmatprep.subr.mxu0 0.0
        %7048 = vmatpush1.msra.mxu0 0.0
        %7049 = vmatprep.subr.mxu0 0.0
        %7050 = vmatpush1.msra.mxu0 0.0
        %7051 = vmatprep.subr.mxu0 0.0
        %7052 = vmatpush1.msra.mxu0 0.0
        %7053 = vmatprep.subr.mxu0 0.0
        %7054 = vmatpush1.msra.mxu0 0.0
        %7055 = vmatprep.subr.mxu0 0.0
        %7056 = vmatpush1.msra.mxu0 0.0
        %7057 = vmatprep.subr.mxu0 0.0
        %7058 = vmatpush1.msra.mxu0 0.0
        %7059 = vmatprep.subr.mxu0 0.0
        %7060 = vmatpush1.msra.mxu0 0.0
        %7061 = vmatprep.subr.mxu0 0.0
        %7062 = vmatpush1.msra.mxu0 0.0
        %7063 = vmatprep.subr.mxu0 0.0
        %7064 = vmatpush1.msra.mxu0 0.0
        %7065 = vmatprep.subr.mxu0 0.0
        %7066 = vmatpush1.msra.mxu0 0.0
        %7067 = vmatprep.subr.mxu0 0.0
        %7068 = vmatpush1.msra.mxu0 0.0
        %7069 = vmatprep.subr.mxu0 0.0
        %7070 = vmatpush1.msra.mxu0 0.0
        %7071 = vmatprep.subr.mxu0 0.0
        %7072 = vmatpush1.msra.mxu0 0.0
        %7073 = vmatprep.subr.mxu0 0.0
        %7074 = vmatpush1.msra.mxu0 0.0
        %7075 = vmatprep.mubr.f32.mxu0 0.0
        %7076 = vmatmul.mubr.f32.gmra.mrb[0].mxu0 %v6867
        %v7077 = vpop.f32.mrb[0].mxu0
        %v7078 = vadd.f32 0.0, %v7077
        %v7079 = vpop.f32.mrb[0].mxu0
        %v7080 = vadd.f32 0.0, %v7079
        %7081 = vdwg.mxu0
        %7082 = vmatprep.subr.mxu0 %v6841
        %7083 = vmatpush1.msra.mxu0 %v6840
        %7084 = vmatprep.subr.mxu0 %v6849
        %7085 = vmatpush1.msra.mxu0 %v6848
        %7086 = vmatprep.subr.mxu0 0.0
        %7087 = vmatpush1.msra.mxu0 0.0
        %7088 = vmatprep.subr.mxu0 0.0
        %7089 = vmatpush1.msra.mxu0 0.0
        %7090 = vmatprep.subr.mxu0 0.0
        %7091 = vmatpush1.msra.mxu0 0.0
        %7092 = vmatprep.subr.mxu0 0.0
        %7093 = vmatpush1.msra.mxu0 0.0
        %7094 = vmatprep.subr.mxu0 0.0
        %7095 = vmatpush1.msra.mxu0 0.0
        %7096 = vmatprep.subr.mxu0 0.0
        %7097 = vmatpush1.msra.mxu0 0.0
        %7098 = vmatprep.subr.mxu0 0.0
        %7099 = vmatpush1.msra.mxu0 0.0
        %7100 = vmatprep.subr.mxu0 0.0
        %7101 = vmatpush1.msra.mxu0 0.0
        %7102 = vmatprep.subr.mxu0 0.0
        %7103 = vmatpush1.msra.mxu0 0.0
        %7104 = vmatprep.subr.mxu0 0.0
        %7105 = vmatpush1.msra.mxu0 0.0
        %7106 = vmatprep.subr.mxu0 0.0
        %7107 = vmatpush1.msra.mxu0 0.0
        %7108 = vmatprep.subr.mxu0 0.0
        %7109 = vmatpush1.msra.mxu0 0.0
        %7110 = vmatprep.subr.mxu0 0.0
        %7111 = vmatpush1.msra.mxu0 0.0
        %7112 = vmatprep.subr.mxu0 0.0
        %7113 = vmatpush1.msra.mxu0 0.0
        %7114 = vmatprep.subr.mxu0 0.0
        %7115 = vmatpush1.msra.mxu0 0.0
        %7116 = vmatprep.subr.mxu0 0.0
        %7117 = vmatpush1.msra.mxu0 0.0
        %7118 = vmatprep.subr.mxu0 0.0
        %7119 = vmatpush1.msra.mxu0 0.0
        %7120 = vmatprep.subr.mxu0 0.0
        %7121 = vmatpush1.msra.mxu0 0.0
        %7122 = vmatprep.subr.mxu0 0.0
        %7123 = vmatpush1.msra.mxu0 0.0
        %7124 = vmatprep.subr.mxu0 0.0
        %7125 = vmatpush1.msra.mxu0 0.0
        %7126 = vmatprep.subr.mxu0 0.0
        %7127 = vmatpush1.msra.mxu0 0.0
        %7128 = vmatprep.subr.mxu0 0.0
        %7129 = vmatpush1.msra.mxu0 0.0
        %7130 = vmatprep.subr.mxu0 0.0
        %7131 = vmatpush1.msra.mxu0 0.0
        %7132 = vmatprep.subr.mxu0 0.0
        %7133 = vmatpush1.msra.mxu0 0.0
        %7134 = vmatprep.subr.mxu0 0.0
        %7135 = vmatpush1.msra.mxu0 0.0
        %7136 = vmatprep.subr.mxu0 0.0
        %7137 = vmatpush1.msra.mxu0 0.0
        %7138 = vmatprep.subr.mxu0 0.0
        %7139 = vmatpush1.msra.mxu0 0.0
        %7140 = vmatprep.subr.mxu0 0.0
        %7141 = vmatpush1.msra.mxu0 0.0
        %7142 = vmatprep.subr.mxu0 0.0
        %7143 = vmatpush1.msra.mxu0 0.0
        %7144 = vmatprep.subr.mxu0 0.0
        %7145 = vmatpush1.msra.mxu0 0.0
        %7146 = vmatprep.mubr.f32.mxu0 0.0
        %7147 = vmatmul.mubr.f32.gmra.mrb[0].mxu0 %v6867
        %v7148 = vpop.f32.mrb[0].mxu0
        %v7149 = vadd.f32 0.0, %v7148
        %v7150 = vpop.f32.mrb[0].mxu0
        %v7151 = vadd.f32 0.0, %v7150
        %7152 = vdwg.mxu0
        %v7153 = vadd.f32 %v6579, %v6936
        %v7154 = vadd.f32 %v6581, %v6938
        %v7155 = vadd.f32 %v6650, %v7007
        %v7156 = vadd.f32 %v6652, %v7009
        %v7157 = vadd.f32 %v6721, %v7078
        %v7158 = vadd.f32 %v6723, %v7080
        %v7159 = vadd.f32 %v6792, %v7149
        %v7160 = vadd.f32 %v6794, %v7151
        %v7161 = vadd.f32 %v6074, %v7153
        %v7162 = vadd.f32 %v6075, %v7154
        %v7163 = vadd.f32 %v6076, %v7155
        %v7164 = vadd.f32 %v6077, %v7156
        %v7165 = vadd.f32 %v6078, %v7157
        %v7166 = vadd.f32 %v6079, %v7158
        %v7167 = vadd.f32 %v6080, %v7159
        %v7168 = vadd.f32 %v6081, %v7160
        %s7169 = scalar_lea.vmem %s3, 16
        %v7170 = vld [vmem:[%s7169] sm:$0xff]
        %s7171 = scalar_lea.vmem %s3, 40
        %v7172 = vld [vmem:[%s7171] sm:$0xff]
        %7173 = vrot.lane.b32.xlu0 %v4952, 63
        %v7174 = vpop.permute.xlu0 %7173
        %7175 = vrot.lane.b32.xlu0 %v4953, 63
        %v7176 = vpop.permute.xlu0 %7175
        %7177 = vrot.lane.b32.xlu0 %v4954, 63
        %v7178 = vpop.permute.xlu0 %7177
        %7179 = vrot.lane.b32.xlu0 %v4955, 63
        %v7180 = vpop.permute.xlu0 %7179
        %7181 = vrot.lane.b32.xlu0 %v4956, 63
        %v7182 = vpop.permute.xlu0 %7181
        %7183 = vrot.lane.b32.xlu0 %v4957, 63
        %v7184 = vpop.permute.xlu0 %7183
        %7185 = vrot.lane.b32.xlu0 %v4958, 63
        %v7186 = vpop.permute.xlu0 %7185
        %7187 = vrot.lane.b32.xlu0 %v4959, 63
        %v7188 = vpop.permute.xlu0 %7187
        %7189 = vrot.lane.b32.xlu0 %v4960, 63
        %v7190 = vpop.permute.xlu0 %7189
        %7191 = vrot.lane.b32.xlu0 %v4961, 63
        %v7192 = vpop.permute.xlu0 %7191
        %7193 = vrot.lane.b32.xlu0 %v4962, 63
        %v7194 = vpop.permute.xlu0 %7193
        %7195 = vrot.lane.b32.xlu0 %v4963, 63
        %v7196 = vpop.permute.xlu0 %7195
        %7197 = vrot.lane.b32.xlu0 %v4964, 63
        %v7198 = vpop.permute.xlu0 %7197
        %7199 = vrot.lane.b32.xlu0 %v4965, 63
        %v7200 = vpop.permute.xlu0 %7199
        %7201 = vrot.lane.b32.xlu0 %v4966, 63
        %v7202 = vpop.permute.xlu0 %7201
        %7203 = vrot.lane.b32.xlu0 %v4967, 63
        %v7204 = vpop.permute.xlu0 %7203
        %7205 = vrot.lane.b32.xlu0 %v4968, 63
        %v7206 = vpop.permute.xlu0 %7205
        %7207 = vrot.lane.b32.xlu0 %v4969, 63
        %v7208 = vpop.permute.xlu0 %7207
        %v7209 = vsel %vm3754, %v7174, %v7176
        %v7210 = vsel %vm3754, %v7176, %v7178
        %v7211 = vsel %vm3754, %v7178, %v7180
        %v7212 = vsel %vm3754, %v7180, %v7182
        %v7213 = vsel %vm3754, %v7182, %v7184
        %v7214 = vsel %vm3754, %v7184, %v7186
        %v7215 = vsel %vm3754, %v7186, %v7188
        %v7216 = vsel %vm3754, %v7188, %v7190
        %v7217 = vsel %vm3754, %v7192, %v7194
        %v7218 = vsel %vm3754, %v7194, %v7196
        %v7219 = vsel %vm3754, %v7196, %v7198
        %v7220 = vsel %vm3754, %v7198, %v7200
        %v7221 = vsel %vm3754, %v7200, %v7202
        %v7222 = vsel %vm3754, %v7202, %v7204
        %v7223 = vsel %vm3754, %v7204, %v7206
        %v7224 = vsel %vm3754, %v7206, %v7208
        %v7242 = vsel %vm326, %v7172, 0
        %7244 = vmatprep.subr.mxu0 %v7210
        %7245 = vmatpush1.msra.mxu0 %v7209
        %7246 = vmatprep.subr.mxu0 %v7218
        %7247 = vmatpush1.msra.mxu0 %v7217
        %7248 = vmatprep.subr.mxu0 0.0
        %7249 = vmatpush1.msra.mxu0 0.0
        %7250 = vmatprep.subr.mxu0 0.0
        %7251 = vmatpush1.msra.mxu0 0.0
        %7252 = vmatprep.subr.mxu0 0.0
        %7253 = vmatpush1.msra.mxu0 0.0
        %7254 = vmatprep.subr.mxu0 0.0
        %7255 = vmatpush1.msra.mxu0 0.0
        %7256 = vmatprep.subr.mxu0 0.0
        %7257 = vmatpush1.msra.mxu0 0.0
        %7258 = vmatprep.subr.mxu0 0.0
        %7259 = vmatpush1.msra.mxu0 0.0
        %7260 = vmatprep.subr.mxu0 0.0
        %7261 = vmatpush1.msra.mxu0 0.0
        %7262 = vmatprep.subr.mxu0 0.0
        %7263 = vmatpush1.msra.mxu0 0.0
        %7264 = vmatprep.subr.mxu0 0.0
        %7265 = vmatpush1.msra.mxu0 0.0
        %7266 = vmatprep.subr.mxu0 0.0
        %7267 = vmatpush1.msra.mxu0 0.0
        %7268 = vmatprep.subr.mxu0 0.0
        %7269 = vmatpush1.msra.mxu0 0.0
        %7270 = vmatprep.subr.mxu0 0.0
        %7271 = vmatpush1.msra.mxu0 0.0
        %7272 = vmatprep.subr.mxu0 0.0
        %7273 = vmatpush1.msra.mxu0 0.0
        %7274 = vmatprep.subr.mxu0 0.0
        %7275 = vmatpush1.msra.mxu0 0.0
        %7276 = vmatprep.subr.mxu0 0.0
        %7277 = vmatpush1.msra.mxu0 0.0
        %7278 = vmatprep.subr.mxu0 0.0
        %7279 = vmatpush1.msra.mxu0 0.0
        %7280 = vmatprep.subr.mxu0 0.0
        %7281 = vmatpush1.msra.mxu0 0.0
        %7282 = vmatprep.subr.mxu0 0.0
        %7283 = vmatpush1.msra.mxu0 0.0
        %7284 = vmatprep.subr.mxu0 0.0
        %7285 = vmatpush1.msra.mxu0 0.0
        %7286 = vmatprep.subr.mxu0 0.0
        %7287 = vmatpush1.msra.mxu0 0.0
        %7288 = vmatprep.subr.mxu0 0.0
        %7289 = vmatpush1.msra.mxu0 0.0
        %7290 = vmatprep.subr.mxu0 0.0
        %7291 = vmatpush1.msra.mxu0 0.0
        %7292 = vmatprep.subr.mxu0 0.0
        %7293 = vmatpush1.msra.mxu0 0.0
        %7294 = vmatprep.subr.mxu0 0.0
        %7295 = vmatpush1.msra.mxu0 0.0
        %7296 = vmatprep.subr.mxu0 0.0
        %7297 = vmatpush1.msra.mxu0 0.0
        %7298 = vmatprep.subr.mxu0 0.0
        %7299 = vmatpush1.msra.mxu0 0.0
        %7300 = vmatprep.subr.mxu0 0.0
        %7301 = vmatpush1.msra.mxu0 0.0
        %7302 = vmatprep.subr.mxu0 0.0
        %7303 = vmatpush1.msra.mxu0 0.0
        %7304 = vmatprep.subr.mxu0 0.0
        %7305 = vmatpush1.msra.mxu0 0.0
        %7306 = vmatprep.subr.mxu0 0.0
        %7307 = vmatpush1.msra.mxu0 0.0
        %7308 = vmatprep.mubr.f32.mxu0 0.0
        %7309 = vmatmul.mubr.f32.gmra.mrb[0].mxu0 %v7242
        %v7310 = vpop.f32.mrb[0].mxu0
        %v7311 = vadd.f32 0.0, %v7310
        %v7312 = vpop.f32.mrb[0].mxu0
        %v7313 = vadd.f32 0.0, %v7312
        %7314 = vdwg.mxu0
        %7315 = vmatprep.subr.mxu0 %v7212
        %7316 = vmatpush1.msra.mxu0 %v7211
        %7317 = vmatprep.subr.mxu0 %v7220
        %7318 = vmatpush1.msra.mxu0 %v7219
        %7319 = vmatprep.subr.mxu0 0.0
        %7320 = vmatpush1.msra.mxu0 0.0
        %7321 = vmatprep.subr.mxu0 0.0
        %7322 = vmatpush1.msra.mxu0 0.0
        %7323 = vmatprep.subr.mxu0 0.0
        %7324 = vmatpush1.msra.mxu0 0.0
        %7325 = vmatprep.subr.mxu0 0.0
        %7326 = vmatpush1.msra.mxu0 0.0
        %7327 = vmatprep.subr.mxu0 0.0
        %7328 = vmatpush1.msra.mxu0 0.0
        %7329 = vmatprep.subr.mxu0 0.0
        %7330 = vmatpush1.msra.mxu0 0.0
        %7331 = vmatprep.subr.mxu0 0.0
        %7332 = vmatpush1.msra.mxu0 0.0
        %7333 = vmatprep.subr.mxu0 0.0
        %7334 = vmatpush1.msra.mxu0 0.0
        %7335 = vmatprep.subr.mxu0 0.0
        %7336 = vmatpush1.msra.mxu0 0.0
        %7337 = vmatprep.subr.mxu0 0.0
        %7338 = vmatpush1.msra.mxu0 0.0
        %7339 = vmatprep.subr.mxu0 0.0
        %7340 = vmatpush1.msra.mxu0 0.0
        %7341 = vmatprep.subr.mxu0 0.0
        %7342 = vmatpush1.msra.mxu0 0.0
        %7343 = vmatprep.subr.mxu0 0.0
        %7344 = vmatpush1.msra.mxu0 0.0
        %7345 = vmatprep.subr.mxu0 0.0
        %7346 = vmatpush1.msra.mxu0 0.0
        %7347 = vmatprep.subr.mxu0 0.0
        %7348 = vmatpush1.msra.mxu0 0.0
        %7349 = vmatprep.subr.mxu0 0.0
        %7350 = vmatpush1.msra.mxu0 0.0
        %7351 = vmatprep.subr.mxu0 0.0
        %7352 = vmatpush1.msra.mxu0 0.0
        %7353 = vmatprep.subr.mxu0 0.0
        %7354 = vmatpush1.msra.mxu0 0.0
        %7355 = vmatprep.subr.mxu0 0.0
        %7356 = vmatpush1.msra.mxu0 0.0
        %7357 = vmatprep.subr.mxu0 0.0
        %7358 = vmatpush1.msra.mxu0 0.0
        %7359 = vmatprep.subr.mxu0 0.0
        %7360 = vmatpush1.msra.mxu0 0.0
        %7361 = vmatprep.subr.mxu0 0.0
        %7362 = vmatpush1.msra.mxu0 0.0
        %7363 = vmatprep.subr.mxu0 0.0
        %7364 = vmatpush1.msra.mxu0 0.0
        %7365 = vmatprep.subr.mxu0 0.0
        %7366 = vmatpush1.msra.mxu0 0.0
        %7367 = vmatprep.subr.mxu0 0.0
        %7368 = vmatpush1.msra.mxu0 0.0
        %7369 = vmatprep.subr.mxu0 0.0
        %7370 = vmatpush1.msra.mxu0 0.0
        %7371 = vmatprep.subr.mxu0 0.0
        %7372 = vmatpush1.msra.mxu0 0.0
        %7373 = vmatprep.subr.mxu0 0.0
        %7374 = vmatpush1.msra.mxu0 0.0
        %7375 = vmatprep.subr.mxu0 0.0
        %7376 = vmatpush1.msra.mxu0 0.0
        %7377 = vmatprep.subr.mxu0 0.0
        %7378 = vmatpush1.msra.mxu0 0.0
        %7379 = vmatprep.mubr.f32.mxu0 0.0
        %7380 = vmatmul.mubr.f32.gmra.mrb[0].mxu0 %v7242
        %v7381 = vpop.f32.mrb[0].mxu0
        %v7382 = vadd.f32 0.0, %v7381
        %v7383 = vpop.f32.mrb[0].mxu0
        %v7384 = vadd.f32 0.0, %v7383
        %7385 = vdwg.mxu0
        %7386 = vmatprep.subr.mxu0 %v7214
        %7387 = vmatpush1.msra.mxu0 %v7213
        %7388 = vmatprep.subr.mxu0 %v7222
        %7389 = vmatpush1.msra.mxu0 %v7221
        %7390 = vmatprep.subr.mxu0 0.0
        %7391 = vmatpush1.msra.mxu0 0.0
        %7392 = vmatprep.subr.mxu0 0.0
        %7393 = vmatpush1.msra.mxu0 0.0
        %7394 = vmatprep.subr.mxu0 0.0
        %7395 = vmatpush1.msra.mxu0 0.0
        %7396 = vmatprep.subr.mxu0 0.0
        %7397 = vmatpush1.msra.mxu0 0.0
        %7398 = vmatprep.subr.mxu0 0.0
        %7399 = vmatpush1.msra.mxu0 0.0
        %7400 = vmatprep.subr.mxu0 0.0
        %7401 = vmatpush1.msra.mxu0 0.0
        %7402 = vmatprep.subr.mxu0 0.0
        %7403 = vmatpush1.msra.mxu0 0.0
        %7404 = vmatprep.subr.mxu0 0.0
        %7405 = vmatpush1.msra.mxu0 0.0
        %7406 = vmatprep.subr.mxu0 0.0
        %7407 = vmatpush1.msra.mxu0 0.0
        %7408 = vmatprep.subr.mxu0 0.0
        %7409 = vmatpush1.msra.mxu0 0.0
        %7410 = vmatprep.subr.mxu0 0.0
        %7411 = vmatpush1.msra.mxu0 0.0
        %7412 = vmatprep.subr.mxu0 0.0
        %7413 = vmatpush1.msra.mxu0 0.0
        %7414 = vmatprep.subr.mxu0 0.0
        %7415 = vmatpush1.msra.mxu0 0.0
        %7416 = vmatprep.subr.mxu0 0.0
        %7417 = vmatpush1.msra.mxu0 0.0
        %7418 = vmatprep.subr.mxu0 0.0
        %7419 = vmatpush1.msra.mxu0 0.0
        %7420 = vmatprep.subr.mxu0 0.0
        %7421 = vmatpush1.msra.mxu0 0.0
        %7422 = vmatprep.subr.mxu0 0.0
        %7423 = vmatpush1.msra.mxu0 0.0
        %7424 = vmatprep.subr.mxu0 0.0
        %7425 = vmatpush1.msra.mxu0 0.0
        %7426 = vmatprep.subr.mxu0 0.0
        %7427 = vmatpush1.msra.mxu0 0.0
        %7428 = vmatprep.subr.mxu0 0.0
        %7429 = vmatpush1.msra.mxu0 0.0
        %7430 = vmatprep.subr.mxu0 0.0
        %7431 = vmatpush1.msra.mxu0 0.0
        %7432 = vmatprep.subr.mxu0 0.0
        %7433 = vmatpush1.msra.mxu0 0.0
        %7434 = vmatprep.subr.mxu0 0.0
        %7435 = vmatpush1.msra.mxu0 0.0
        %7436 = vmatprep.subr.mxu0 0.0
        %7437 = vmatpush1.msra.mxu0 0.0
        %7438 = vmatprep.subr.mxu0 0.0
        %7439 = vmatpush1.msra.mxu0 0.0
        %7440 = vmatprep.subr.mxu0 0.0
        %7441 = vmatpush1.msra.mxu0 0.0
        %7442 = vmatprep.subr.mxu0 0.0
        %7443 = vmatpush1.msra.mxu0 0.0
        %7444 = vmatprep.subr.mxu0 0.0
        %7445 = vmatpush1.msra.mxu0 0.0
        %7446 = vmatprep.subr.mxu0 0.0
        %7447 = vmatpush1.msra.mxu0 0.0
        %7448 = vmatprep.subr.mxu0 0.0
        %7449 = vmatpush1.msra.mxu0 0.0
        %7450 = vmatprep.mubr.f32.mxu0 0.0
        %7451 = vmatmul.mubr.f32.gmra.mrb[0].mxu0 %v7242
        %v7452 = vpop.f32.mrb[0].mxu0
        %v7453 = vadd.f32 0.0, %v7452
        %v7454 = vpop.f32.mrb[0].mxu0
        %v7455 = vadd.f32 0.0, %v7454
        %7456 = vdwg.mxu0
        %7457 = vmatprep.subr.mxu0 %v7216
        %7458 = vmatpush1.msra.mxu0 %v7215
        %7459 = vmatprep.subr.mxu0 %v7224
        %7460 = vmatpush1.msra.mxu0 %v7223
        %7461 = vmatprep.subr.mxu0 0.0
        %7462 = vmatpush1.msra.mxu0 0.0
        %7463 = vmatprep.subr.mxu0 0.0
        %7464 = vmatpush1.msra.mxu0 0.0
        %7465 = vmatprep.subr.mxu0 0.0
        %7466 = vmatpush1.msra.mxu0 0.0
        %7467 = vmatprep.subr.mxu0 0.0
        %7468 = vmatpush1.msra.mxu0 0.0
        %7469 = vmatprep.subr.mxu0 0.0
        %7470 = vmatpush1.msra.mxu0 0.0
        %7471 = vmatprep.subr.mxu0 0.0
        %7472 = vmatpush1.msra.mxu0 0.0
        %7473 = vmatprep.subr.mxu0 0.0
        %7474 = vmatpush1.msra.mxu0 0.0
        %7475 = vmatprep.subr.mxu0 0.0
        %7476 = vmatpush1.msra.mxu0 0.0
        %7477 = vmatprep.subr.mxu0 0.0
        %7478 = vmatpush1.msra.mxu0 0.0
        %7479 = vmatprep.subr.mxu0 0.0
        %7480 = vmatpush1.msra.mxu0 0.0
        %7481 = vmatprep.subr.mxu0 0.0
        %7482 = vmatpush1.msra.mxu0 0.0
        %7483 = vmatprep.subr.mxu0 0.0
        %7484 = vmatpush1.msra.mxu0 0.0
        %7485 = vmatprep.subr.mxu0 0.0
        %7486 = vmatpush1.msra.mxu0 0.0
        %7487 = vmatprep.subr.mxu0 0.0
        %7488 = vmatpush1.msra.mxu0 0.0
        %7489 = vmatprep.subr.mxu0 0.0
        %7490 = vmatpush1.msra.mxu0 0.0
        %7491 = vmatprep.subr.mxu0 0.0
        %7492 = vmatpush1.msra.mxu0 0.0
        %7493 = vmatprep.subr.mxu0 0.0
        %7494 = vmatpush1.msra.mxu0 0.0
        %7495 = vmatprep.subr.mxu0 0.0
        %7496 = vmatpush1.msra.mxu0 0.0
        %7497 = vmatprep.subr.mxu0 0.0
        %7498 = vmatpush1.msra.mxu0 0.0
        %7499 = vmatprep.subr.mxu0 0.0
        %7500 = vmatpush1.msra.mxu0 0.0
        %7501 = vmatprep.subr.mxu0 0.0
        %7502 = vmatpush1.msra.mxu0 0.0
        %7503 = vmatprep.subr.mxu0 0.0
        %7504 = vmatpush1.msra.mxu0 0.0
        %7505 = vmatprep.subr.mxu0 0.0
        %7506 = vmatpush1.msra.mxu0 0.0
        %7507 = vmatprep.subr.mxu0 0.0
        %7508 = vmatpush1.msra.mxu0 0.0
        %7509 = vmatprep.subr.mxu0 0.0
        %7510 = vmatpush1.msra.mxu0 0.0
        %7511 = vmatprep.subr.mxu0 0.0
        %7512 = vmatpush1.msra.mxu0 0.0
        %7513 = vmatprep.subr.mxu0 0.0
        %7514 = vmatpush1.msra.mxu0 0.0
        %7515 = vmatprep.subr.mxu0 0.0
        %7516 = vmatpush1.msra.mxu0 0.0
        %7517 = vmatprep.subr.mxu0 0.0
        %7518 = vmatpush1.msra.mxu0 0.0
        %7519 = vmatprep.subr.mxu0 0.0
        %7520 = vmatpush1.msra.mxu0 0.0
        %7521 = vmatprep.mubr.f32.mxu0 0.0
        %7522 = vmatmul.mubr.f32.gmra.mrb[0].mxu0 %v7242
        %v7523 = vpop.f32.mrb[0].mxu0
        %v7524 = vadd.f32 0.0, %v7523
        %v7525 = vpop.f32.mrb[0].mxu0
        %v7526 = vadd.f32 0.0, %v7525
        %7527 = vdwg.mxu0
        %7528 = vrot.lane.b32.xlu0 %v4952, 95
        %v7529 = vpop.permute.xlu0 %7528
        %7530 = vrot.lane.b32.xlu0 %v4953, 95
        %v7531 = vpop.permute.xlu0 %7530
        %7532 = vrot.lane.b32.xlu0 %v4954, 95
        %v7533 = vpop.permute.xlu0 %7532
        %7534 = vrot.lane.b32.xlu0 %v4955, 95
        %v7535 = vpop.permute.xlu0 %7534
        %7536 = vrot.lane.b32.xlu0 %v4956, 95
        %v7537 = vpop.permute.xlu0 %7536
        %7538 = vrot.lane.b32.xlu0 %v4957, 95
        %v7539 = vpop.permute.xlu0 %7538
        %7540 = vrot.lane.b32.xlu0 %v4958, 95
        %v7541 = vpop.permute.xlu0 %7540
        %7542 = vrot.lane.b32.xlu0 %v4959, 95
        %v7543 = vpop.permute.xlu0 %7542
        %7544 = vrot.lane.b32.xlu0 %v4960, 95
        %v7545 = vpop.permute.xlu0 %7544
        %7546 = vrot.lane.b32.xlu0 %v4961, 95
        %v7547 = vpop.permute.xlu0 %7546
        %7548 = vrot.lane.b32.xlu0 %v4962, 95
        %v7549 = vpop.permute.xlu0 %7548
        %7550 = vrot.lane.b32.xlu0 %v4963, 95
        %v7551 = vpop.permute.xlu0 %7550
        %7552 = vrot.lane.b32.xlu0 %v4964, 95
        %v7553 = vpop.permute.xlu0 %7552
        %7554 = vrot.lane.b32.xlu0 %v4965, 95
        %v7555 = vpop.permute.xlu0 %7554
        %7556 = vrot.lane.b32.xlu0 %v4966, 95
        %v7557 = vpop.permute.xlu0 %7556
        %7558 = vrot.lane.b32.xlu0 %v4967, 95
        %v7559 = vpop.permute.xlu0 %7558
        %7560 = vrot.lane.b32.xlu0 %v4968, 95
        %v7561 = vpop.permute.xlu0 %7560
        %7562 = vrot.lane.b32.xlu0 %v4969, 95
        %v7563 = vpop.permute.xlu0 %7562
        %v7564 = vsel %vm4084, %v7529, %v7531
        %v7565 = vsel %vm4084, %v7531, %v7533
        %v7566 = vsel %vm4084, %v7533, %v7535
        %v7567 = vsel %vm4084, %v7535, %v7537
        %v7568 = vsel %vm4084, %v7537, %v7539
        %v7569 = vsel %vm4084, %v7539, %v7541
        %v7570 = vsel %vm4084, %v7541, %v7543
        %v7571 = vsel %vm4084, %v7543, %v7545
        %v7572 = vsel %vm4084, %v7547, %v7549
        %v7573 = vsel %vm4084, %v7549, %v7551
        %v7574 = vsel %vm4084, %v7551, %v7553
        %v7575 = vsel %vm4084, %v7553, %v7555
        %v7576 = vsel %vm4084, %v7555, %v7557
        %v7577 = vsel %vm4084, %v7557, %v7559
        %v7578 = vsel %vm4084, %v7559, %v7561
        %v7579 = vsel %vm4084, %v7561, %v7563
        %v7597 = vsel %vm326, %v7170, 0
        %7599 = vmatprep.subr.mxu0 %v7565
        %7600 = vmatpush1.msra.mxu0 %v7564
        %7601 = vmatprep.subr.mxu0 %v7573
        %7602 = vmatpush1.msra.mxu0 %v7572
        %7603 = vmatprep.subr.mxu0 0.0
        %7604 = vmatpush1.msra.mxu0 0.0
        %7605 = vmatprep.subr.mxu0 0.0
        %7606 = vmatpush1.msra.mxu0 0.0
        %7607 = vmatprep.subr.mxu0 0.0
        %7608 = vmatpush1.msra.mxu0 0.0
        %7609 = vmatprep.subr.mxu0 0.0
        %7610 = vmatpush1.msra.mxu0 0.0
        %7611 = vmatprep.subr.mxu0 0.0
        %7612 = vmatpush1.msra.mxu0 0.0
        %7613 = vmatprep.subr.mxu0 0.0
        %7614 = vmatpush1.msra.mxu0 0.0
        %7615 = vmatprep.subr.mxu0 0.0
        %7616 = vmatpush1.msra.mxu0 0.0
        %7617 = vmatprep.subr.mxu0 0.0
        %7618 = vmatpush1.msra.mxu0 0.0
        %7619 = vmatprep.subr.mxu0 0.0
        %7620 = vmatpush1.msra.mxu0 0.0
        %7621 = vmatprep.subr.mxu0 0.0
        %7622 = vmatpush1.msra.mxu0 0.0
        %7623 = vmatprep.subr.mxu0 0.0
        %7624 = vmatpush1.msra.mxu0 0.0
        %7625 = vmatprep.subr.mxu0 0.0
        %7626 = vmatpush1.msra.mxu0 0.0
        %7627 = vmatprep.subr.mxu0 0.0
        %7628 = vmatpush1.msra.mxu0 0.0
        %7629 = vmatprep.subr.mxu0 0.0
        %7630 = vmatpush1.msra.mxu0 0.0
        %7631 = vmatprep.subr.mxu0 0.0
        %7632 = vmatpush1.msra.mxu0 0.0
        %7633 = vmatprep.subr.mxu0 0.0
        %7634 = vmatpush1.msra.mxu0 0.0
        %7635 = vmatprep.subr.mxu0 0.0
        %7636 = vmatpush1.msra.mxu0 0.0
        %7637 = vmatprep.subr.mxu0 0.0
        %7638 = vmatpush1.msra.mxu0 0.0
        %7639 = vmatprep.subr.mxu0 0.0
        %7640 = vmatpush1.msra.mxu0 0.0
        %7641 = vmatprep.subr.mxu0 0.0
        %7642 = vmatpush1.msra.mxu0 0.0
        %7643 = vmatprep.subr.mxu0 0.0
        %7644 = vmatpush1.msra.mxu0 0.0
        %7645 = vmatprep.subr.mxu0 0.0
        %7646 = vmatpush1.msra.mxu0 0.0
        %7647 = vmatprep.subr.mxu0 0.0
        %7648 = vmatpush1.msra.mxu0 0.0
        %7649 = vmatprep.subr.mxu0 0.0
        %7650 = vmatpush1.msra.mxu0 0.0
        %7651 = vmatprep.subr.mxu0 0.0
        %7652 = vmatpush1.msra.mxu0 0.0
        %7653 = vmatprep.subr.mxu0 0.0
        %7654 = vmatpush1.msra.mxu0 0.0
        %7655 = vmatprep.subr.mxu0 0.0
        %7656 = vmatpush1.msra.mxu0 0.0
        %7657 = vmatprep.subr.mxu0 0.0
        %7658 = vmatpush1.msra.mxu0 0.0
        %7659 = vmatprep.subr.mxu0 0.0
        %7660 = vmatpush1.msra.mxu0 0.0
        %7661 = vmatprep.subr.mxu0 0.0
        %7662 = vmatpush1.msra.mxu0 0.0
        %7663 = vmatprep.mubr.f32.mxu0 0.0
        %7664 = vmatmul.mubr.f32.gmra.mrb[0].mxu0 %v7597
        %v7665 = vpop.f32.mrb[0].mxu0
        %v7666 = vadd.f32 %v7311, %v7665
        %v7667 = vpop.f32.mrb[0].mxu0
        %v7668 = vadd.f32 %v7313, %v7667
        %7669 = vdwg.mxu0
        %7670 = vmatprep.subr.mxu0 %v7567
        %7671 = vmatpush1.msra.mxu0 %v7566
        %7672 = vmatprep.subr.mxu0 %v7575
        %7673 = vmatpush1.msra.mxu0 %v7574
        %7674 = vmatprep.subr.mxu0 0.0
        %7675 = vmatpush1.msra.mxu0 0.0
        %7676 = vmatprep.subr.mxu0 0.0
        %7677 = vmatpush1.msra.mxu0 0.0
        %7678 = vmatprep.subr.mxu0 0.0
        %7679 = vmatpush1.msra.mxu0 0.0
        %7680 = vmatprep.subr.mxu0 0.0
        %7681 = vmatpush1.msra.mxu0 0.0
        %7682 = vmatprep.subr.mxu0 0.0
        %7683 = vmatpush1.msra.mxu0 0.0
        %7684 = vmatprep.subr.mxu0 0.0
        %7685 = vmatpush1.msra.mxu0 0.0
        %7686 = vmatprep.subr.mxu0 0.0
        %7687 = vmatpush1.msra.mxu0 0.0
        %7688 = vmatprep.subr.mxu0 0.0
        %7689 = vmatpush1.msra.mxu0 0.0
        %7690 = vmatprep.subr.mxu0 0.0
        %7691 = vmatpush1.msra.mxu0 0.0
        %7692 = vmatprep.subr.mxu0 0.0
        %7693 = vmatpush1.msra.mxu0 0.0
        %7694 = vmatprep.subr.mxu0 0.0
        %7695 = vmatpush1.msra.mxu0 0.0
        %7696 = vmatprep.subr.mxu0 0.0
        %7697 = vmatpush1.msra.mxu0 0.0
        %7698 = vmatprep.subr.mxu0 0.0
        %7699 = vmatpush1.msra.mxu0 0.0
        %7700 = vmatprep.subr.mxu0 0.0
        %7701 = vmatpush1.msra.mxu0 0.0
        %7702 = vmatprep.subr.mxu0 0.0
        %7703 = vmatpush1.msra.mxu0 0.0
        %7704 = vmatprep.subr.mxu0 0.0
        %7705 = vmatpush1.msra.mxu0 0.0
        %7706 = vmatprep.subr.mxu0 0.0
        %7707 = vmatpush1.msra.mxu0 0.0
        %7708 = vmatprep.subr.mxu0 0.0
        %7709 = vmatpush1.msra.mxu0 0.0
        %7710 = vmatprep.subr.mxu0 0.0
        %7711 = vmatpush1.msra.mxu0 0.0
        %7712 = vmatprep.subr.mxu0 0.0
        %7713 = vmatpush1.msra.mxu0 0.0
        %7714 = vmatprep.subr.mxu0 0.0
        %7715 = vmatpush1.msra.mxu0 0.0
        %7716 = vmatprep.subr.mxu0 0.0
        %7717 = vmatpush1.msra.mxu0 0.0
        %7718 = vmatprep.subr.mxu0 0.0
        %7719 = vmatpush1.msra.mxu0 0.0
        %7720 = vmatprep.subr.mxu0 0.0
        %7721 = vmatpush1.msra.mxu0 0.0
        %7722 = vmatprep.subr.mxu0 0.0
        %7723 = vmatpush1.msra.mxu0 0.0
        %7724 = vmatprep.subr.mxu0 0.0
        %7725 = vmatpush1.msra.mxu0 0.0
        %7726 = vmatprep.subr.mxu0 0.0
        %7727 = vmatpush1.msra.mxu0 0.0
        %7728 = vmatprep.subr.mxu0 0.0
        %7729 = vmatpush1.msra.mxu0 0.0
        %7730 = vmatprep.subr.mxu0 0.0
        %7731 = vmatpush1.msra.mxu0 0.0
        %7732 = vmatprep.subr.mxu0 0.0
        %7733 = vmatpush1.msra.mxu0 0.0
        %7734 = vmatprep.mubr.f32.mxu0 0.0
        %7735 = vmatmul.mubr.f32.gmra.mrb[0].mxu0 %v7597
        %v7736 = vpop.f32.mrb[0].mxu0
        %v7737 = vadd.f32 %v7382, %v7736
        %v7738 = vpop.f32.mrb[0].mxu0
        %v7739 = vadd.f32 %v7384, %v7738
        %7740 = vdwg.mxu0
        %7741 = vmatprep.subr.mxu0 %v7569
        %7742 = vmatpush1.msra.mxu0 %v7568
        %7743 = vmatprep.subr.mxu0 %v7577
        %7744 = vmatpush1.msra.mxu0 %v7576
        %7745 = vmatprep.subr.mxu0 0.0
        %7746 = vmatpush1.msra.mxu0 0.0
        %7747 = vmatprep.subr.mxu0 0.0
        %7748 = vmatpush1.msra.mxu0 0.0
        %7749 = vmatprep.subr.mxu0 0.0
        %7750 = vmatpush1.msra.mxu0 0.0
        %7751 = vmatprep.subr.mxu0 0.0
        %7752 = vmatpush1.msra.mxu0 0.0
        %7753 = vmatprep.subr.mxu0 0.0
        %7754 = vmatpush1.msra.mxu0 0.0
        %7755 = vmatprep.subr.mxu0 0.0
        %7756 = vmatpush1.msra.mxu0 0.0
        %7757 = vmatprep.subr.mxu0 0.0
        %7758 = vmatpush1.msra.mxu0 0.0
        %7759 = vmatprep.subr.mxu0 0.0
        %7760 = vmatpush1.msra.mxu0 0.0
        %7761 = vmatprep.subr.mxu0 0.0
        %7762 = vmatpush1.msra.mxu0 0.0
        %7763 = vmatprep.subr.mxu0 0.0
        %7764 = vmatpush1.msra.mxu0 0.0
        %7765 = vmatprep.subr.mxu0 0.0
        %7766 = vmatpush1.msra.mxu0 0.0
        %7767 = vmatprep.subr.mxu0 0.0
        %7768 = vmatpush1.msra.mxu0 0.0
        %7769 = vmatprep.subr.mxu0 0.0
        %7770 = vmatpush1.msra.mxu0 0.0
        %7771 = vmatprep.subr.mxu0 0.0
        %7772 = vmatpush1.msra.mxu0 0.0
        %7773 = vmatprep.subr.mxu0 0.0
        %7774 = vmatpush1.msra.mxu0 0.0
        %7775 = vmatprep.subr.mxu0 0.0
        %7776 = vmatpush1.msra.mxu0 0.0
        %7777 = vmatprep.subr.mxu0 0.0
        %7778 = vmatpush1.msra.mxu0 0.0
        %7779 = vmatprep.subr.mxu0 0.0
        %7780 = vmatpush1.msra.mxu0 0.0
        %7781 = vmatprep.subr.mxu0 0.0
        %7782 = vmatpush1.msra.mxu0 0.0
        %7783 = vmatprep.subr.mxu0 0.0
        %7784 = vmatpush1.msra.mxu0 0.0
        %7785 = vmatprep.subr.mxu0 0.0
        %7786 = vmatpush1.msra.mxu0 0.0
        %7787 = vmatprep.subr.mxu0 0.0
        %7788 = vmatpush1.msra.mxu0 0.0
        %7789 = vmatprep.subr.mxu0 0.0
        %7790 = vmatpush1.msra.mxu0 0.0
        %7791 = vmatprep.subr.mxu0 0.0
        %7792 = vmatpush1.msra.mxu0 0.0
        %7793 = vmatprep.subr.mxu0 0.0
        %7794 = vmatpush1.msra.mxu0 0.0
        %7795 = vmatprep.subr.mxu0 0.0
        %7796 = vmatpush1.msra.mxu0 0.0
        %7797 = vmatprep.subr.mxu0 0.0
        %7798 = vmatpush1.msra.mxu0 0.0
        %7799 = vmatprep.subr.mxu0 0.0
        %7800 = vmatpush1.msra.mxu0 0.0
        %7801 = vmatprep.subr.mxu0 0.0
        %7802 = vmatpush1.msra.mxu0 0.0
        %7803 = vmatprep.subr.mxu0 0.0
        %7804 = vmatpush1.msra.mxu0 0.0
        %7805 = vmatprep.mubr.f32.mxu0 0.0
        %7806 = vmatmul.mubr.f32.gmra.mrb[0].mxu0 %v7597
        %v7807 = vpop.f32.mrb[0].mxu0
        %v7808 = vadd.f32 %v7453, %v7807
        %v7809 = vpop.f32.mrb[0].mxu0
        %v7810 = vadd.f32 %v7455, %v7809
        %7811 = vdwg.mxu0
        %7812 = vmatprep.subr.mxu0 %v7571
        %7813 = vmatpush1.msra.mxu0 %v7570
        %7814 = vmatprep.subr.mxu0 %v7579
        %7815 = vmatpush1.msra.mxu0 %v7578
        %7816 = vmatprep.subr.mxu0 0.0
        %7817 = vmatpush1.msra.mxu0 0.0
        %7818 = vmatprep.subr.mxu0 0.0
        %7819 = vmatpush1.msra.mxu0 0.0
        %7820 = vmatprep.subr.mxu0 0.0
        %7821 = vmatpush1.msra.mxu0 0.0
        %7822 = vmatprep.subr.mxu0 0.0
        %7823 = vmatpush1.msra.mxu0 0.0
        %7824 = vmatprep.subr.mxu0 0.0
        %7825 = vmatpush1.msra.mxu0 0.0
        %7826 = vmatprep.subr.mxu0 0.0
        %7827 = vmatpush1.msra.mxu0 0.0
        %7828 = vmatprep.subr.mxu0 0.0
        %7829 = vmatpush1.msra.mxu0 0.0
        %7830 = vmatprep.subr.mxu0 0.0
        %7831 = vmatpush1.msra.mxu0 0.0
        %7832 = vmatprep.subr.mxu0 0.0
        %7833 = vmatpush1.msra.mxu0 0.0
        %7834 = vmatprep.subr.mxu0 0.0
        %7835 = vmatpush1.msra.mxu0 0.0
        %7836 = vmatprep.subr.mxu0 0.0
        %7837 = vmatpush1.msra.mxu0 0.0
        %7838 = vmatprep.subr.mxu0 0.0
        %7839 = vmatpush1.msra.mxu0 0.0
        %7840 = vmatprep.subr.mxu0 0.0
        %7841 = vmatpush1.msra.mxu0 0.0
        %7842 = vmatprep.subr.mxu0 0.0
        %7843 = vmatpush1.msra.mxu0 0.0
        %7844 = vmatprep.subr.mxu0 0.0
        %7845 = vmatpush1.msra.mxu0 0.0
        %7846 = vmatprep.subr.mxu0 0.0
        %7847 = vmatpush1.msra.mxu0 0.0
        %7848 = vmatprep.subr.mxu0 0.0
        %7849 = vmatpush1.msra.mxu0 0.0
        %7850 = vmatprep.subr.mxu0 0.0
        %7851 = vmatpush1.msra.mxu0 0.0
        %7852 = vmatprep.subr.mxu0 0.0
        %7853 = vmatpush1.msra.mxu0 0.0
        %7854 = vmatprep.subr.mxu0 0.0
        %7855 = vmatpush1.msra.mxu0 0.0
        %7856 = vmatprep.subr.mxu0 0.0
        %7857 = vmatpush1.msra.mxu0 0.0
        %7858 = vmatprep.subr.mxu0 0.0
        %7859 = vmatpush1.msra.mxu0 0.0
        %7860 = vmatprep.subr.mxu0 0.0
        %7861 = vmatpush1.msra.mxu0 0.0
        %7862 = vmatprep.subr.mxu0 0.0
        %7863 = vmatpush1.msra.mxu0 0.0
        %7864 = vmatprep.subr.mxu0 0.0
        %7865 = vmatpush1.msra.mxu0 0.0
        %7866 = vmatprep.subr.mxu0 0.0
        %7867 = vmatpush1.msra.mxu0 0.0
        %7868 = vmatprep.subr.mxu0 0.0
        %7869 = vmatpush1.msra.mxu0 0.0
        %7870 = vmatprep.subr.mxu0 0.0
        %7871 = vmatpush1.msra.mxu0 0.0
        %7872 = vmatprep.subr.mxu0 0.0
        %7873 = vmatpush1.msra.mxu0 0.0
        %7874 = vmatprep.subr.mxu0 0.0
        %7875 = vmatpush1.msra.mxu0 0.0
        %7876 = vmatprep.mubr.f32.mxu0 0.0
        %7877 = vmatmul.mubr.f32.gmra.mrb[0].mxu0 %v7597
        %v7878 = vpop.f32.mrb[0].mxu0
        %v7879 = vadd.f32 %v7524, %v7878
        %v7880 = vpop.f32.mrb[0].mxu0
        %v7881 = vadd.f32 %v7526, %v7880
        %7882 = vdwg.mxu0
        %s7883 = scalar_lea.vmem %s3, 64
        %v7884 = vld [vmem:[%s7883] sm:$0xff]
        %7885 = vrot.lane.b32.xlu0 %v4952, 31
        %v7886 = vpop.permute.xlu0 %7885
        %7887 = vrot.lane.b32.xlu0 %v4953, 31
        %v7888 = vpop.permute.xlu0 %7887
        %7889 = vrot.lane.b32.xlu0 %v4954, 31
        %v7890 = vpop.permute.xlu0 %7889
        %7891 = vrot.lane.b32.xlu0 %v4955, 31
        %v7892 = vpop.permute.xlu0 %7891
        %7893 = vrot.lane.b32.xlu0 %v4956, 31
        %v7894 = vpop.permute.xlu0 %7893
        %7895 = vrot.lane.b32.xlu0 %v4957, 31
        %v7896 = vpop.permute.xlu0 %7895
        %7897 = vrot.lane.b32.xlu0 %v4958, 31
        %v7898 = vpop.permute.xlu0 %7897
        %7899 = vrot.lane.b32.xlu0 %v4959, 31
        %v7900 = vpop.permute.xlu0 %7899
        %7901 = vrot.lane.b32.xlu0 %v4960, 31
        %v7902 = vpop.permute.xlu0 %7901
        %7903 = vrot.lane.b32.xlu0 %v4961, 31
        %v7904 = vpop.permute.xlu0 %7903
        %7905 = vrot.lane.b32.xlu0 %v4962, 31
        %v7906 = vpop.permute.xlu0 %7905
        %7907 = vrot.lane.b32.xlu0 %v4963, 31
        %v7908 = vpop.permute.xlu0 %7907
        %7909 = vrot.lane.b32.xlu0 %v4964, 31
        %v7910 = vpop.permute.xlu0 %7909
        %7911 = vrot.lane.b32.xlu0 %v4965, 31
        %v7912 = vpop.permute.xlu0 %7911
        %7913 = vrot.lane.b32.xlu0 %v4966, 31
        %v7914 = vpop.permute.xlu0 %7913
        %7915 = vrot.lane.b32.xlu0 %v4967, 31
        %v7916 = vpop.permute.xlu0 %7915
        %7917 = vrot.lane.b32.xlu0 %v4968, 31
        %v7918 = vpop.permute.xlu0 %7917
        %7919 = vrot.lane.b32.xlu0 %v4969, 31
        %v7920 = vpop.permute.xlu0 %7919
        %v7921 = vsel %vm4430, %v7886, %v7888
        %v7922 = vsel %vm4430, %v7888, %v7890
        %v7923 = vsel %vm4430, %v7890, %v7892
        %v7924 = vsel %vm4430, %v7892, %v7894
        %v7925 = vsel %vm4430, %v7894, %v7896
        %v7926 = vsel %vm4430, %v7896, %v7898
        %v7927 = vsel %vm4430, %v7898, %v7900
        %v7928 = vsel %vm4430, %v7900, %v7902
        %v7929 = vsel %vm4430, %v7904, %v7906
        %v7930 = vsel %vm4430, %v7906, %v7908
        %v7931 = vsel %vm4430, %v7908, %v7910
        %v7932 = vsel %vm4430, %v7910, %v7912
        %v7933 = vsel %vm4430, %v7912, %v7914
        %v7934 = vsel %vm4430, %v7914, %v7916
        %v7935 = vsel %vm4430, %v7916, %v7918
        %v7936 = vsel %vm4430, %v7918, %v7920
        %v7954 = vsel %vm326, %v7884, 0
        %7956 = vmatprep.subr.mxu0 %v7922
        %7957 = vmatpush1.msra.mxu0 %v7921
        %7958 = vmatprep.subr.mxu0 %v7930
        %7959 = vmatpush1.msra.mxu0 %v7929
        %7960 = vmatprep.subr.mxu0 0.0
        %7961 = vmatpush1.msra.mxu0 0.0
        %7962 = vmatprep.subr.mxu0 0.0
        %7963 = vmatpush1.msra.mxu0 0.0
        %7964 = vmatprep.subr.mxu0 0.0
        %7965 = vmatpush1.msra.mxu0 0.0
        %7966 = vmatprep.subr.mxu0 0.0
        %7967 = vmatpush1.msra.mxu0 0.0
        %7968 = vmatprep.subr.mxu0 0.0
        %7969 = vmatpush1.msra.mxu0 0.0
        %7970 = vmatprep.subr.mxu0 0.0
        %7971 = vmatpush1.msra.mxu0 0.0
        %7972 = vmatprep.subr.mxu0 0.0
        %7973 = vmatpush1.msra.mxu0 0.0
        %7974 = vmatprep.subr.mxu0 0.0
        %7975 = vmatpush1.msra.mxu0 0.0
        %7976 = vmatprep.subr.mxu0 0.0
        %7977 = vmatpush1.msra.mxu0 0.0
        %7978 = vmatprep.subr.mxu0 0.0
        %7979 = vmatpush1.msra.mxu0 0.0
        %7980 = vmatprep.subr.mxu0 0.0
        %7981 = vmatpush1.msra.mxu0 0.0
        %7982 = vmatprep.subr.mxu0 0.0
        %7983 = vmatpush1.msra.mxu0 0.0
        %7984 = vmatprep.subr.mxu0 0.0
        %7985 = vmatpush1.msra.mxu0 0.0
        %7986 = vmatprep.subr.mxu0 0.0
        %7987 = vmatpush1.msra.mxu0 0.0
        %7988 = vmatprep.subr.mxu0 0.0
        %7989 = vmatpush1.msra.mxu0 0.0
        %7990 = vmatprep.subr.mxu0 0.0
        %7991 = vmatpush1.msra.mxu0 0.0
        %7992 = vmatprep.subr.mxu0 0.0
        %7993 = vmatpush1.msra.mxu0 0.0
        %7994 = vmatprep.subr.mxu0 0.0
        %7995 = vmatpush1.msra.mxu0 0.0
        %7996 = vmatprep.subr.mxu0 0.0
        %7997 = vmatpush1.msra.mxu0 0.0
        %7998 = vmatprep.subr.mxu0 0.0
        %7999 = vmatpush1.msra.mxu0 0.0
        %8000 = vmatprep.subr.mxu0 0.0
        %8001 = vmatpush1.msra.mxu0 0.0
        %8002 = vmatprep.subr.mxu0 0.0
        %8003 = vmatpush1.msra.mxu0 0.0
        %8004 = vmatprep.subr.mxu0 0.0
        %8005 = vmatpush1.msra.mxu0 0.0
        %8006 = vmatprep.subr.mxu0 0.0
        %8007 = vmatpush1.msra.mxu0 0.0
        %8008 = vmatprep.subr.mxu0 0.0
        %8009 = vmatpush1.msra.mxu0 0.0
        %8010 = vmatprep.subr.mxu0 0.0
        %8011 = vmatpush1.msra.mxu0 0.0
        %8012 = vmatprep.subr.mxu0 0.0
        %8013 = vmatpush1.msra.mxu0 0.0
        %8014 = vmatprep.subr.mxu0 0.0
        %8015 = vmatpush1.msra.mxu0 0.0
        %8016 = vmatprep.subr.mxu0 0.0
        %8017 = vmatpush1.msra.mxu0 0.0
        %8018 = vmatprep.subr.mxu0 0.0
        %8019 = vmatpush1.msra.mxu0 0.0
        %8020 = vmatprep.mubr.f32.mxu0 0.0
        %8021 = vmatmul.mubr.f32.gmra.mrb[0].mxu0 %v7954
        %v8022 = vpop.f32.mrb[0].mxu0
        %v8023 = vadd.f32 0.0, %v8022
        %v8024 = vpop.f32.mrb[0].mxu0
        %v8025 = vadd.f32 0.0, %v8024
        %8026 = vdwg.mxu0
        %8027 = vmatprep.subr.mxu0 %v7924
        %8028 = vmatpush1.msra.mxu0 %v7923
        %8029 = vmatprep.subr.mxu0 %v7932
        %8030 = vmatpush1.msra.mxu0 %v7931
        %8031 = vmatprep.subr.mxu0 0.0
        %8032 = vmatpush1.msra.mxu0 0.0
        %8033 = vmatprep.subr.mxu0 0.0
        %8034 = vmatpush1.msra.mxu0 0.0
        %8035 = vmatprep.subr.mxu0 0.0
        %8036 = vmatpush1.msra.mxu0 0.0
        %8037 = vmatprep.subr.mxu0 0.0
        %8038 = vmatpush1.msra.mxu0 0.0
        %8039 = vmatprep.subr.mxu0 0.0
        %8040 = vmatpush1.msra.mxu0 0.0
        %8041 = vmatprep.subr.mxu0 0.0
        %8042 = vmatpush1.msra.mxu0 0.0
        %8043 = vmatprep.subr.mxu0 0.0
        %8044 = vmatpush1.msra.mxu0 0.0
        %8045 = vmatprep.subr.mxu0 0.0
        %8046 = vmatpush1.msra.mxu0 0.0
        %8047 = vmatprep.subr.mxu0 0.0
        %8048 = vmatpush1.msra.mxu0 0.0
        %8049 = vmatprep.subr.mxu0 0.0
        %8050 = vmatpush1.msra.mxu0 0.0
        %8051 = vmatprep.subr.mxu0 0.0
        %8052 = vmatpush1.msra.mxu0 0.0
        %8053 = vmatprep.subr.mxu0 0.0
        %8054 = vmatpush1.msra.mxu0 0.0
        %8055 = vmatprep.subr.mxu0 0.0
        %8056 = vmatpush1.msra.mxu0 0.0
        %8057 = vmatprep.subr.mxu0 0.0
        %8058 = vmatpush1.msra.mxu0 0.0
        %8059 = vmatprep.subr.mxu0 0.0
        %8060 = vmatpush1.msra.mxu0 0.0
        %8061 = vmatprep.subr.mxu0 0.0
        %8062 = vmatpush1.msra.mxu0 0.0
        %8063 = vmatprep.subr.mxu0 0.0
        %8064 = vmatpush1.msra.mxu0 0.0
        %8065 = vmatprep.subr.mxu0 0.0
        %8066 = vmatpush1.msra.mxu0 0.0
        %8067 = vmatprep.subr.mxu0 0.0
        %8068 = vmatpush1.msra.mxu0 0.0
        %8069 = vmatprep.subr.mxu0 0.0
        %8070 = vmatpush1.msra.mxu0 0.0
        %8071 = vmatprep.subr.mxu0 0.0
        %8072 = vmatpush1.msra.mxu0 0.0
        %8073 = vmatprep.subr.mxu0 0.0
        %8074 = vmatpush1.msra.mxu0 0.0
        %8075 = vmatprep.subr.mxu0 0.0
        %8076 = vmatpush1.msra.mxu0 0.0
        %8077 = vmatprep.subr.mxu0 0.0
        %8078 = vmatpush1.msra.mxu0 0.0
        %8079 = vmatprep.subr.mxu0 0.0
        %8080 = vmatpush1.msra.mxu0 0.0
        %8081 = vmatprep.subr.mxu0 0.0
        %8082 = vmatpush1.msra.mxu0 0.0
        %8083 = vmatprep.subr.mxu0 0.0
        %8084 = vmatpush1.msra.mxu0 0.0
        %8085 = vmatprep.subr.mxu0 0.0
        %8086 = vmatpush1.msra.mxu0 0.0
        %8087 = vmatprep.subr.mxu0 0.0
        %8088 = vmatpush1.msra.mxu0 0.0
        %8089 = vmatprep.subr.mxu0 0.0
        %8090 = vmatpush1.msra.mxu0 0.0
        %8091 = vmatprep.mubr.f32.mxu0 0.0
        %8092 = vmatmul.mubr.f32.gmra.mrb[0].mxu0 %v7954
        %v8093 = vpop.f32.mrb[0].mxu0
        %v8094 = vadd.f32 0.0, %v8093
        %v8095 = vpop.f32.mrb[0].mxu0
        %v8096 = vadd.f32 0.0, %v8095
        %8097 = vdwg.mxu0
        %8098 = vmatprep.subr.mxu0 %v7926
        %8099 = vmatpush1.msra.mxu0 %v7925
        %8100 = vmatprep.subr.mxu0 %v7934
        %8101 = vmatpush1.msra.mxu0 %v7933
        %8102 = vmatprep.subr.mxu0 0.0
        %8103 = vmatpush1.msra.mxu0 0.0
        %8104 = vmatprep.subr.mxu0 0.0
        %8105 = vmatpush1.msra.mxu0 0.0
        %8106 = vmatprep.subr.mxu0 0.0
        %8107 = vmatpush1.msra.mxu0 0.0
        %8108 = vmatprep.subr.mxu0 0.0
        %8109 = vmatpush1.msra.mxu0 0.0
        %8110 = vmatprep.subr.mxu0 0.0
        %8111 = vmatpush1.msra.mxu0 0.0
        %8112 = vmatprep.subr.mxu0 0.0
        %8113 = vmatpush1.msra.mxu0 0.0
        %8114 = vmatprep.subr.mxu0 0.0
        %8115 = vmatpush1.msra.mxu0 0.0
        %8116 = vmatprep.subr.mxu0 0.0
        %8117 = vmatpush1.msra.mxu0 0.0
        %8118 = vmatprep.subr.mxu0 0.0
        %8119 = vmatpush1.msra.mxu0 0.0
        %8120 = vmatprep.subr.mxu0 0.0
        %8121 = vmatpush1.msra.mxu0 0.0
        %8122 = vmatprep.subr.mxu0 0.0
        %8123 = vmatpush1.msra.mxu0 0.0
        %8124 = vmatprep.subr.mxu0 0.0
        %8125 = vmatpush1.msra.mxu0 0.0
        %8126 = vmatprep.subr.mxu0 0.0
        %8127 = vmatpush1.msra.mxu0 0.0
        %8128 = vmatprep.subr.mxu0 0.0
        %8129 = vmatpush1.msra.mxu0 0.0
        %8130 = vmatprep.subr.mxu0 0.0
        %8131 = vmatpush1.msra.mxu0 0.0
        %8132 = vmatprep.subr.mxu0 0.0
        %8133 = vmatpush1.msra.mxu0 0.0
        %8134 = vmatprep.subr.mxu0 0.0
        %8135 = vmatpush1.msra.mxu0 0.0
        %8136 = vmatprep.subr.mxu0 0.0
        %8137 = vmatpush1.msra.mxu0 0.0
        %8138 = vmatprep.subr.mxu0 0.0
        %8139 = vmatpush1.msra.mxu0 0.0
        %8140 = vmatprep.subr.mxu0 0.0
        %8141 = vmatpush1.msra.mxu0 0.0
        %8142 = vmatprep.subr.mxu0 0.0
        %8143 = vmatpush1.msra.mxu0 0.0
        %8144 = vmatprep.subr.mxu0 0.0
        %8145 = vmatpush1.msra.mxu0 0.0
        %8146 = vmatprep.subr.mxu0 0.0
        %8147 = vmatpush1.msra.mxu0 0.0
        %8148 = vmatprep.subr.mxu0 0.0
        %8149 = vmatpush1.msra.mxu0 0.0
        %8150 = vmatprep.subr.mxu0 0.0
        %8151 = vmatpush1.msra.mxu0 0.0
        %8152 = vmatprep.subr.mxu0 0.0
        %8153 = vmatpush1.msra.mxu0 0.0
        %8154 = vmatprep.subr.mxu0 0.0
        %8155 = vmatpush1.msra.mxu0 0.0
        %8156 = vmatprep.subr.mxu0 0.0
        %8157 = vmatpush1.msra.mxu0 0.0
        %8158 = vmatprep.subr.mxu0 0.0
        %8159 = vmatpush1.msra.mxu0 0.0
        %8160 = vmatprep.subr.mxu0 0.0
        %8161 = vmatpush1.msra.mxu0 0.0
        %8162 = vmatprep.mubr.f32.mxu0 0.0
        %8163 = vmatmul.mubr.f32.gmra.mrb[0].mxu0 %v7954
        %v8164 = vpop.f32.mrb[0].mxu0
        %v8165 = vadd.f32 0.0, %v8164
        %v8166 = vpop.f32.mrb[0].mxu0
        %v8167 = vadd.f32 0.0, %v8166
        %8168 = vdwg.mxu0
        %8169 = vmatprep.subr.mxu0 %v7928
        %8170 = vmatpush1.msra.mxu0 %v7927
        %8171 = vmatprep.subr.mxu0 %v7936
        %8172 = vmatpush1.msra.mxu0 %v7935
        %8173 = vmatprep.subr.mxu0 0.0
        %8174 = vmatpush1.msra.mxu0 0.0
        %8175 = vmatprep.subr.mxu0 0.0
        %8176 = vmatpush1.msra.mxu0 0.0
        %8177 = vmatprep.subr.mxu0 0.0
        %8178 = vmatpush1.msra.mxu0 0.0
        %8179 = vmatprep.subr.mxu0 0.0
        %8180 = vmatpush1.msra.mxu0 0.0
        %8181 = vmatprep.subr.mxu0 0.0
        %8182 = vmatpush1.msra.mxu0 0.0
        %8183 = vmatprep.subr.mxu0 0.0
        %8184 = vmatpush1.msra.mxu0 0.0
        %8185 = vmatprep.subr.mxu0 0.0
        %8186 = vmatpush1.msra.mxu0 0.0
        %8187 = vmatprep.subr.mxu0 0.0
        %8188 = vmatpush1.msra.mxu0 0.0
        %8189 = vmatprep.subr.mxu0 0.0
        %8190 = vmatpush1.msra.mxu0 0.0
        %8191 = vmatprep.subr.mxu0 0.0
        %8192 = vmatpush1.msra.mxu0 0.0
        %8193 = vmatprep.subr.mxu0 0.0
        %8194 = vmatpush1.msra.mxu0 0.0
        %8195 = vmatprep.subr.mxu0 0.0
        %8196 = vmatpush1.msra.mxu0 0.0
        %8197 = vmatprep.subr.mxu0 0.0
        %8198 = vmatpush1.msra.mxu0 0.0
        %8199 = vmatprep.subr.mxu0 0.0
        %8200 = vmatpush1.msra.mxu0 0.0
        %8201 = vmatprep.subr.mxu0 0.0
        %8202 = vmatpush1.msra.mxu0 0.0
        %8203 = vmatprep.subr.mxu0 0.0
        %8204 = vmatpush1.msra.mxu0 0.0
        %8205 = vmatprep.subr.mxu0 0.0
        %8206 = vmatpush1.msra.mxu0 0.0
        %8207 = vmatprep.subr.mxu0 0.0
        %8208 = vmatpush1.msra.mxu0 0.0
        %8209 = vmatprep.subr.mxu0 0.0
        %8210 = vmatpush1.msra.mxu0 0.0
        %8211 = vmatprep.subr.mxu0 0.0
        %8212 = vmatpush1.msra.mxu0 0.0
        %8213 = vmatprep.subr.mxu0 0.0
        %8214 = vmatpush1.msra.mxu0 0.0
        %8215 = vmatprep.subr.mxu0 0.0
        %8216 = vmatpush1.msra.mxu0 0.0
        %8217 = vmatprep.subr.mxu0 0.0
        %8218 = vmatpush1.msra.mxu0 0.0
        %8219 = vmatprep.subr.mxu0 0.0
        %8220 = vmatpush1.msra.mxu0 0.0
        %8221 = vmatprep.subr.mxu0 0.0
        %8222 = vmatpush1.msra.mxu0 0.0
        %8223 = vmatprep.subr.mxu0 0.0
        %8224 = vmatpush1.msra.mxu0 0.0
        %8225 = vmatprep.subr.mxu0 0.0
        %8226 = vmatpush1.msra.mxu0 0.0
        %8227 = vmatprep.subr.mxu0 0.0
        %8228 = vmatpush1.msra.mxu0 0.0
        %8229 = vmatprep.subr.mxu0 0.0
        %8230 = vmatpush1.msra.mxu0 0.0
        %8231 = vmatprep.subr.mxu0 0.0
        %8232 = vmatpush1.msra.mxu0 0.0
        %8233 = vmatprep.mubr.f32.mxu0 0.0
        %8234 = vmatmul.mubr.f32.gmra.mrb[0].mxu0 %v7954
        %v8235 = vpop.f32.mrb[0].mxu0
        %v8236 = vadd.f32 0.0, %v8235
        %v8237 = vpop.f32.mrb[0].mxu0
        %v8238 = vadd.f32 0.0, %v8237
        %8239 = vdwg.mxu0
        %v8240 = vadd.f32 %v7666, %v8023
        %v8241 = vadd.f32 %v7668, %v8025
        %v8242 = vadd.f32 %v7737, %v8094
        %v8243 = vadd.f32 %v7739, %v8096
        %v8244 = vadd.f32 %v7808, %v8165
        %v8245 = vadd.f32 %v7810, %v8167
        %v8246 = vadd.f32 %v7879, %v8236
        %v8247 = vadd.f32 %v7881, %v8238
        %v8248 = vmul.f32 %v8240, %v4754
        %v8249 = vmul.f32 %v8241, %v4758
        %v8250 = vmul.f32 %v8242, %v4762
        %v8251 = vmul.f32 %v8243, %v4766
        %v8252 = vmul.f32 %v8244, %v4770
        %v8253 = vmul.f32 %v8245, %v4774
        %v8254 = vmul.f32 %v8246, %v4778
        %v8255 = vmul.f32 %v8247, %v4782
        %v8256 = vadd.f32 %v7161, %v8248
        %v8257 = vadd.f32 %v7162, %v8249
        %v8258 = vadd.f32 %v7163, %v8250
        %v8259 = vadd.f32 %v7164, %v8251
        %v8260 = vadd.f32 %v7165, %v8252
        %v8261 = vadd.f32 %v7166, %v8253
        %v8262 = vadd.f32 %v7167, %v8254
        %v8263 = vadd.f32 %v7168, %v8255
        %v8264 = vld [vmem:[%s4] sm:$0xff]
        %8266 = vset.pattern.permute.xlu0 2
        %8267 = vperm.xlu0 %8266, %v8264
        %v8268 = vpop.permute.xlu0 %8267
        %v8270 = vmul.f32 %v8256, %v8268
        %v8271 = vmul.f32 %v8257, %v8268
        %v8272 = vmul.f32 %v8258, %v8268
        %v8273 = vmul.f32 %v8259, %v8268
        %v8274 = vmul.f32 %v8260, %v8268
        %v8275 = vmul.f32 %v8261, %v8268
        %v8276 = vmul.f32 %v8262, %v8268
        %v8277 = vmul.f32 %v8263, %v8268
        %8278 = vset.pattern.permute.xlu0 3
        %8279 = vperm.xlu0 %8278, %v8264
        %v8280 = vpop.permute.xlu0 %8279
        %v8282 = vadd.f32 %v8270, %v8280
        %v8283 = vadd.f32 %v8271, %v8280
        %v8284 = vadd.f32 %v8272, %v8280
        %v8285 = vadd.f32 %v8273, %v8280
        %v8286 = vadd.f32 %v8274, %v8280
        %v8287 = vadd.f32 %v8275, %v8280
        %v8288 = vadd.f32 %v8276, %v8280
        %v8289 = vadd.f32 %v8277, %v8280
        %v8290 = vmax.f32 %v8282, 0.0
        %v8291 = vmax.f32 %v8283, 0.0
        %v8292 = vmax.f32 %v8284, 0.0
        %v8293 = vmax.f32 %v8285, 0.0
        %v8294 = vmax.f32 %v8286, 0.0
        %v8295 = vmax.f32 %v8287, 0.0
        %v8296 = vmax.f32 %v8288, 0.0
        %v8297 = vmax.f32 %v8289, 0.0
        %8298 = vst [vmem:[%s309] sm:$0xff] %v8290
        %8299 = vst [vmem:[%s309 + $0x8] sm:$0xff] %v8291
        %8300 = vst [vmem:[%s309 + $0x10] sm:$0xff] %v8292
        %8301 = vst [vmem:[%s309 + $0x18] sm:$0xff] %v8293
        %8302 = vst [vmem:[%s309 + $0x20] sm:$0xff] %v8294
        %8303 = vst [vmem:[%s309 + $0x28] sm:$0xff] %v8295
        %8304 = vst [vmem:[%s309 + $0x30] sm:$0xff] %v8296
        %8305 = vst [vmem:[%s309 + $0x38] sm:$0xff] %v8297
        %s8306 = sand.u32 %s189, 1
        %s8307 = scalar_lea.sflag [#allocation6], %s8306
        %s8308 = sand.u32 %s189, 1
        %s8309 = smul.addr %s8308, 64
        %s8310 = scalar_lea.vmem [#allocation7], %s8309
        // Predicated region
        $region53: #{tpu_custom_call.1} parent=47 // pred_check
          %p8311 = pneg %p199
        $region54: #{tpu_custom_call.1} parent=47 // pred_check_branch
          %8313 = sbr.rel (%p8311) target = $region56
        $region55: #{tpu_custom_call.1} parent=47 // pred_region
          %s8315 = ssub.s32 1024, 1024
          %8316 = vsyncadd %s8307, %s8315
          %s8317 = smul.addr %s24, 8
          %s8318 = smul.addr %s8317, 128
          %s8319 = scalar_lea.hbm %s7, %s8318
          %s8321 = sshll.u32 %s8310, 4
          %s8322 = int_to_ptr.vmem [resolvable:$true] %s8321
          %8324 = dma.vmem_to_hbm [thread:$0]  %s8322, 1024, %s8319, %s8307
        $region56: #{tpu_custom_call.1} parent=47 // pred_fallthru
          _
      $region48: #{tpu_custom_call.1} parent=5 // pred_fallthru
        _
      %p8325 = scmp.le.s32.totalorder 2, %s19
      // Predicated region
      $region57: #{tpu_custom_call.1} parent=5 // pred_check
        %p8326 = pneg %p8325
      $region58: #{tpu_custom_call.1} parent=5 // pred_check_branch
        %8328 = sbr.rel (%p8326) target = $region60
      $region59: #{tpu_custom_call.1} parent=5 // pred_region
        %s8329 = ssub.s32 %s19, 2
        // Predicated region
        $region61: #{tpu_custom_call.1} parent=59 // pred_check
          %p8330 = pneg %p205
        $region62: #{tpu_custom_call.1} parent=59 // pred_check_branch
          %8332 = sbr.rel (%p8330) target = $region64
        $region63: #{tpu_custom_call.1} parent=59 // pred_region
          %s8333 = sand.u32 %s190, 1
          %s8334 = scalar_lea.sflag [#allocation6], %s8333
          %s8335 = sand.u32 %s190, 1
          %s8336 = smul.addr %s8335, 64
          %s8337 = scalar_lea.vmem [#allocation7], %s8336
          %8338 = dma.done %s8334, 1024
        $region64: #{tpu_custom_call.1} parent=59 // pred_fallthru
          _
      $region60: #{tpu_custom_call.1} parent=5 // pred_fallthru
        _
    $region6: #{tpu_custom_call.1} parent=1 // loop_footer
      %s23 = sadd.s32 1, %s19
    $region7: #{tpu_custom_call.1} parent=1 // loop_footer_branch
      %18 = sbr.rel target = $region3
    $region8: #{tpu_custom_call.1} parent=1 // loop_exit
      _
    %8339 = vsyncpa [#allocation5], 1
    %s8340 = scalar_lea.sflag [#allocation5], 1
    %8341 = vsyncpa %s8340, 1
    %8342 = vsyncpa [#allocation6], 1
    %s8343 = scalar_lea.sflag [#allocation6], 1
    %8344 = vsyncpa %s8343, 1

</llo_original>
